<compile_context>
chip_gen: v5e
topology: v5e:2x2
jax: 0.10.0
libtpu: 0.0.40
codegen_flags: <defaults>
</compile_context>

<pallas_src>
import jax
import jax.numpy as jnp
from jax.experimental import pallas as pl
from jax.experimental.pallas import tpu as pltpu


# ------------------------------ fused kernel ---------------------------------
def _make_fused_kernel(T, B, H, V, L):
    """Builds the fused (L-layer LSTM + linear head) kernel for static sizes."""

    def _lstm_cell(z, c):
        # Gate-column layout (i, f, o, g): one sigmoid launch over the first 3H
        # columns, one tanh launch over the last H.
        s = jax.nn.sigmoid(z[:, : 3 * H])
        g = jnp.tanh(z[:, 3 * H:])
        i = s[:, 0 * H:1 * H]
        f = s[:, 1 * H:2 * H]
        o = s[:, 2 * H:3 * H]
        c_new = f * c + i * g
        h_new = o * jnp.tanh(c_new)
        return h_new, c_new

    def kernel(*args):
        a = list(args)
        # ---- inputs ----
        zx0_ref, h0_ref, c0_ref, whh0_ref = a[0], a[1], a[2], a[3]
        p = 4
        hbm_layer = []                              # (w_ih, w_hh, b) per layer>=1, in HBM
        for _ in range(1, L):
            hbm_layer.append(tuple(a[p:p + 3])); p += 3
        wlin_hbm, blin_hbm = a[p], a[p + 1]; p += 2
        # ---- outputs ----
        out_ref, hT_ref, cT_ref = a[p], a[p + 1], a[p + 2]; p += 3
        # ---- scratch ----
        y_sc, zx_sc = a[p], a[p + 1]; p += 2
        scr_layer = []                              # VMEM destinations for prefetch
        for _ in range(1, L):
            scr_layer.append(tuple(a[p:p + 3])); p += 3
        wlin_sc, blin_sc, dma_sem = a[p], a[p + 1], a[p + 2]

        # ---- start async prefetch of layer>=1 + head weights.  These are not
        # needed until after the layer-0 recurrence, so their DMA overlaps the
        # serial layer-0 compute instead of being exposed up front. ----
        s_idx = 0
        layer_copies = []
        for l in range(1, L):
            cl = []
            for src, dst in zip(hbm_layer[l - 1], scr_layer[l - 1]):
                cl.append(pltpu.make_async_copy(src, dst, dma_sem.at[s_idx]))
                s_idx += 1
            layer_copies.append(cl)
        head_copies = [
            pltpu.make_async_copy(wlin_hbm, wlin_sc, dma_sem.at[s_idx]),
            pltpu.make_async_copy(blin_hbm, blin_sc, dma_sem.at[s_idx + 1]),
        ]
        for cp in [c for cl in layer_copies for c in cl] + head_copies:
            cp.start()

        def run_layer(zx_ref, whh, h, c):
            # Time recurrence, statically unrolled (T is small & static).
            # `whh` is loaded ONCE per layer (hoisted); only the tiny
            # (B,H)x(H,4H) bf16 matmul + gate nonlinearities sit on the serial
            # dependency chain; x-projection + bias already folded into zx_ref.
            for t in range(T):
                rows = slice(t * B, (t + 1) * B)          # static, tile-aligned (B=8)
                z = zx_ref[rows, :] + jnp.dot(
                    h.astype(jnp.bfloat16), whh,
                    preferred_element_type=jnp.float32)
                h, c = _lstm_cell(z, c)
                y_sc[rows, :] = h
            return h, c

        # ---- layer 0: pre-activations (embedding gather + bias) come in as input
        whh0 = whh0_ref[...]                               # hoisted weight load
        h_fin, c_fin = run_layer(zx0_ref, whh0, h0_ref[0], c0_ref[0])
        hT_ref[0] = h_fin
        cT_ref[0] = c_fin

        # ---- layers 1..L-1: wait for their prefetched weights, hoist the
        # x-projection as ONE (T*B, H) @ (H, 4H) bf16 matmul, then recur. ----
        for l in range(1, L):
            for cp in layer_copies[l - 1]:
                cp.wait()
            wih_sc, whh_sc, b_sc = scr_layer[l - 1]
            zx_sc[...] = (jnp.dot(y_sc[...].astype(jnp.bfloat16), wih_sc[...],
                                  preferred_element_type=jnp.float32)
                          + b_sc[...])
            h_fin, c_fin = run_layer(zx_sc, whh_sc[...], h0_ref[l], c0_ref[l])
            hT_ref[l] = h_fin
            cT_ref[l] = c_fin

        # ---- vocab projection on the last layer's outputs (still in VMEM) ----
        for cp in head_copies:
            cp.wait()
        out_ref[...] = (jnp.dot(y_sc[...].astype(jnp.bfloat16), wlin_sc[...],
                                preferred_element_type=jnp.float32)
                        + blin_sc[...])

    return kernel


def _full_spec(shape):
    n = len(shape)
    return pl.BlockSpec(tuple(shape), lambda *_: (0,) * n)


# ----------------------------- RNNModel wrapper ------------------------------
@jax.jit
def rnn_model_forward(inputs, state, params):
    """inputs: (batch, seq) int32; state: (h0, c0), each (num_layers, batch, H)."""
    h0, c0 = state
    L, B, H = h0.shape
    T = inputs.shape[1]
    V = params["linear"]["w_t"].shape[-1]

    # Layer-0 input projection == embedding lookup:
    #   one_hot(tok, V) @ W_ih^T  ==  W_ih^T[tok]
    # Done as cheap XLA glue (a gather); bias folded in so the in-kernel
    # recurrence only does h @ W_hh^T per step.
    p0 = params["lstm"][0]
    tokens = inputs.T.reshape(-1)                           # row index = t*B + b
    zx0 = p0["w_ih_t"][tokens].astype(jnp.float32) + p0["b"]   # (T*B, 4H) f32

    operands = [zx0, h0, c0, p0["w_hh_t"]]
    in_specs = [_full_spec(zx0.shape), _full_spec(h0.shape),
                _full_spec(c0.shape), _full_spec(p0["w_hh_t"].shape)]
    for l in range(1, L):
        p_l = params["lstm"][l]
        operands += [p_l["w_ih_t"], p_l["w_hh_t"], p_l["b"]]
        in_specs += [pl.BlockSpec(memory_space=pl.ANY)] * 3       # manual DMA
    operands += [params["linear"]["w_t"], params["linear"]["b"]]
    in_specs += [pl.BlockSpec(memory_space=pl.ANY)] * 2           # manual DMA

    n_copies = 3 * (L - 1) + 2
    scratch = [
        pltpu.VMEM((T * B, H), jnp.float32),        # per-layer outputs Y (reused)
        pltpu.VMEM((T * B, 4 * H), jnp.float32),    # hoisted pre-activations
    ]
    for _ in range(1, L):
        scratch += [pltpu.VMEM((H, 4 * H), jnp.bfloat16),   # w_ih (prefetched)
                    pltpu.VMEM((H, 4 * H), jnp.bfloat16),   # w_hh (prefetched)
                    pltpu.VMEM((1, 4 * H), jnp.float32)]    # bias (prefetched)
    scratch += [pltpu.VMEM((H, V), jnp.bfloat16),           # head weight (prefetched)
                pltpu.VMEM((1, V), jnp.float32),            # head bias   (prefetched)
                pltpu.SemaphoreType.DMA((n_copies,))]

    out, hT, cT = pl.pallas_call(
        _make_fused_kernel(T, B, H, V, L),
        out_shape=(
            jax.ShapeDtypeStruct((T * B, V), jnp.float32),   # linear(Y.reshape(-1,H))
            jax.ShapeDtypeStruct((L, B, H), jnp.float32),    # h_T
            jax.ShapeDtypeStruct((L, B, H), jnp.float32),    # c_T
        ),
        grid=(),
        in_specs=in_specs,
        out_specs=(
            _full_spec((T * B, V)),
            _full_spec((L, B, H)),
            _full_spec((L, B, H)),
        ),
        scratch_shapes=scratch,
        compiler_params=pltpu.CompilerParams(vmem_limit_bytes=16 * 1024 * 1024),
    )(*operands)
    return out, (hT, cT)


# ------------------------------ parameter init -------------------------------
def init_params(key, vocab_size, num_hiddens, num_layers):
    """Gate-column layout used throughout this file is (i, f, o, g).

    (PyTorch's nn.LSTM stores (i, f, g, o); converting real PyTorch weights
    would require the corresponding column permutation of W^T and the bias.)
    Matmul weights are stored bf16; biases stay f32.
    """
    H = num_hiddens
    k = 1.0 / jnp.sqrt(num_hiddens)
    params = {"lstm": []}
    keys = jax.random.split(key, num_layers * 4 + 2)
    ki = 0
    for layer in range(num_layers):
        d_in = vocab_size if layer == 0 else num_hiddens
        w_ih = jax.random.uniform(keys[ki], (4 * H, d_in), jnp.float32, -k, k); ki += 1
        w_hh = jax.random.uniform(keys[ki], (4 * H, H), jnp.float32, -k, k); ki += 1
        b_ih = jax.random.uniform(keys[ki], (4 * H,), jnp.float32, -k, k); ki += 1
        b_hh = jax.random.uniform(keys[ki], (4 * H,), jnp.float32, -k, k); ki += 1
        params["lstm"].append({
            "w_ih_t": w_ih.T.astype(jnp.bfloat16),    # (D_in, 4H) bf16
            "w_hh_t": w_hh.T.astype(jnp.bfloat16),    # (H, 4H)   bf16
            "b": (b_ih + b_hh)[None, :],               # (1, 4H)   f32
        })
    w_lin = jax.random.uniform(keys[ki], (vocab_size, num_hiddens), jnp.float32, -k, k); ki += 1
    b_lin = jax.random.uniform(keys[ki], (vocab_size,), jnp.float32, -k, k)
    params["linear"] = {"w_t": w_lin.T.astype(jnp.bfloat16),   # (H, V) bf16
                        "b": b_lin[None, :]}                   # (1, V) f32
    return params


# ----------------------------- pure-JAX reference ----------------------------
def _ref_forward(inputs, state, params, vocab_size):
    """f32 reference (weights upcast exactly from bf16); same (i,f,o,g) layout."""
    HIGH = jax.lax.Precision.HIGHEST
    h0_all, c0_all = state
    H = h0_all.shape[-1]
    X = jax.nn.one_hot(inputs.T, vocab_size, dtype=jnp.float32)   # (T, B, V)
    layer_in = X
    h_fin, c_fin = [], []
    for layer in range(h0_all.shape[0]):
        p = params["lstm"][layer]
        w_ih = p["w_ih_t"].astype(jnp.float32)
        w_hh = p["w_hh_t"].astype(jnp.float32)
        b = p["b"]

        def step(carry, x, w_ih=w_ih, w_hh=w_hh, b=b):
            h, c = carry
            z = (jnp.dot(x, w_ih, precision=HIGH)
                 + jnp.dot(h, w_hh, precision=HIGH) + b)
            s = jax.nn.sigmoid(z[:, : 3 * H])
            g = jnp.tanh(z[:, 3 * H:])
            i, f, o = s[:, :H], s[:, H:2 * H], s[:, 2 * H:3 * H]
            c = f * c + i * g
            h = o * jnp.tanh(c)
            return (h, c), h

        (hT, cT), ys = jax.lax.scan(step, (h0_all[layer], c0_all[layer]), layer_in)
        h_fin.append(hT)
        c_fin.append(cT)
        layer_in = ys
    Y = layer_in
    w_lin = params["linear"]["w_t"].astype(jnp.float32)
    out = (jnp.dot(Y.reshape(-1, Y.shape[-1]), w_lin, precision=HIGH)
           + params["linear"]["b"])
    return out, (jnp.stack(h_fin), jnp.stack(c_fin))


if __name__ == "__main__":
    vocab_size = 128      # lane-dense vocab head
    num_hiddens = 256     # matches the PyTorch spec (num_hiddens = 256)
    num_layers = 2
    batch = 8             # sublane-aligned
    seq = 8

    key = jax.random.PRNGKey(0)
    k_in, k_param = jax.random.split(key)
    inputs = jax.random.randint(k_in, (batch, seq), 0, vocab_size, dtype=jnp.int32)
    params = init_params(k_param, vocab_size, num_hiddens, num_layers)

    # begin_state: zeros (num_directions * num_layers, batch, num_hiddens) for h and c
    state = (jnp.zeros((num_layers, batch, num_hiddens), jnp.float32),
             jnp.zeros((num_layers, batch, num_hiddens), jnp.float32))

    out, (hN, cN) = rnn_model_forward(inputs, state, params)
    jax.block_until_ready((out, hN, cN))

    assert out.shape == (seq * batch, vocab_size)
    assert hN.shape == (num_layers, batch, num_hiddens)
    assert cN.shape == (num_layers, batch, num_hiddens)

    ref_out, (ref_h, ref_c) = _ref_forward(inputs, state, params, vocab_size)
    # bf16 matmul operands (f32 accumulate) vs. the all-f32 HIGHEST reference:
    # activation rounding only, well inside 1e-2.
    assert jnp.allclose(out, ref_out, atol=1e-2, rtol=1e-2)
    assert jnp.allclose(hN, ref_h, atol=1e-2, rtol=1e-2)
    assert jnp.allclose(cN, ref_c, atol=1e-2, rtol=1e-2)

    print("KERNEL_OK")
</pallas_src>

<mosaic_0001>
module attributes {stable_mosaic.version = 11 : i64} {
  func.func @kernel(%arg0: memref<64x1024xf32, #tpu.memory_space<vmem>>, %arg1: memref<2x8x256xf32, #tpu.memory_space<vmem>>, %arg2: memref<2x8x256xf32, #tpu.memory_space<vmem>>, %arg3: memref<256x1024xbf16, #tpu.memory_space<vmem>>, %arg4: memref<256x1024xbf16, #tpu.memory_space<any>>, %arg5: memref<256x1024xbf16, #tpu.memory_space<any>>, %arg6: memref<1x1024xf32, #tpu.memory_space<any>>, %arg7: memref<256x128xbf16, #tpu.memory_space<any>>, %arg8: memref<1x128xf32, #tpu.memory_space<any>>, %arg9: memref<64x128xf32, #tpu.memory_space<vmem>>, %arg10: memref<2x8x256xf32, #tpu.memory_space<vmem>>, %arg11: memref<2x8x256xf32, #tpu.memory_space<vmem>>, %arg12: memref<64x256xf32, #tpu.memory_space<vmem>>, %arg13: memref<64x1024xf32, #tpu.memory_space<vmem>>, %arg14: memref<256x1024xbf16, #tpu.memory_space<vmem>>, %arg15: memref<256x1024xbf16, #tpu.memory_space<vmem>>, %arg16: memref<1x1024xf32, #tpu.memory_space<vmem>>, %arg17: memref<256x128xbf16, #tpu.memory_space<vmem>>, %arg18: memref<1x128xf32, #tpu.memory_space<vmem>>, %arg19: memref<5x!tpu.dma_semaphore, #tpu.memory_space<semaphore_mem>>) attributes {dimension_semantics = [], scalar_prefetch = 0 : i64, scratch_operands = 8 : i64, tpu.core_type = #tpu.core_type<tc>} {
    %c0_i32 = arith.constant 0 : i32
    %0 = tpu.memref_slice %arg19[%c0_i32] : memref<5x!tpu.dma_semaphore, #tpu.memory_space<semaphore_mem>> -> memref<1x!tpu.dma_semaphore, #tpu.memory_space<semaphore_mem>>
    %1 = tpu.memref_squeeze %0 : memref<1x!tpu.dma_semaphore, #tpu.memory_space<semaphore_mem>> -> memref<!tpu.dma_semaphore, #tpu.memory_space<semaphore_mem>>
    tpu.enqueue_dma source(%arg4 : memref<256x1024xbf16, #tpu.memory_space<any>>) target(%arg14 : memref<256x1024xbf16, #tpu.memory_space<vmem>>) target_semaphore(%1 : memref<!tpu.dma_semaphore, #tpu.memory_space<semaphore_mem>>)
    %c1_i32 = arith.constant 1 : i32
    %2 = tpu.memref_slice %arg19[%c1_i32] : memref<5x!tpu.dma_semaphore, #tpu.memory_space<semaphore_mem>> -> memref<1x!tpu.dma_semaphore, #tpu.memory_space<semaphore_mem>>
    %3 = tpu.memref_squeeze %2 : memref<1x!tpu.dma_semaphore, #tpu.memory_space<semaphore_mem>> -> memref<!tpu.dma_semaphore, #tpu.memory_space<semaphore_mem>>
    tpu.enqueue_dma source(%arg5 : memref<256x1024xbf16, #tpu.memory_space<any>>) target(%arg15 : memref<256x1024xbf16, #tpu.memory_space<vmem>>) target_semaphore(%3 : memref<!tpu.dma_semaphore, #tpu.memory_space<semaphore_mem>>)
    %c2_i32 = arith.constant 2 : i32
    %4 = tpu.memref_slice %arg19[%c2_i32] : memref<5x!tpu.dma_semaphore, #tpu.memory_space<semaphore_mem>> -> memref<1x!tpu.dma_semaphore, #tpu.memory_space<semaphore_mem>>
    %5 = tpu.memref_squeeze %4 : memref<1x!tpu.dma_semaphore, #tpu.memory_space<semaphore_mem>> -> memref<!tpu.dma_semaphore, #tpu.memory_space<semaphore_mem>>
    tpu.enqueue_dma source(%arg6 : memref<1x1024xf32, #tpu.memory_space<any>>) target(%arg16 : memref<1x1024xf32, #tpu.memory_space<vmem>>) target_semaphore(%5 : memref<!tpu.dma_semaphore, #tpu.memory_space<semaphore_mem>>)
    %c3_i32 = arith.constant 3 : i32
    %6 = tpu.memref_slice %arg19[%c3_i32] : memref<5x!tpu.dma_semaphore, #tpu.memory_space<semaphore_mem>> -> memref<1x!tpu.dma_semaphore, #tpu.memory_space<semaphore_mem>>
    %7 = tpu.memref_squeeze %6 : memref<1x!tpu.dma_semaphore, #tpu.memory_space<semaphore_mem>> -> memref<!tpu.dma_semaphore, #tpu.memory_space<semaphore_mem>>
    tpu.enqueue_dma source(%arg7 : memref<256x128xbf16, #tpu.memory_space<any>>) target(%arg17 : memref<256x128xbf16, #tpu.memory_space<vmem>>) target_semaphore(%7 : memref<!tpu.dma_semaphore, #tpu.memory_space<semaphore_mem>>)
    %c4_i32 = arith.constant 4 : i32
    %8 = tpu.memref_slice %arg19[%c4_i32] : memref<5x!tpu.dma_semaphore, #tpu.memory_space<semaphore_mem>> -> memref<1x!tpu.dma_semaphore, #tpu.memory_space<semaphore_mem>>
    %9 = tpu.memref_squeeze %8 : memref<1x!tpu.dma_semaphore, #tpu.memory_space<semaphore_mem>> -> memref<!tpu.dma_semaphore, #tpu.memory_space<semaphore_mem>>
    tpu.enqueue_dma source(%arg8 : memref<1x128xf32, #tpu.memory_space<any>>) target(%arg18 : memref<1x128xf32, #tpu.memory_space<vmem>>) target_semaphore(%9 : memref<!tpu.dma_semaphore, #tpu.memory_space<semaphore_mem>>)
    %c0 = arith.constant 0 : index
    %c0_0 = arith.constant 0 : index
    %10 = vector.load %arg3[%c0, %c0_0] : memref<256x1024xbf16, #tpu.memory_space<vmem>>, vector<256x1024xbf16>
    %c0_1 = arith.constant 0 : index
    %c0_2 = arith.constant 0 : index
    %c0_3 = arith.constant 0 : index
    %11 = vector.load %arg1[%c0_1, %c0_2, %c0_3] : memref<2x8x256xf32, #tpu.memory_space<vmem>>, vector<1x8x256xf32>
    %12 = vector.shape_cast %11 : vector<1x8x256xf32> to vector<8x256xf32>
    %c0_4 = arith.constant 0 : index
    %c0_5 = arith.constant 0 : index
    %c0_6 = arith.constant 0 : index
    %13 = vector.load %arg2[%c0_4, %c0_5, %c0_6] : memref<2x8x256xf32, #tpu.memory_space<vmem>>, vector<1x8x256xf32>
    %14 = vector.shape_cast %13 : vector<1x8x256xf32> to vector<8x256xf32>
    %c0_7 = arith.constant 0 : index
    %c0_8 = arith.constant 0 : index
    %15 = vector.load %arg0[%c0_7, %c0_8] : memref<64x1024xf32, #tpu.memory_space<vmem>>, vector<8x1024xf32>
    %16 = arith.truncf %12 : vector<8x256xf32> to vector<8x256xbf16>
    %cst = arith.constant dense<0.000000e+00> : vector<8x1024xf32>
    %17 = tpu.matmul %16, %10, %cst {dimension_numbers = #tpu.dot_dimension_numbers<[1], [0], [0], [1], [0, 0, 1, 1], [], []>} : vector<8x256xbf16>, vector<256x1024xbf16>, vector<8x1024xf32> -> vector<8x1024xf32>
    %18 = arith.addf %15, %17 : vector<8x1024xf32>
    %19 = vector.extract_strided_slice %18 {offsets = [0, 0], sizes = [8, 768], strides = [1, 1]} : vector<8x1024xf32> to vector<8x768xf32>
    %20 = arith.negf %19 : vector<8x768xf32>
    %21 = math.exp %20 : vector<8x768xf32>
    %cst_9 = arith.constant 1.000000e+00 : f32
    %22 = vector.broadcast %cst_9 : f32 to vector<8x768xf32>
    %23 = arith.addf %22, %21 : vector<8x768xf32>
    %24 = arith.divf %22, %23 : vector<8x768xf32>
    %25 = vector.extract_strided_slice %18 {offsets = [0, 768], sizes = [8, 256], strides = [1, 1]} : vector<8x1024xf32> to vector<8x256xf32>
    %26 = math.tanh %25 : vector<8x256xf32>
    %27 = vector.extract_strided_slice %24 {offsets = [0, 0], sizes = [8, 256], strides = [1, 1]} : vector<8x768xf32> to vector<8x256xf32>
    %28 = vector.extract_strided_slice %24 {offsets = [0, 256], sizes = [8, 256], strides = [1, 1]} : vector<8x768xf32> to vector<8x256xf32>
    %29 = vector.extract_strided_slice %24 {offsets = [0, 512], sizes = [8, 256], strides = [1, 1]} : vector<8x768xf32> to vector<8x256xf32>
    %30 = arith.mulf %28, %14 : vector<8x256xf32>
    %31 = arith.mulf %27, %26 : vector<8x256xf32>
    %32 = arith.addf %30, %31 : vector<8x256xf32>
    %33 = math.tanh %32 : vector<8x256xf32>
    %34 = arith.mulf %29, %33 : vector<8x256xf32>
    %c0_10 = arith.constant 0 : index
    %c0_11 = arith.constant 0 : index
    %35 = vector.load %arg12[%c0_10, %c0_11] : memref<64x256xf32, #tpu.memory_space<vmem>>, vector<8x256xf32>
    tpu.vector_store %arg12[%c0_10, %c0_11], %34 {strides = array<i32>} : memref<64x256xf32, #tpu.memory_space<vmem>>, vector<8x256xf32>,
    %c8 = arith.constant 8 : index
    %c0_12 = arith.constant 0 : index
    %36 = vector.load %arg0[%c8, %c0_12] : memref<64x1024xf32, #tpu.memory_space<vmem>>, vector<8x1024xf32>
    %37 = arith.truncf %34 : vector<8x256xf32> to vector<8x256xbf16>
    %cst_13 = arith.constant dense<0.000000e+00> : vector<8x1024xf32>
    %38 = tpu.matmul %37, %10, %cst_13 {dimension_numbers = #tpu.dot_dimension_numbers<[1], [0], [0], [1], [0, 0, 1, 1], [], []>} : vector<8x256xbf16>, vector<256x1024xbf16>, vector<8x1024xf32> -> vector<8x1024xf32>
    %39 = arith.addf %36, %38 : vector<8x1024xf32>
    %40 = vector.extract_strided_slice %39 {offsets = [0, 0], sizes = [8, 768], strides = [1, 1]} : vector<8x1024xf32> to vector<8x768xf32>
    %41 = arith.negf %40 : vector<8x768xf32>
    %42 = math.exp %41 : vector<8x768xf32>
    %cst_14 = arith.constant 1.000000e+00 : f32
    %43 = vector.broadcast %cst_14 : f32 to vector<8x768xf32>
    %44 = arith.addf %43, %42 : vector<8x768xf32>
    %45 = arith.divf %43, %44 : vector<8x768xf32>
    %46 = vector.extract_strided_slice %39 {offsets = [0, 768], sizes = [8, 256], strides = [1, 1]} : vector<8x1024xf32> to vector<8x256xf32>
    %47 = math.tanh %46 : vector<8x256xf32>
    %48 = vector.extract_strided_slice %45 {offsets = [0, 0], sizes = [8, 256], strides = [1, 1]} : vector<8x768xf32> to vector<8x256xf32>
    %49 = vector.extract_strided_slice %45 {offsets = [0, 256], sizes = [8, 256], strides = [1, 1]} : vector<8x768xf32> to vector<8x256xf32>
    %50 = vector.extract_strided_slice %45 {offsets = [0, 512], sizes = [8, 256], strides = [1, 1]} : vector<8x768xf32> to vector<8x256xf32>
    %51 = arith.mulf %49, %32 : vector<8x256xf32>
    %52 = arith.mulf %48, %47 : vector<8x256xf32>
    %53 = arith.addf %51, %52 : vector<8x256xf32>
    %54 = math.tanh %53 : vector<8x256xf32>
    %55 = arith.mulf %50, %54 : vector<8x256xf32>
    %c8_15 = arith.constant 8 : index
    %c0_16 = arith.constant 0 : index
    %56 = vector.load %arg12[%c8_15, %c0_16] : memref<64x256xf32, #tpu.memory_space<vmem>>, vector<8x256xf32>
    tpu.vector_store %arg12[%c8_15, %c0_16], %55 {strides = array<i32>} : memref<64x256xf32, #tpu.memory_space<vmem>>, vector<8x256xf32>,
    %c16 = arith.constant 16 : index
    %c0_17 = arith.constant 0 : index
    %57 = vector.load %arg0[%c16, %c0_17] : memref<64x1024xf32, #tpu.memory_space<vmem>>, vector<8x1024xf32>
    %58 = arith.truncf %55 : vector<8x256xf32> to vector<8x256xbf16>
    %cst_18 = arith.constant dense<0.000000e+00> : vector<8x1024xf32>
    %59 = tpu.matmul %58, %10, %cst_18 {dimension_numbers = #tpu.dot_dimension_numbers<[1], [0], [0], [1], [0, 0, 1, 1], [], []>} : vector<8x256xbf16>, vector<256x1024xbf16>, vector<8x1024xf32> -> vector<8x1024xf32>
    %60 = arith.addf %57, %59 : vector<8x1024xf32>
    %61 = vector.extract_strided_slice %60 {offsets = [0, 0], sizes = [8, 768], strides = [1, 1]} : vector<8x1024xf32> to vector<8x768xf32>
    %62 = arith.negf %61 : vector<8x768xf32>
    %63 = math.exp %62 : vector<8x768xf32>
    %cst_19 = arith.constant 1.000000e+00 : f32
    %64 = vector.broadcast %cst_19 : f32 to vector<8x768xf32>
    %65 = arith.addf %64, %63 : vector<8x768xf32>
    %66 = arith.divf %64, %65 : vector<8x768xf32>
    %67 = vector.extract_strided_slice %60 {offsets = [0, 768], sizes = [8, 256], strides = [1, 1]} : vector<8x1024xf32> to vector<8x256xf32>
    %68 = math.tanh %67 : vector<8x256xf32>
    %69 = vector.extract_strided_slice %66 {offsets = [0, 0], sizes = [8, 256], strides = [1, 1]} : vector<8x768xf32> to vector<8x256xf32>
    %70 = vector.extract_strided_slice %66 {offsets = [0, 256], sizes = [8, 256], strides = [1, 1]} : vector<8x768xf32> to vector<8x256xf32>
    %71 = vector.extract_strided_slice %66 {offsets = [0, 512], sizes = [8, 256], strides = [1, 1]} : vector<8x768xf32> to vector<8x256xf32>
    %72 = arith.mulf %70, %53 : vector<8x256xf32>
    %73 = arith.mulf %69, %68 : vector<8x256xf32>
    %74 = arith.addf %72, %73 : vector<8x256xf32>
    %75 = math.tanh %74 : vector<8x256xf32>
    %76 = arith.mulf %71, %75 : vector<8x256xf32>
    %c16_20 = arith.constant 16 : index
    %c0_21 = arith.constant 0 : index
    %77 = vector.load %arg12[%c16_20, %c0_21] : memref<64x256xf32, #tpu.memory_space<vmem>>, vector<8x256xf32>
    tpu.vector_store %arg12[%c16_20, %c0_21], %76 {strides = array<i32>} : memref<64x256xf32, #tpu.memory_space<vmem>>, vector<8x256xf32>,
    %c24 = arith.constant 24 : index
    %c0_22 = arith.constant 0 : index
    %78 = vector.load %arg0[%c24, %c0_22] : memref<64x1024xf32, #tpu.memory_space<vmem>>, vector<8x1024xf32>
    %79 = arith.truncf %76 : vector<8x256xf32> to vector<8x256xbf16>
    %cst_23 = arith.constant dense<0.000000e+00> : vector<8x1024xf32>
    %80 = tpu.matmul %79, %10, %cst_23 {dimension_numbers = #tpu.dot_dimension_numbers<[1], [0], [0], [1], [0, 0, 1, 1], [], []>} : vector<8x256xbf16>, vector<256x1024xbf16>, vector<8x1024xf32> -> vector<8x1024xf32>
    %81 = arith.addf %78, %80 : vector<8x1024xf32>
    %82 = vector.extract_strided_slice %81 {offsets = [0, 0], sizes = [8, 768], strides = [1, 1]} : vector<8x1024xf32> to vector<8x768xf32>
    %83 = arith.negf %82 : vector<8x768xf32>
    %84 = math.exp %83 : vector<8x768xf32>
    %cst_24 = arith.constant 1.000000e+00 : f32
    %85 = vector.broadcast %cst_24 : f32 to vector<8x768xf32>
    %86 = arith.addf %85, %84 : vector<8x768xf32>
    %87 = arith.divf %85, %86 : vector<8x768xf32>
    %88 = vector.extract_strided_slice %81 {offsets = [0, 768], sizes = [8, 256], strides = [1, 1]} : vector<8x1024xf32> to vector<8x256xf32>
    %89 = math.tanh %88 : vector<8x256xf32>
    %90 = vector.extract_strided_slice %87 {offsets = [0, 0], sizes = [8, 256], strides = [1, 1]} : vector<8x768xf32> to vector<8x256xf32>
    %91 = vector.extract_strided_slice %87 {offsets = [0, 256], sizes = [8, 256], strides = [1, 1]} : vector<8x768xf32> to vector<8x256xf32>
    %92 = vector.extract_strided_slice %87 {offsets = [0, 512], sizes = [8, 256], strides = [1, 1]} : vector<8x768xf32> to vector<8x256xf32>
    %93 = arith.mulf %91, %74 : vector<8x256xf32>
    %94 = arith.mulf %90, %89 : vector<8x256xf32>
    %95 = arith.addf %93, %94 : vector<8x256xf32>
    %96 = math.tanh %95 : vector<8x256xf32>
    %97 = arith.mulf %92, %96 : vector<8x256xf32>
    %c24_25 = arith.constant 24 : index
    %c0_26 = arith.constant 0 : index
    %98 = vector.load %arg12[%c24_25, %c0_26] : memref<64x256xf32, #tpu.memory_space<vmem>>, vector<8x256xf32>
    tpu.vector_store %arg12[%c24_25, %c0_26], %97 {strides = array<i32>} : memref<64x256xf32, #tpu.memory_space<vmem>>, vector<8x256xf32>,
    %c32 = arith.constant 32 : index
    %c0_27 = arith.constant 0 : index
    %99 = vector.load %arg0[%c32, %c0_27] : memref<64x1024xf32, #tpu.memory_space<vmem>>, vector<8x1024xf32>
    %100 = arith.truncf %97 : vector<8x256xf32> to vector<8x256xbf16>
    %cst_28 = arith.constant dense<0.000000e+00> : vector<8x1024xf32>
    %101 = tpu.matmul %100, %10, %cst_28 {dimension_numbers = #tpu.dot_dimension_numbers<[1], [0], [0], [1], [0, 0, 1, 1], [], []>} : vector<8x256xbf16>, vector<256x1024xbf16>, vector<8x1024xf32> -> vector<8x1024xf32>
    %102 = arith.addf %99, %101 : vector<8x1024xf32>
    %103 = vector.extract_strided_slice %102 {offsets = [0, 0], sizes = [8, 768], strides = [1, 1]} : vector<8x1024xf32> to vector<8x768xf32>
    %104 = arith.negf %103 : vector<8x768xf32>
    %105 = math.exp %104 : vector<8x768xf32>
    %cst_29 = arith.constant 1.000000e+00 : f32
    %106 = vector.broadcast %cst_29 : f32 to vector<8x768xf32>
    %107 = arith.addf %106, %105 : vector<8x768xf32>
    %108 = arith.divf %106, %107 : vector<8x768xf32>
    %109 = vector.extract_strided_slice %102 {offsets = [0, 768], sizes = [8, 256], strides = [1, 1]} : vector<8x1024xf32> to vector<8x256xf32>
    %110 = math.tanh %109 : vector<8x256xf32>
    %111 = vector.extract_strided_slice %108 {offsets = [0, 0], sizes = [8, 256], strides = [1, 1]} : vector<8x768xf32> to vector<8x256xf32>
    %112 = vector.extract_strided_slice %108 {offsets = [0, 256], sizes = [8, 256], strides = [1, 1]} : vector<8x768xf32> to vector<8x256xf32>
    %113 = vector.extract_strided_slice %108 {offsets = [0, 512], sizes = [8, 256], strides = [1, 1]} : vector<8x768xf32> to vector<8x256xf32>
    %114 = arith.mulf %112, %95 : vector<8x256xf32>
    %115 = arith.mulf %111, %110 : vector<8x256xf32>
    %116 = arith.addf %114, %115 : vector<8x256xf32>
    %117 = math.tanh %116 : vector<8x256xf32>
    %118 = arith.mulf %113, %117 : vector<8x256xf32>
    %c32_30 = arith.constant 32 : index
    %c0_31 = arith.constant 0 : index
    %119 = vector.load %arg12[%c32_30, %c0_31] : memref<64x256xf32, #tpu.memory_space<vmem>>, vector<8x256xf32>
    tpu.vector_store %arg12[%c32_30, %c0_31], %118 {strides = array<i32>} : memref<64x256xf32, #tpu.memory_space<vmem>>, vector<8x256xf32>,
    %c40 = arith.constant 40 : index
    %c0_32 = arith.constant 0 : index
    %120 = vector.load %arg0[%c40, %c0_32] : memref<64x1024xf32, #tpu.memory_space<vmem>>, vector<8x1024xf32>
    %121 = arith.truncf %118 : vector<8x256xf32> to vector<8x256xbf16>
    %cst_33 = arith.constant dense<0.000000e+00> : vector<8x1024xf32>
    %122 = tpu.matmul %121, %10, %cst_33 {dimension_numbers = #tpu.dot_dimension_numbers<[1], [0], [0], [1], [0, 0, 1, 1], [], []>} : vector<8x256xbf16>, vector<256x1024xbf16>, vector<8x1024xf32> -> vector<8x1024xf32>
    %123 = arith.addf %120, %122 : vector<8x1024xf32>
    %124 = vector.extract_strided_slice %123 {offsets = [0, 0], sizes = [8, 768], strides = [1, 1]} : vector<8x1024xf32> to vector<8x768xf32>
    %125 = arith.negf %124 : vector<8x768xf32>
    %126 = math.exp %125 : vector<8x768xf32>
    %cst_34 = arith.constant 1.000000e+00 : f32
    %127 = vector.broadcast %cst_34 : f32 to vector<8x768xf32>
    %128 = arith.addf %127, %126 : vector<8x768xf32>
    %129 = arith.divf %127, %128 : vector<8x768xf32>
    %130 = vector.extract_strided_slice %123 {offsets = [0, 768], sizes = [8, 256], strides = [1, 1]} : vector<8x1024xf32> to vector<8x256xf32>
    %131 = math.tanh %130 : vector<8x256xf32>
    %132 = vector.extract_strided_slice %129 {offsets = [0, 0], sizes = [8, 256], strides = [1, 1]} : vector<8x768xf32> to vector<8x256xf32>
    %133 = vector.extract_strided_slice %129 {offsets = [0, 256], sizes = [8, 256], strides = [1, 1]} : vector<8x768xf32> to vector<8x256xf32>
    %134 = vector.extract_strided_slice %129 {offsets = [0, 512], sizes = [8, 256], strides = [1, 1]} : vector<8x768xf32> to vector<8x256xf32>
    %135 = arith.mulf %133, %116 : vector<8x256xf32>
    %136 = arith.mulf %132, %131 : vector<8x256xf32>
    %137 = arith.addf %135, %136 : vector<8x256xf32>
    %138 = math.tanh %137 : vector<8x256xf32>
    %139 = arith.mulf %134, %138 : vector<8x256xf32>
    %c40_35 = arith.constant 40 : index
    %c0_36 = arith.constant 0 : index
    %140 = vector.load %arg12[%c40_35, %c0_36] : memref<64x256xf32, #tpu.memory_space<vmem>>, vector<8x256xf32>
    tpu.vector_store %arg12[%c40_35, %c0_36], %139 {strides = array<i32>} : memref<64x256xf32, #tpu.memory_space<vmem>>, vector<8x256xf32>,
    %c48 = arith.constant 48 : index
    %c0_37 = arith.constant 0 : index
    %141 = vector.load %arg0[%c48, %c0_37] : memref<64x1024xf32, #tpu.memory_space<vmem>>, vector<8x1024xf32>
    %142 = arith.truncf %139 : vector<8x256xf32> to vector<8x256xbf16>
    %cst_38 = arith.constant dense<0.000000e+00> : vector<8x1024xf32>
    %143 = tpu.matmul %142, %10, %cst_38 {dimension_numbers = #tpu.dot_dimension_numbers<[1], [0], [0], [1], [0, 0, 1, 1], [], []>} : vector<8x256xbf16>, vector<256x1024xbf16>, vector<8x1024xf32> -> vector<8x1024xf32>
    %144 = arith.addf %141, %143 : vector<8x1024xf32>
    %145 = vector.extract_strided_slice %144 {offsets = [0, 0], sizes = [8, 768], strides = [1, 1]} : vector<8x1024xf32> to vector<8x768xf32>
    %146 = arith.negf %145 : vector<8x768xf32>
    %147 = math.exp %146 : vector<8x768xf32>
    %cst_39 = arith.constant 1.000000e+00 : f32
    %148 = vector.broadcast %cst_39 : f32 to vector<8x768xf32>
    %149 = arith.addf %148, %147 : vector<8x768xf32>
    %150 = arith.divf %148, %149 : vector<8x768xf32>
    %151 = vector.extract_strided_slice %144 {offsets = [0, 768], sizes = [8, 256], strides = [1, 1]} : vector<8x1024xf32> to vector<8x256xf32>
    %152 = math.tanh %151 : vector<8x256xf32>
    %153 = vector.extract_strided_slice %150 {offsets = [0, 0], sizes = [8, 256], strides = [1, 1]} : vector<8x768xf32> to vector<8x256xf32>
    %154 = vector.extract_strided_slice %150 {offsets = [0, 256], sizes = [8, 256], strides = [1, 1]} : vector<8x768xf32> to vector<8x256xf32>
    %155 = vector.extract_strided_slice %150 {offsets = [0, 512], sizes = [8, 256], strides = [1, 1]} : vector<8x768xf32> to vector<8x256xf32>
    %156 = arith.mulf %154, %137 : vector<8x256xf32>
    %157 = arith.mulf %153, %152 : vector<8x256xf32>
    %158 = arith.addf %156, %157 : vector<8x256xf32>
    %159 = math.tanh %158 : vector<8x256xf32>
    %160 = arith.mulf %155, %159 : vector<8x256xf32>
    %c48_40 = arith.constant 48 : index
    %c0_41 = arith.constant 0 : index
    %161 = vector.load %arg12[%c48_40, %c0_41] : memref<64x256xf32, #tpu.memory_space<vmem>>, vector<8x256xf32>
    tpu.vector_store %arg12[%c48_40, %c0_41], %160 {strides = array<i32>} : memref<64x256xf32, #tpu.memory_space<vmem>>, vector<8x256xf32>,
    %c56 = arith.constant 56 : index
    %c0_42 = arith.constant 0 : index
    %162 = vector.load %arg0[%c56, %c0_42] : memref<64x1024xf32, #tpu.memory_space<vmem>>, vector<8x1024xf32>
    %163 = arith.truncf %160 : vector<8x256xf32> to vector<8x256xbf16>
    %cst_43 = arith.constant dense<0.000000e+00> : vector<8x1024xf32>
    %164 = tpu.matmul %163, %10, %cst_43 {dimension_numbers = #tpu.dot_dimension_numbers<[1], [0], [0], [1], [0, 0, 1, 1], [], []>} : vector<8x256xbf16>, vector<256x1024xbf16>, vector<8x1024xf32> -> vector<8x1024xf32>
    %165 = arith.addf %162, %164 : vector<8x1024xf32>
    %166 = vector.extract_strided_slice %165 {offsets = [0, 0], sizes = [8, 768], strides = [1, 1]} : vector<8x1024xf32> to vector<8x768xf32>
    %167 = arith.negf %166 : vector<8x768xf32>
    %168 = math.exp %167 : vector<8x768xf32>
    %cst_44 = arith.constant 1.000000e+00 : f32
    %169 = vector.broadcast %cst_44 : f32 to vector<8x768xf32>
    %170 = arith.addf %169, %168 : vector<8x768xf32>
    %171 = arith.divf %169, %170 : vector<8x768xf32>
    %172 = vector.extract_strided_slice %165 {offsets = [0, 768], sizes = [8, 256], strides = [1, 1]} : vector<8x1024xf32> to vector<8x256xf32>
    %173 = math.tanh %172 : vector<8x256xf32>
    %174 = vector.extract_strided_slice %171 {offsets = [0, 0], sizes = [8, 256], strides = [1, 1]} : vector<8x768xf32> to vector<8x256xf32>
    %175 = vector.extract_strided_slice %171 {offsets = [0, 256], sizes = [8, 256], strides = [1, 1]} : vector<8x768xf32> to vector<8x256xf32>
    %176 = vector.extract_strided_slice %171 {offsets = [0, 512], sizes = [8, 256], strides = [1, 1]} : vector<8x768xf32> to vector<8x256xf32>
    %177 = arith.mulf %175, %158 : vector<8x256xf32>
    %178 = arith.mulf %174, %173 : vector<8x256xf32>
    %179 = arith.addf %177, %178 : vector<8x256xf32>
    %180 = math.tanh %179 : vector<8x256xf32>
    %181 = arith.mulf %176, %180 : vector<8x256xf32>
    %c56_45 = arith.constant 56 : index
    %c0_46 = arith.constant 0 : index
    %182 = vector.load %arg12[%c56_45, %c0_46] : memref<64x256xf32, #tpu.memory_space<vmem>>, vector<8x256xf32>
    tpu.vector_store %arg12[%c56_45, %c0_46], %181 {strides = array<i32>} : memref<64x256xf32, #tpu.memory_space<vmem>>, vector<8x256xf32>,
    %c0_47 = arith.constant 0 : index
    %c0_48 = arith.constant 0 : index
    %c0_49 = arith.constant 0 : index
    %183 = vector.load %arg10[%c0_47, %c0_48, %c0_49] : memref<2x8x256xf32, #tpu.memory_space<vmem>>, vector<1x8x256xf32>
    %184 = vector.shape_cast %183 : vector<1x8x256xf32> to vector<8x256xf32>
    %185 = vector.shape_cast %181 : vector<8x256xf32> to vector<1x8x256xf32>
    tpu.vector_store %arg10[%c0_47, %c0_48, %c0_49], %185 {strides = array<i32>} : memref<2x8x256xf32, #tpu.memory_space<vmem>>, vector<1x8x256xf32>,
    %c0_50 = arith.constant 0 : index
    %c0_51 = arith.constant 0 : index
    %c0_52 = arith.constant 0 : index
    %186 = vector.load %arg11[%c0_50, %c0_51, %c0_52] : memref<2x8x256xf32, #tpu.memory_space<vmem>>, vector<1x8x256xf32>
    %187 = vector.shape_cast %186 : vector<1x8x256xf32> to vector<8x256xf32>
    %188 = vector.shape_cast %179 : vector<8x256xf32> to vector<1x8x256xf32>
    tpu.vector_store %arg11[%c0_50, %c0_51, %c0_52], %188 {strides = array<i32>} : memref<2x8x256xf32, #tpu.memory_space<vmem>>, vector<1x8x256xf32>,
    %c0_i32_53 = arith.constant 0 : i32
    %189 = tpu.memref_slice %arg19[%c0_i32_53] : memref<5x!tpu.dma_semaphore, #tpu.memory_space<semaphore_mem>> -> memref<1x!tpu.dma_semaphore, #tpu.memory_space<semaphore_mem>>
    %190 = tpu.memref_squeeze %189 : memref<1x!tpu.dma_semaphore, #tpu.memory_space<semaphore_mem>> -> memref<!tpu.dma_semaphore, #tpu.memory_space<semaphore_mem>>
    tpu.wait_dma2 semaphore(%190 : memref<!tpu.dma_semaphore, #tpu.memory_space<semaphore_mem>>) src(%arg4 : memref<256x1024xbf16, #tpu.memory_space<any>>) dst(%arg14 : memref<256x1024xbf16, #tpu.memory_space<vmem>>)
    %c1_i32_54 = arith.constant 1 : i32
    %191 = tpu.memref_slice %arg19[%c1_i32_54] : memref<5x!tpu.dma_semaphore, #tpu.memory_space<semaphore_mem>> -> memref<1x!tpu.dma_semaphore, #tpu.memory_space<semaphore_mem>>
    %192 = tpu.memref_squeeze %191 : memref<1x!tpu.dma_semaphore, #tpu.memory_space<semaphore_mem>> -> memref<!tpu.dma_semaphore, #tpu.memory_space<semaphore_mem>>
    tpu.wait_dma2 semaphore(%192 : memref<!tpu.dma_semaphore, #tpu.memory_space<semaphore_mem>>) src(%arg5 : memref<256x1024xbf16, #tpu.memory_space<any>>) dst(%arg15 : memref<256x1024xbf16, #tpu.memory_space<vmem>>)
    %c2_i32_55 = arith.constant 2 : i32
    %193 = tpu.memref_slice %arg19[%c2_i32_55] : memref<5x!tpu.dma_semaphore, #tpu.memory_space<semaphore_mem>> -> memref<1x!tpu.dma_semaphore, #tpu.memory_space<semaphore_mem>>
    %194 = tpu.memref_squeeze %193 : memref<1x!tpu.dma_semaphore, #tpu.memory_space<semaphore_mem>> -> memref<!tpu.dma_semaphore, #tpu.memory_space<semaphore_mem>>
    tpu.wait_dma2 semaphore(%194 : memref<!tpu.dma_semaphore, #tpu.memory_space<semaphore_mem>>) src(%arg6 : memref<1x1024xf32, #tpu.memory_space<any>>) dst(%arg16 : memref<1x1024xf32, #tpu.memory_space<vmem>>)
    %c0_56 = arith.constant 0 : index
    %c0_57 = arith.constant 0 : index
    %195 = vector.load %arg12[%c0_56, %c0_57] : memref<64x256xf32, #tpu.memory_space<vmem>>, vector<64x256xf32>
    %196 = arith.truncf %195 : vector<64x256xf32> to vector<64x256xbf16>
    %c0_58 = arith.constant 0 : index
    %c0_59 = arith.constant 0 : index
    %197 = vector.load %arg14[%c0_58, %c0_59] : memref<256x1024xbf16, #tpu.memory_space<vmem>>, vector<256x1024xbf16>
    %cst_60 = arith.constant dense<0.000000e+00> : vector<64x1024xf32>
    %198 = tpu.matmul %196, %197, %cst_60 {dimension_numbers = #tpu.dot_dimension_numbers<[1], [0], [0], [1], [0, 0, 1, 1], [], []>} : vector<64x256xbf16>, vector<256x1024xbf16>, vector<64x1024xf32> -> vector<64x1024xf32>
    %c0_61 = arith.constant 0 : index
    %c0_62 = arith.constant 0 : index
    %199 = vector.load %arg16[%c0_61, %c0_62] : memref<1x1024xf32, #tpu.memory_space<vmem>>, vector<1x1024xf32>
    %200 = vector.broadcast %199 : vector<1x1024xf32> to vector<64x1024xf32>
    %201 = arith.addf %198, %200 : vector<64x1024xf32>
    %c0_63 = arith.constant 0 : index
    %c0_64 = arith.constant 0 : index
    %202 = vector.load %arg13[%c0_63, %c0_64] : memref<64x1024xf32, #tpu.memory_space<vmem>>, vector<64x1024xf32>
    tpu.vector_store %arg13[%c0_63, %c0_64], %201 {strides = array<i32>} : memref<64x1024xf32, #tpu.memory_space<vmem>>, vector<64x1024xf32>,
    %c0_65 = arith.constant 0 : index
    %c0_66 = arith.constant 0 : index
    %203 = vector.load %arg15[%c0_65, %c0_66] : memref<256x1024xbf16, #tpu.memory_space<vmem>>, vector<256x1024xbf16>
    %c1 = arith.constant 1 : index
    %c0_67 = arith.constant 0 : index
    %c0_68 = arith.constant 0 : index
    %204 = vector.load %arg1[%c1, %c0_67, %c0_68] : memref<2x8x256xf32, #tpu.memory_space<vmem>>, vector<1x8x256xf32>
    %205 = vector.shape_cast %204 : vector<1x8x256xf32> to vector<8x256xf32>
    %c1_69 = arith.constant 1 : index
    %c0_70 = arith.constant 0 : index
    %c0_71 = arith.constant 0 : index
    %206 = vector.load %arg2[%c1_69, %c0_70, %c0_71] : memref<2x8x256xf32, #tpu.memory_space<vmem>>, vector<1x8x256xf32>
    %207 = vector.shape_cast %206 : vector<1x8x256xf32> to vector<8x256xf32>
    %c0_72 = arith.constant 0 : index
    %c0_73 = arith.constant 0 : index
    %208 = vector.load %arg13[%c0_72, %c0_73] : memref<64x1024xf32, #tpu.memory_space<vmem>>, vector<8x1024xf32>
    %209 = arith.truncf %205 : vector<8x256xf32> to vector<8x256xbf16>
    %cst_74 = arith.constant dense<0.000000e+00> : vector<8x1024xf32>
    %210 = tpu.matmul %209, %203, %cst_74 {dimension_numbers = #tpu.dot_dimension_numbers<[1], [0], [0], [1], [0, 0, 1, 1], [], []>} : vector<8x256xbf16>, vector<256x1024xbf16>, vector<8x1024xf32> -> vector<8x1024xf32>
    %211 = arith.addf %208, %210 : vector<8x1024xf32>
    %212 = vector.extract_strided_slice %211 {offsets = [0, 0], sizes = [8, 768], strides = [1, 1]} : vector<8x1024xf32> to vector<8x768xf32>
    %213 = arith.negf %212 : vector<8x768xf32>
    %214 = math.exp %213 : vector<8x768xf32>
    %cst_75 = arith.constant 1.000000e+00 : f32
    %215 = vector.broadcast %cst_75 : f32 to vector<8x768xf32>
    %216 = arith.addf %215, %214 : vector<8x768xf32>
    %217 = arith.divf %215, %216 : vector<8x768xf32>
    %218 = vector.extract_strided_slice %211 {offsets = [0, 768], sizes = [8, 256], strides = [1, 1]} : vector<8x1024xf32> to vector<8x256xf32>
    %219 = math.tanh %218 : vector<8x256xf32>
    %220 = vector.extract_strided_slice %217 {offsets = [0, 0], sizes = [8, 256], strides = [1, 1]} : vector<8x768xf32> to vector<8x256xf32>
    %221 = vector.extract_strided_slice %217 {offsets = [0, 256], sizes = [8, 256], strides = [1, 1]} : vector<8x768xf32> to vector<8x256xf32>
    %222 = vector.extract_strided_slice %217 {offsets = [0, 512], sizes = [8, 256], strides = [1, 1]} : vector<8x768xf32> to vector<8x256xf32>
    %223 = arith.mulf %221, %207 : vector<8x256xf32>
    %224 = arith.mulf %220, %219 : vector<8x256xf32>
    %225 = arith.addf %223, %224 : vector<8x256xf32>
    %226 = math.tanh %225 : vector<8x256xf32>
    %227 = arith.mulf %222, %226 : vector<8x256xf32>
    %c0_76 = arith.constant 0 : index
    %c0_77 = arith.constant 0 : index
    %228 = vector.load %arg12[%c0_76, %c0_77] : memref<64x256xf32, #tpu.memory_space<vmem>>, vector<8x256xf32>
    tpu.vector_store %arg12[%c0_76, %c0_77], %227 {strides = array<i32>} : memref<64x256xf32, #tpu.memory_space<vmem>>, vector<8x256xf32>,
    %c8_78 = arith.constant 8 : index
    %c0_79 = arith.constant 0 : index
    %229 = vector.load %arg13[%c8_78, %c0_79] : memref<64x1024xf32, #tpu.memory_space<vmem>>, vector<8x1024xf32>
    %230 = arith.truncf %227 : vector<8x256xf32> to vector<8x256xbf16>
    %cst_80 = arith.constant dense<0.000000e+00> : vector<8x1024xf32>
    %231 = tpu.matmul %230, %203, %cst_80 {dimension_numbers = #tpu.dot_dimension_numbers<[1], [0], [0], [1], [0, 0, 1, 1], [], []>} : vector<8x256xbf16>, vector<256x1024xbf16>, vector<8x1024xf32> -> vector<8x1024xf32>
    %232 = arith.addf %229, %231 : vector<8x1024xf32>
    %233 = vector.extract_strided_slice %232 {offsets = [0, 0], sizes = [8, 768], strides = [1, 1]} : vector<8x1024xf32> to vector<8x768xf32>
    %234 = arith.negf %233 : vector<8x768xf32>
    %235 = math.exp %234 : vector<8x768xf32>
    %cst_81 = arith.constant 1.000000e+00 : f32
    %236 = vector.broadcast %cst_81 : f32 to vector<8x768xf32>
    %237 = arith.addf %236, %235 : vector<8x768xf32>
    %238 = arith.divf %236, %237 : vector<8x768xf32>
    %239 = vector.extract_strided_slice %232 {offsets = [0, 768], sizes = [8, 256], strides = [1, 1]} : vector<8x1024xf32> to vector<8x256xf32>
    %240 = math.tanh %239 : vector<8x256xf32>
    %241 = vector.extract_strided_slice %238 {offsets = [0, 0], sizes = [8, 256], strides = [1, 1]} : vector<8x768xf32> to vector<8x256xf32>
    %242 = vector.extract_strided_slice %238 {offsets = [0, 256], sizes = [8, 256], strides = [1, 1]} : vector<8x768xf32> to vector<8x256xf32>
    %243 = vector.extract_strided_slice %238 {offsets = [0, 512], sizes = [8, 256], strides = [1, 1]} : vector<8x768xf32> to vector<8x256xf32>
    %244 = arith.mulf %242, %225 : vector<8x256xf32>
    %245 = arith.mulf %241, %240 : vector<8x256xf32>
    %246 = arith.addf %244, %245 : vector<8x256xf32>
    %247 = math.tanh %246 : vector<8x256xf32>
    %248 = arith.mulf %243, %247 : vector<8x256xf32>
    %c8_82 = arith.constant 8 : index
    %c0_83 = arith.constant 0 : index
    %249 = vector.load %arg12[%c8_82, %c0_83] : memref<64x256xf32, #tpu.memory_space<vmem>>, vector<8x256xf32>
    tpu.vector_store %arg12[%c8_82, %c0_83], %248 {strides = array<i32>} : memref<64x256xf32, #tpu.memory_space<vmem>>, vector<8x256xf32>,
    %c16_84 = arith.constant 16 : index
    %c0_85 = arith.constant 0 : index
    %250 = vector.load %arg13[%c16_84, %c0_85] : memref<64x1024xf32, #tpu.memory_space<vmem>>, vector<8x1024xf32>
    %251 = arith.truncf %248 : vector<8x256xf32> to vector<8x256xbf16>
    %cst_86 = arith.constant dense<0.000000e+00> : vector<8x1024xf32>
    %252 = tpu.matmul %251, %203, %cst_86 {dimension_numbers = #tpu.dot_dimension_numbers<[1], [0], [0], [1], [0, 0, 1, 1], [], []>} : vector<8x256xbf16>, vector<256x1024xbf16>, vector<8x1024xf32> -> vector<8x1024xf32>
    %253 = arith.addf %250, %252 : vector<8x1024xf32>
    %254 = vector.extract_strided_slice %253 {offsets = [0, 0], sizes = [8, 768], strides = [1, 1]} : vector<8x1024xf32> to vector<8x768xf32>
    %255 = arith.negf %254 : vector<8x768xf32>
    %256 = math.exp %255 : vector<8x768xf32>
    %cst_87 = arith.constant 1.000000e+00 : f32
    %257 = vector.broadcast %cst_87 : f32 to vector<8x768xf32>
    %258 = arith.addf %257, %256 : vector<8x768xf32>
    %259 = arith.divf %257, %258 : vector<8x768xf32>
    %260 = vector.extract_strided_slice %253 {offsets = [0, 768], sizes = [8, 256], strides = [1, 1]} : vector<8x1024xf32> to vector<8x256xf32>
    %261 = math.tanh %260 : vector<8x256xf32>
    %262 = vector.extract_strided_slice %259 {offsets = [0, 0], sizes = [8, 256], strides = [1, 1]} : vector<8x768xf32> to vector<8x256xf32>
    %263 = vector.extract_strided_slice %259 {offsets = [0, 256], sizes = [8, 256], strides = [1, 1]} : vector<8x768xf32> to vector<8x256xf32>
    %264 = vector.extract_strided_slice %259 {offsets = [0, 512], sizes = [8, 256], strides = [1, 1]} : vector<8x768xf32> to vector<8x256xf32>
    %265 = arith.mulf %263, %246 : vector<8x256xf32>
    %266 = arith.mulf %262, %261 : vector<8x256xf32>
    %267 = arith.addf %265, %266 : vector<8x256xf32>
    %268 = math.tanh %267 : vector<8x256xf32>
    %269 = arith.mulf %264, %268 : vector<8x256xf32>
    %c16_88 = arith.constant 16 : index
    %c0_89 = arith.constant 0 : index
    %270 = vector.load %arg12[%c16_88, %c0_89] : memref<64x256xf32, #tpu.memory_space<vmem>>, vector<8x256xf32>
    tpu.vector_store %arg12[%c16_88, %c0_89], %269 {strides = array<i32>} : memref<64x256xf32, #tpu.memory_space<vmem>>, vector<8x256xf32>,
    %c24_90 = arith.constant 24 : index
    %c0_91 = arith.constant 0 : index
    %271 = vector.load %arg13[%c24_90, %c0_91] : memref<64x1024xf32, #tpu.memory_space<vmem>>, vector<8x1024xf32>
    %272 = arith.truncf %269 : vector<8x256xf32> to vector<8x256xbf16>
    %cst_92 = arith.constant dense<0.000000e+00> : vector<8x1024xf32>
    %273 = tpu.matmul %272, %203, %cst_92 {dimension_numbers = #tpu.dot_dimension_numbers<[1], [0], [0], [1], [0, 0, 1, 1], [], []>} : vector<8x256xbf16>, vector<256x1024xbf16>, vector<8x1024xf32> -> vector<8x1024xf32>
    %274 = arith.addf %271, %273 : vector<8x1024xf32>
    %275 = vector.extract_strided_slice %274 {offsets = [0, 0], sizes = [8, 768], strides = [1, 1]} : vector<8x1024xf32> to vector<8x768xf32>
    %276 = arith.negf %275 : vector<8x768xf32>
    %277 = math.exp %276 : vector<8x768xf32>
    %cst_93 = arith.constant 1.000000e+00 : f32
    %278 = vector.broadcast %cst_93 : f32 to vector<8x768xf32>
    %279 = arith.addf %278, %277 : vector<8x768xf32>
    %280 = arith.divf %278, %279 : vector<8x768xf32>
    %281 = vector.extract_strided_slice %274 {offsets = [0, 768], sizes = [8, 256], strides = [1, 1]} : vector<8x1024xf32> to vector<8x256xf32>
    %282 = math.tanh %281 : vector<8x256xf32>
    %283 = vector.extract_strided_slice %280 {offsets = [0, 0], sizes = [8, 256], strides = [1, 1]} : vector<8x768xf32> to vector<8x256xf32>
    %284 = vector.extract_strided_slice %280 {offsets = [0, 256], sizes = [8, 256], strides = [1, 1]} : vector<8x768xf32> to vector<8x256xf32>
    %285 = vector.extract_strided_slice %280 {offsets = [0, 512], sizes = [8, 256], strides = [1, 1]} : vector<8x768xf32> to vector<8x256xf32>
    %286 = arith.mulf %284, %267 : vector<8x256xf32>
    %287 = arith.mulf %283, %282 : vector<8x256xf32>
    %288 = arith.addf %286, %287 : vector<8x256xf32>
    %289 = math.tanh %288 : vector<8x256xf32>
    %290 = arith.mulf %285, %289 : vector<8x256xf32>
    %c24_94 = arith.constant 24 : index
    %c0_95 = arith.constant 0 : index
    %291 = vector.load %arg12[%c24_94, %c0_95] : memref<64x256xf32, #tpu.memory_space<vmem>>, vector<8x256xf32>
    tpu.vector_store %arg12[%c24_94, %c0_95], %290 {strides = array<i32>} : memref<64x256xf32, #tpu.memory_space<vmem>>, vector<8x256xf32>,
    %c32_96 = arith.constant 32 : index
    %c0_97 = arith.constant 0 : index
    %292 = vector.load %arg13[%c32_96, %c0_97] : memref<64x1024xf32, #tpu.memory_space<vmem>>, vector<8x1024xf32>
    %293 = arith.truncf %290 : vector<8x256xf32> to vector<8x256xbf16>
    %cst_98 = arith.constant dense<0.000000e+00> : vector<8x1024xf32>
    %294 = tpu.matmul %293, %203, %cst_98 {dimension_numbers = #tpu.dot_dimension_numbers<[1], [0], [0], [1], [0, 0, 1, 1], [], []>} : vector<8x256xbf16>, vector<256x1024xbf16>, vector<8x1024xf32> -> vector<8x1024xf32>
    %295 = arith.addf %292, %294 : vector<8x1024xf32>
    %296 = vector.extract_strided_slice %295 {offsets = [0, 0], sizes = [8, 768], strides = [1, 1]} : vector<8x1024xf32> to vector<8x768xf32>
    %297 = arith.negf %296 : vector<8x768xf32>
    %298 = math.exp %297 : vector<8x768xf32>
    %cst_99 = arith.constant 1.000000e+00 : f32
    %299 = vector.broadcast %cst_99 : f32 to vector<8x768xf32>
    %300 = arith.addf %299, %298 : vector<8x768xf32>
    %301 = arith.divf %299, %300 : vector<8x768xf32>
    %302 = vector.extract_strided_slice %295 {offsets = [0, 768], sizes = [8, 256], strides = [1, 1]} : vector<8x1024xf32> to vector<8x256xf32>
    %303 = math.tanh %302 : vector<8x256xf32>
    %304 = vector.extract_strided_slice %301 {offsets = [0, 0], sizes = [8, 256], strides = [1, 1]} : vector<8x768xf32> to vector<8x256xf32>
    %305 = vector.extract_strided_slice %301 {offsets = [0, 256], sizes = [8, 256], strides = [1, 1]} : vector<8x768xf32> to vector<8x256xf32>
    %306 = vector.extract_strided_slice %301 {offsets = [0, 512], sizes = [8, 256], strides = [1, 1]} : vector<8x768xf32> to vector<8x256xf32>
    %307 = arith.mulf %305, %288 : vector<8x256xf32>
    %308 = arith.mulf %304, %303 : vector<8x256xf32>
    %309 = arith.addf %307, %308 : vector<8x256xf32>
    %310 = math.tanh %309 : vector<8x256xf32>
    %311 = arith.mulf %306, %310 : vector<8x256xf32>
    %c32_100 = arith.constant 32 : index
    %c0_101 = arith.constant 0 : index
    %312 = vector.load %arg12[%c32_100, %c0_101] : memref<64x256xf32, #tpu.memory_space<vmem>>, vector<8x256xf32>
    tpu.vector_store %arg12[%c32_100, %c0_101], %311 {strides = array<i32>} : memref<64x256xf32, #tpu.memory_space<vmem>>, vector<8x256xf32>,
    %c40_102 = arith.constant 40 : index
    %c0_103 = arith.constant 0 : index
    %313 = vector.load %arg13[%c40_102, %c0_103] : memref<64x1024xf32, #tpu.memory_space<vmem>>, vector<8x1024xf32>
    %314 = arith.truncf %311 : vector<8x256xf32> to vector<8x256xbf16>
    %cst_104 = arith.constant dense<0.000000e+00> : vector<8x1024xf32>
    %315 = tpu.matmul %314, %203, %cst_104 {dimension_numbers = #tpu.dot_dimension_numbers<[1], [0], [0], [1], [0, 0, 1, 1], [], []>} : vector<8x256xbf16>, vector<256x1024xbf16>, vector<8x1024xf32> -> vector<8x1024xf32>
    %316 = arith.addf %313, %315 : vector<8x1024xf32>
    %317 = vector.extract_strided_slice %316 {offsets = [0, 0], sizes = [8, 768], strides = [1, 1]} : vector<8x1024xf32> to vector<8x768xf32>
    %318 = arith.negf %317 : vector<8x768xf32>
    %319 = math.exp %318 : vector<8x768xf32>
    %cst_105 = arith.constant 1.000000e+00 : f32
    %320 = vector.broadcast %cst_105 : f32 to vector<8x768xf32>
    %321 = arith.addf %320, %319 : vector<8x768xf32>
    %322 = arith.divf %320, %321 : vector<8x768xf32>
    %323 = vector.extract_strided_slice %316 {offsets = [0, 768], sizes = [8, 256], strides = [1, 1]} : vector<8x1024xf32> to vector<8x256xf32>
    %324 = math.tanh %323 : vector<8x256xf32>
    %325 = vector.extract_strided_slice %322 {offsets = [0, 0], sizes = [8, 256], strides = [1, 1]} : vector<8x768xf32> to vector<8x256xf32>
    %326 = vector.extract_strided_slice %322 {offsets = [0, 256], sizes = [8, 256], strides = [1, 1]} : vector<8x768xf32> to vector<8x256xf32>
    %327 = vector.extract_strided_slice %322 {offsets = [0, 512], sizes = [8, 256], strides = [1, 1]} : vector<8x768xf32> to vector<8x256xf32>
    %328 = arith.mulf %326, %309 : vector<8x256xf32>
    %329 = arith.mulf %325, %324 : vector<8x256xf32>
    %330 = arith.addf %328, %329 : vector<8x256xf32>
    %331 = math.tanh %330 : vector<8x256xf32>
    %332 = arith.mulf %327, %331 : vector<8x256xf32>
    %c40_106 = arith.constant 40 : index
    %c0_107 = arith.constant 0 : index
    %333 = vector.load %arg12[%c40_106, %c0_107] : memref<64x256xf32, #tpu.memory_space<vmem>>, vector<8x256xf32>
    tpu.vector_store %arg12[%c40_106, %c0_107], %332 {strides = array<i32>} : memref<64x256xf32, #tpu.memory_space<vmem>>, vector<8x256xf32>,
    %c48_108 = arith.constant 48 : index
    %c0_109 = arith.constant 0 : index
    %334 = vector.load %arg13[%c48_108, %c0_109] : memref<64x1024xf32, #tpu.memory_space<vmem>>, vector<8x1024xf32>
    %335 = arith.truncf %332 : vector<8x256xf32> to vector<8x256xbf16>
    %cst_110 = arith.constant dense<0.000000e+00> : vector<8x1024xf32>
    %336 = tpu.matmul %335, %203, %cst_110 {dimension_numbers = #tpu.dot_dimension_numbers<[1], [0], [0], [1], [0, 0, 1, 1], [], []>} : vector<8x256xbf16>, vector<256x1024xbf16>, vector<8x1024xf32> -> vector<8x1024xf32>
    %337 = arith.addf %334, %336 : vector<8x1024xf32>
    %338 = vector.extract_strided_slice %337 {offsets = [0, 0], sizes = [8, 768], strides = [1, 1]} : vector<8x1024xf32> to vector<8x768xf32>
    %339 = arith.negf %338 : vector<8x768xf32>
    %340 = math.exp %339 : vector<8x768xf32>
    %cst_111 = arith.constant 1.000000e+00 : f32
    %341 = vector.broadcast %cst_111 : f32 to vector<8x768xf32>
    %342 = arith.addf %341, %340 : vector<8x768xf32>
    %343 = arith.divf %341, %342 : vector<8x768xf32>
    %344 = vector.extract_strided_slice %337 {offsets = [0, 768], sizes = [8, 256], strides = [1, 1]} : vector<8x1024xf32> to vector<8x256xf32>
    %345 = math.tanh %344 : vector<8x256xf32>
    %346 = vector.extract_strided_slice %343 {offsets = [0, 0], sizes = [8, 256], strides = [1, 1]} : vector<8x768xf32> to vector<8x256xf32>
    %347 = vector.extract_strided_slice %343 {offsets = [0, 256], sizes = [8, 256], strides = [1, 1]} : vector<8x768xf32> to vector<8x256xf32>
    %348 = vector.extract_strided_slice %343 {offsets = [0, 512], sizes = [8, 256], strides = [1, 1]} : vector<8x768xf32> to vector<8x256xf32>
    %349 = arith.mulf %347, %330 : vector<8x256xf32>
    %350 = arith.mulf %346, %345 : vector<8x256xf32>
    %351 = arith.addf %349, %350 : vector<8x256xf32>
    %352 = math.tanh %351 : vector<8x256xf32>
    %353 = arith.mulf %348, %352 : vector<8x256xf32>
    %c48_112 = arith.constant 48 : index
    %c0_113 = arith.constant 0 : index
    %354 = vector.load %arg12[%c48_112, %c0_113] : memref<64x256xf32, #tpu.memory_space<vmem>>, vector<8x256xf32>
    tpu.vector_store %arg12[%c48_112, %c0_113], %353 {strides = array<i32>} : memref<64x256xf32, #tpu.memory_space<vmem>>, vector<8x256xf32>,
    %c56_114 = arith.constant 56 : index
    %c0_115 = arith.constant 0 : index
    %355 = vector.load %arg13[%c56_114, %c0_115] : memref<64x1024xf32, #tpu.memory_space<vmem>>, vector<8x1024xf32>
    %356 = arith.truncf %353 : vector<8x256xf32> to vector<8x256xbf16>
    %cst_116 = arith.constant dense<0.000000e+00> : vector<8x1024xf32>
    %357 = tpu.matmul %356, %203, %cst_116 {dimension_numbers = #tpu.dot_dimension_numbers<[1], [0], [0], [1], [0, 0, 1, 1], [], []>} : vector<8x256xbf16>, vector<256x1024xbf16>, vector<8x1024xf32> -> vector<8x1024xf32>
    %358 = arith.addf %355, %357 : vector<8x1024xf32>
    %359 = vector.extract_strided_slice %358 {offsets = [0, 0], sizes = [8, 768], strides = [1, 1]} : vector<8x1024xf32> to vector<8x768xf32>
    %360 = arith.negf %359 : vector<8x768xf32>
    %361 = math.exp %360 : vector<8x768xf32>
    %cst_117 = arith.constant 1.000000e+00 : f32
    %362 = vector.broadcast %cst_117 : f32 to vector<8x768xf32>
    %363 = arith.addf %362, %361 : vector<8x768xf32>
    %364 = arith.divf %362, %363 : vector<8x768xf32>
    %365 = vector.extract_strided_slice %358 {offsets = [0, 768], sizes = [8, 256], strides = [1, 1]} : vector<8x1024xf32> to vector<8x256xf32>
    %366 = math.tanh %365 : vector<8x256xf32>
    %367 = vector.extract_strided_slice %364 {offsets = [0, 0], sizes = [8, 256], strides = [1, 1]} : vector<8x768xf32> to vector<8x256xf32>
    %368 = vector.extract_strided_slice %364 {offsets = [0, 256], sizes = [8, 256], strides = [1, 1]} : vector<8x768xf32> to vector<8x256xf32>
    %369 = vector.extract_strided_slice %364 {offsets = [0, 512], sizes = [8, 256], strides = [1, 1]} : vector<8x768xf32> to vector<8x256xf32>
    %370 = arith.mulf %368, %351 : vector<8x256xf32>
    %371 = arith.mulf %367, %366 : vector<8x256xf32>
    %372 = arith.addf %370, %371 : vector<8x256xf32>
    %373 = math.tanh %372 : vector<8x256xf32>
    %374 = arith.mulf %369, %373 : vector<8x256xf32>
    %c56_118 = arith.constant 56 : index
    %c0_119 = arith.constant 0 : index
    %375 = vector.load %arg12[%c56_118, %c0_119] : memref<64x256xf32, #tpu.memory_space<vmem>>, vector<8x256xf32>
    tpu.vector_store %arg12[%c56_118, %c0_119], %374 {strides = array<i32>} : memref<64x256xf32, #tpu.memory_space<vmem>>, vector<8x256xf32>,
    %c1_120 = arith.constant 1 : index
    %c0_121 = arith.constant 0 : index
    %c0_122 = arith.constant 0 : index
    %376 = vector.load %arg10[%c1_120, %c0_121, %c0_122] : memref<2x8x256xf32, #tpu.memory_space<vmem>>, vector<1x8x256xf32>
    %377 = vector.shape_cast %376 : vector<1x8x256xf32> to vector<8x256xf32>
    %378 = vector.shape_cast %374 : vector<8x256xf32> to vector<1x8x256xf32>
    tpu.vector_store %arg10[%c1_120, %c0_121, %c0_122], %378 {strides = array<i32>} : memref<2x8x256xf32, #tpu.memory_space<vmem>>, vector<1x8x256xf32>,
    %c1_123 = arith.constant 1 : index
    %c0_124 = arith.constant 0 : index
    %c0_125 = arith.constant 0 : index
    %379 = vector.load %arg11[%c1_123, %c0_124, %c0_125] : memref<2x8x256xf32, #tpu.memory_space<vmem>>, vector<1x8x256xf32>
    %380 = vector.shape_cast %379 : vector<1x8x256xf32> to vector<8x256xf32>
    %381 = vector.shape_cast %372 : vector<8x256xf32> to vector<1x8x256xf32>
    tpu.vector_store %arg11[%c1_123, %c0_124, %c0_125], %381 {strides = array<i32>} : memref<2x8x256xf32, #tpu.memory_space<vmem>>, vector<1x8x256xf32>,
    %c3_i32_126 = arith.constant 3 : i32
    %382 = tpu.memref_slice %arg19[%c3_i32_126] : memref<5x!tpu.dma_semaphore, #tpu.memory_space<semaphore_mem>> -> memref<1x!tpu.dma_semaphore, #tpu.memory_space<semaphore_mem>>
    %383 = tpu.memref_squeeze %382 : memref<1x!tpu.dma_semaphore, #tpu.memory_space<semaphore_mem>> -> memref<!tpu.dma_semaphore, #tpu.memory_space<semaphore_mem>>
    tpu.wait_dma2 semaphore(%383 : memref<!tpu.dma_semaphore, #tpu.memory_space<semaphore_mem>>) src(%arg7 : memref<256x128xbf16, #tpu.memory_space<any>>) dst(%arg17 : memref<256x128xbf16, #tpu.memory_space<vmem>>)
    %c4_i32_127 = arith.constant 4 : i32
    %384 = tpu.memref_slice %arg19[%c4_i32_127] : memref<5x!tpu.dma_semaphore, #tpu.memory_space<semaphore_mem>> -> memref<1x!tpu.dma_semaphore, #tpu.memory_space<semaphore_mem>>
    %385 = tpu.memref_squeeze %384 : memref<1x!tpu.dma_semaphore, #tpu.memory_space<semaphore_mem>> -> memref<!tpu.dma_semaphore, #tpu.memory_space<semaphore_mem>>
    tpu.wait_dma2 semaphore(%385 : memref<!tpu.dma_semaphore, #tpu.memory_space<semaphore_mem>>) src(%arg8 : memref<1x128xf32, #tpu.memory_space<any>>) dst(%arg18 : memref<1x128xf32, #tpu.memory_space<vmem>>)
    %c0_128 = arith.constant 0 : index
    %c0_129 = arith.constant 0 : index
    %386 = vector.load %arg12[%c0_128, %c0_129] : memref<64x256xf32, #tpu.memory_space<vmem>>, vector<64x256xf32>
    %387 = arith.truncf %386 : vector<64x256xf32> to vector<64x256xbf16>
    %c0_130 = arith.constant 0 : index
    %c0_131 = arith.constant 0 : index
    %388 = vector.load %arg17[%c0_130, %c0_131] : memref<256x128xbf16, #tpu.memory_space<vmem>>, vector<256x128xbf16>
    %cst_132 = arith.constant dense<0.000000e+00> : vector<64x128xf32>
    %389 = tpu.matmul %387, %388, %cst_132 {dimension_numbers = #tpu.dot_dimension_numbers<[1], [0], [0], [1], [0, 0, 1, 1], [], []>} : vector<64x256xbf16>, vector<256x128xbf16>, vector<64x128xf32> -> vector<64x128xf32>
    %c0_133 = arith.constant 0 : index
    %c0_134 = arith.constant 0 : index
    %390 = vector.load %arg18[%c0_133, %c0_134] : memref<1x128xf32, #tpu.memory_space<vmem>>, vector<1x128xf32>
    %391 = vector.broadcast %390 : vector<1x128xf32> to vector<64x128xf32>
    %392 = arith.addf %389, %391 : vector<64x128xf32>
    %c0_135 = arith.constant 0 : index
    %c0_136 = arith.constant 0 : index
    %393 = vector.load %arg9[%c0_135, %c0_136] : memref<64x128xf32, #tpu.memory_space<vmem>>, vector<64x128xf32>
    tpu.vector_store %arg9[%c0_135, %c0_136], %392 {strides = array<i32>} : memref<64x128xf32, #tpu.memory_space<vmem>>, vector<64x128xf32>,
    return
  }
}

</mosaic_0001>

<llo_original>
// kernel: rnn_model_forward.1
$region0: #{rnn_model_forward.1}
  #allocation0 [shape = 'u32[]', space=smem, size = 0x4, offset = 0x4, fixed_abs, tag = 'smem constant byte address 0x4 - core index']
  #allocation1 [shape = 'u32[72,128]{1,0:T(1,128)}', space=vmem, size = 0x9000, scoped, tag = 'internal scratch']
  #allocation2 [shape = 'f32[64,256]{1,0:T(8,128)}', space=vmem, size = 0x10000, scoped, tag = 'scratch operand']
  #allocation3 [shape = 'f32[64,1024]{1,0:T(8,128)}', space=vmem, size = 0x40000, scoped, tag = 'scratch operand']
  #allocation4 [shape = 'bf16[256,1024]{1,0:T(8,128)(2,1)}', space=vmem, size = 0x80000, scoped, tag = 'scratch operand']
  #allocation5 [shape = 'bf16[256,1024]{1,0:T(8,128)(2,1)}', space=vmem, size = 0x80000, scoped, tag = 'scratch operand']
  #allocation6 [shape = 'f32[1,1024]{1,0:T(1,128)}', space=vmem, size = 0x1000, scoped, tag = 'scratch operand']
  #allocation7 [shape = 'bf16[256,128]{1,0:T(8,128)(2,1)}', space=vmem, size = 0x10000, scoped, tag = 'scratch operand']
  #allocation8 [shape = 'f32[1,128]{1,0:T(1,128)}', space=vmem, size = 0x200, scoped, tag = 'scratch operand']
  #allocation9 [shape = 's32[5]{0}', space=sflag, size = 0x14, scoped, tag = 'scratch operand']
  #allocation17 [shape = 's32[]', space=sflag, size = 0x4, offset = 0, fixed_abs, tag = 'sflag constant byte address 0x0 - dummy sync flag']
  #allocation18 [shape = 's32[]', space=sflag, size = 0x4, offset = 0, fixed_abs, tag = 'sflag constant byte address 0x0 - dummy sync flag']
  #allocation19 [shape = 's32[]', space=sflag, size = 0x4, offset = 0, fixed_abs, tag = 'sflag constant byte address 0x0 - dummy sync flag']
  #allocation20 [shape = 's32[]', space=sflag, size = 0x4, offset = 0, fixed_abs, tag = 'sflag constant byte address 0x0 - dummy sync flag']
  #allocation21 [shape = 'u32[]', space=smem, size = 0x4, offset = 0x44, fixed_abs, tag = 'smem constant byte address 0x44 - assertion arg 0']
  #allocation22 [shape = 'u32[]', space=smem, size = 0x4, offset = 0x48, fixed_abs, tag = 'smem constant byte address 0x48 - assertion arg 1']
  #allocation23 [shape = 's32[]', space=sflag, size = 0x4, offset = 0, fixed_abs, tag = 'sflag constant byte address 0x0 - dummy sync flag']
  #allocation24 [shape = 's32[]', space=sflag, size = 0x4, offset = 0, fixed_abs, tag = 'sflag constant byte address 0x0 - dummy sync flag']
  #allocation25 [shape = 's32[]', space=sflag, size = 0x4, offset = 0, fixed_abs, tag = 'sflag constant byte address 0x0 - dummy sync flag']
  %s0 = inlined_call_operand.vmem [shape: f32[64,1024], index: 0, kind: input, shape index: {}]
  %s1 = inlined_call_operand.vmem [shape: f32[2,8,256], index: 1, kind: input, shape index: {}]
  %s2 = inlined_call_operand.hbm [shape: f32[2,8,256], index: 2, kind: input, shape index: {}]
  %s3 = inlined_call_operand.vmem [shape: bf16[256,1024], index: 3, kind: input, shape index: {}]
  %s4 = inlined_call_operand.vmem [shape: bf16[256,1024], index: 4, kind: input, shape index: {}]
  %s5 = inlined_call_operand.vmem [shape: bf16[256,1024], index: 5, kind: input, shape index: {}]
  %s6 = inlined_call_operand.hbm [shape: f32[1,1024], index: 6, kind: input, shape index: {}]
  %s7 = inlined_call_operand.hbm [shape: bf16[256,128], index: 7, kind: input, shape index: {}]
  %s8 = inlined_call_operand.vmem [shape: f32[1,128], index: 8, kind: input, shape index: {}]
  %s9 = inlined_call_operand.hbm [shape: f32[64,128], index: 9, kind: output, shape index: {0}]
  %s10 = inlined_call_operand.hbm [shape: f32[2,8,256], index: 10, kind: output, shape index: {1}]
  %s11 = inlined_call_operand.hbm [shape: f32[2,8,256], index: 11, kind: output, shape index: {2}]
  %12 = xla_tuple %s9, %s10, %s11
  %s13 = sld [smem:[#allocation0]]
  $region122: #{rnn_model_forward.1} parent=0
    _
  %s15 = ssub.s32 1, %s13
  %s16 = scalar_select 0, %s15, %s13
  $region1: #{rnn_model_forward.1} parent=0
    #allocation10 [shape = 'u8[16384]{0}', space=vmem, size = 0x4000, scoped, tag = 'input window, operand 2, single buffered']
    #allocation11 [shape = 's32[1]{0}', space=sflag, size = 0x4, scoped, tag = 'scoped memory for rnn_model_forward.1']
    #allocation12 [shape = 's32[1]{0}', space=sflag, size = 0x4, scoped, tag = 'scoped memory for rnn_model_forward.1']
    #allocation13 [shape = 'u8[32768]{0}', space=vmem, size = 0x8000, scoped, tag = 'output window, operand 0, single buffered']
    #allocation14 [shape = 'u8[16384]{0}', space=vmem, size = 0x4000, scoped, tag = 'output window, operand 1, single buffered']
    #allocation15 [shape = 's32[1]{0}', space=sflag, size = 0x4, scoped, tag = 'scoped memory for rnn_model_forward.1']
    #allocation16 [shape = 'u8[16384]{0}', space=vmem, size = 0x4000, scoped, tag = 'output window, operand 2, single buffered']
    %17 = vsyncpa [#allocation11], 0
    %18 = vsyncpa [#allocation12], 0
    %19 = vsyncpa [#allocation15], 0
    // Predicated region
    $region2: #{rnn_model_forward.1} parent=1 // pred_check
      _
    $region3: #{rnn_model_forward.1} parent=1 // pred_check_branch
      %21 = sbr.rel (0) target = $region5
    $region4: #{rnn_model_forward.1} parent=1 // pred_region
      _
    $region5: #{rnn_model_forward.1} parent=1 // pred_fallthru
      _
    // Predicated region
    $region6: #{rnn_model_forward.1} parent=1 // pred_check
      _
    $region7: #{rnn_model_forward.1} parent=1 // pred_check_branch
      %23 = sbr.rel (0) target = $region9
    $region8: #{rnn_model_forward.1} parent=1 // pred_region
      _
    $region9: #{rnn_model_forward.1} parent=1 // pred_fallthru
      _
    // Predicated region
    $region10: #{rnn_model_forward.1} parent=1 // pred_check
      _
    $region11: #{rnn_model_forward.1} parent=1 // pred_check_branch
      %25 = sbr.rel (0) target = $region13
    $region12: #{rnn_model_forward.1} parent=1 // pred_region
      %27 = vsyncadd [#allocation11], 0
      %s28 = sshll.u32 %s2, 4
      %s29 = int_to_ptr.hbm [resolvable:$true] %s28
      %s30 = sshll.u32 [#allocation10], 4
      %s31 = int_to_ptr.vmem [resolvable:$true] %s30
      %36 = dma.hbm_to_vmem [thread:$0]  %s29, 512, %s31, [#allocation11], 256, 256, 16
    $region13: #{rnn_model_forward.1} parent=1 // pred_fallthru
      _
    // Predicated region
    $region14: #{rnn_model_forward.1} parent=1 // pred_check
      _
    $region15: #{rnn_model_forward.1} parent=1 // pred_check_branch
      %38 = sbr.rel (0) target = $region17
    $region16: #{rnn_model_forward.1} parent=1 // pred_region
      _
    $region17: #{rnn_model_forward.1} parent=1 // pred_fallthru
      _
    // Predicated region
    $region18: #{rnn_model_forward.1} parent=1 // pred_check
      _
    $region19: #{rnn_model_forward.1} parent=1 // pred_check_branch
      %40 = sbr.rel (0) target = $region21
    $region20: #{rnn_model_forward.1} parent=1 // pred_region
      %42 = dma.done [#allocation11], 512
    $region21: #{rnn_model_forward.1} parent=1 // pred_fallthru
      _
    // Predicated region
    $region22: #{rnn_model_forward.1} parent=1 // pred_check
      _
    $region23: #{rnn_model_forward.1} parent=1 // pred_check_branch
      %44 = sbr.rel (0) target = $region25
    $region24: #{rnn_model_forward.1} parent=1 // pred_region
      loop: start=0, step=1, limit=1
      $region26: #{rnn_model_forward.1} parent=24 // loop_pre_header
        _
      $region27: #{rnn_model_forward.1} parent=24 // loop_header
        %s46 = sphi 0, %s50
        %p47 = scmp.ge.s32.totalorder %s46, 1
        %s51 = sphi %s4, %s4
        %s52 = sphi [#allocation4], [#allocation4]
      $region28: #{rnn_model_forward.1} parent=24 // loop_header_branch
        %49 = sbr.rel (%p47) target = $region32
      $region29: #{rnn_model_forward.1} parent=24 // loop_body
        %v53 = vld [vmem:[%s51] sm:$0xff]
        %54 = vst [vmem:[%s52] sm:$0xff] %v53
        %v55 = vld [vmem:[%s51 + $0x8] sm:$0xff]
        %56 = vst [vmem:[%s52 + $0x8] sm:$0xff] %v55
        %v57 = vld [vmem:[%s51 + $0x10] sm:$0xff]
        %58 = vst [vmem:[%s52 + $0x10] sm:$0xff] %v57
        %v59 = vld [vmem:[%s51 + $0x18] sm:$0xff]
        %60 = vst [vmem:[%s52 + $0x18] sm:$0xff] %v59
        %v61 = vld [vmem:[%s51 + $0x20] sm:$0xff]
        %62 = vst [vmem:[%s52 + $0x20] sm:$0xff] %v61
        %v63 = vld [vmem:[%s51 + $0x28] sm:$0xff]
        %64 = vst [vmem:[%s52 + $0x28] sm:$0xff] %v63
        %v65 = vld [vmem:[%s51 + $0x30] sm:$0xff]
        %66 = vst [vmem:[%s52 + $0x30] sm:$0xff] %v65
        %v67 = vld [vmem:[%s51 + $0x38] sm:$0xff]
        %68 = vst [vmem:[%s52 + $0x38] sm:$0xff] %v67
        %v69 = vld [vmem:[%s51 + $0x40] sm:$0xff]
        %70 = vst [vmem:[%s52 + $0x40] sm:$0xff] %v69
        %v71 = vld [vmem:[%s51 + $0x48] sm:$0xff]
        %72 = vst [vmem:[%s52 + $0x48] sm:$0xff] %v71
        %v73 = vld [vmem:[%s51 + $0x50] sm:$0xff]
        %74 = vst [vmem:[%s52 + $0x50] sm:$0xff] %v73
        %v75 = vld [vmem:[%s51 + $0x58] sm:$0xff]
        %76 = vst [vmem:[%s52 + $0x58] sm:$0xff] %v75
        %v77 = vld [vmem:[%s51 + $0x60] sm:$0xff]
        %78 = vst [vmem:[%s52 + $0x60] sm:$0xff] %v77
        %v79 = vld [vmem:[%s51 + $0x68] sm:$0xff]
        %80 = vst [vmem:[%s52 + $0x68] sm:$0xff] %v79
        %v81 = vld [vmem:[%s51 + $0x70] sm:$0xff]
        %82 = vst [vmem:[%s52 + $0x70] sm:$0xff] %v81
        %v83 = vld [vmem:[%s51 + $0x78] sm:$0xff]
        %84 = vst [vmem:[%s52 + $0x78] sm:$0xff] %v83
        %v85 = vld [vmem:[%s51 + $0x80] sm:$0xff]
        %86 = vst [vmem:[%s52 + $0x80] sm:$0xff] %v85
        %v87 = vld [vmem:[%s51 + $0x88] sm:$0xff]
        %88 = vst [vmem:[%s52 + $0x88] sm:$0xff] %v87
        %v89 = vld [vmem:[%s51 + $0x90] sm:$0xff]
        %90 = vst [vmem:[%s52 + $0x90] sm:$0xff] %v89
        %v91 = vld [vmem:[%s51 + $0x98] sm:$0xff]
        %92 = vst [vmem:[%s52 + $0x98] sm:$0xff] %v91
        %v93 = vld [vmem:[%s51 + $0xa0] sm:$0xff]
        %94 = vst [vmem:[%s52 + $0xa0] sm:$0xff] %v93
        %v95 = vld [vmem:[%s51 + $0xa8] sm:$0xff]
        %96 = vst [vmem:[%s52 + $0xa8] sm:$0xff] %v95
        %v97 = vld [vmem:[%s51 + $0xb0] sm:$0xff]
        %98 = vst [vmem:[%s52 + $0xb0] sm:$0xff] %v97
        %v99 = vld [vmem:[%s51 + $0xb8] sm:$0xff]
        %100 = vst [vmem:[%s52 + $0xb8] sm:$0xff] %v99
        %v101 = vld [vmem:[%s51 + $0xc0] sm:$0xff]
        %102 = vst [vmem:[%s52 + $0xc0] sm:$0xff] %v101
        %v103 = vld [vmem:[%s51 + $0xc8] sm:$0xff]
        %104 = vst [vmem:[%s52 + $0xc8] sm:$0xff] %v103
        %v105 = vld [vmem:[%s51 + $0xd0] sm:$0xff]
        %106 = vst [vmem:[%s52 + $0xd0] sm:$0xff] %v105
        %v107 = vld [vmem:[%s51 + $0xd8] sm:$0xff]
        %108 = vst [vmem:[%s52 + $0xd8] sm:$0xff] %v107
        %v109 = vld [vmem:[%s51 + $0xe0] sm:$0xff]
        %110 = vst [vmem:[%s52 + $0xe0] sm:$0xff] %v109
        %v111 = vld [vmem:[%s51 + $0xe8] sm:$0xff]
        %112 = vst [vmem:[%s52 + $0xe8] sm:$0xff] %v111
        %v113 = vld [vmem:[%s51 + $0xf0] sm:$0xff]
        %114 = vst [vmem:[%s52 + $0xf0] sm:$0xff] %v113
        %v115 = vld [vmem:[%s51 + $0xf8] sm:$0xff]
        %116 = vst [vmem:[%s52 + $0xf8] sm:$0xff] %v115
        %v117 = vld [vmem:[%s51 + $0x100] sm:$0xff]
        %118 = vst [vmem:[%s52 + $0x100] sm:$0xff] %v117
        %v119 = vld [vmem:[%s51 + $0x108] sm:$0xff]
        %120 = vst [vmem:[%s52 + $0x108] sm:$0xff] %v119
        %v121 = vld [vmem:[%s51 + $0x110] sm:$0xff]
        %122 = vst [vmem:[%s52 + $0x110] sm:$0xff] %v121
        %v123 = vld [vmem:[%s51 + $0x118] sm:$0xff]
        %124 = vst [vmem:[%s52 + $0x118] sm:$0xff] %v123
        %v125 = vld [vmem:[%s51 + $0x120] sm:$0xff]
        %126 = vst [vmem:[%s52 + $0x120] sm:$0xff] %v125
        %v127 = vld [vmem:[%s51 + $0x128] sm:$0xff]
        %128 = vst [vmem:[%s52 + $0x128] sm:$0xff] %v127
        %v129 = vld [vmem:[%s51 + $0x130] sm:$0xff]
        %130 = vst [vmem:[%s52 + $0x130] sm:$0xff] %v129
        %v131 = vld [vmem:[%s51 + $0x138] sm:$0xff]
        %132 = vst [vmem:[%s52 + $0x138] sm:$0xff] %v131
        %v133 = vld [vmem:[%s51 + $0x140] sm:$0xff]
        %134 = vst [vmem:[%s52 + $0x140] sm:$0xff] %v133
        %v135 = vld [vmem:[%s51 + $0x148] sm:$0xff]
        %136 = vst [vmem:[%s52 + $0x148] sm:$0xff] %v135
        %v137 = vld [vmem:[%s51 + $0x150] sm:$0xff]
        %138 = vst [vmem:[%s52 + $0x150] sm:$0xff] %v137
        %v139 = vld [vmem:[%s51 + $0x158] sm:$0xff]
        %140 = vst [vmem:[%s52 + $0x158] sm:$0xff] %v139
        %v141 = vld [vmem:[%s51 + $0x160] sm:$0xff]
        %142 = vst [vmem:[%s52 + $0x160] sm:$0xff] %v141
        %v143 = vld [vmem:[%s51 + $0x168] sm:$0xff]
        %144 = vst [vmem:[%s52 + $0x168] sm:$0xff] %v143
        %v145 = vld [vmem:[%s51 + $0x170] sm:$0xff]
        %146 = vst [vmem:[%s52 + $0x170] sm:$0xff] %v145
        %v147 = vld [vmem:[%s51 + $0x178] sm:$0xff]
        %148 = vst [vmem:[%s52 + $0x178] sm:$0xff] %v147
        %v149 = vld [vmem:[%s51 + $0x180] sm:$0xff]
        %150 = vst [vmem:[%s52 + $0x180] sm:$0xff] %v149
        %v151 = vld [vmem:[%s51 + $0x188] sm:$0xff]
        %152 = vst [vmem:[%s52 + $0x188] sm:$0xff] %v151
        %v153 = vld [vmem:[%s51 + $0x190] sm:$0xff]
        %154 = vst [vmem:[%s52 + $0x190] sm:$0xff] %v153
        %v155 = vld [vmem:[%s51 + $0x198] sm:$0xff]
        %156 = vst [vmem:[%s52 + $0x198] sm:$0xff] %v155
        %v157 = vld [vmem:[%s51 + $0x1a0] sm:$0xff]
        %158 = vst [vmem:[%s52 + $0x1a0] sm:$0xff] %v157
        %v159 = vld [vmem:[%s51 + $0x1a8] sm:$0xff]
        %160 = vst [vmem:[%s52 + $0x1a8] sm:$0xff] %v159
        %v161 = vld [vmem:[%s51 + $0x1b0] sm:$0xff]
        %162 = vst [vmem:[%s52 + $0x1b0] sm:$0xff] %v161
        %v163 = vld [vmem:[%s51 + $0x1b8] sm:$0xff]
        %164 = vst [vmem:[%s52 + $0x1b8] sm:$0xff] %v163
        %v165 = vld [vmem:[%s51 + $0x1c0] sm:$0xff]
        %166 = vst [vmem:[%s52 + $0x1c0] sm:$0xff] %v165
        %v167 = vld [vmem:[%s51 + $0x1c8] sm:$0xff]
        %168 = vst [vmem:[%s52 + $0x1c8] sm:$0xff] %v167
        %v169 = vld [vmem:[%s51 + $0x1d0] sm:$0xff]
        %170 = vst [vmem:[%s52 + $0x1d0] sm:$0xff] %v169
        %v171 = vld [vmem:[%s51 + $0x1d8] sm:$0xff]
        %172 = vst [vmem:[%s52 + $0x1d8] sm:$0xff] %v171
        %v173 = vld [vmem:[%s51 + $0x1e0] sm:$0xff]
        %174 = vst [vmem:[%s52 + $0x1e0] sm:$0xff] %v173
        %v175 = vld [vmem:[%s51 + $0x1e8] sm:$0xff]
        %176 = vst [vmem:[%s52 + $0x1e8] sm:$0xff] %v175
        %v177 = vld [vmem:[%s51 + $0x1f0] sm:$0xff]
        %178 = vst [vmem:[%s52 + $0x1f0] sm:$0xff] %v177
        %v179 = vld [vmem:[%s51 + $0x1f8] sm:$0xff]
        %180 = vst [vmem:[%s52 + $0x1f8] sm:$0xff] %v179
        %v181 = vld [vmem:[%s51 + $0x200] sm:$0xff]
        %182 = vst [vmem:[%s52 + $0x200] sm:$0xff] %v181
        %v183 = vld [vmem:[%s51 + $0x208] sm:$0xff]
        %184 = vst [vmem:[%s52 + $0x208] sm:$0xff] %v183
        %v185 = vld [vmem:[%s51 + $0x210] sm:$0xff]
        %186 = vst [vmem:[%s52 + $0x210] sm:$0xff] %v185
        %v187 = vld [vmem:[%s51 + $0x218] sm:$0xff]
        %188 = vst [vmem:[%s52 + $0x218] sm:$0xff] %v187
        %v189 = vld [vmem:[%s51 + $0x220] sm:$0xff]
        %190 = vst [vmem:[%s52 + $0x220] sm:$0xff] %v189
        %v191 = vld [vmem:[%s51 + $0x228] sm:$0xff]
        %192 = vst [vmem:[%s52 + $0x228] sm:$0xff] %v191
        %v193 = vld [vmem:[%s51 + $0x230] sm:$0xff]
        %194 = vst [vmem:[%s52 + $0x230] sm:$0xff] %v193
        %v195 = vld [vmem:[%s51 + $0x238] sm:$0xff]
        %196 = vst [vmem:[%s52 + $0x238] sm:$0xff] %v195
        %v197 = vld [vmem:[%s51 + $0x240] sm:$0xff]
        %198 = vst [vmem:[%s52 + $0x240] sm:$0xff] %v197
        %v199 = vld [vmem:[%s51 + $0x248] sm:$0xff]
        %200 = vst [vmem:[%s52 + $0x248] sm:$0xff] %v199
        %v201 = vld [vmem:[%s51 + $0x250] sm:$0xff]
        %202 = vst [vmem:[%s52 + $0x250] sm:$0xff] %v201
        %v203 = vld [vmem:[%s51 + $0x258] sm:$0xff]
        %204 = vst [vmem:[%s52 + $0x258] sm:$0xff] %v203
        %v205 = vld [vmem:[%s51 + $0x260] sm:$0xff]
        %206 = vst [vmem:[%s52 + $0x260] sm:$0xff] %v205
        %v207 = vld [vmem:[%s51 + $0x268] sm:$0xff]
        %208 = vst [vmem:[%s52 + $0x268] sm:$0xff] %v207
        %v209 = vld [vmem:[%s51 + $0x270] sm:$0xff]
        %210 = vst [vmem:[%s52 + $0x270] sm:$0xff] %v209
        %v211 = vld [vmem:[%s51 + $0x278] sm:$0xff]
        %212 = vst [vmem:[%s52 + $0x278] sm:$0xff] %v211
        %v213 = vld [vmem:[%s51 + $0x280] sm:$0xff]
        %214 = vst [vmem:[%s52 + $0x280] sm:$0xff] %v213
        %v215 = vld [vmem:[%s51 + $0x288] sm:$0xff]
        %216 = vst [vmem:[%s52 + $0x288] sm:$0xff] %v215
        %v217 = vld [vmem:[%s51 + $0x290] sm:$0xff]
        %218 = vst [vmem:[%s52 + $0x290] sm:$0xff] %v217
        %v219 = vld [vmem:[%s51 + $0x298] sm:$0xff]
        %220 = vst [vmem:[%s52 + $0x298] sm:$0xff] %v219
        %v221 = vld [vmem:[%s51 + $0x2a0] sm:$0xff]
        %222 = vst [vmem:[%s52 + $0x2a0] sm:$0xff] %v221
        %v223 = vld [vmem:[%s51 + $0x2a8] sm:$0xff]
        %224 = vst [vmem:[%s52 + $0x2a8] sm:$0xff] %v223
        %v225 = vld [vmem:[%s51 + $0x2b0] sm:$0xff]
        %226 = vst [vmem:[%s52 + $0x2b0] sm:$0xff] %v225
        %v227 = vld [vmem:[%s51 + $0x2b8] sm:$0xff]
        %228 = vst [vmem:[%s52 + $0x2b8] sm:$0xff] %v227
        %v229 = vld [vmem:[%s51 + $0x2c0] sm:$0xff]
        %230 = vst [vmem:[%s52 + $0x2c0] sm:$0xff] %v229
        %v231 = vld [vmem:[%s51 + $0x2c8] sm:$0xff]
        %232 = vst [vmem:[%s52 + $0x2c8] sm:$0xff] %v231
        %v233 = vld [vmem:[%s51 + $0x2d0] sm:$0xff]
        %234 = vst [vmem:[%s52 + $0x2d0] sm:$0xff] %v233
        %v235 = vld [vmem:[%s51 + $0x2d8] sm:$0xff]
        %236 = vst [vmem:[%s52 + $0x2d8] sm:$0xff] %v235
        %v237 = vld [vmem:[%s51 + $0x2e0] sm:$0xff]
        %238 = vst [vmem:[%s52 + $0x2e0] sm:$0xff] %v237
        %v239 = vld [vmem:[%s51 + $0x2e8] sm:$0xff]
        %240 = vst [vmem:[%s52 + $0x2e8] sm:$0xff] %v239
        %v241 = vld [vmem:[%s51 + $0x2f0] sm:$0xff]
        %242 = vst [vmem:[%s52 + $0x2f0] sm:$0xff] %v241
        %v243 = vld [vmem:[%s51 + $0x2f8] sm:$0xff]
        %244 = vst [vmem:[%s52 + $0x2f8] sm:$0xff] %v243
        %v245 = vld [vmem:[%s51 + $0x300] sm:$0xff]
        %246 = vst [vmem:[%s52 + $0x300] sm:$0xff] %v245
        %v247 = vld [vmem:[%s51 + $0x308] sm:$0xff]
        %248 = vst [vmem:[%s52 + $0x308] sm:$0xff] %v247
        %v249 = vld [vmem:[%s51 + $0x310] sm:$0xff]
        %250 = vst [vmem:[%s52 + $0x310] sm:$0xff] %v249
        %v251 = vld [vmem:[%s51 + $0x318] sm:$0xff]
        %252 = vst [vmem:[%s52 + $0x318] sm:$0xff] %v251
        %v253 = vld [vmem:[%s51 + $0x320] sm:$0xff]
        %254 = vst [vmem:[%s52 + $0x320] sm:$0xff] %v253
        %v255 = vld [vmem:[%s51 + $0x328] sm:$0xff]
        %256 = vst [vmem:[%s52 + $0x328] sm:$0xff] %v255
        %v257 = vld [vmem:[%s51 + $0x330] sm:$0xff]
        %258 = vst [vmem:[%s52 + $0x330] sm:$0xff] %v257
        %v259 = vld [vmem:[%s51 + $0x338] sm:$0xff]
        %260 = vst [vmem:[%s52 + $0x338] sm:$0xff] %v259
        %v261 = vld [vmem:[%s51 + $0x340] sm:$0xff]
        %262 = vst [vmem:[%s52 + $0x340] sm:$0xff] %v261
        %v263 = vld [vmem:[%s51 + $0x348] sm:$0xff]
        %264 = vst [vmem:[%s52 + $0x348] sm:$0xff] %v263
        %v265 = vld [vmem:[%s51 + $0x350] sm:$0xff]
        %266 = vst [vmem:[%s52 + $0x350] sm:$0xff] %v265
        %v267 = vld [vmem:[%s51 + $0x358] sm:$0xff]
        %268 = vst [vmem:[%s52 + $0x358] sm:$0xff] %v267
        %v269 = vld [vmem:[%s51 + $0x360] sm:$0xff]
        %270 = vst [vmem:[%s52 + $0x360] sm:$0xff] %v269
        %v271 = vld [vmem:[%s51 + $0x368] sm:$0xff]
        %272 = vst [vmem:[%s52 + $0x368] sm:$0xff] %v271
        %v273 = vld [vmem:[%s51 + $0x370] sm:$0xff]
        %274 = vst [vmem:[%s52 + $0x370] sm:$0xff] %v273
        %v275 = vld [vmem:[%s51 + $0x378] sm:$0xff]
        %276 = vst [vmem:[%s52 + $0x378] sm:$0xff] %v275
        %v277 = vld [vmem:[%s51 + $0x380] sm:$0xff]
        %278 = vst [vmem:[%s52 + $0x380] sm:$0xff] %v277
        %v279 = vld [vmem:[%s51 + $0x388] sm:$0xff]
        %280 = vst [vmem:[%s52 + $0x388] sm:$0xff] %v279
        %v281 = vld [vmem:[%s51 + $0x390] sm:$0xff]
        %282 = vst [vmem:[%s52 + $0x390] sm:$0xff] %v281
        %v283 = vld [vmem:[%s51 + $0x398] sm:$0xff]
        %284 = vst [vmem:[%s52 + $0x398] sm:$0xff] %v283
        %v285 = vld [vmem:[%s51 + $0x3a0] sm:$0xff]
        %286 = vst [vmem:[%s52 + $0x3a0] sm:$0xff] %v285
        %v287 = vld [vmem:[%s51 + $0x3a8] sm:$0xff]
        %288 = vst [vmem:[%s52 + $0x3a8] sm:$0xff] %v287
        %v289 = vld [vmem:[%s51 + $0x3b0] sm:$0xff]
        %290 = vst [vmem:[%s52 + $0x3b0] sm:$0xff] %v289
        %v291 = vld [vmem:[%s51 + $0x3b8] sm:$0xff]
        %292 = vst [vmem:[%s52 + $0x3b8] sm:$0xff] %v291
        %v293 = vld [vmem:[%s51 + $0x3c0] sm:$0xff]
        %294 = vst [vmem:[%s52 + $0x3c0] sm:$0xff] %v293
        %v295 = vld [vmem:[%s51 + $0x3c8] sm:$0xff]
        %296 = vst [vmem:[%s52 + $0x3c8] sm:$0xff] %v295
        %v297 = vld [vmem:[%s51 + $0x3d0] sm:$0xff]
        %298 = vst [vmem:[%s52 + $0x3d0] sm:$0xff] %v297
        %v299 = vld [vmem:[%s51 + $0x3d8] sm:$0xff]
        %300 = vst [vmem:[%s52 + $0x3d8] sm:$0xff] %v299
        %v301 = vld [vmem:[%s51 + $0x3e0] sm:$0xff]
        %302 = vst [vmem:[%s52 + $0x3e0] sm:$0xff] %v301
        %v303 = vld [vmem:[%s51 + $0x3e8] sm:$0xff]
        %304 = vst [vmem:[%s52 + $0x3e8] sm:$0xff] %v303
        %v305 = vld [vmem:[%s51 + $0x3f0] sm:$0xff]
        %306 = vst [vmem:[%s52 + $0x3f0] sm:$0xff] %v305
        %v307 = vld [vmem:[%s51 + $0x3f8] sm:$0xff]
        %308 = vst [vmem:[%s52 + $0x3f8] sm:$0xff] %v307
      $region30: #{rnn_model_forward.1} parent=24 // loop_footer
        %s50 = sadd.s32 1, %s46
      $region31: #{rnn_model_forward.1} parent=24 // loop_footer_branch
        %45 = sbr.rel target = $region27
      $region32: #{rnn_model_forward.1} parent=24 // loop_exit
        _
    $region25: #{rnn_model_forward.1} parent=1 // pred_fallthru
      _
    // Predicated region
    $region33: #{rnn_model_forward.1} parent=1 // pred_check
      _
    $region34: #{rnn_model_forward.1} parent=1 // pred_check_branch
      %310 = sbr.rel target = $region36
    $region35: #{rnn_model_forward.1} parent=1 // pred_region
      _
    $region36: #{rnn_model_forward.1} parent=1 // pred_fallthru
      _
    // Predicated region
    $region37: #{rnn_model_forward.1} parent=1 // pred_check
      _
    $region38: #{rnn_model_forward.1} parent=1 // pred_check_branch
      %313 = sbr.rel (0) target = $region40
    $region39: #{rnn_model_forward.1} parent=1 // pred_region
      %314 = vsyncadd [#allocation9], 16384
    $region40: #{rnn_model_forward.1} parent=1 // pred_fallthru
      _
    %s315 = scalar_lea.sflag [#allocation9], 1
    // Predicated region
    $region41: #{rnn_model_forward.1} parent=1 // pred_check
      _
    $region42: #{rnn_model_forward.1} parent=1 // pred_check_branch
      %317 = sbr.rel (0) target = $region44
    $region43: #{rnn_model_forward.1} parent=1 // pred_region
      loop: start=0, step=1, limit=1
      $region45: #{rnn_model_forward.1} parent=43 // loop_pre_header
        _
      $region46: #{rnn_model_forward.1} parent=43 // loop_header
        %s319 = sphi 0, %s323
        %p320 = scmp.ge.s32.totalorder %s319, 1
        %s324 = sphi %s5, %s5
        %s325 = sphi [#allocation5], [#allocation5]
      $region47: #{rnn_model_forward.1} parent=43 // loop_header_branch
        %322 = sbr.rel (%p320) target = $region51
      $region48: #{rnn_model_forward.1} parent=43 // loop_body
        %v326 = vld [vmem:[%s324] sm:$0xff]
        %327 = vst [vmem:[%s325] sm:$0xff] %v326
        %v328 = vld [vmem:[%s324 + $0x8] sm:$0xff]
        %329 = vst [vmem:[%s325 + $0x8] sm:$0xff] %v328
        %v330 = vld [vmem:[%s324 + $0x10] sm:$0xff]
        %331 = vst [vmem:[%s325 + $0x10] sm:$0xff] %v330
        %v332 = vld [vmem:[%s324 + $0x18] sm:$0xff]
        %333 = vst [vmem:[%s325 + $0x18] sm:$0xff] %v332
        %v334 = vld [vmem:[%s324 + $0x20] sm:$0xff]
        %335 = vst [vmem:[%s325 + $0x20] sm:$0xff] %v334
        %v336 = vld [vmem:[%s324 + $0x28] sm:$0xff]
        %337 = vst [vmem:[%s325 + $0x28] sm:$0xff] %v336
        %v338 = vld [vmem:[%s324 + $0x30] sm:$0xff]
        %339 = vst [vmem:[%s325 + $0x30] sm:$0xff] %v338
        %v340 = vld [vmem:[%s324 + $0x38] sm:$0xff]
        %341 = vst [vmem:[%s325 + $0x38] sm:$0xff] %v340
        %v342 = vld [vmem:[%s324 + $0x40] sm:$0xff]
        %343 = vst [vmem:[%s325 + $0x40] sm:$0xff] %v342
        %v344 = vld [vmem:[%s324 + $0x48] sm:$0xff]
        %345 = vst [vmem:[%s325 + $0x48] sm:$0xff] %v344
        %v346 = vld [vmem:[%s324 + $0x50] sm:$0xff]
        %347 = vst [vmem:[%s325 + $0x50] sm:$0xff] %v346
        %v348 = vld [vmem:[%s324 + $0x58] sm:$0xff]
        %349 = vst [vmem:[%s325 + $0x58] sm:$0xff] %v348
        %v350 = vld [vmem:[%s324 + $0x60] sm:$0xff]
        %351 = vst [vmem:[%s325 + $0x60] sm:$0xff] %v350
        %v352 = vld [vmem:[%s324 + $0x68] sm:$0xff]
        %353 = vst [vmem:[%s325 + $0x68] sm:$0xff] %v352
        %v354 = vld [vmem:[%s324 + $0x70] sm:$0xff]
        %355 = vst [vmem:[%s325 + $0x70] sm:$0xff] %v354
        %v356 = vld [vmem:[%s324 + $0x78] sm:$0xff]
        %357 = vst [vmem:[%s325 + $0x78] sm:$0xff] %v356
        %v358 = vld [vmem:[%s324 + $0x80] sm:$0xff]
        %359 = vst [vmem:[%s325 + $0x80] sm:$0xff] %v358
        %v360 = vld [vmem:[%s324 + $0x88] sm:$0xff]
        %361 = vst [vmem:[%s325 + $0x88] sm:$0xff] %v360
        %v362 = vld [vmem:[%s324 + $0x90] sm:$0xff]
        %363 = vst [vmem:[%s325 + $0x90] sm:$0xff] %v362
        %v364 = vld [vmem:[%s324 + $0x98] sm:$0xff]
        %365 = vst [vmem:[%s325 + $0x98] sm:$0xff] %v364
        %v366 = vld [vmem:[%s324 + $0xa0] sm:$0xff]
        %367 = vst [vmem:[%s325 + $0xa0] sm:$0xff] %v366
        %v368 = vld [vmem:[%s324 + $0xa8] sm:$0xff]
        %369 = vst [vmem:[%s325 + $0xa8] sm:$0xff] %v368
        %v370 = vld [vmem:[%s324 + $0xb0] sm:$0xff]
        %371 = vst [vmem:[%s325 + $0xb0] sm:$0xff] %v370
        %v372 = vld [vmem:[%s324 + $0xb8] sm:$0xff]
        %373 = vst [vmem:[%s325 + $0xb8] sm:$0xff] %v372
        %v374 = vld [vmem:[%s324 + $0xc0] sm:$0xff]
        %375 = vst [vmem:[%s325 + $0xc0] sm:$0xff] %v374
        %v376 = vld [vmem:[%s324 + $0xc8] sm:$0xff]
        %377 = vst [vmem:[%s325 + $0xc8] sm:$0xff] %v376
        %v378 = vld [vmem:[%s324 + $0xd0] sm:$0xff]
        %379 = vst [vmem:[%s325 + $0xd0] sm:$0xff] %v378
        %v380 = vld [vmem:[%s324 + $0xd8] sm:$0xff]
        %381 = vst [vmem:[%s325 + $0xd8] sm:$0xff] %v380
        %v382 = vld [vmem:[%s324 + $0xe0] sm:$0xff]
        %383 = vst [vmem:[%s325 + $0xe0] sm:$0xff] %v382
        %v384 = vld [vmem:[%s324 + $0xe8] sm:$0xff]
        %385 = vst [vmem:[%s325 + $0xe8] sm:$0xff] %v384
        %v386 = vld [vmem:[%s324 + $0xf0] sm:$0xff]
        %387 = vst [vmem:[%s325 + $0xf0] sm:$0xff] %v386
        %v388 = vld [vmem:[%s324 + $0xf8] sm:$0xff]
        %389 = vst [vmem:[%s325 + $0xf8] sm:$0xff] %v388
        %v390 = vld [vmem:[%s324 + $0x100] sm:$0xff]
        %391 = vst [vmem:[%s325 + $0x100] sm:$0xff] %v390
        %v392 = vld [vmem:[%s324 + $0x108] sm:$0xff]
        %393 = vst [vmem:[%s325 + $0x108] sm:$0xff] %v392
        %v394 = vld [vmem:[%s324 + $0x110] sm:$0xff]
        %395 = vst [vmem:[%s325 + $0x110] sm:$0xff] %v394
        %v396 = vld [vmem:[%s324 + $0x118] sm:$0xff]
        %397 = vst [vmem:[%s325 + $0x118] sm:$0xff] %v396
        %v398 = vld [vmem:[%s324 + $0x120] sm:$0xff]
        %399 = vst [vmem:[%s325 + $0x120] sm:$0xff] %v398
        %v400 = vld [vmem:[%s324 + $0x128] sm:$0xff]
        %401 = vst [vmem:[%s325 + $0x128] sm:$0xff] %v400
        %v402 = vld [vmem:[%s324 + $0x130] sm:$0xff]
        %403 = vst [vmem:[%s325 + $0x130] sm:$0xff] %v402
        %v404 = vld [vmem:[%s324 + $0x138] sm:$0xff]
        %405 = vst [vmem:[%s325 + $0x138] sm:$0xff] %v404
        %v406 = vld [vmem:[%s324 + $0x140] sm:$0xff]
        %407 = vst [vmem:[%s325 + $0x140] sm:$0xff] %v406
        %v408 = vld [vmem:[%s324 + $0x148] sm:$0xff]
        %409 = vst [vmem:[%s325 + $0x148] sm:$0xff] %v408
        %v410 = vld [vmem:[%s324 + $0x150] sm:$0xff]
        %411 = vst [vmem:[%s325 + $0x150] sm:$0xff] %v410
        %v412 = vld [vmem:[%s324 + $0x158] sm:$0xff]
        %413 = vst [vmem:[%s325 + $0x158] sm:$0xff] %v412
        %v414 = vld [vmem:[%s324 + $0x160] sm:$0xff]
        %415 = vst [vmem:[%s325 + $0x160] sm:$0xff] %v414
        %v416 = vld [vmem:[%s324 + $0x168] sm:$0xff]
        %417 = vst [vmem:[%s325 + $0x168] sm:$0xff] %v416
        %v418 = vld [vmem:[%s324 + $0x170] sm:$0xff]
        %419 = vst [vmem:[%s325 + $0x170] sm:$0xff] %v418
        %v420 = vld [vmem:[%s324 + $0x178] sm:$0xff]
        %421 = vst [vmem:[%s325 + $0x178] sm:$0xff] %v420
        %v422 = vld [vmem:[%s324 + $0x180] sm:$0xff]
        %423 = vst [vmem:[%s325 + $0x180] sm:$0xff] %v422
        %v424 = vld [vmem:[%s324 + $0x188] sm:$0xff]
        %425 = vst [vmem:[%s325 + $0x188] sm:$0xff] %v424
        %v426 = vld [vmem:[%s324 + $0x190] sm:$0xff]
        %427 = vst [vmem:[%s325 + $0x190] sm:$0xff] %v426
        %v428 = vld [vmem:[%s324 + $0x198] sm:$0xff]
        %429 = vst [vmem:[%s325 + $0x198] sm:$0xff] %v428
        %v430 = vld [vmem:[%s324 + $0x1a0] sm:$0xff]
        %431 = vst [vmem:[%s325 + $0x1a0] sm:$0xff] %v430
        %v432 = vld [vmem:[%s324 + $0x1a8] sm:$0xff]
        %433 = vst [vmem:[%s325 + $0x1a8] sm:$0xff] %v432
        %v434 = vld [vmem:[%s324 + $0x1b0] sm:$0xff]
        %435 = vst [vmem:[%s325 + $0x1b0] sm:$0xff] %v434
        %v436 = vld [vmem:[%s324 + $0x1b8] sm:$0xff]
        %437 = vst [vmem:[%s325 + $0x1b8] sm:$0xff] %v436
        %v438 = vld [vmem:[%s324 + $0x1c0] sm:$0xff]
        %439 = vst [vmem:[%s325 + $0x1c0] sm:$0xff] %v438
        %v440 = vld [vmem:[%s324 + $0x1c8] sm:$0xff]
        %441 = vst [vmem:[%s325 + $0x1c8] sm:$0xff] %v440
        %v442 = vld [vmem:[%s324 + $0x1d0] sm:$0xff]
        %443 = vst [vmem:[%s325 + $0x1d0] sm:$0xff] %v442
        %v444 = vld [vmem:[%s324 + $0x1d8] sm:$0xff]
        %445 = vst [vmem:[%s325 + $0x1d8] sm:$0xff] %v444
        %v446 = vld [vmem:[%s324 + $0x1e0] sm:$0xff]
        %447 = vst [vmem:[%s325 + $0x1e0] sm:$0xff] %v446
        %v448 = vld [vmem:[%s324 + $0x1e8] sm:$0xff]
        %449 = vst [vmem:[%s325 + $0x1e8] sm:$0xff] %v448
        %v450 = vld [vmem:[%s324 + $0x1f0] sm:$0xff]
        %451 = vst [vmem:[%s325 + $0x1f0] sm:$0xff] %v450
        %v452 = vld [vmem:[%s324 + $0x1f8] sm:$0xff]
        %453 = vst [vmem:[%s325 + $0x1f8] sm:$0xff] %v452
        %v454 = vld [vmem:[%s324 + $0x200] sm:$0xff]
        %455 = vst [vmem:[%s325 + $0x200] sm:$0xff] %v454
        %v456 = vld [vmem:[%s324 + $0x208] sm:$0xff]
        %457 = vst [vmem:[%s325 + $0x208] sm:$0xff] %v456
        %v458 = vld [vmem:[%s324 + $0x210] sm:$0xff]
        %459 = vst [vmem:[%s325 + $0x210] sm:$0xff] %v458
        %v460 = vld [vmem:[%s324 + $0x218] sm:$0xff]
        %461 = vst [vmem:[%s325 + $0x218] sm:$0xff] %v460
        %v462 = vld [vmem:[%s324 + $0x220] sm:$0xff]
        %463 = vst [vmem:[%s325 + $0x220] sm:$0xff] %v462
        %v464 = vld [vmem:[%s324 + $0x228] sm:$0xff]
        %465 = vst [vmem:[%s325 + $0x228] sm:$0xff] %v464
        %v466 = vld [vmem:[%s324 + $0x230] sm:$0xff]
        %467 = vst [vmem:[%s325 + $0x230] sm:$0xff] %v466
        %v468 = vld [vmem:[%s324 + $0x238] sm:$0xff]
        %469 = vst [vmem:[%s325 + $0x238] sm:$0xff] %v468
        %v470 = vld [vmem:[%s324 + $0x240] sm:$0xff]
        %471 = vst [vmem:[%s325 + $0x240] sm:$0xff] %v470
        %v472 = vld [vmem:[%s324 + $0x248] sm:$0xff]
        %473 = vst [vmem:[%s325 + $0x248] sm:$0xff] %v472
        %v474 = vld [vmem:[%s324 + $0x250] sm:$0xff]
        %475 = vst [vmem:[%s325 + $0x250] sm:$0xff] %v474
        %v476 = vld [vmem:[%s324 + $0x258] sm:$0xff]
        %477 = vst [vmem:[%s325 + $0x258] sm:$0xff] %v476
        %v478 = vld [vmem:[%s324 + $0x260] sm:$0xff]
        %479 = vst [vmem:[%s325 + $0x260] sm:$0xff] %v478
        %v480 = vld [vmem:[%s324 + $0x268] sm:$0xff]
        %481 = vst [vmem:[%s325 + $0x268] sm:$0xff] %v480
        %v482 = vld [vmem:[%s324 + $0x270] sm:$0xff]
        %483 = vst [vmem:[%s325 + $0x270] sm:$0xff] %v482
        %v484 = vld [vmem:[%s324 + $0x278] sm:$0xff]
        %485 = vst [vmem:[%s325 + $0x278] sm:$0xff] %v484
        %v486 = vld [vmem:[%s324 + $0x280] sm:$0xff]
        %487 = vst [vmem:[%s325 + $0x280] sm:$0xff] %v486
        %v488 = vld [vmem:[%s324 + $0x288] sm:$0xff]
        %489 = vst [vmem:[%s325 + $0x288] sm:$0xff] %v488
        %v490 = vld [vmem:[%s324 + $0x290] sm:$0xff]
        %491 = vst [vmem:[%s325 + $0x290] sm:$0xff] %v490
        %v492 = vld [vmem:[%s324 + $0x298] sm:$0xff]
        %493 = vst [vmem:[%s325 + $0x298] sm:$0xff] %v492
        %v494 = vld [vmem:[%s324 + $0x2a0] sm:$0xff]
        %495 = vst [vmem:[%s325 + $0x2a0] sm:$0xff] %v494
        %v496 = vld [vmem:[%s324 + $0x2a8] sm:$0xff]
        %497 = vst [vmem:[%s325 + $0x2a8] sm:$0xff] %v496
        %v498 = vld [vmem:[%s324 + $0x2b0] sm:$0xff]
        %499 = vst [vmem:[%s325 + $0x2b0] sm:$0xff] %v498
        %v500 = vld [vmem:[%s324 + $0x2b8] sm:$0xff]
        %501 = vst [vmem:[%s325 + $0x2b8] sm:$0xff] %v500
        %v502 = vld [vmem:[%s324 + $0x2c0] sm:$0xff]
        %503 = vst [vmem:[%s325 + $0x2c0] sm:$0xff] %v502
        %v504 = vld [vmem:[%s324 + $0x2c8] sm:$0xff]
        %505 = vst [vmem:[%s325 + $0x2c8] sm:$0xff] %v504
        %v506 = vld [vmem:[%s324 + $0x2d0] sm:$0xff]
        %507 = vst [vmem:[%s325 + $0x2d0] sm:$0xff] %v506
        %v508 = vld [vmem:[%s324 + $0x2d8] sm:$0xff]
        %509 = vst [vmem:[%s325 + $0x2d8] sm:$0xff] %v508
        %v510 = vld [vmem:[%s324 + $0x2e0] sm:$0xff]
        %511 = vst [vmem:[%s325 + $0x2e0] sm:$0xff] %v510
        %v512 = vld [vmem:[%s324 + $0x2e8] sm:$0xff]
        %513 = vst [vmem:[%s325 + $0x2e8] sm:$0xff] %v512
        %v514 = vld [vmem:[%s324 + $0x2f0] sm:$0xff]
        %515 = vst [vmem:[%s325 + $0x2f0] sm:$0xff] %v514
        %v516 = vld [vmem:[%s324 + $0x2f8] sm:$0xff]
        %517 = vst [vmem:[%s325 + $0x2f8] sm:$0xff] %v516
        %v518 = vld [vmem:[%s324 + $0x300] sm:$0xff]
        %519 = vst [vmem:[%s325 + $0x300] sm:$0xff] %v518
        %v520 = vld [vmem:[%s324 + $0x308] sm:$0xff]
        %521 = vst [vmem:[%s325 + $0x308] sm:$0xff] %v520
        %v522 = vld [vmem:[%s324 + $0x310] sm:$0xff]
        %523 = vst [vmem:[%s325 + $0x310] sm:$0xff] %v522
        %v524 = vld [vmem:[%s324 + $0x318] sm:$0xff]
        %525 = vst [vmem:[%s325 + $0x318] sm:$0xff] %v524
        %v526 = vld [vmem:[%s324 + $0x320] sm:$0xff]
        %527 = vst [vmem:[%s325 + $0x320] sm:$0xff] %v526
        %v528 = vld [vmem:[%s324 + $0x328] sm:$0xff]
        %529 = vst [vmem:[%s325 + $0x328] sm:$0xff] %v528
        %v530 = vld [vmem:[%s324 + $0x330] sm:$0xff]
        %531 = vst [vmem:[%s325 + $0x330] sm:$0xff] %v530
        %v532 = vld [vmem:[%s324 + $0x338] sm:$0xff]
        %533 = vst [vmem:[%s325 + $0x338] sm:$0xff] %v532
        %v534 = vld [vmem:[%s324 + $0x340] sm:$0xff]
        %535 = vst [vmem:[%s325 + $0x340] sm:$0xff] %v534
        %v536 = vld [vmem:[%s324 + $0x348] sm:$0xff]
        %537 = vst [vmem:[%s325 + $0x348] sm:$0xff] %v536
        %v538 = vld [vmem:[%s324 + $0x350] sm:$0xff]
        %539 = vst [vmem:[%s325 + $0x350] sm:$0xff] %v538
        %v540 = vld [vmem:[%s324 + $0x358] sm:$0xff]
        %541 = vst [vmem:[%s325 + $0x358] sm:$0xff] %v540
        %v542 = vld [vmem:[%s324 + $0x360] sm:$0xff]
        %543 = vst [vmem:[%s325 + $0x360] sm:$0xff] %v542
        %v544 = vld [vmem:[%s324 + $0x368] sm:$0xff]
        %545 = vst [vmem:[%s325 + $0x368] sm:$0xff] %v544
        %v546 = vld [vmem:[%s324 + $0x370] sm:$0xff]
        %547 = vst [vmem:[%s325 + $0x370] sm:$0xff] %v546
        %v548 = vld [vmem:[%s324 + $0x378] sm:$0xff]
        %549 = vst [vmem:[%s325 + $0x378] sm:$0xff] %v548
        %v550 = vld [vmem:[%s324 + $0x380] sm:$0xff]
        %551 = vst [vmem:[%s325 + $0x380] sm:$0xff] %v550
        %v552 = vld [vmem:[%s324 + $0x388] sm:$0xff]
        %553 = vst [vmem:[%s325 + $0x388] sm:$0xff] %v552
        %v554 = vld [vmem:[%s324 + $0x390] sm:$0xff]
        %555 = vst [vmem:[%s325 + $0x390] sm:$0xff] %v554
        %v556 = vld [vmem:[%s324 + $0x398] sm:$0xff]
        %557 = vst [vmem:[%s325 + $0x398] sm:$0xff] %v556
        %v558 = vld [vmem:[%s324 + $0x3a0] sm:$0xff]
        %559 = vst [vmem:[%s325 + $0x3a0] sm:$0xff] %v558
        %v560 = vld [vmem:[%s324 + $0x3a8] sm:$0xff]
        %561 = vst [vmem:[%s325 + $0x3a8] sm:$0xff] %v560
        %v562 = vld [vmem:[%s324 + $0x3b0] sm:$0xff]
        %563 = vst [vmem:[%s325 + $0x3b0] sm:$0xff] %v562
        %v564 = vld [vmem:[%s324 + $0x3b8] sm:$0xff]
        %565 = vst [vmem:[%s325 + $0x3b8] sm:$0xff] %v564
        %v566 = vld [vmem:[%s324 + $0x3c0] sm:$0xff]
        %567 = vst [vmem:[%s325 + $0x3c0] sm:$0xff] %v566
        %v568 = vld [vmem:[%s324 + $0x3c8] sm:$0xff]
        %569 = vst [vmem:[%s325 + $0x3c8] sm:$0xff] %v568
        %v570 = vld [vmem:[%s324 + $0x3d0] sm:$0xff]
        %571 = vst [vmem:[%s325 + $0x3d0] sm:$0xff] %v570
        %v572 = vld [vmem:[%s324 + $0x3d8] sm:$0xff]
        %573 = vst [vmem:[%s325 + $0x3d8] sm:$0xff] %v572
        %v574 = vld [vmem:[%s324 + $0x3e0] sm:$0xff]
        %575 = vst [vmem:[%s325 + $0x3e0] sm:$0xff] %v574
        %v576 = vld [vmem:[%s324 + $0x3e8] sm:$0xff]
        %577 = vst [vmem:[%s325 + $0x3e8] sm:$0xff] %v576
        %v578 = vld [vmem:[%s324 + $0x3f0] sm:$0xff]
        %579 = vst [vmem:[%s325 + $0x3f0] sm:$0xff] %v578
        %v580 = vld [vmem:[%s324 + $0x3f8] sm:$0xff]
        %581 = vst [vmem:[%s325 + $0x3f8] sm:$0xff] %v580
      $region49: #{rnn_model_forward.1} parent=43 // loop_footer
        %s323 = sadd.s32 1, %s319
      $region50: #{rnn_model_forward.1} parent=43 // loop_footer_branch
        %318 = sbr.rel target = $region46
      $region51: #{rnn_model_forward.1} parent=43 // loop_exit
        _
    $region44: #{rnn_model_forward.1} parent=1 // pred_fallthru
      _
    // Predicated region
    $region52: #{rnn_model_forward.1} parent=1 // pred_check
      _
    $region53: #{rnn_model_forward.1} parent=1 // pred_check_branch
      %583 = sbr.rel target = $region55
    $region54: #{rnn_model_forward.1} parent=1 // pred_region
      _
    $region55: #{rnn_model_forward.1} parent=1 // pred_fallthru
      _
    // Predicated region
    $region56: #{rnn_model_forward.1} parent=1 // pred_check
      _
    $region57: #{rnn_model_forward.1} parent=1 // pred_check_branch
      %586 = sbr.rel (0) target = $region59
    $region58: #{rnn_model_forward.1} parent=1 // pred_region
      %587 = vsyncadd %s315, 16384
    $region59: #{rnn_model_forward.1} parent=1 // pred_fallthru
      _
    %s588 = scalar_lea.sflag [#allocation9], 2
    // Predicated region
    $region60: #{rnn_model_forward.1} parent=1 // pred_check
      _
    $region61: #{rnn_model_forward.1} parent=1 // pred_check_branch
      %590 = sbr.rel target = $region63
    $region62: #{rnn_model_forward.1} parent=1 // pred_region
      %591 = sst [smem:[#allocation21]] [#allocation20]
      %592 = sst [smem:[#allocation22]] [#allocation19]
    $region63: #{rnn_model_forward.1} parent=1 // pred_fallthru
      _
    %594 = shalt.err (0)
    %s596 = sshll.u32 %s6, 4
    %s597 = int_to_ptr.hbm [resolvable:$true] %s596
    %s598 = sshll.u32 [#allocation6], 4
    %s599 = int_to_ptr.vmem [resolvable:$true] %s598
    %601 = dma.hbm_to_vmem [thread:$0]  %s597, 128, %s599, %s588
    %s602 = scalar_lea.sflag [#allocation9], 3
    // Predicated region
    $region64: #{rnn_model_forward.1} parent=1 // pred_check
      _
    $region65: #{rnn_model_forward.1} parent=1 // pred_check_branch
      %604 = sbr.rel target = $region67
    $region66: #{rnn_model_forward.1} parent=1 // pred_region
      %605 = sst [smem:[#allocation21]] [#allocation24]
      %606 = sst [smem:[#allocation22]] [#allocation23]
    $region67: #{rnn_model_forward.1} parent=1 // pred_fallthru
      _
    %608 = shalt.err (0)
    %s610 = sshll.u32 %s7, 4
    %s611 = int_to_ptr.hbm [resolvable:$true] %s610
    %s612 = sshll.u32 [#allocation7], 4
    %s613 = int_to_ptr.vmem [resolvable:$true] %s612
    %615 = dma.hbm_to_vmem [thread:$0]  %s611, 2048, %s613, %s602
    %s616 = scalar_lea.sflag [#allocation9], 4
    // Predicated region
    $region68: #{rnn_model_forward.1} parent=1 // pred_check
      _
    $region69: #{rnn_model_forward.1} parent=1 // pred_check_branch
      %618 = sbr.rel target = $region71
    $region70: #{rnn_model_forward.1} parent=1 // pred_region
      // Predicated region
      $region83: #{rnn_model_forward.1} parent=70 // pred_check
        _
      $region84: #{rnn_model_forward.1} parent=70 // pred_check_branch
        %634 = sbr.rel (0) target = $region86
      $region85: #{rnn_model_forward.1} parent=70 // pred_region
        %s636 = ssub.s32 2, 1
        loop: start=0, step=1, limit=1
        $region87: #{rnn_model_forward.1} parent=85 // loop_pre_header
          _
        $region88: #{rnn_model_forward.1} parent=85 // loop_header
          %s638 = sphi 0, %s642
          %p639 = scmp.ge.s32.totalorder %s638, 1
          %s643 = sphi %s8, %s8
          %s644 = sphi [#allocation8], [#allocation8]
        $region89: #{rnn_model_forward.1} parent=85 // loop_header_branch
          %641 = sbr.rel (%p639) target = $region93
        $region90: #{rnn_model_forward.1} parent=85 // loop_body
          %v645 = vld [vmem:[%s643] sm:%s636]
          %646 = vst [vmem:[%s644] sm:%s636] %v645
        $region91: #{rnn_model_forward.1} parent=85 // loop_footer
          %s642 = sadd.s32 1, %s638
        $region92: #{rnn_model_forward.1} parent=85 // loop_footer_branch
          %637 = sbr.rel target = $region88
        $region93: #{rnn_model_forward.1} parent=85 // loop_exit
          _
      $region86: #{rnn_model_forward.1} parent=70 // pred_fallthru
        _
    $region71: #{rnn_model_forward.1} parent=1 // pred_fallthru
      _
    // Predicated region
    $region72: #{rnn_model_forward.1} parent=1 // pred_check
      _
    $region73: #{rnn_model_forward.1} parent=1 // pred_check_branch
      %620 = sbr.rel (0) target = $region75
    $region74: #{rnn_model_forward.1} parent=1 // pred_region
      %s622 = ssub.s32 2, 1
      loop: start=0, step=1, limit=1
      $region76: #{rnn_model_forward.1} parent=74 // loop_pre_header
        _
      $region77: #{rnn_model_forward.1} parent=74 // loop_header
        %s624 = sphi 0, %s628
        %p625 = scmp.ge.s32.totalorder %s624, 1
        %s629 = sphi %s8, %s8
        %s630 = sphi [#allocation8], [#allocation8]
      $region78: #{rnn_model_forward.1} parent=74 // loop_header_branch
        %627 = sbr.rel (%p625) target = $region82
      $region79: #{rnn_model_forward.1} parent=74 // loop_body
        %v631 = vld [vmem:[%s629] sm:%s622]
        %632 = vst [vmem:[%s630] sm:%s622] %v631
      $region80: #{rnn_model_forward.1} parent=74 // loop_footer
        %s628 = sadd.s32 1, %s624
      $region81: #{rnn_model_forward.1} parent=74 // loop_footer_branch
        %623 = sbr.rel target = $region77
      $region82: #{rnn_model_forward.1} parent=74 // loop_exit
        _
    $region75: #{rnn_model_forward.1} parent=1 // pred_fallthru
      _
    // Predicated region
    $region94: #{rnn_model_forward.1} parent=1 // pred_check
      _
    $region95: #{rnn_model_forward.1} parent=1 // pred_check_branch
      %649 = sbr.rel (0) target = $region97
    $region96: #{rnn_model_forward.1} parent=1 // pred_region
      %650 = vsyncadd %s616, 16
    $region97: #{rnn_model_forward.1} parent=1 // pred_fallthru
      _
    %v651 = vld [vmem:[%s3] sm:$0xff]
    %v652 = vld [vmem:[%s3 + $0x8] sm:$0xff]
    %v653 = vld [vmem:[%s3 + $0x10] sm:$0xff]
    %v654 = vld [vmem:[%s3 + $0x18] sm:$0xff]
    %v655 = vld [vmem:[%s3 + $0x20] sm:$0xff]
    %v656 = vld [vmem:[%s3 + $0x28] sm:$0xff]
    %v657 = vld [vmem:[%s3 + $0x30] sm:$0xff]
    %v658 = vld [vmem:[%s3 + $0x38] sm:$0xff]
    %v659 = vld [vmem:[%s3 + $0x40] sm:$0xff]
    %v660 = vld [vmem:[%s3 + $0x48] sm:$0xff]
    %v661 = vld [vmem:[%s3 + $0x50] sm:$0xff]
    %v662 = vld [vmem:[%s3 + $0x58] sm:$0xff]
    %v663 = vld [vmem:[%s3 + $0x60] sm:$0xff]
    %v664 = vld [vmem:[%s3 + $0x68] sm:$0xff]
    %v665 = vld [vmem:[%s3 + $0x70] sm:$0xff]
    %v666 = vld [vmem:[%s3 + $0x78] sm:$0xff]
    %v667 = vld [vmem:[%s3 + $0x80] sm:$0xff]
    %v668 = vld [vmem:[%s3 + $0x88] sm:$0xff]
    %v669 = vld [vmem:[%s3 + $0x90] sm:$0xff]
    %v670 = vld [vmem:[%s3 + $0x98] sm:$0xff]
    %v671 = vld [vmem:[%s3 + $0xa0] sm:$0xff]
    %v672 = vld [vmem:[%s3 + $0xa8] sm:$0xff]
    %v673 = vld [vmem:[%s3 + $0xb0] sm:$0xff]
    %v674 = vld [vmem:[%s3 + $0xb8] sm:$0xff]
    %v675 = vld [vmem:[%s3 + $0xc0] sm:$0xff]
    %v676 = vld [vmem:[%s3 + $0xc8] sm:$0xff]
    %v677 = vld [vmem:[%s3 + $0xd0] sm:$0xff]
    %v678 = vld [vmem:[%s3 + $0xd8] sm:$0xff]
    %v679 = vld [vmem:[%s3 + $0xe0] sm:$0xff]
    %v680 = vld [vmem:[%s3 + $0xe8] sm:$0xff]
    %v681 = vld [vmem:[%s3 + $0xf0] sm:$0xff]
    %v682 = vld [vmem:[%s3 + $0xf8] sm:$0xff]
    %v683 = vld [vmem:[%s3 + $0x100] sm:$0xff]
    %v684 = vld [vmem:[%s3 + $0x108] sm:$0xff]
    %v685 = vld [vmem:[%s3 + $0x110] sm:$0xff]
    %v686 = vld [vmem:[%s3 + $0x118] sm:$0xff]
    %v687 = vld [vmem:[%s3 + $0x120] sm:$0xff]
    %v688 = vld [vmem:[%s3 + $0x128] sm:$0xff]
    %v689 = vld [vmem:[%s3 + $0x130] sm:$0xff]
    %v690 = vld [vmem:[%s3 + $0x138] sm:$0xff]
    %v691 = vld [vmem:[%s3 + $0x140] sm:$0xff]
    %v692 = vld [vmem:[%s3 + $0x148] sm:$0xff]
    %v693 = vld [vmem:[%s3 + $0x150] sm:$0xff]
    %v694 = vld [vmem:[%s3 + $0x158] sm:$0xff]
    %v695 = vld [vmem:[%s3 + $0x160] sm:$0xff]
    %v696 = vld [vmem:[%s3 + $0x168] sm:$0xff]
    %v697 = vld [vmem:[%s3 + $0x170] sm:$0xff]
    %v698 = vld [vmem:[%s3 + $0x178] sm:$0xff]
    %v699 = vld [vmem:[%s3 + $0x180] sm:$0xff]
    %v700 = vld [vmem:[%s3 + $0x188] sm:$0xff]
    %v701 = vld [vmem:[%s3 + $0x190] sm:$0xff]
    %v702 = vld [vmem:[%s3 + $0x198] sm:$0xff]
    %v703 = vld [vmem:[%s3 + $0x1a0] sm:$0xff]
    %v704 = vld [vmem:[%s3 + $0x1a8] sm:$0xff]
    %v705 = vld [vmem:[%s3 + $0x1b0] sm:$0xff]
    %v706 = vld [vmem:[%s3 + $0x1b8] sm:$0xff]
    %v707 = vld [vmem:[%s3 + $0x1c0] sm:$0xff]
    %v708 = vld [vmem:[%s3 + $0x1c8] sm:$0xff]
    %v709 = vld [vmem:[%s3 + $0x1d0] sm:$0xff]
    %v710 = vld [vmem:[%s3 + $0x1d8] sm:$0xff]
    %v711 = vld [vmem:[%s3 + $0x1e0] sm:$0xff]
    %v712 = vld [vmem:[%s3 + $0x1e8] sm:$0xff]
    %v713 = vld [vmem:[%s3 + $0x1f0] sm:$0xff]
    %v714 = vld [vmem:[%s3 + $0x1f8] sm:$0xff]
    %v715 = vld [vmem:[%s3 + $0x200] sm:$0xff]
    %v716 = vld [vmem:[%s3 + $0x208] sm:$0xff]
    %v717 = vld [vmem:[%s3 + $0x210] sm:$0xff]
    %v718 = vld [vmem:[%s3 + $0x218] sm:$0xff]
    %v719 = vld [vmem:[%s3 + $0x220] sm:$0xff]
    %v720 = vld [vmem:[%s3 + $0x228] sm:$0xff]
    %v721 = vld [vmem:[%s3 + $0x230] sm:$0xff]
    %v722 = vld [vmem:[%s3 + $0x238] sm:$0xff]
    %v723 = vld [vmem:[%s3 + $0x240] sm:$0xff]
    %v724 = vld [vmem:[%s3 + $0x248] sm:$0xff]
    %v725 = vld [vmem:[%s3 + $0x250] sm:$0xff]
    %v726 = vld [vmem:[%s3 + $0x258] sm:$0xff]
    %v727 = vld [vmem:[%s3 + $0x260] sm:$0xff]
    %v728 = vld [vmem:[%s3 + $0x268] sm:$0xff]
    %v729 = vld [vmem:[%s3 + $0x270] sm:$0xff]
    %v730 = vld [vmem:[%s3 + $0x278] sm:$0xff]
    %v731 = vld [vmem:[%s3 + $0x280] sm:$0xff]
    %v732 = vld [vmem:[%s3 + $0x288] sm:$0xff]
    %v733 = vld [vmem:[%s3 + $0x290] sm:$0xff]
    %v734 = vld [vmem:[%s3 + $0x298] sm:$0xff]
    %v735 = vld [vmem:[%s3 + $0x2a0] sm:$0xff]
    %v736 = vld [vmem:[%s3 + $0x2a8] sm:$0xff]
    %v737 = vld [vmem:[%s3 + $0x2b0] sm:$0xff]
    %v738 = vld [vmem:[%s3 + $0x2b8] sm:$0xff]
    %v739 = vld [vmem:[%s3 + $0x2c0] sm:$0xff]
    %v740 = vld [vmem:[%s3 + $0x2c8] sm:$0xff]
    %v741 = vld [vmem:[%s3 + $0x2d0] sm:$0xff]
    %v742 = vld [vmem:[%s3 + $0x2d8] sm:$0xff]
    %v743 = vld [vmem:[%s3 + $0x2e0] sm:$0xff]
    %v744 = vld [vmem:[%s3 + $0x2e8] sm:$0xff]
    %v745 = vld [vmem:[%s3 + $0x2f0] sm:$0xff]
    %v746 = vld [vmem:[%s3 + $0x2f8] sm:$0xff]
    %v747 = vld [vmem:[%s3 + $0x300] sm:$0xff]
    %v748 = vld [vmem:[%s3 + $0x308] sm:$0xff]
    %v749 = vld [vmem:[%s3 + $0x310] sm:$0xff]
    %v750 = vld [vmem:[%s3 + $0x318] sm:$0xff]
    %v751 = vld [vmem:[%s3 + $0x320] sm:$0xff]
    %v752 = vld [vmem:[%s3 + $0x328] sm:$0xff]
    %v753 = vld [vmem:[%s3 + $0x330] sm:$0xff]
    %v754 = vld [vmem:[%s3 + $0x338] sm:$0xff]
    %v755 = vld [vmem:[%s3 + $0x340] sm:$0xff]
    %v756 = vld [vmem:[%s3 + $0x348] sm:$0xff]
    %v757 = vld [vmem:[%s3 + $0x350] sm:$0xff]
    %v758 = vld [vmem:[%s3 + $0x358] sm:$0xff]
    %v759 = vld [vmem:[%s3 + $0x360] sm:$0xff]
    %v760 = vld [vmem:[%s3 + $0x368] sm:$0xff]
    %v761 = vld [vmem:[%s3 + $0x370] sm:$0xff]
    %v762 = vld [vmem:[%s3 + $0x378] sm:$0xff]
    %v763 = vld [vmem:[%s3 + $0x380] sm:$0xff]
    %v764 = vld [vmem:[%s3 + $0x388] sm:$0xff]
    %v765 = vld [vmem:[%s3 + $0x390] sm:$0xff]
    %v766 = vld [vmem:[%s3 + $0x398] sm:$0xff]
    %v767 = vld [vmem:[%s3 + $0x3a0] sm:$0xff]
    %v768 = vld [vmem:[%s3 + $0x3a8] sm:$0xff]
    %v769 = vld [vmem:[%s3 + $0x3b0] sm:$0xff]
    %v770 = vld [vmem:[%s3 + $0x3b8] sm:$0xff]
    %v771 = vld [vmem:[%s3 + $0x3c0] sm:$0xff]
    %v772 = vld [vmem:[%s3 + $0x3c8] sm:$0xff]
    %v773 = vld [vmem:[%s3 + $0x3d0] sm:$0xff]
    %v774 = vld [vmem:[%s3 + $0x3d8] sm:$0xff]
    %v775 = vld [vmem:[%s3 + $0x3e0] sm:$0xff]
    %v776 = vld [vmem:[%s3 + $0x3e8] sm:$0xff]
    %v777 = vld [vmem:[%s3 + $0x3f0] sm:$0xff]
    %v778 = vld [vmem:[%s3 + $0x3f8] sm:$0xff]
    %v779 = vld [vmem:[%s1] sm:$0xff]
    %v780 = vld [vmem:[%s1 + $0x8] sm:$0xff]
    %v781 = vld [vmem:[#allocation10] sm:$0xff]
    %v782 = vld [vmem:[#allocation10 + $0x8] sm:$0xff]
    %v783 = vld [vmem:[%s0] sm:$0xff]
    %v784 = vld [vmem:[%s0 + $0x8] sm:$0xff]
    %v785 = vld [vmem:[%s0 + $0x10] sm:$0xff]
    %v786 = vld [vmem:[%s0 + $0x18] sm:$0xff]
    %v787 = vld [vmem:[%s0 + $0x20] sm:$0xff]
    %v788 = vld [vmem:[%s0 + $0x28] sm:$0xff]
    %v789 = vld [vmem:[%s0 + $0x30] sm:$0xff]
    %v790 = vld [vmem:[%s0 + $0x38] sm:$0xff]
    %v791 = vpack.c.bf16 %v779, %v779
    %v792 = vpack.c.bf16 %v780, %v780
    %v921 = vunpack.c.l.b16 %v651
    %v922 = vunpack.c.h.b16 %v651
    %v923 = vunpack.c.l.b16 %v652
    %v924 = vunpack.c.h.b16 %v652
    %v925 = vunpack.c.l.b16 %v653
    %v926 = vunpack.c.h.b16 %v653
    %v927 = vunpack.c.l.b16 %v654
    %v928 = vunpack.c.h.b16 %v654
    %v929 = vunpack.c.l.b16 %v655
    %v930 = vunpack.c.h.b16 %v655
    %v931 = vunpack.c.l.b16 %v656
    %v932 = vunpack.c.h.b16 %v656
    %v933 = vunpack.c.l.b16 %v657
    %v934 = vunpack.c.h.b16 %v657
    %v935 = vunpack.c.l.b16 %v658
    %v936 = vunpack.c.h.b16 %v658
    %v937 = vunpack.c.l.b16 %v659
    %v938 = vunpack.c.h.b16 %v659
    %v939 = vunpack.c.l.b16 %v660
    %v940 = vunpack.c.h.b16 %v660
    %v941 = vunpack.c.l.b16 %v661
    %v942 = vunpack.c.h.b16 %v661
    %v943 = vunpack.c.l.b16 %v662
    %v944 = vunpack.c.h.b16 %v662
    %v945 = vunpack.c.l.b16 %v663
    %v946 = vunpack.c.h.b16 %v663
    %v947 = vunpack.c.l.b16 %v664
    %v948 = vunpack.c.h.b16 %v664
    %v949 = vunpack.c.l.b16 %v665
    %v950 = vunpack.c.h.b16 %v665
    %v951 = vunpack.c.l.b16 %v666
    %v952 = vunpack.c.h.b16 %v666
    %v953 = vunpack.c.l.b16 %v667
    %v954 = vunpack.c.h.b16 %v667
    %v955 = vunpack.c.l.b16 %v668
    %v956 = vunpack.c.h.b16 %v668
    %v957 = vunpack.c.l.b16 %v669
    %v958 = vunpack.c.h.b16 %v669
    %v959 = vunpack.c.l.b16 %v670
    %v960 = vunpack.c.h.b16 %v670
    %v961 = vunpack.c.l.b16 %v671
    %v962 = vunpack.c.h.b16 %v671
    %v963 = vunpack.c.l.b16 %v672
    %v964 = vunpack.c.h.b16 %v672
    %v965 = vunpack.c.l.b16 %v673
    %v966 = vunpack.c.h.b16 %v673
    %v967 = vunpack.c.l.b16 %v674
    %v968 = vunpack.c.h.b16 %v674
    %v969 = vunpack.c.l.b16 %v675
    %v970 = vunpack.c.h.b16 %v675
    %v971 = vunpack.c.l.b16 %v676
    %v972 = vunpack.c.h.b16 %v676
    %v973 = vunpack.c.l.b16 %v677
    %v974 = vunpack.c.h.b16 %v677
    %v975 = vunpack.c.l.b16 %v678
    %v976 = vunpack.c.h.b16 %v678
    %v977 = vunpack.c.l.b16 %v679
    %v978 = vunpack.c.h.b16 %v679
    %v979 = vunpack.c.l.b16 %v680
    %v980 = vunpack.c.h.b16 %v680
    %v981 = vunpack.c.l.b16 %v681
    %v982 = vunpack.c.h.b16 %v681
    %v983 = vunpack.c.l.b16 %v682
    %v984 = vunpack.c.h.b16 %v682
    %v985 = vunpack.c.l.b16 %v683
    %v986 = vunpack.c.h.b16 %v683
    %v987 = vunpack.c.l.b16 %v684
    %v988 = vunpack.c.h.b16 %v684
    %v989 = vunpack.c.l.b16 %v685
    %v990 = vunpack.c.h.b16 %v685
    %v991 = vunpack.c.l.b16 %v686
    %v992 = vunpack.c.h.b16 %v686
    %v993 = vunpack.c.l.b16 %v687
    %v994 = vunpack.c.h.b16 %v687
    %v995 = vunpack.c.l.b16 %v688
    %v996 = vunpack.c.h.b16 %v688
    %v997 = vunpack.c.l.b16 %v689
    %v998 = vunpack.c.h.b16 %v689
    %v999 = vunpack.c.l.b16 %v690
    %v1000 = vunpack.c.h.b16 %v690
    %v1001 = vunpack.c.l.b16 %v691
    %v1002 = vunpack.c.h.b16 %v691
    %v1003 = vunpack.c.l.b16 %v692
    %v1004 = vunpack.c.h.b16 %v692
    %v1005 = vunpack.c.l.b16 %v693
    %v1006 = vunpack.c.h.b16 %v693
    %v1007 = vunpack.c.l.b16 %v694
    %v1008 = vunpack.c.h.b16 %v694
    %v1009 = vunpack.c.l.b16 %v695
    %v1010 = vunpack.c.h.b16 %v695
    %v1011 = vunpack.c.l.b16 %v696
    %v1012 = vunpack.c.h.b16 %v696
    %v1013 = vunpack.c.l.b16 %v697
    %v1014 = vunpack.c.h.b16 %v697
    %v1015 = vunpack.c.l.b16 %v698
    %v1016 = vunpack.c.h.b16 %v698
    %v1017 = vunpack.c.l.b16 %v699
    %v1018 = vunpack.c.h.b16 %v699
    %v1019 = vunpack.c.l.b16 %v700
    %v1020 = vunpack.c.h.b16 %v700
    %v1021 = vunpack.c.l.b16 %v701
    %v1022 = vunpack.c.h.b16 %v701
    %v1023 = vunpack.c.l.b16 %v702
    %v1024 = vunpack.c.h.b16 %v702
    %v1025 = vunpack.c.l.b16 %v703
    %v1026 = vunpack.c.h.b16 %v703
    %v1027 = vunpack.c.l.b16 %v704
    %v1028 = vunpack.c.h.b16 %v704
    %v1029 = vunpack.c.l.b16 %v705
    %v1030 = vunpack.c.h.b16 %v705
    %v1031 = vunpack.c.l.b16 %v706
    %v1032 = vunpack.c.h.b16 %v706
    %v1033 = vunpack.c.l.b16 %v707
    %v1034 = vunpack.c.h.b16 %v707
    %v1035 = vunpack.c.l.b16 %v708
    %v1036 = vunpack.c.h.b16 %v708
    %v1037 = vunpack.c.l.b16 %v709
    %v1038 = vunpack.c.h.b16 %v709
    %v1039 = vunpack.c.l.b16 %v710
    %v1040 = vunpack.c.h.b16 %v710
    %v1041 = vunpack.c.l.b16 %v711
    %v1042 = vunpack.c.h.b16 %v711
    %v1043 = vunpack.c.l.b16 %v712
    %v1044 = vunpack.c.h.b16 %v712
    %v1045 = vunpack.c.l.b16 %v713
    %v1046 = vunpack.c.h.b16 %v713
    %v1047 = vunpack.c.l.b16 %v714
    %v1048 = vunpack.c.h.b16 %v714
    %v1049 = vunpack.c.l.b16 %v715
    %v1050 = vunpack.c.h.b16 %v715
    %v1051 = vunpack.c.l.b16 %v716
    %v1052 = vunpack.c.h.b16 %v716
    %v1053 = vunpack.c.l.b16 %v717
    %v1054 = vunpack.c.h.b16 %v717
    %v1055 = vunpack.c.l.b16 %v718
    %v1056 = vunpack.c.h.b16 %v718
    %v1057 = vunpack.c.l.b16 %v719
    %v1058 = vunpack.c.h.b16 %v719
    %v1059 = vunpack.c.l.b16 %v720
    %v1060 = vunpack.c.h.b16 %v720
    %v1061 = vunpack.c.l.b16 %v721
    %v1062 = vunpack.c.h.b16 %v721
    %v1063 = vunpack.c.l.b16 %v722
    %v1064 = vunpack.c.h.b16 %v722
    %v1065 = vunpack.c.l.b16 %v723
    %v1066 = vunpack.c.h.b16 %v723
    %v1067 = vunpack.c.l.b16 %v724
    %v1068 = vunpack.c.h.b16 %v724
    %v1069 = vunpack.c.l.b16 %v725
    %v1070 = vunpack.c.h.b16 %v725
    %v1071 = vunpack.c.l.b16 %v726
    %v1072 = vunpack.c.h.b16 %v726
    %v1073 = vunpack.c.l.b16 %v727
    %v1074 = vunpack.c.h.b16 %v727
    %v1075 = vunpack.c.l.b16 %v728
    %v1076 = vunpack.c.h.b16 %v728
    %v1077 = vunpack.c.l.b16 %v729
    %v1078 = vunpack.c.h.b16 %v729
    %v1079 = vunpack.c.l.b16 %v730
    %v1080 = vunpack.c.h.b16 %v730
    %v1081 = vunpack.c.l.b16 %v731
    %v1082 = vunpack.c.h.b16 %v731
    %v1083 = vunpack.c.l.b16 %v732
    %v1084 = vunpack.c.h.b16 %v732
    %v1085 = vunpack.c.l.b16 %v733
    %v1086 = vunpack.c.h.b16 %v733
    %v1087 = vunpack.c.l.b16 %v734
    %v1088 = vunpack.c.h.b16 %v734
    %v1089 = vunpack.c.l.b16 %v735
    %v1090 = vunpack.c.h.b16 %v735
    %v1091 = vunpack.c.l.b16 %v736
    %v1092 = vunpack.c.h.b16 %v736
    %v1093 = vunpack.c.l.b16 %v737
    %v1094 = vunpack.c.h.b16 %v737
    %v1095 = vunpack.c.l.b16 %v738
    %v1096 = vunpack.c.h.b16 %v738
    %v1097 = vunpack.c.l.b16 %v739
    %v1098 = vunpack.c.h.b16 %v739
    %v1099 = vunpack.c.l.b16 %v740
    %v1100 = vunpack.c.h.b16 %v740
    %v1101 = vunpack.c.l.b16 %v741
    %v1102 = vunpack.c.h.b16 %v741
    %v1103 = vunpack.c.l.b16 %v742
    %v1104 = vunpack.c.h.b16 %v742
    %v1105 = vunpack.c.l.b16 %v743
    %v1106 = vunpack.c.h.b16 %v743
    %v1107 = vunpack.c.l.b16 %v744
    %v1108 = vunpack.c.h.b16 %v744
    %v1109 = vunpack.c.l.b16 %v745
    %v1110 = vunpack.c.h.b16 %v745
    %v1111 = vunpack.c.l.b16 %v746
    %v1112 = vunpack.c.h.b16 %v746
    %v1113 = vunpack.c.l.b16 %v747
    %v1114 = vunpack.c.h.b16 %v747
    %v1115 = vunpack.c.l.b16 %v748
    %v1116 = vunpack.c.h.b16 %v748
    %v1117 = vunpack.c.l.b16 %v749
    %v1118 = vunpack.c.h.b16 %v749
    %v1119 = vunpack.c.l.b16 %v750
    %v1120 = vunpack.c.h.b16 %v750
    %v1121 = vunpack.c.l.b16 %v751
    %v1122 = vunpack.c.h.b16 %v751
    %v1123 = vunpack.c.l.b16 %v752
    %v1124 = vunpack.c.h.b16 %v752
    %v1125 = vunpack.c.l.b16 %v753
    %v1126 = vunpack.c.h.b16 %v753
    %v1127 = vunpack.c.l.b16 %v754
    %v1128 = vunpack.c.h.b16 %v754
    %v1129 = vunpack.c.l.b16 %v755
    %v1130 = vunpack.c.h.b16 %v755
    %v1131 = vunpack.c.l.b16 %v756
    %v1132 = vunpack.c.h.b16 %v756
    %v1133 = vunpack.c.l.b16 %v757
    %v1134 = vunpack.c.h.b16 %v757
    %v1135 = vunpack.c.l.b16 %v758
    %v1136 = vunpack.c.h.b16 %v758
    %v1137 = vunpack.c.l.b16 %v759
    %v1138 = vunpack.c.h.b16 %v759
    %v1139 = vunpack.c.l.b16 %v760
    %v1140 = vunpack.c.h.b16 %v760
    %v1141 = vunpack.c.l.b16 %v761
    %v1142 = vunpack.c.h.b16 %v761
    %v1143 = vunpack.c.l.b16 %v762
    %v1144 = vunpack.c.h.b16 %v762
    %v1145 = vunpack.c.l.b16 %v763
    %v1146 = vunpack.c.h.b16 %v763
    %v1147 = vunpack.c.l.b16 %v764
    %v1148 = vunpack.c.h.b16 %v764
    %v1149 = vunpack.c.l.b16 %v765
    %v1150 = vunpack.c.h.b16 %v765
    %v1151 = vunpack.c.l.b16 %v766
    %v1152 = vunpack.c.h.b16 %v766
    %v1153 = vunpack.c.l.b16 %v767
    %v1154 = vunpack.c.h.b16 %v767
    %v1155 = vunpack.c.l.b16 %v768
    %v1156 = vunpack.c.h.b16 %v768
    %v1157 = vunpack.c.l.b16 %v769
    %v1158 = vunpack.c.h.b16 %v769
    %v1159 = vunpack.c.l.b16 %v770
    %v1160 = vunpack.c.h.b16 %v770
    %v1161 = vunpack.c.l.b16 %v771
    %v1162 = vunpack.c.h.b16 %v771
    %v1163 = vunpack.c.l.b16 %v772
    %v1164 = vunpack.c.h.b16 %v772
    %v1165 = vunpack.c.l.b16 %v773
    %v1166 = vunpack.c.h.b16 %v773
    %v1167 = vunpack.c.l.b16 %v774
    %v1168 = vunpack.c.h.b16 %v774
    %v1169 = vunpack.c.l.b16 %v775
    %v1170 = vunpack.c.h.b16 %v775
    %v1171 = vunpack.c.l.b16 %v776
    %v1172 = vunpack.c.h.b16 %v776
    %v1173 = vunpack.c.l.b16 %v777
    %v1174 = vunpack.c.h.b16 %v777
    %v1175 = vunpack.c.l.b16 %v778
    %v1176 = vunpack.c.h.b16 %v778
    %v1177 = vpack.c.b16 %v929, %v921
    %v1178 = vpack.c.b16 %v930, %v922
    %v1179 = vpack.c.b16 %v931, %v923
    %v1180 = vpack.c.b16 %v932, %v924
    %v1181 = vpack.c.b16 %v933, %v925
    %v1182 = vpack.c.b16 %v934, %v926
    %v1183 = vpack.c.b16 %v935, %v927
    %v1184 = vpack.c.b16 %v936, %v928
    %v1185 = vpack.c.b16 %v945, %v937
    %v1186 = vpack.c.b16 %v946, %v938
    %v1187 = vpack.c.b16 %v947, %v939
    %v1188 = vpack.c.b16 %v948, %v940
    %v1189 = vpack.c.b16 %v949, %v941
    %v1190 = vpack.c.b16 %v950, %v942
    %v1191 = vpack.c.b16 %v951, %v943
    %v1192 = vpack.c.b16 %v952, %v944
    %v1193 = vpack.c.b16 %v961, %v953
    %v1194 = vpack.c.b16 %v962, %v954
    %v1195 = vpack.c.b16 %v963, %v955
    %v1196 = vpack.c.b16 %v964, %v956
    %v1197 = vpack.c.b16 %v965, %v957
    %v1198 = vpack.c.b16 %v966, %v958
    %v1199 = vpack.c.b16 %v967, %v959
    %v1200 = vpack.c.b16 %v968, %v960
    %v1201 = vpack.c.b16 %v977, %v969
    %v1202 = vpack.c.b16 %v978, %v970
    %v1203 = vpack.c.b16 %v979, %v971
    %v1204 = vpack.c.b16 %v980, %v972
    %v1205 = vpack.c.b16 %v981, %v973
    %v1206 = vpack.c.b16 %v982, %v974
    %v1207 = vpack.c.b16 %v983, %v975
    %v1208 = vpack.c.b16 %v984, %v976
    %v1209 = vpack.c.b16 %v993, %v985
    %v1210 = vpack.c.b16 %v994, %v986
    %v1211 = vpack.c.b16 %v995, %v987
    %v1212 = vpack.c.b16 %v996, %v988
    %v1213 = vpack.c.b16 %v997, %v989
    %v1214 = vpack.c.b16 %v998, %v990
    %v1215 = vpack.c.b16 %v999, %v991
    %v1216 = vpack.c.b16 %v1000, %v992
    %v1217 = vpack.c.b16 %v1009, %v1001
    %v1218 = vpack.c.b16 %v1010, %v1002
    %v1219 = vpack.c.b16 %v1011, %v1003
    %v1220 = vpack.c.b16 %v1012, %v1004
    %v1221 = vpack.c.b16 %v1013, %v1005
    %v1222 = vpack.c.b16 %v1014, %v1006
    %v1223 = vpack.c.b16 %v1015, %v1007
    %v1224 = vpack.c.b16 %v1016, %v1008
    %v1225 = vpack.c.b16 %v1025, %v1017
    %v1226 = vpack.c.b16 %v1026, %v1018
    %v1227 = vpack.c.b16 %v1027, %v1019
    %v1228 = vpack.c.b16 %v1028, %v1020
    %v1229 = vpack.c.b16 %v1029, %v1021
    %v1230 = vpack.c.b16 %v1030, %v1022
    %v1231 = vpack.c.b16 %v1031, %v1023
    %v1232 = vpack.c.b16 %v1032, %v1024
    %v1233 = vpack.c.b16 %v1041, %v1033
    %v1234 = vpack.c.b16 %v1042, %v1034
    %v1235 = vpack.c.b16 %v1043, %v1035
    %v1236 = vpack.c.b16 %v1044, %v1036
    %v1237 = vpack.c.b16 %v1045, %v1037
    %v1238 = vpack.c.b16 %v1046, %v1038
    %v1239 = vpack.c.b16 %v1047, %v1039
    %v1240 = vpack.c.b16 %v1048, %v1040
    %v1241 = vpack.c.b16 %v1057, %v1049
    %v1242 = vpack.c.b16 %v1058, %v1050
    %v1243 = vpack.c.b16 %v1059, %v1051
    %v1244 = vpack.c.b16 %v1060, %v1052
    %v1245 = vpack.c.b16 %v1061, %v1053
    %v1246 = vpack.c.b16 %v1062, %v1054
    %v1247 = vpack.c.b16 %v1063, %v1055
    %v1248 = vpack.c.b16 %v1064, %v1056
    %v1249 = vpack.c.b16 %v1073, %v1065
    %v1250 = vpack.c.b16 %v1074, %v1066
    %v1251 = vpack.c.b16 %v1075, %v1067
    %v1252 = vpack.c.b16 %v1076, %v1068
    %v1253 = vpack.c.b16 %v1077, %v1069
    %v1254 = vpack.c.b16 %v1078, %v1070
    %v1255 = vpack.c.b16 %v1079, %v1071
    %v1256 = vpack.c.b16 %v1080, %v1072
    %v1257 = vpack.c.b16 %v1089, %v1081
    %v1258 = vpack.c.b16 %v1090, %v1082
    %v1259 = vpack.c.b16 %v1091, %v1083
    %v1260 = vpack.c.b16 %v1092, %v1084
    %v1261 = vpack.c.b16 %v1093, %v1085
    %v1262 = vpack.c.b16 %v1094, %v1086
    %v1263 = vpack.c.b16 %v1095, %v1087
    %v1264 = vpack.c.b16 %v1096, %v1088
    %v1265 = vpack.c.b16 %v1105, %v1097
    %v1266 = vpack.c.b16 %v1106, %v1098
    %v1267 = vpack.c.b16 %v1107, %v1099
    %v1268 = vpack.c.b16 %v1108, %v1100
    %v1269 = vpack.c.b16 %v1109, %v1101
    %v1270 = vpack.c.b16 %v1110, %v1102
    %v1271 = vpack.c.b16 %v1111, %v1103
    %v1272 = vpack.c.b16 %v1112, %v1104
    %v1273 = vpack.c.b16 %v1121, %v1113
    %v1274 = vpack.c.b16 %v1122, %v1114
    %v1275 = vpack.c.b16 %v1123, %v1115
    %v1276 = vpack.c.b16 %v1124, %v1116
    %v1277 = vpack.c.b16 %v1125, %v1117
    %v1278 = vpack.c.b16 %v1126, %v1118
    %v1279 = vpack.c.b16 %v1127, %v1119
    %v1280 = vpack.c.b16 %v1128, %v1120
    %v1281 = vpack.c.b16 %v1137, %v1129
    %v1282 = vpack.c.b16 %v1138, %v1130
    %v1283 = vpack.c.b16 %v1139, %v1131
    %v1284 = vpack.c.b16 %v1140, %v1132
    %v1285 = vpack.c.b16 %v1141, %v1133
    %v1286 = vpack.c.b16 %v1142, %v1134
    %v1287 = vpack.c.b16 %v1143, %v1135
    %v1288 = vpack.c.b16 %v1144, %v1136
    %v1289 = vpack.c.b16 %v1153, %v1145
    %v1290 = vpack.c.b16 %v1154, %v1146
    %v1291 = vpack.c.b16 %v1155, %v1147
    %v1292 = vpack.c.b16 %v1156, %v1148
    %v1293 = vpack.c.b16 %v1157, %v1149
    %v1294 = vpack.c.b16 %v1158, %v1150
    %v1295 = vpack.c.b16 %v1159, %v1151
    %v1296 = vpack.c.b16 %v1160, %v1152
    %v1297 = vpack.c.b16 %v1169, %v1161
    %v1298 = vpack.c.b16 %v1170, %v1162
    %v1299 = vpack.c.b16 %v1171, %v1163
    %v1300 = vpack.c.b16 %v1172, %v1164
    %v1301 = vpack.c.b16 %v1173, %v1165
    %v1302 = vpack.c.b16 %v1174, %v1166
    %v1303 = vpack.c.b16 %v1175, %v1167
    %v1304 = vpack.c.b16 %v1176, %v1168
    %1433 = vmatpush.bf16.msra.mxu0 %v1233
    %1434 = vmatpush.bf16.msra.mxu0 %v1225
    %1435 = vmatpush.bf16.msra.mxu0 %v1217
    %1436 = vmatpush.bf16.msra.mxu0 %v1209
    %1437 = vmatpush.bf16.msra.mxu0 %v1201
    %1438 = vmatpush.bf16.msra.mxu0 %v1193
    %1439 = vmatpush.bf16.msra.mxu0 %v1185
    %1440 = vmatpush.bf16.msra.mxu0 %v1177
    %1441 = vmatmul.bf16.gmra.mxu0 %v791
    %v1442 = vpop.f32.mrf.mxu0
    %v1443 = vadd.f32 0.0, %v1442
    %v1444 = vpop.f32.mrf.mxu0
    %1445 = vdwg.mxu0
    %1446 = vmatpush.bf16.msra.mxu0 %v1297
    %1447 = vmatpush.bf16.msra.mxu0 %v1289
    %1448 = vmatpush.bf16.msra.mxu0 %v1281
    %1449 = vmatpush.bf16.msra.mxu0 %v1273
    %1450 = vmatpush.bf16.msra.mxu0 %v1265
    %1451 = vmatpush.bf16.msra.mxu0 %v1257
    %1452 = vmatpush.bf16.msra.mxu0 %v1249
    %1453 = vmatpush.bf16.msra.mxu0 %v1241
    %1454 = vmatmul.bf16.gmra.mxu0 %v792
    %v1455 = vpop.f32.mrf.mxu0
    %v1456 = vadd.f32 %v1443, %v1455
    %v1457 = vpop.f32.mrf.mxu0
    %1458 = vdwg.mxu0
    %1459 = vmatpush.bf16.msra.mxu0 %v1234
    %1460 = vmatpush.bf16.msra.mxu0 %v1226
    %1461 = vmatpush.bf16.msra.mxu0 %v1218
    %1462 = vmatpush.bf16.msra.mxu0 %v1210
    %1463 = vmatpush.bf16.msra.mxu0 %v1202
    %1464 = vmatpush.bf16.msra.mxu0 %v1194
    %1465 = vmatpush.bf16.msra.mxu0 %v1186
    %1466 = vmatpush.bf16.msra.mxu0 %v1178
    %1467 = vmatmul.bf16.gmra.mxu0 %v791
    %v1468 = vpop.f32.mrf.mxu0
    %v1469 = vadd.f32 0.0, %v1468
    %v1470 = vpop.f32.mrf.mxu0
    %1471 = vdwg.mxu0
    %1472 = vmatpush.bf16.msra.mxu0 %v1298
    %1473 = vmatpush.bf16.msra.mxu0 %v1290
    %1474 = vmatpush.bf16.msra.mxu0 %v1282
    %1475 = vmatpush.bf16.msra.mxu0 %v1274
    %1476 = vmatpush.bf16.msra.mxu0 %v1266
    %1477 = vmatpush.bf16.msra.mxu0 %v1258
    %1478 = vmatpush.bf16.msra.mxu0 %v1250
    %1479 = vmatpush.bf16.msra.mxu0 %v1242
    %1480 = vmatmul.bf16.gmra.mxu0 %v792
    %v1481 = vpop.f32.mrf.mxu0
    %v1482 = vadd.f32 %v1469, %v1481
    %v1483 = vpop.f32.mrf.mxu0
    %1484 = vdwg.mxu0
    %1485 = vmatpush.bf16.msra.mxu0 %v1235
    %1486 = vmatpush.bf16.msra.mxu0 %v1227
    %1487 = vmatpush.bf16.msra.mxu0 %v1219
    %1488 = vmatpush.bf16.msra.mxu0 %v1211
    %1489 = vmatpush.bf16.msra.mxu0 %v1203
    %1490 = vmatpush.bf16.msra.mxu0 %v1195
    %1491 = vmatpush.bf16.msra.mxu0 %v1187
    %1492 = vmatpush.bf16.msra.mxu0 %v1179
    %1493 = vmatmul.bf16.gmra.mxu0 %v791
    %v1494 = vpop.f32.mrf.mxu0
    %v1495 = vadd.f32 0.0, %v1494
    %v1496 = vpop.f32.mrf.mxu0
    %1497 = vdwg.mxu0
    %1498 = vmatpush.bf16.msra.mxu0 %v1299
    %1499 = vmatpush.bf16.msra.mxu0 %v1291
    %1500 = vmatpush.bf16.msra.mxu0 %v1283
    %1501 = vmatpush.bf16.msra.mxu0 %v1275
    %1502 = vmatpush.bf16.msra.mxu0 %v1267
    %1503 = vmatpush.bf16.msra.mxu0 %v1259
    %1504 = vmatpush.bf16.msra.mxu0 %v1251
    %1505 = vmatpush.bf16.msra.mxu0 %v1243
    %1506 = vmatmul.bf16.gmra.mxu0 %v792
    %v1507 = vpop.f32.mrf.mxu0
    %v1508 = vadd.f32 %v1495, %v1507
    %v1509 = vpop.f32.mrf.mxu0
    %1510 = vdwg.mxu0
    %1511 = vmatpush.bf16.msra.mxu0 %v1236
    %1512 = vmatpush.bf16.msra.mxu0 %v1228
    %1513 = vmatpush.bf16.msra.mxu0 %v1220
    %1514 = vmatpush.bf16.msra.mxu0 %v1212
    %1515 = vmatpush.bf16.msra.mxu0 %v1204
    %1516 = vmatpush.bf16.msra.mxu0 %v1196
    %1517 = vmatpush.bf16.msra.mxu0 %v1188
    %1518 = vmatpush.bf16.msra.mxu0 %v1180
    %1519 = vmatmul.bf16.gmra.mxu0 %v791
    %v1520 = vpop.f32.mrf.mxu0
    %v1521 = vadd.f32 0.0, %v1520
    %v1522 = vpop.f32.mrf.mxu0
    %1523 = vdwg.mxu0
    %1524 = vmatpush.bf16.msra.mxu0 %v1300
    %1525 = vmatpush.bf16.msra.mxu0 %v1292
    %1526 = vmatpush.bf16.msra.mxu0 %v1284
    %1527 = vmatpush.bf16.msra.mxu0 %v1276
    %1528 = vmatpush.bf16.msra.mxu0 %v1268
    %1529 = vmatpush.bf16.msra.mxu0 %v1260
    %1530 = vmatpush.bf16.msra.mxu0 %v1252
    %1531 = vmatpush.bf16.msra.mxu0 %v1244
    %1532 = vmatmul.bf16.gmra.mxu0 %v792
    %v1533 = vpop.f32.mrf.mxu0
    %v1534 = vadd.f32 %v1521, %v1533
    %v1535 = vpop.f32.mrf.mxu0
    %1536 = vdwg.mxu0
    %1537 = vmatpush.bf16.msra.mxu0 %v1237
    %1538 = vmatpush.bf16.msra.mxu0 %v1229
    %1539 = vmatpush.bf16.msra.mxu0 %v1221
    %1540 = vmatpush.bf16.msra.mxu0 %v1213
    %1541 = vmatpush.bf16.msra.mxu0 %v1205
    %1542 = vmatpush.bf16.msra.mxu0 %v1197
    %1543 = vmatpush.bf16.msra.mxu0 %v1189
    %1544 = vmatpush.bf16.msra.mxu0 %v1181
    %1545 = vmatmul.bf16.gmra.mxu0 %v791
    %v1546 = vpop.f32.mrf.mxu0
    %v1547 = vadd.f32 0.0, %v1546
    %v1548 = vpop.f32.mrf.mxu0
    %1549 = vdwg.mxu0
    %1550 = vmatpush.bf16.msra.mxu0 %v1301
    %1551 = vmatpush.bf16.msra.mxu0 %v1293
    %1552 = vmatpush.bf16.msra.mxu0 %v1285
    %1553 = vmatpush.bf16.msra.mxu0 %v1277
    %1554 = vmatpush.bf16.msra.mxu0 %v1269
    %1555 = vmatpush.bf16.msra.mxu0 %v1261
    %1556 = vmatpush.bf16.msra.mxu0 %v1253
    %1557 = vmatpush.bf16.msra.mxu0 %v1245
    %1558 = vmatmul.bf16.gmra.mxu0 %v792
    %v1559 = vpop.f32.mrf.mxu0
    %v1560 = vadd.f32 %v1547, %v1559
    %v1561 = vpop.f32.mrf.mxu0
    %1562 = vdwg.mxu0
    %1563 = vmatpush.bf16.msra.mxu0 %v1238
    %1564 = vmatpush.bf16.msra.mxu0 %v1230
    %1565 = vmatpush.bf16.msra.mxu0 %v1222
    %1566 = vmatpush.bf16.msra.mxu0 %v1214
    %1567 = vmatpush.bf16.msra.mxu0 %v1206
    %1568 = vmatpush.bf16.msra.mxu0 %v1198
    %1569 = vmatpush.bf16.msra.mxu0 %v1190
    %1570 = vmatpush.bf16.msra.mxu0 %v1182
    %1571 = vmatmul.bf16.gmra.mxu0 %v791
    %v1572 = vpop.f32.mrf.mxu0
    %v1573 = vadd.f32 0.0, %v1572
    %v1574 = vpop.f32.mrf.mxu0
    %1575 = vdwg.mxu0
    %1576 = vmatpush.bf16.msra.mxu0 %v1302
    %1577 = vmatpush.bf16.msra.mxu0 %v1294
    %1578 = vmatpush.bf16.msra.mxu0 %v1286
    %1579 = vmatpush.bf16.msra.mxu0 %v1278
    %1580 = vmatpush.bf16.msra.mxu0 %v1270
    %1581 = vmatpush.bf16.msra.mxu0 %v1262
    %1582 = vmatpush.bf16.msra.mxu0 %v1254
    %1583 = vmatpush.bf16.msra.mxu0 %v1246
    %1584 = vmatmul.bf16.gmra.mxu0 %v792
    %v1585 = vpop.f32.mrf.mxu0
    %v1586 = vadd.f32 %v1573, %v1585
    %v1587 = vpop.f32.mrf.mxu0
    %1588 = vdwg.mxu0
    %1589 = vmatpush.bf16.msra.mxu0 %v1239
    %1590 = vmatpush.bf16.msra.mxu0 %v1231
    %1591 = vmatpush.bf16.msra.mxu0 %v1223
    %1592 = vmatpush.bf16.msra.mxu0 %v1215
    %1593 = vmatpush.bf16.msra.mxu0 %v1207
    %1594 = vmatpush.bf16.msra.mxu0 %v1199
    %1595 = vmatpush.bf16.msra.mxu0 %v1191
    %1596 = vmatpush.bf16.msra.mxu0 %v1183
    %1597 = vmatmul.bf16.gmra.mxu0 %v791
    %v1598 = vpop.f32.mrf.mxu0
    %v1599 = vadd.f32 0.0, %v1598
    %v1600 = vpop.f32.mrf.mxu0
    %1601 = vdwg.mxu0
    %1602 = vmatpush.bf16.msra.mxu0 %v1303
    %1603 = vmatpush.bf16.msra.mxu0 %v1295
    %1604 = vmatpush.bf16.msra.mxu0 %v1287
    %1605 = vmatpush.bf16.msra.mxu0 %v1279
    %1606 = vmatpush.bf16.msra.mxu0 %v1271
    %1607 = vmatpush.bf16.msra.mxu0 %v1263
    %1608 = vmatpush.bf16.msra.mxu0 %v1255
    %1609 = vmatpush.bf16.msra.mxu0 %v1247
    %1610 = vmatmul.bf16.gmra.mxu0 %v792
    %v1611 = vpop.f32.mrf.mxu0
    %v1612 = vadd.f32 %v1599, %v1611
    %v1613 = vpop.f32.mrf.mxu0
    %1614 = vdwg.mxu0
    %1615 = vmatpush.bf16.msra.mxu0 %v1240
    %1616 = vmatpush.bf16.msra.mxu0 %v1232
    %1617 = vmatpush.bf16.msra.mxu0 %v1224
    %1618 = vmatpush.bf16.msra.mxu0 %v1216
    %1619 = vmatpush.bf16.msra.mxu0 %v1208
    %1620 = vmatpush.bf16.msra.mxu0 %v1200
    %1621 = vmatpush.bf16.msra.mxu0 %v1192
    %1622 = vmatpush.bf16.msra.mxu0 %v1184
    %1623 = vmatmul.bf16.gmra.mxu0 %v791
    %v1624 = vpop.f32.mrf.mxu0
    %v1625 = vadd.f32 0.0, %v1624
    %v1626 = vpop.f32.mrf.mxu0
    %1627 = vdwg.mxu0
    %1628 = vmatpush.bf16.msra.mxu0 %v1304
    %1629 = vmatpush.bf16.msra.mxu0 %v1296
    %1630 = vmatpush.bf16.msra.mxu0 %v1288
    %1631 = vmatpush.bf16.msra.mxu0 %v1280
    %1632 = vmatpush.bf16.msra.mxu0 %v1272
    %1633 = vmatpush.bf16.msra.mxu0 %v1264
    %1634 = vmatpush.bf16.msra.mxu0 %v1256
    %1635 = vmatpush.bf16.msra.mxu0 %v1248
    %1636 = vmatmul.bf16.gmra.mxu0 %v792
    %v1637 = vpop.f32.mrf.mxu0
    %v1638 = vadd.f32 %v1625, %v1637
    %v1639 = vpop.f32.mrf.mxu0
    %1640 = vdwg.mxu0
    %v1641 = vadd.f32 %v783, %v1456
    %v1642 = vadd.f32 %v784, %v1482
    %v1643 = vadd.f32 %v785, %v1508
    %v1644 = vadd.f32 %v786, %v1534
    %v1645 = vadd.f32 %v787, %v1560
    %v1646 = vadd.f32 %v788, %v1586
    %v1647 = vadd.f32 %v789, %v1612
    %v1648 = vadd.f32 %v790, %v1638
    %v1649 = vxor.u32 %v1641, 2147483648
    %v1650 = vxor.u32 %v1642, 2147483648
    %v1651 = vxor.u32 %v1643, 2147483648
    %v1652 = vxor.u32 %v1644, 2147483648
    %v1653 = vxor.u32 %v1645, 2147483648
    %v1654 = vxor.u32 %v1646, 2147483648
    %v1655 = vmul.f32 %v1649, 1.442695
    %v1656 = vpow.pop %v1655
    %v1657 = vmul.f32 %v1650, 1.442695
    %v1658 = vpow.pop %v1657
    %v1659 = vmul.f32 %v1651, 1.442695
    %v1660 = vpow.pop %v1659
    %v1661 = vmul.f32 %v1652, 1.442695
    %v1662 = vpow.pop %v1661
    %v1663 = vmul.f32 %v1653, 1.442695
    %v1664 = vpow.pop %v1663
    %v1665 = vmul.f32 %v1654, 1.442695
    %v1666 = vpow.pop %v1665
    %v1667 = vadd.f32 %v1656, 1.0
    %v1668 = vadd.f32 %v1658, 1.0
    %v1669 = vadd.f32 %v1660, 1.0
    %v1670 = vadd.f32 %v1662, 1.0
    %v1671 = vadd.f32 %v1664, 1.0
    %v1672 = vadd.f32 %v1666, 1.0
    %v1673 = vrcp.pop %v1667
    %v1674 = vmul.f32 %v1667, %v1673
    %v1675 = vsub.f32 1.0, %v1674
    %v1676 = vmul.f32 %v1673, %v1675
    %v1677 = vadd.f32 %v1673, %v1676
    %vm1678 = vweird.f32 %v1667
    %vm1679 = vweird.f32 %v1673
    %vm1680 = vmor %vm1678, %vm1679
    %v1681 = vsel %vm1680, %v1673, %v1677
    %v1682 = vand.u32 2147483647, %v1667
    %vm1683 = vcmp.eq.f32.partialorder %v1682, 8.507059e+37
    %v1684 = vand.u32 %v1667, 2147483648
    %v1685 = vor.u32 1.1754944e-38, %v1684
    %v1686 = vsel %vm1683, %v1685, %v1681
    %v1687 = vmul.f32 1.0, %v1686
    %v1688 = vrcp.pop %v1668
    %v1689 = vmul.f32 %v1668, %v1688
    %v1690 = vsub.f32 1.0, %v1689
    %v1691 = vmul.f32 %v1688, %v1690
    %v1692 = vadd.f32 %v1688, %v1691
    %vm1693 = vweird.f32 %v1668
    %vm1694 = vweird.f32 %v1688
    %vm1695 = vmor %vm1693, %vm1694
    %v1696 = vsel %vm1695, %v1688, %v1692
    %v1697 = vand.u32 2147483647, %v1668
    %vm1698 = vcmp.eq.f32.partialorder %v1697, 8.507059e+37
    %v1699 = vand.u32 %v1668, 2147483648
    %v1700 = vor.u32 1.1754944e-38, %v1699
    %v1701 = vsel %vm1698, %v1700, %v1696
    %v1702 = vmul.f32 1.0, %v1701
    %v1703 = vrcp.pop %v1669
    %v1704 = vmul.f32 %v1669, %v1703
    %v1705 = vsub.f32 1.0, %v1704
    %v1706 = vmul.f32 %v1703, %v1705
    %v1707 = vadd.f32 %v1703, %v1706
    %vm1708 = vweird.f32 %v1669
    %vm1709 = vweird.f32 %v1703
    %vm1710 = vmor %vm1708, %vm1709
    %v1711 = vsel %vm1710, %v1703, %v1707
    %v1712 = vand.u32 2147483647, %v1669
    %vm1713 = vcmp.eq.f32.partialorder %v1712, 8.507059e+37
    %v1714 = vand.u32 %v1669, 2147483648
    %v1715 = vor.u32 1.1754944e-38, %v1714
    %v1716 = vsel %vm1713, %v1715, %v1711
    %v1717 = vmul.f32 1.0, %v1716
    %v1718 = vrcp.pop %v1670
    %v1719 = vmul.f32 %v1670, %v1718
    %v1720 = vsub.f32 1.0, %v1719
    %v1721 = vmul.f32 %v1718, %v1720
    %v1722 = vadd.f32 %v1718, %v1721
    %vm1723 = vweird.f32 %v1670
    %vm1724 = vweird.f32 %v1718
    %vm1725 = vmor %vm1723, %vm1724
    %v1726 = vsel %vm1725, %v1718, %v1722
    %v1727 = vand.u32 2147483647, %v1670
    %vm1728 = vcmp.eq.f32.partialorder %v1727, 8.507059e+37
    %v1729 = vand.u32 %v1670, 2147483648
    %v1730 = vor.u32 1.1754944e-38, %v1729
    %v1731 = vsel %vm1728, %v1730, %v1726
    %v1732 = vmul.f32 1.0, %v1731
    %v1733 = vrcp.pop %v1671
    %v1734 = vmul.f32 %v1671, %v1733
    %v1735 = vsub.f32 1.0, %v1734
    %v1736 = vmul.f32 %v1733, %v1735
    %v1737 = vadd.f32 %v1733, %v1736
    %vm1738 = vweird.f32 %v1671
    %vm1739 = vweird.f32 %v1733
    %vm1740 = vmor %vm1738, %vm1739
    %v1741 = vsel %vm1740, %v1733, %v1737
    %v1742 = vand.u32 2147483647, %v1671
    %vm1743 = vcmp.eq.f32.partialorder %v1742, 8.507059e+37
    %v1744 = vand.u32 %v1671, 2147483648
    %v1745 = vor.u32 1.1754944e-38, %v1744
    %v1746 = vsel %vm1743, %v1745, %v1741
    %v1747 = vmul.f32 1.0, %v1746
    %v1748 = vrcp.pop %v1672
    %v1749 = vmul.f32 %v1672, %v1748
    %v1750 = vsub.f32 1.0, %v1749
    %v1751 = vmul.f32 %v1748, %v1750
    %v1752 = vadd.f32 %v1748, %v1751
    %vm1753 = vweird.f32 %v1672
    %vm1754 = vweird.f32 %v1748
    %vm1755 = vmor %vm1753, %vm1754
    %v1756 = vsel %vm1755, %v1748, %v1752
    %v1757 = vand.u32 2147483647, %v1672
    %vm1758 = vcmp.eq.f32.partialorder %v1757, 8.507059e+37
    %v1759 = vand.u32 %v1672, 2147483648
    %v1760 = vor.u32 1.1754944e-38, %v1759
    %v1761 = vsel %vm1758, %v1760, %v1756
    %v1762 = vmul.f32 1.0, %v1761
    %v1763 = vtanh.pop %v1647
    %v1764 = vtanh.pop %v1648
    %v1765 = vmul.f32 %v1717, %v781
    %v1766 = vmul.f32 %v1732, %v782
    %v1767 = vmul.f32 %v1687, %v1763
    %v1768 = vmul.f32 %v1702, %v1764
    %v1769 = vadd.f32 %v1765, %v1767
    %v1770 = vadd.f32 %v1766, %v1768
    %v1771 = vtanh.pop %v1769
    %v1772 = vtanh.pop %v1770
    %v1773 = vmul.f32 %v1747, %v1771
    %v1774 = vmul.f32 %v1762, %v1772
    %1775 = vst [vmem:[#allocation2] sm:$0xff] %v1773
    %1776 = vst [vmem:[#allocation2 + $0x8] sm:$0xff] %v1774
    %v1777 = vld [vmem:[%s0 + $0x40] sm:$0xff]
    %v1778 = vld [vmem:[%s0 + $0x48] sm:$0xff]
    %v1779 = vld [vmem:[%s0 + $0x50] sm:$0xff]
    %v1780 = vld [vmem:[%s0 + $0x58] sm:$0xff]
    %v1781 = vld [vmem:[%s0 + $0x60] sm:$0xff]
    %v1782 = vld [vmem:[%s0 + $0x68] sm:$0xff]
    %v1783 = vld [vmem:[%s0 + $0x70] sm:$0xff]
    %v1784 = vld [vmem:[%s0 + $0x78] sm:$0xff]
    %v1785 = vpack.c.bf16 %v1773, %v1773
    %v1786 = vpack.c.bf16 %v1774, %v1774
    %1787 = vmatpush.bf16.msra.mxu0 %v1233
    %1788 = vmatpush.bf16.msra.mxu0 %v1225
    %1789 = vmatpush.bf16.msra.mxu0 %v1217
    %1790 = vmatpush.bf16.msra.mxu0 %v1209
    %1791 = vmatpush.bf16.msra.mxu0 %v1201
    %1792 = vmatpush.bf16.msra.mxu0 %v1193
    %1793 = vmatpush.bf16.msra.mxu0 %v1185
    %1794 = vmatpush.bf16.msra.mxu0 %v1177
    %1795 = vmatmul.bf16.gmra.mxu0 %v1785
    %v1796 = vpop.f32.mrf.mxu0
    %v1797 = vadd.f32 0.0, %v1796
    %v1798 = vpop.f32.mrf.mxu0
    %1799 = vdwg.mxu0
    %1800 = vmatpush.bf16.msra.mxu0 %v1297
    %1801 = vmatpush.bf16.msra.mxu0 %v1289
    %1802 = vmatpush.bf16.msra.mxu0 %v1281
    %1803 = vmatpush.bf16.msra.mxu0 %v1273
    %1804 = vmatpush.bf16.msra.mxu0 %v1265
    %1805 = vmatpush.bf16.msra.mxu0 %v1257
    %1806 = vmatpush.bf16.msra.mxu0 %v1249
    %1807 = vmatpush.bf16.msra.mxu0 %v1241
    %1808 = vmatmul.bf16.gmra.mxu0 %v1786
    %v1809 = vpop.f32.mrf.mxu0
    %v1810 = vadd.f32 %v1797, %v1809
    %v1811 = vpop.f32.mrf.mxu0
    %1812 = vdwg.mxu0
    %1813 = vmatpush.bf16.msra.mxu0 %v1234
    %1814 = vmatpush.bf16.msra.mxu0 %v1226
    %1815 = vmatpush.bf16.msra.mxu0 %v1218
    %1816 = vmatpush.bf16.msra.mxu0 %v1210
    %1817 = vmatpush.bf16.msra.mxu0 %v1202
    %1818 = vmatpush.bf16.msra.mxu0 %v1194
    %1819 = vmatpush.bf16.msra.mxu0 %v1186
    %1820 = vmatpush.bf16.msra.mxu0 %v1178
    %1821 = vmatmul.bf16.gmra.mxu0 %v1785
    %v1822 = vpop.f32.mrf.mxu0
    %v1823 = vadd.f32 0.0, %v1822
    %v1824 = vpop.f32.mrf.mxu0
    %1825 = vdwg.mxu0
    %1826 = vmatpush.bf16.msra.mxu0 %v1298
    %1827 = vmatpush.bf16.msra.mxu0 %v1290
    %1828 = vmatpush.bf16.msra.mxu0 %v1282
    %1829 = vmatpush.bf16.msra.mxu0 %v1274
    %1830 = vmatpush.bf16.msra.mxu0 %v1266
    %1831 = vmatpush.bf16.msra.mxu0 %v1258
    %1832 = vmatpush.bf16.msra.mxu0 %v1250
    %1833 = vmatpush.bf16.msra.mxu0 %v1242
    %1834 = vmatmul.bf16.gmra.mxu0 %v1786
    %v1835 = vpop.f32.mrf.mxu0
    %v1836 = vadd.f32 %v1823, %v1835
    %v1837 = vpop.f32.mrf.mxu0
    %1838 = vdwg.mxu0
    %1839 = vmatpush.bf16.msra.mxu0 %v1235
    %1840 = vmatpush.bf16.msra.mxu0 %v1227
    %1841 = vmatpush.bf16.msra.mxu0 %v1219
    %1842 = vmatpush.bf16.msra.mxu0 %v1211
    %1843 = vmatpush.bf16.msra.mxu0 %v1203
    %1844 = vmatpush.bf16.msra.mxu0 %v1195
    %1845 = vmatpush.bf16.msra.mxu0 %v1187
    %1846 = vmatpush.bf16.msra.mxu0 %v1179
    %1847 = vmatmul.bf16.gmra.mxu0 %v1785
    %v1848 = vpop.f32.mrf.mxu0
    %v1849 = vadd.f32 0.0, %v1848
    %v1850 = vpop.f32.mrf.mxu0
    %1851 = vdwg.mxu0
    %1852 = vmatpush.bf16.msra.mxu0 %v1299
    %1853 = vmatpush.bf16.msra.mxu0 %v1291
    %1854 = vmatpush.bf16.msra.mxu0 %v1283
    %1855 = vmatpush.bf16.msra.mxu0 %v1275
    %1856 = vmatpush.bf16.msra.mxu0 %v1267
    %1857 = vmatpush.bf16.msra.mxu0 %v1259
    %1858 = vmatpush.bf16.msra.mxu0 %v1251
    %1859 = vmatpush.bf16.msra.mxu0 %v1243
    %1860 = vmatmul.bf16.gmra.mxu0 %v1786
    %v1861 = vpop.f32.mrf.mxu0
    %v1862 = vadd.f32 %v1849, %v1861
    %v1863 = vpop.f32.mrf.mxu0
    %1864 = vdwg.mxu0
    %1865 = vmatpush.bf16.msra.mxu0 %v1236
    %1866 = vmatpush.bf16.msra.mxu0 %v1228
    %1867 = vmatpush.bf16.msra.mxu0 %v1220
    %1868 = vmatpush.bf16.msra.mxu0 %v1212
    %1869 = vmatpush.bf16.msra.mxu0 %v1204
    %1870 = vmatpush.bf16.msra.mxu0 %v1196
    %1871 = vmatpush.bf16.msra.mxu0 %v1188
    %1872 = vmatpush.bf16.msra.mxu0 %v1180
    %1873 = vmatmul.bf16.gmra.mxu0 %v1785
    %v1874 = vpop.f32.mrf.mxu0
    %v1875 = vadd.f32 0.0, %v1874
    %v1876 = vpop.f32.mrf.mxu0
    %1877 = vdwg.mxu0
    %1878 = vmatpush.bf16.msra.mxu0 %v1300
    %1879 = vmatpush.bf16.msra.mxu0 %v1292
    %1880 = vmatpush.bf16.msra.mxu0 %v1284
    %1881 = vmatpush.bf16.msra.mxu0 %v1276
    %1882 = vmatpush.bf16.msra.mxu0 %v1268
    %1883 = vmatpush.bf16.msra.mxu0 %v1260
    %1884 = vmatpush.bf16.msra.mxu0 %v1252
    %1885 = vmatpush.bf16.msra.mxu0 %v1244
    %1886 = vmatmul.bf16.gmra.mxu0 %v1786
    %v1887 = vpop.f32.mrf.mxu0
    %v1888 = vadd.f32 %v1875, %v1887
    %v1889 = vpop.f32.mrf.mxu0
    %1890 = vdwg.mxu0
    %1891 = vmatpush.bf16.msra.mxu0 %v1237
    %1892 = vmatpush.bf16.msra.mxu0 %v1229
    %1893 = vmatpush.bf16.msra.mxu0 %v1221
    %1894 = vmatpush.bf16.msra.mxu0 %v1213
    %1895 = vmatpush.bf16.msra.mxu0 %v1205
    %1896 = vmatpush.bf16.msra.mxu0 %v1197
    %1897 = vmatpush.bf16.msra.mxu0 %v1189
    %1898 = vmatpush.bf16.msra.mxu0 %v1181
    %1899 = vmatmul.bf16.gmra.mxu0 %v1785
    %v1900 = vpop.f32.mrf.mxu0
    %v1901 = vadd.f32 0.0, %v1900
    %v1902 = vpop.f32.mrf.mxu0
    %1903 = vdwg.mxu0
    %1904 = vmatpush.bf16.msra.mxu0 %v1301
    %1905 = vmatpush.bf16.msra.mxu0 %v1293
    %1906 = vmatpush.bf16.msra.mxu0 %v1285
    %1907 = vmatpush.bf16.msra.mxu0 %v1277
    %1908 = vmatpush.bf16.msra.mxu0 %v1269
    %1909 = vmatpush.bf16.msra.mxu0 %v1261
    %1910 = vmatpush.bf16.msra.mxu0 %v1253
    %1911 = vmatpush.bf16.msra.mxu0 %v1245
    %1912 = vmatmul.bf16.gmra.mxu0 %v1786
    %v1913 = vpop.f32.mrf.mxu0
    %v1914 = vadd.f32 %v1901, %v1913
    %v1915 = vpop.f32.mrf.mxu0
    %1916 = vdwg.mxu0
    %1917 = vmatpush.bf16.msra.mxu0 %v1238
    %1918 = vmatpush.bf16.msra.mxu0 %v1230
    %1919 = vmatpush.bf16.msra.mxu0 %v1222
    %1920 = vmatpush.bf16.msra.mxu0 %v1214
    %1921 = vmatpush.bf16.msra.mxu0 %v1206
    %1922 = vmatpush.bf16.msra.mxu0 %v1198
    %1923 = vmatpush.bf16.msra.mxu0 %v1190
    %1924 = vmatpush.bf16.msra.mxu0 %v1182
    %1925 = vmatmul.bf16.gmra.mxu0 %v1785
    %v1926 = vpop.f32.mrf.mxu0
    %v1927 = vadd.f32 0.0, %v1926
    %v1928 = vpop.f32.mrf.mxu0
    %1929 = vdwg.mxu0
    %1930 = vmatpush.bf16.msra.mxu0 %v1302
    %1931 = vmatpush.bf16.msra.mxu0 %v1294
    %1932 = vmatpush.bf16.msra.mxu0 %v1286
    %1933 = vmatpush.bf16.msra.mxu0 %v1278
    %1934 = vmatpush.bf16.msra.mxu0 %v1270
    %1935 = vmatpush.bf16.msra.mxu0 %v1262
    %1936 = vmatpush.bf16.msra.mxu0 %v1254
    %1937 = vmatpush.bf16.msra.mxu0 %v1246
    %1938 = vmatmul.bf16.gmra.mxu0 %v1786
    %v1939 = vpop.f32.mrf.mxu0
    %v1940 = vadd.f32 %v1927, %v1939
    %v1941 = vpop.f32.mrf.mxu0
    %1942 = vdwg.mxu0
    %1943 = vmatpush.bf16.msra.mxu0 %v1239
    %1944 = vmatpush.bf16.msra.mxu0 %v1231
    %1945 = vmatpush.bf16.msra.mxu0 %v1223
    %1946 = vmatpush.bf16.msra.mxu0 %v1215
    %1947 = vmatpush.bf16.msra.mxu0 %v1207
    %1948 = vmatpush.bf16.msra.mxu0 %v1199
    %1949 = vmatpush.bf16.msra.mxu0 %v1191
    %1950 = vmatpush.bf16.msra.mxu0 %v1183
    %1951 = vmatmul.bf16.gmra.mxu0 %v1785
    %v1952 = vpop.f32.mrf.mxu0
    %v1953 = vadd.f32 0.0, %v1952
    %v1954 = vpop.f32.mrf.mxu0
    %1955 = vdwg.mxu0
    %1956 = vmatpush.bf16.msra.mxu0 %v1303
    %1957 = vmatpush.bf16.msra.mxu0 %v1295
    %1958 = vmatpush.bf16.msra.mxu0 %v1287
    %1959 = vmatpush.bf16.msra.mxu0 %v1279
    %1960 = vmatpush.bf16.msra.mxu0 %v1271
    %1961 = vmatpush.bf16.msra.mxu0 %v1263
    %1962 = vmatpush.bf16.msra.mxu0 %v1255
    %1963 = vmatpush.bf16.msra.mxu0 %v1247
    %1964 = vmatmul.bf16.gmra.mxu0 %v1786
    %v1965 = vpop.f32.mrf.mxu0
    %v1966 = vadd.f32 %v1953, %v1965
    %v1967 = vpop.f32.mrf.mxu0
    %1968 = vdwg.mxu0
    %1969 = vmatpush.bf16.msra.mxu0 %v1240
    %1970 = vmatpush.bf16.msra.mxu0 %v1232
    %1971 = vmatpush.bf16.msra.mxu0 %v1224
    %1972 = vmatpush.bf16.msra.mxu0 %v1216
    %1973 = vmatpush.bf16.msra.mxu0 %v1208
    %1974 = vmatpush.bf16.msra.mxu0 %v1200
    %1975 = vmatpush.bf16.msra.mxu0 %v1192
    %1976 = vmatpush.bf16.msra.mxu0 %v1184
    %1977 = vmatmul.bf16.gmra.mxu0 %v1785
    %v1978 = vpop.f32.mrf.mxu0
    %v1979 = vadd.f32 0.0, %v1978
    %v1980 = vpop.f32.mrf.mxu0
    %1981 = vdwg.mxu0
    %1982 = vmatpush.bf16.msra.mxu0 %v1304
    %1983 = vmatpush.bf16.msra.mxu0 %v1296
    %1984 = vmatpush.bf16.msra.mxu0 %v1288
    %1985 = vmatpush.bf16.msra.mxu0 %v1280
    %1986 = vmatpush.bf16.msra.mxu0 %v1272
    %1987 = vmatpush.bf16.msra.mxu0 %v1264
    %1988 = vmatpush.bf16.msra.mxu0 %v1256
    %1989 = vmatpush.bf16.msra.mxu0 %v1248
    %1990 = vmatmul.bf16.gmra.mxu0 %v1786
    %v1991 = vpop.f32.mrf.mxu0
    %v1992 = vadd.f32 %v1979, %v1991
    %v1993 = vpop.f32.mrf.mxu0
    %1994 = vdwg.mxu0
    %v1995 = vadd.f32 %v1777, %v1810
    %v1996 = vadd.f32 %v1778, %v1836
    %v1997 = vadd.f32 %v1779, %v1862
    %v1998 = vadd.f32 %v1780, %v1888
    %v1999 = vadd.f32 %v1781, %v1914
    %v2000 = vadd.f32 %v1782, %v1940
    %v2001 = vadd.f32 %v1783, %v1966
    %v2002 = vadd.f32 %v1784, %v1992
    %v2003 = vxor.u32 %v1995, 2147483648
    %v2004 = vxor.u32 %v1996, 2147483648
    %v2005 = vxor.u32 %v1997, 2147483648
    %v2006 = vxor.u32 %v1998, 2147483648
    %v2007 = vxor.u32 %v1999, 2147483648
    %v2008 = vxor.u32 %v2000, 2147483648
    %v2009 = vmul.f32 %v2003, 1.442695
    %v2010 = vpow.pop %v2009
    %v2011 = vmul.f32 %v2004, 1.442695
    %v2012 = vpow.pop %v2011
    %v2013 = vmul.f32 %v2005, 1.442695
    %v2014 = vpow.pop %v2013
    %v2015 = vmul.f32 %v2006, 1.442695
    %v2016 = vpow.pop %v2015
    %v2017 = vmul.f32 %v2007, 1.442695
    %v2018 = vpow.pop %v2017
    %v2019 = vmul.f32 %v2008, 1.442695
    %v2020 = vpow.pop %v2019
    %v2021 = vadd.f32 %v2010, 1.0
    %v2022 = vadd.f32 %v2012, 1.0
    %v2023 = vadd.f32 %v2014, 1.0
    %v2024 = vadd.f32 %v2016, 1.0
    %v2025 = vadd.f32 %v2018, 1.0
    %v2026 = vadd.f32 %v2020, 1.0
    %v2027 = vrcp.pop %v2021
    %v2028 = vmul.f32 %v2021, %v2027
    %v2029 = vsub.f32 1.0, %v2028
    %v2030 = vmul.f32 %v2027, %v2029
    %v2031 = vadd.f32 %v2027, %v2030
    %vm2032 = vweird.f32 %v2021
    %vm2033 = vweird.f32 %v2027
    %vm2034 = vmor %vm2032, %vm2033
    %v2035 = vsel %vm2034, %v2027, %v2031
    %v2036 = vand.u32 2147483647, %v2021
    %vm2037 = vcmp.eq.f32.partialorder %v2036, 8.507059e+37
    %v2038 = vand.u32 %v2021, 2147483648
    %v2039 = vor.u32 1.1754944e-38, %v2038
    %v2040 = vsel %vm2037, %v2039, %v2035
    %v2041 = vmul.f32 1.0, %v2040
    %v2042 = vrcp.pop %v2022
    %v2043 = vmul.f32 %v2022, %v2042
    %v2044 = vsub.f32 1.0, %v2043
    %v2045 = vmul.f32 %v2042, %v2044
    %v2046 = vadd.f32 %v2042, %v2045
    %vm2047 = vweird.f32 %v2022
    %vm2048 = vweird.f32 %v2042
    %vm2049 = vmor %vm2047, %vm2048
    %v2050 = vsel %vm2049, %v2042, %v2046
    %v2051 = vand.u32 2147483647, %v2022
    %vm2052 = vcmp.eq.f32.partialorder %v2051, 8.507059e+37
    %v2053 = vand.u32 %v2022, 2147483648
    %v2054 = vor.u32 1.1754944e-38, %v2053
    %v2055 = vsel %vm2052, %v2054, %v2050
    %v2056 = vmul.f32 1.0, %v2055
    %v2057 = vrcp.pop %v2023
    %v2058 = vmul.f32 %v2023, %v2057
    %v2059 = vsub.f32 1.0, %v2058
    %v2060 = vmul.f32 %v2057, %v2059
    %v2061 = vadd.f32 %v2057, %v2060
    %vm2062 = vweird.f32 %v2023
    %vm2063 = vweird.f32 %v2057
    %vm2064 = vmor %vm2062, %vm2063
    %v2065 = vsel %vm2064, %v2057, %v2061
    %v2066 = vand.u32 2147483647, %v2023
    %vm2067 = vcmp.eq.f32.partialorder %v2066, 8.507059e+37
    %v2068 = vand.u32 %v2023, 2147483648
    %v2069 = vor.u32 1.1754944e-38, %v2068
    %v2070 = vsel %vm2067, %v2069, %v2065
    %v2071 = vmul.f32 1.0, %v2070
    %v2072 = vrcp.pop %v2024
    %v2073 = vmul.f32 %v2024, %v2072
    %v2074 = vsub.f32 1.0, %v2073
    %v2075 = vmul.f32 %v2072, %v2074
    %v2076 = vadd.f32 %v2072, %v2075
    %vm2077 = vweird.f32 %v2024
    %vm2078 = vweird.f32 %v2072
    %vm2079 = vmor %vm2077, %vm2078
    %v2080 = vsel %vm2079, %v2072, %v2076
    %v2081 = vand.u32 2147483647, %v2024
    %vm2082 = vcmp.eq.f32.partialorder %v2081, 8.507059e+37
    %v2083 = vand.u32 %v2024, 2147483648
    %v2084 = vor.u32 1.1754944e-38, %v2083
    %v2085 = vsel %vm2082, %v2084, %v2080
    %v2086 = vmul.f32 1.0, %v2085
    %v2087 = vrcp.pop %v2025
    %v2088 = vmul.f32 %v2025, %v2087
    %v2089 = vsub.f32 1.0, %v2088
    %v2090 = vmul.f32 %v2087, %v2089
    %v2091 = vadd.f32 %v2087, %v2090
    %vm2092 = vweird.f32 %v2025
    %vm2093 = vweird.f32 %v2087
    %vm2094 = vmor %vm2092, %vm2093
    %v2095 = vsel %vm2094, %v2087, %v2091
    %v2096 = vand.u32 2147483647, %v2025
    %vm2097 = vcmp.eq.f32.partialorder %v2096, 8.507059e+37
    %v2098 = vand.u32 %v2025, 2147483648
    %v2099 = vor.u32 1.1754944e-38, %v2098
    %v2100 = vsel %vm2097, %v2099, %v2095
    %v2101 = vmul.f32 1.0, %v2100
    %v2102 = vrcp.pop %v2026
    %v2103 = vmul.f32 %v2026, %v2102
    %v2104 = vsub.f32 1.0, %v2103
    %v2105 = vmul.f32 %v2102, %v2104
    %v2106 = vadd.f32 %v2102, %v2105
    %vm2107 = vweird.f32 %v2026
    %vm2108 = vweird.f32 %v2102
    %vm2109 = vmor %vm2107, %vm2108
    %v2110 = vsel %vm2109, %v2102, %v2106
    %v2111 = vand.u32 2147483647, %v2026
    %vm2112 = vcmp.eq.f32.partialorder %v2111, 8.507059e+37
    %v2113 = vand.u32 %v2026, 2147483648
    %v2114 = vor.u32 1.1754944e-38, %v2113
    %v2115 = vsel %vm2112, %v2114, %v2110
    %v2116 = vmul.f32 1.0, %v2115
    %v2117 = vtanh.pop %v2001
    %v2118 = vtanh.pop %v2002
    %v2119 = vmul.f32 %v2071, %v1769
    %v2120 = vmul.f32 %v2086, %v1770
    %v2121 = vmul.f32 %v2041, %v2117
    %v2122 = vmul.f32 %v2056, %v2118
    %v2123 = vadd.f32 %v2119, %v2121
    %v2124 = vadd.f32 %v2120, %v2122
    %v2125 = vtanh.pop %v2123
    %v2126 = vtanh.pop %v2124
    %v2127 = vmul.f32 %v2101, %v2125
    %v2128 = vmul.f32 %v2116, %v2126
    %2129 = vst [vmem:[#allocation2 + $0x10] sm:$0xff] %v2127
    %2130 = vst [vmem:[#allocation2 + $0x18] sm:$0xff] %v2128
    %v2131 = vld [vmem:[%s0 + $0x80] sm:$0xff]
    %v2132 = vld [vmem:[%s0 + $0x88] sm:$0xff]
    %v2133 = vld [vmem:[%s0 + $0x90] sm:$0xff]
    %v2134 = vld [vmem:[%s0 + $0x98] sm:$0xff]
    %v2135 = vld [vmem:[%s0 + $0xa0] sm:$0xff]
    %v2136 = vld [vmem:[%s0 + $0xa8] sm:$0xff]
    %v2137 = vld [vmem:[%s0 + $0xb0] sm:$0xff]
    %v2138 = vld [vmem:[%s0 + $0xb8] sm:$0xff]
    %v2139 = vpack.c.bf16 %v2127, %v2127
    %v2140 = vpack.c.bf16 %v2128, %v2128
    %2141 = vmatpush.bf16.msra.mxu0 %v1233
    %2142 = vmatpush.bf16.msra.mxu0 %v1225
    %2143 = vmatpush.bf16.msra.mxu0 %v1217
    %2144 = vmatpush.bf16.msra.mxu0 %v1209
    %2145 = vmatpush.bf16.msra.mxu0 %v1201
    %2146 = vmatpush.bf16.msra.mxu0 %v1193
    %2147 = vmatpush.bf16.msra.mxu0 %v1185
    %2148 = vmatpush.bf16.msra.mxu0 %v1177
    %2149 = vmatmul.bf16.gmra.mxu0 %v2139
    %v2150 = vpop.f32.mrf.mxu0
    %v2151 = vadd.f32 0.0, %v2150
    %v2152 = vpop.f32.mrf.mxu0
    %2153 = vdwg.mxu0
    %2154 = vmatpush.bf16.msra.mxu0 %v1297
    %2155 = vmatpush.bf16.msra.mxu0 %v1289
    %2156 = vmatpush.bf16.msra.mxu0 %v1281
    %2157 = vmatpush.bf16.msra.mxu0 %v1273
    %2158 = vmatpush.bf16.msra.mxu0 %v1265
    %2159 = vmatpush.bf16.msra.mxu0 %v1257
    %2160 = vmatpush.bf16.msra.mxu0 %v1249
    %2161 = vmatpush.bf16.msra.mxu0 %v1241
    %2162 = vmatmul.bf16.gmra.mxu0 %v2140
    %v2163 = vpop.f32.mrf.mxu0
    %v2164 = vadd.f32 %v2151, %v2163
    %v2165 = vpop.f32.mrf.mxu0
    %2166 = vdwg.mxu0
    %2167 = vmatpush.bf16.msra.mxu0 %v1234
    %2168 = vmatpush.bf16.msra.mxu0 %v1226
    %2169 = vmatpush.bf16.msra.mxu0 %v1218
    %2170 = vmatpush.bf16.msra.mxu0 %v1210
    %2171 = vmatpush.bf16.msra.mxu0 %v1202
    %2172 = vmatpush.bf16.msra.mxu0 %v1194
    %2173 = vmatpush.bf16.msra.mxu0 %v1186
    %2174 = vmatpush.bf16.msra.mxu0 %v1178
    %2175 = vmatmul.bf16.gmra.mxu0 %v2139
    %v2176 = vpop.f32.mrf.mxu0
    %v2177 = vadd.f32 0.0, %v2176
    %v2178 = vpop.f32.mrf.mxu0
    %2179 = vdwg.mxu0
    %2180 = vmatpush.bf16.msra.mxu0 %v1298
    %2181 = vmatpush.bf16.msra.mxu0 %v1290
    %2182 = vmatpush.bf16.msra.mxu0 %v1282
    %2183 = vmatpush.bf16.msra.mxu0 %v1274
    %2184 = vmatpush.bf16.msra.mxu0 %v1266
    %2185 = vmatpush.bf16.msra.mxu0 %v1258
    %2186 = vmatpush.bf16.msra.mxu0 %v1250
    %2187 = vmatpush.bf16.msra.mxu0 %v1242
    %2188 = vmatmul.bf16.gmra.mxu0 %v2140
    %v2189 = vpop.f32.mrf.mxu0
    %v2190 = vadd.f32 %v2177, %v2189
    %v2191 = vpop.f32.mrf.mxu0
    %2192 = vdwg.mxu0
    %2193 = vmatpush.bf16.msra.mxu0 %v1235
    %2194 = vmatpush.bf16.msra.mxu0 %v1227
    %2195 = vmatpush.bf16.msra.mxu0 %v1219
    %2196 = vmatpush.bf16.msra.mxu0 %v1211
    %2197 = vmatpush.bf16.msra.mxu0 %v1203
    %2198 = vmatpush.bf16.msra.mxu0 %v1195
    %2199 = vmatpush.bf16.msra.mxu0 %v1187
    %2200 = vmatpush.bf16.msra.mxu0 %v1179
    %2201 = vmatmul.bf16.gmra.mxu0 %v2139
    %v2202 = vpop.f32.mrf.mxu0
    %v2203 = vadd.f32 0.0, %v2202
    %v2204 = vpop.f32.mrf.mxu0
    %2205 = vdwg.mxu0
    %2206 = vmatpush.bf16.msra.mxu0 %v1299
    %2207 = vmatpush.bf16.msra.mxu0 %v1291
    %2208 = vmatpush.bf16.msra.mxu0 %v1283
    %2209 = vmatpush.bf16.msra.mxu0 %v1275
    %2210 = vmatpush.bf16.msra.mxu0 %v1267
    %2211 = vmatpush.bf16.msra.mxu0 %v1259
    %2212 = vmatpush.bf16.msra.mxu0 %v1251
    %2213 = vmatpush.bf16.msra.mxu0 %v1243
    %2214 = vmatmul.bf16.gmra.mxu0 %v2140
    %v2215 = vpop.f32.mrf.mxu0
    %v2216 = vadd.f32 %v2203, %v2215
    %v2217 = vpop.f32.mrf.mxu0
    %2218 = vdwg.mxu0
    %2219 = vmatpush.bf16.msra.mxu0 %v1236
    %2220 = vmatpush.bf16.msra.mxu0 %v1228
    %2221 = vmatpush.bf16.msra.mxu0 %v1220
    %2222 = vmatpush.bf16.msra.mxu0 %v1212
    %2223 = vmatpush.bf16.msra.mxu0 %v1204
    %2224 = vmatpush.bf16.msra.mxu0 %v1196
    %2225 = vmatpush.bf16.msra.mxu0 %v1188
    %2226 = vmatpush.bf16.msra.mxu0 %v1180
    %2227 = vmatmul.bf16.gmra.mxu0 %v2139
    %v2228 = vpop.f32.mrf.mxu0
    %v2229 = vadd.f32 0.0, %v2228
    %v2230 = vpop.f32.mrf.mxu0
    %2231 = vdwg.mxu0
    %2232 = vmatpush.bf16.msra.mxu0 %v1300
    %2233 = vmatpush.bf16.msra.mxu0 %v1292
    %2234 = vmatpush.bf16.msra.mxu0 %v1284
    %2235 = vmatpush.bf16.msra.mxu0 %v1276
    %2236 = vmatpush.bf16.msra.mxu0 %v1268
    %2237 = vmatpush.bf16.msra.mxu0 %v1260
    %2238 = vmatpush.bf16.msra.mxu0 %v1252
    %2239 = vmatpush.bf16.msra.mxu0 %v1244
    %2240 = vmatmul.bf16.gmra.mxu0 %v2140
    %v2241 = vpop.f32.mrf.mxu0
    %v2242 = vadd.f32 %v2229, %v2241
    %v2243 = vpop.f32.mrf.mxu0
    %2244 = vdwg.mxu0
    %2245 = vmatpush.bf16.msra.mxu0 %v1237
    %2246 = vmatpush.bf16.msra.mxu0 %v1229
    %2247 = vmatpush.bf16.msra.mxu0 %v1221
    %2248 = vmatpush.bf16.msra.mxu0 %v1213
    %2249 = vmatpush.bf16.msra.mxu0 %v1205
    %2250 = vmatpush.bf16.msra.mxu0 %v1197
    %2251 = vmatpush.bf16.msra.mxu0 %v1189
    %2252 = vmatpush.bf16.msra.mxu0 %v1181
    %2253 = vmatmul.bf16.gmra.mxu0 %v2139
    %v2254 = vpop.f32.mrf.mxu0
    %v2255 = vadd.f32 0.0, %v2254
    %v2256 = vpop.f32.mrf.mxu0
    %2257 = vdwg.mxu0
    %2258 = vmatpush.bf16.msra.mxu0 %v1301
    %2259 = vmatpush.bf16.msra.mxu0 %v1293
    %2260 = vmatpush.bf16.msra.mxu0 %v1285
    %2261 = vmatpush.bf16.msra.mxu0 %v1277
    %2262 = vmatpush.bf16.msra.mxu0 %v1269
    %2263 = vmatpush.bf16.msra.mxu0 %v1261
    %2264 = vmatpush.bf16.msra.mxu0 %v1253
    %2265 = vmatpush.bf16.msra.mxu0 %v1245
    %2266 = vmatmul.bf16.gmra.mxu0 %v2140
    %v2267 = vpop.f32.mrf.mxu0
    %v2268 = vadd.f32 %v2255, %v2267
    %v2269 = vpop.f32.mrf.mxu0
    %2270 = vdwg.mxu0
    %2271 = vmatpush.bf16.msra.mxu0 %v1238
    %2272 = vmatpush.bf16.msra.mxu0 %v1230
    %2273 = vmatpush.bf16.msra.mxu0 %v1222
    %2274 = vmatpush.bf16.msra.mxu0 %v1214
    %2275 = vmatpush.bf16.msra.mxu0 %v1206
    %2276 = vmatpush.bf16.msra.mxu0 %v1198
    %2277 = vmatpush.bf16.msra.mxu0 %v1190
    %2278 = vmatpush.bf16.msra.mxu0 %v1182
    %2279 = vmatmul.bf16.gmra.mxu0 %v2139
    %v2280 = vpop.f32.mrf.mxu0
    %v2281 = vadd.f32 0.0, %v2280
    %v2282 = vpop.f32.mrf.mxu0
    %2283 = vdwg.mxu0
    %2284 = vmatpush.bf16.msra.mxu0 %v1302
    %2285 = vmatpush.bf16.msra.mxu0 %v1294
    %2286 = vmatpush.bf16.msra.mxu0 %v1286
    %2287 = vmatpush.bf16.msra.mxu0 %v1278
    %2288 = vmatpush.bf16.msra.mxu0 %v1270
    %2289 = vmatpush.bf16.msra.mxu0 %v1262
    %2290 = vmatpush.bf16.msra.mxu0 %v1254
    %2291 = vmatpush.bf16.msra.mxu0 %v1246
    %2292 = vmatmul.bf16.gmra.mxu0 %v2140
    %v2293 = vpop.f32.mrf.mxu0
    %v2294 = vadd.f32 %v2281, %v2293
    %v2295 = vpop.f32.mrf.mxu0
    %2296 = vdwg.mxu0
    %2297 = vmatpush.bf16.msra.mxu0 %v1239
    %2298 = vmatpush.bf16.msra.mxu0 %v1231
    %2299 = vmatpush.bf16.msra.mxu0 %v1223
    %2300 = vmatpush.bf16.msra.mxu0 %v1215
    %2301 = vmatpush.bf16.msra.mxu0 %v1207
    %2302 = vmatpush.bf16.msra.mxu0 %v1199
    %2303 = vmatpush.bf16.msra.mxu0 %v1191
    %2304 = vmatpush.bf16.msra.mxu0 %v1183
    %2305 = vmatmul.bf16.gmra.mxu0 %v2139
    %v2306 = vpop.f32.mrf.mxu0
    %v2307 = vadd.f32 0.0, %v2306
    %v2308 = vpop.f32.mrf.mxu0
    %2309 = vdwg.mxu0
    %2310 = vmatpush.bf16.msra.mxu0 %v1303
    %2311 = vmatpush.bf16.msra.mxu0 %v1295
    %2312 = vmatpush.bf16.msra.mxu0 %v1287
    %2313 = vmatpush.bf16.msra.mxu0 %v1279
    %2314 = vmatpush.bf16.msra.mxu0 %v1271
    %2315 = vmatpush.bf16.msra.mxu0 %v1263
    %2316 = vmatpush.bf16.msra.mxu0 %v1255
    %2317 = vmatpush.bf16.msra.mxu0 %v1247
    %2318 = vmatmul.bf16.gmra.mxu0 %v2140
    %v2319 = vpop.f32.mrf.mxu0
    %v2320 = vadd.f32 %v2307, %v2319
    %v2321 = vpop.f32.mrf.mxu0
    %2322 = vdwg.mxu0
    %2323 = vmatpush.bf16.msra.mxu0 %v1240
    %2324 = vmatpush.bf16.msra.mxu0 %v1232
    %2325 = vmatpush.bf16.msra.mxu0 %v1224
    %2326 = vmatpush.bf16.msra.mxu0 %v1216
    %2327 = vmatpush.bf16.msra.mxu0 %v1208
    %2328 = vmatpush.bf16.msra.mxu0 %v1200
    %2329 = vmatpush.bf16.msra.mxu0 %v1192
    %2330 = vmatpush.bf16.msra.mxu0 %v1184
    %2331 = vmatmul.bf16.gmra.mxu0 %v2139
    %v2332 = vpop.f32.mrf.mxu0
    %v2333 = vadd.f32 0.0, %v2332
    %v2334 = vpop.f32.mrf.mxu0
    %2335 = vdwg.mxu0
    %2336 = vmatpush.bf16.msra.mxu0 %v1304
    %2337 = vmatpush.bf16.msra.mxu0 %v1296
    %2338 = vmatpush.bf16.msra.mxu0 %v1288
    %2339 = vmatpush.bf16.msra.mxu0 %v1280
    %2340 = vmatpush.bf16.msra.mxu0 %v1272
    %2341 = vmatpush.bf16.msra.mxu0 %v1264
    %2342 = vmatpush.bf16.msra.mxu0 %v1256
    %2343 = vmatpush.bf16.msra.mxu0 %v1248
    %2344 = vmatmul.bf16.gmra.mxu0 %v2140
    %v2345 = vpop.f32.mrf.mxu0
    %v2346 = vadd.f32 %v2333, %v2345
    %v2347 = vpop.f32.mrf.mxu0
    %2348 = vdwg.mxu0
    %v2349 = vadd.f32 %v2131, %v2164
    %v2350 = vadd.f32 %v2132, %v2190
    %v2351 = vadd.f32 %v2133, %v2216
    %v2352 = vadd.f32 %v2134, %v2242
    %v2353 = vadd.f32 %v2135, %v2268
    %v2354 = vadd.f32 %v2136, %v2294
    %v2355 = vadd.f32 %v2137, %v2320
    %v2356 = vadd.f32 %v2138, %v2346
    %v2357 = vxor.u32 %v2349, 2147483648
    %v2358 = vxor.u32 %v2350, 2147483648
    %v2359 = vxor.u32 %v2351, 2147483648
    %v2360 = vxor.u32 %v2352, 2147483648
    %v2361 = vxor.u32 %v2353, 2147483648
    %v2362 = vxor.u32 %v2354, 2147483648
    %v2363 = vmul.f32 %v2357, 1.442695
    %v2364 = vpow.pop %v2363
    %v2365 = vmul.f32 %v2358, 1.442695
    %v2366 = vpow.pop %v2365
    %v2367 = vmul.f32 %v2359, 1.442695
    %v2368 = vpow.pop %v2367
    %v2369 = vmul.f32 %v2360, 1.442695
    %v2370 = vpow.pop %v2369
    %v2371 = vmul.f32 %v2361, 1.442695
    %v2372 = vpow.pop %v2371
    %v2373 = vmul.f32 %v2362, 1.442695
    %v2374 = vpow.pop %v2373
    %v2375 = vadd.f32 %v2364, 1.0
    %v2376 = vadd.f32 %v2366, 1.0
    %v2377 = vadd.f32 %v2368, 1.0
    %v2378 = vadd.f32 %v2370, 1.0
    %v2379 = vadd.f32 %v2372, 1.0
    %v2380 = vadd.f32 %v2374, 1.0
    %v2381 = vrcp.pop %v2375
    %v2382 = vmul.f32 %v2375, %v2381
    %v2383 = vsub.f32 1.0, %v2382
    %v2384 = vmul.f32 %v2381, %v2383
    %v2385 = vadd.f32 %v2381, %v2384
    %vm2386 = vweird.f32 %v2375
    %vm2387 = vweird.f32 %v2381
    %vm2388 = vmor %vm2386, %vm2387
    %v2389 = vsel %vm2388, %v2381, %v2385
    %v2390 = vand.u32 2147483647, %v2375
    %vm2391 = vcmp.eq.f32.partialorder %v2390, 8.507059e+37
    %v2392 = vand.u32 %v2375, 2147483648
    %v2393 = vor.u32 1.1754944e-38, %v2392
    %v2394 = vsel %vm2391, %v2393, %v2389
    %v2395 = vmul.f32 1.0, %v2394
    %v2396 = vrcp.pop %v2376
    %v2397 = vmul.f32 %v2376, %v2396
    %v2398 = vsub.f32 1.0, %v2397
    %v2399 = vmul.f32 %v2396, %v2398
    %v2400 = vadd.f32 %v2396, %v2399
    %vm2401 = vweird.f32 %v2376
    %vm2402 = vweird.f32 %v2396
    %vm2403 = vmor %vm2401, %vm2402
    %v2404 = vsel %vm2403, %v2396, %v2400
    %v2405 = vand.u32 2147483647, %v2376
    %vm2406 = vcmp.eq.f32.partialorder %v2405, 8.507059e+37
    %v2407 = vand.u32 %v2376, 2147483648
    %v2408 = vor.u32 1.1754944e-38, %v2407
    %v2409 = vsel %vm2406, %v2408, %v2404
    %v2410 = vmul.f32 1.0, %v2409
    %v2411 = vrcp.pop %v2377
    %v2412 = vmul.f32 %v2377, %v2411
    %v2413 = vsub.f32 1.0, %v2412
    %v2414 = vmul.f32 %v2411, %v2413
    %v2415 = vadd.f32 %v2411, %v2414
    %vm2416 = vweird.f32 %v2377
    %vm2417 = vweird.f32 %v2411
    %vm2418 = vmor %vm2416, %vm2417
    %v2419 = vsel %vm2418, %v2411, %v2415
    %v2420 = vand.u32 2147483647, %v2377
    %vm2421 = vcmp.eq.f32.partialorder %v2420, 8.507059e+37
    %v2422 = vand.u32 %v2377, 2147483648
    %v2423 = vor.u32 1.1754944e-38, %v2422
    %v2424 = vsel %vm2421, %v2423, %v2419
    %v2425 = vmul.f32 1.0, %v2424
    %v2426 = vrcp.pop %v2378
    %v2427 = vmul.f32 %v2378, %v2426
    %v2428 = vsub.f32 1.0, %v2427
    %v2429 = vmul.f32 %v2426, %v2428
    %v2430 = vadd.f32 %v2426, %v2429
    %vm2431 = vweird.f32 %v2378
    %vm2432 = vweird.f32 %v2426
    %vm2433 = vmor %vm2431, %vm2432
    %v2434 = vsel %vm2433, %v2426, %v2430
    %v2435 = vand.u32 2147483647, %v2378
    %vm2436 = vcmp.eq.f32.partialorder %v2435, 8.507059e+37
    %v2437 = vand.u32 %v2378, 2147483648
    %v2438 = vor.u32 1.1754944e-38, %v2437
    %v2439 = vsel %vm2436, %v2438, %v2434
    %v2440 = vmul.f32 1.0, %v2439
    %v2441 = vrcp.pop %v2379
    %v2442 = vmul.f32 %v2379, %v2441
    %v2443 = vsub.f32 1.0, %v2442
    %v2444 = vmul.f32 %v2441, %v2443
    %v2445 = vadd.f32 %v2441, %v2444
    %vm2446 = vweird.f32 %v2379
    %vm2447 = vweird.f32 %v2441
    %vm2448 = vmor %vm2446, %vm2447
    %v2449 = vsel %vm2448, %v2441, %v2445
    %v2450 = vand.u32 2147483647, %v2379
    %vm2451 = vcmp.eq.f32.partialorder %v2450, 8.507059e+37
    %v2452 = vand.u32 %v2379, 2147483648
    %v2453 = vor.u32 1.1754944e-38, %v2452
    %v2454 = vsel %vm2451, %v2453, %v2449
    %v2455 = vmul.f32 1.0, %v2454
    %v2456 = vrcp.pop %v2380
    %v2457 = vmul.f32 %v2380, %v2456
    %v2458 = vsub.f32 1.0, %v2457
    %v2459 = vmul.f32 %v2456, %v2458
    %v2460 = vadd.f32 %v2456, %v2459
    %vm2461 = vweird.f32 %v2380
    %vm2462 = vweird.f32 %v2456
    %vm2463 = vmor %vm2461, %vm2462
    %v2464 = vsel %vm2463, %v2456, %v2460
    %v2465 = vand.u32 2147483647, %v2380
    %vm2466 = vcmp.eq.f32.partialorder %v2465, 8.507059e+37
    %v2467 = vand.u32 %v2380, 2147483648
    %v2468 = vor.u32 1.1754944e-38, %v2467
    %v2469 = vsel %vm2466, %v2468, %v2464
    %v2470 = vmul.f32 1.0, %v2469
    %v2471 = vtanh.pop %v2355
    %v2472 = vtanh.pop %v2356
    %v2473 = vmul.f32 %v2425, %v2123
    %v2474 = vmul.f32 %v2440, %v2124
    %v2475 = vmul.f32 %v2395, %v2471
    %v2476 = vmul.f32 %v2410, %v2472
    %v2477 = vadd.f32 %v2473, %v2475
    %v2478 = vadd.f32 %v2474, %v2476
    %v2479 = vtanh.pop %v2477
    %v2480 = vtanh.pop %v2478
    %v2481 = vmul.f32 %v2455, %v2479
    %v2482 = vmul.f32 %v2470, %v2480
    %2483 = vst [vmem:[#allocation2 + $0x20] sm:$0xff] %v2481
    %2484 = vst [vmem:[#allocation2 + $0x28] sm:$0xff] %v2482
    %v2485 = vld [vmem:[%s0 + $0xc0] sm:$0xff]
    %v2486 = vld [vmem:[%s0 + $0xc8] sm:$0xff]
    %v2487 = vld [vmem:[%s0 + $0xd0] sm:$0xff]
    %v2488 = vld [vmem:[%s0 + $0xd8] sm:$0xff]
    %v2489 = vld [vmem:[%s0 + $0xe0] sm:$0xff]
    %v2490 = vld [vmem:[%s0 + $0xe8] sm:$0xff]
    %v2491 = vld [vmem:[%s0 + $0xf0] sm:$0xff]
    %v2492 = vld [vmem:[%s0 + $0xf8] sm:$0xff]
    %v2493 = vpack.c.bf16 %v2481, %v2481
    %v2494 = vpack.c.bf16 %v2482, %v2482
    %2495 = vmatpush.bf16.msra.mxu0 %v1233
    %2496 = vmatpush.bf16.msra.mxu0 %v1225
    %2497 = vmatpush.bf16.msra.mxu0 %v1217
    %2498 = vmatpush.bf16.msra.mxu0 %v1209
    %2499 = vmatpush.bf16.msra.mxu0 %v1201
    %2500 = vmatpush.bf16.msra.mxu0 %v1193
    %2501 = vmatpush.bf16.msra.mxu0 %v1185
    %2502 = vmatpush.bf16.msra.mxu0 %v1177
    %2503 = vmatmul.bf16.gmra.mxu0 %v2493
    %v2504 = vpop.f32.mrf.mxu0
    %v2505 = vadd.f32 0.0, %v2504
    %v2506 = vpop.f32.mrf.mxu0
    %2507 = vdwg.mxu0
    %2508 = vmatpush.bf16.msra.mxu0 %v1297
    %2509 = vmatpush.bf16.msra.mxu0 %v1289
    %2510 = vmatpush.bf16.msra.mxu0 %v1281
    %2511 = vmatpush.bf16.msra.mxu0 %v1273
    %2512 = vmatpush.bf16.msra.mxu0 %v1265
    %2513 = vmatpush.bf16.msra.mxu0 %v1257
    %2514 = vmatpush.bf16.msra.mxu0 %v1249
    %2515 = vmatpush.bf16.msra.mxu0 %v1241
    %2516 = vmatmul.bf16.gmra.mxu0 %v2494
    %v2517 = vpop.f32.mrf.mxu0
    %v2518 = vadd.f32 %v2505, %v2517
    %v2519 = vpop.f32.mrf.mxu0
    %2520 = vdwg.mxu0
    %2521 = vmatpush.bf16.msra.mxu0 %v1234
    %2522 = vmatpush.bf16.msra.mxu0 %v1226
    %2523 = vmatpush.bf16.msra.mxu0 %v1218
    %2524 = vmatpush.bf16.msra.mxu0 %v1210
    %2525 = vmatpush.bf16.msra.mxu0 %v1202
    %2526 = vmatpush.bf16.msra.mxu0 %v1194
    %2527 = vmatpush.bf16.msra.mxu0 %v1186
    %2528 = vmatpush.bf16.msra.mxu0 %v1178
    %2529 = vmatmul.bf16.gmra.mxu0 %v2493
    %v2530 = vpop.f32.mrf.mxu0
    %v2531 = vadd.f32 0.0, %v2530
    %v2532 = vpop.f32.mrf.mxu0
    %2533 = vdwg.mxu0
    %2534 = vmatpush.bf16.msra.mxu0 %v1298
    %2535 = vmatpush.bf16.msra.mxu0 %v1290
    %2536 = vmatpush.bf16.msra.mxu0 %v1282
    %2537 = vmatpush.bf16.msra.mxu0 %v1274
    %2538 = vmatpush.bf16.msra.mxu0 %v1266
    %2539 = vmatpush.bf16.msra.mxu0 %v1258
    %2540 = vmatpush.bf16.msra.mxu0 %v1250
    %2541 = vmatpush.bf16.msra.mxu0 %v1242
    %2542 = vmatmul.bf16.gmra.mxu0 %v2494
    %v2543 = vpop.f32.mrf.mxu0
    %v2544 = vadd.f32 %v2531, %v2543
    %v2545 = vpop.f32.mrf.mxu0
    %2546 = vdwg.mxu0
    %2547 = vmatpush.bf16.msra.mxu0 %v1235
    %2548 = vmatpush.bf16.msra.mxu0 %v1227
    %2549 = vmatpush.bf16.msra.mxu0 %v1219
    %2550 = vmatpush.bf16.msra.mxu0 %v1211
    %2551 = vmatpush.bf16.msra.mxu0 %v1203
    %2552 = vmatpush.bf16.msra.mxu0 %v1195
    %2553 = vmatpush.bf16.msra.mxu0 %v1187
    %2554 = vmatpush.bf16.msra.mxu0 %v1179
    %2555 = vmatmul.bf16.gmra.mxu0 %v2493
    %v2556 = vpop.f32.mrf.mxu0
    %v2557 = vadd.f32 0.0, %v2556
    %v2558 = vpop.f32.mrf.mxu0
    %2559 = vdwg.mxu0
    %2560 = vmatpush.bf16.msra.mxu0 %v1299
    %2561 = vmatpush.bf16.msra.mxu0 %v1291
    %2562 = vmatpush.bf16.msra.mxu0 %v1283
    %2563 = vmatpush.bf16.msra.mxu0 %v1275
    %2564 = vmatpush.bf16.msra.mxu0 %v1267
    %2565 = vmatpush.bf16.msra.mxu0 %v1259
    %2566 = vmatpush.bf16.msra.mxu0 %v1251
    %2567 = vmatpush.bf16.msra.mxu0 %v1243
    %2568 = vmatmul.bf16.gmra.mxu0 %v2494
    %v2569 = vpop.f32.mrf.mxu0
    %v2570 = vadd.f32 %v2557, %v2569
    %v2571 = vpop.f32.mrf.mxu0
    %2572 = vdwg.mxu0
    %2573 = vmatpush.bf16.msra.mxu0 %v1236
    %2574 = vmatpush.bf16.msra.mxu0 %v1228
    %2575 = vmatpush.bf16.msra.mxu0 %v1220
    %2576 = vmatpush.bf16.msra.mxu0 %v1212
    %2577 = vmatpush.bf16.msra.mxu0 %v1204
    %2578 = vmatpush.bf16.msra.mxu0 %v1196
    %2579 = vmatpush.bf16.msra.mxu0 %v1188
    %2580 = vmatpush.bf16.msra.mxu0 %v1180
    %2581 = vmatmul.bf16.gmra.mxu0 %v2493
    %v2582 = vpop.f32.mrf.mxu0
    %v2583 = vadd.f32 0.0, %v2582
    %v2584 = vpop.f32.mrf.mxu0
    %2585 = vdwg.mxu0
    %2586 = vmatpush.bf16.msra.mxu0 %v1300
    %2587 = vmatpush.bf16.msra.mxu0 %v1292
    %2588 = vmatpush.bf16.msra.mxu0 %v1284
    %2589 = vmatpush.bf16.msra.mxu0 %v1276
    %2590 = vmatpush.bf16.msra.mxu0 %v1268
    %2591 = vmatpush.bf16.msra.mxu0 %v1260
    %2592 = vmatpush.bf16.msra.mxu0 %v1252
    %2593 = vmatpush.bf16.msra.mxu0 %v1244
    %2594 = vmatmul.bf16.gmra.mxu0 %v2494
    %v2595 = vpop.f32.mrf.mxu0
    %v2596 = vadd.f32 %v2583, %v2595
    %v2597 = vpop.f32.mrf.mxu0
    %2598 = vdwg.mxu0
    %2599 = vmatpush.bf16.msra.mxu0 %v1237
    %2600 = vmatpush.bf16.msra.mxu0 %v1229
    %2601 = vmatpush.bf16.msra.mxu0 %v1221
    %2602 = vmatpush.bf16.msra.mxu0 %v1213
    %2603 = vmatpush.bf16.msra.mxu0 %v1205
    %2604 = vmatpush.bf16.msra.mxu0 %v1197
    %2605 = vmatpush.bf16.msra.mxu0 %v1189
    %2606 = vmatpush.bf16.msra.mxu0 %v1181
    %2607 = vmatmul.bf16.gmra.mxu0 %v2493
    %v2608 = vpop.f32.mrf.mxu0
    %v2609 = vadd.f32 0.0, %v2608
    %v2610 = vpop.f32.mrf.mxu0
    %2611 = vdwg.mxu0
    %2612 = vmatpush.bf16.msra.mxu0 %v1301
    %2613 = vmatpush.bf16.msra.mxu0 %v1293
    %2614 = vmatpush.bf16.msra.mxu0 %v1285
    %2615 = vmatpush.bf16.msra.mxu0 %v1277
    %2616 = vmatpush.bf16.msra.mxu0 %v1269
    %2617 = vmatpush.bf16.msra.mxu0 %v1261
    %2618 = vmatpush.bf16.msra.mxu0 %v1253
    %2619 = vmatpush.bf16.msra.mxu0 %v1245
    %2620 = vmatmul.bf16.gmra.mxu0 %v2494
    %v2621 = vpop.f32.mrf.mxu0
    %v2622 = vadd.f32 %v2609, %v2621
    %v2623 = vpop.f32.mrf.mxu0
    %2624 = vdwg.mxu0
    %2625 = vmatpush.bf16.msra.mxu0 %v1238
    %2626 = vmatpush.bf16.msra.mxu0 %v1230
    %2627 = vmatpush.bf16.msra.mxu0 %v1222
    %2628 = vmatpush.bf16.msra.mxu0 %v1214
    %2629 = vmatpush.bf16.msra.mxu0 %v1206
    %2630 = vmatpush.bf16.msra.mxu0 %v1198
    %2631 = vmatpush.bf16.msra.mxu0 %v1190
    %2632 = vmatpush.bf16.msra.mxu0 %v1182
    %2633 = vmatmul.bf16.gmra.mxu0 %v2493
    %v2634 = vpop.f32.mrf.mxu0
    %v2635 = vadd.f32 0.0, %v2634
    %v2636 = vpop.f32.mrf.mxu0
    %2637 = vdwg.mxu0
    %2638 = vmatpush.bf16.msra.mxu0 %v1302
    %2639 = vmatpush.bf16.msra.mxu0 %v1294
    %2640 = vmatpush.bf16.msra.mxu0 %v1286
    %2641 = vmatpush.bf16.msra.mxu0 %v1278
    %2642 = vmatpush.bf16.msra.mxu0 %v1270
    %2643 = vmatpush.bf16.msra.mxu0 %v1262
    %2644 = vmatpush.bf16.msra.mxu0 %v1254
    %2645 = vmatpush.bf16.msra.mxu0 %v1246
    %2646 = vmatmul.bf16.gmra.mxu0 %v2494
    %v2647 = vpop.f32.mrf.mxu0
    %v2648 = vadd.f32 %v2635, %v2647
    %v2649 = vpop.f32.mrf.mxu0
    %2650 = vdwg.mxu0
    %2651 = vmatpush.bf16.msra.mxu0 %v1239
    %2652 = vmatpush.bf16.msra.mxu0 %v1231
    %2653 = vmatpush.bf16.msra.mxu0 %v1223
    %2654 = vmatpush.bf16.msra.mxu0 %v1215
    %2655 = vmatpush.bf16.msra.mxu0 %v1207
    %2656 = vmatpush.bf16.msra.mxu0 %v1199
    %2657 = vmatpush.bf16.msra.mxu0 %v1191
    %2658 = vmatpush.bf16.msra.mxu0 %v1183
    %2659 = vmatmul.bf16.gmra.mxu0 %v2493
    %v2660 = vpop.f32.mrf.mxu0
    %v2661 = vadd.f32 0.0, %v2660
    %v2662 = vpop.f32.mrf.mxu0
    %2663 = vdwg.mxu0
    %2664 = vmatpush.bf16.msra.mxu0 %v1303
    %2665 = vmatpush.bf16.msra.mxu0 %v1295
    %2666 = vmatpush.bf16.msra.mxu0 %v1287
    %2667 = vmatpush.bf16.msra.mxu0 %v1279
    %2668 = vmatpush.bf16.msra.mxu0 %v1271
    %2669 = vmatpush.bf16.msra.mxu0 %v1263
    %2670 = vmatpush.bf16.msra.mxu0 %v1255
    %2671 = vmatpush.bf16.msra.mxu0 %v1247
    %2672 = vmatmul.bf16.gmra.mxu0 %v2494
    %v2673 = vpop.f32.mrf.mxu0
    %v2674 = vadd.f32 %v2661, %v2673
    %v2675 = vpop.f32.mrf.mxu0
    %2676 = vdwg.mxu0
    %2677 = vmatpush.bf16.msra.mxu0 %v1240
    %2678 = vmatpush.bf16.msra.mxu0 %v1232
    %2679 = vmatpush.bf16.msra.mxu0 %v1224
    %2680 = vmatpush.bf16.msra.mxu0 %v1216
    %2681 = vmatpush.bf16.msra.mxu0 %v1208
    %2682 = vmatpush.bf16.msra.mxu0 %v1200
    %2683 = vmatpush.bf16.msra.mxu0 %v1192
    %2684 = vmatpush.bf16.msra.mxu0 %v1184
    %2685 = vmatmul.bf16.gmra.mxu0 %v2493
    %v2686 = vpop.f32.mrf.mxu0
    %v2687 = vadd.f32 0.0, %v2686
    %v2688 = vpop.f32.mrf.mxu0
    %2689 = vdwg.mxu0
    %2690 = vmatpush.bf16.msra.mxu0 %v1304
    %2691 = vmatpush.bf16.msra.mxu0 %v1296
    %2692 = vmatpush.bf16.msra.mxu0 %v1288
    %2693 = vmatpush.bf16.msra.mxu0 %v1280
    %2694 = vmatpush.bf16.msra.mxu0 %v1272
    %2695 = vmatpush.bf16.msra.mxu0 %v1264
    %2696 = vmatpush.bf16.msra.mxu0 %v1256
    %2697 = vmatpush.bf16.msra.mxu0 %v1248
    %2698 = vmatmul.bf16.gmra.mxu0 %v2494
    %v2699 = vpop.f32.mrf.mxu0
    %v2700 = vadd.f32 %v2687, %v2699
    %v2701 = vpop.f32.mrf.mxu0
    %2702 = vdwg.mxu0
    %v2703 = vadd.f32 %v2485, %v2518
    %v2704 = vadd.f32 %v2486, %v2544
    %v2705 = vadd.f32 %v2487, %v2570
    %v2706 = vadd.f32 %v2488, %v2596
    %v2707 = vadd.f32 %v2489, %v2622
    %v2708 = vadd.f32 %v2490, %v2648
    %v2709 = vadd.f32 %v2491, %v2674
    %v2710 = vadd.f32 %v2492, %v2700
    %v2711 = vxor.u32 %v2703, 2147483648
    %v2712 = vxor.u32 %v2704, 2147483648
    %v2713 = vxor.u32 %v2705, 2147483648
    %v2714 = vxor.u32 %v2706, 2147483648
    %v2715 = vxor.u32 %v2707, 2147483648
    %v2716 = vxor.u32 %v2708, 2147483648
    %v2717 = vmul.f32 %v2711, 1.442695
    %v2718 = vpow.pop %v2717
    %v2719 = vmul.f32 %v2712, 1.442695
    %v2720 = vpow.pop %v2719
    %v2721 = vmul.f32 %v2713, 1.442695
    %v2722 = vpow.pop %v2721
    %v2723 = vmul.f32 %v2714, 1.442695
    %v2724 = vpow.pop %v2723
    %v2725 = vmul.f32 %v2715, 1.442695
    %v2726 = vpow.pop %v2725
    %v2727 = vmul.f32 %v2716, 1.442695
    %v2728 = vpow.pop %v2727
    %v2729 = vadd.f32 %v2718, 1.0
    %v2730 = vadd.f32 %v2720, 1.0
    %v2731 = vadd.f32 %v2722, 1.0
    %v2732 = vadd.f32 %v2724, 1.0
    %v2733 = vadd.f32 %v2726, 1.0
    %v2734 = vadd.f32 %v2728, 1.0
    %v2735 = vrcp.pop %v2729
    %v2736 = vmul.f32 %v2729, %v2735
    %v2737 = vsub.f32 1.0, %v2736
    %v2738 = vmul.f32 %v2735, %v2737
    %v2739 = vadd.f32 %v2735, %v2738
    %vm2740 = vweird.f32 %v2729
    %vm2741 = vweird.f32 %v2735
    %vm2742 = vmor %vm2740, %vm2741
    %v2743 = vsel %vm2742, %v2735, %v2739
    %v2744 = vand.u32 2147483647, %v2729
    %vm2745 = vcmp.eq.f32.partialorder %v2744, 8.507059e+37
    %v2746 = vand.u32 %v2729, 2147483648
    %v2747 = vor.u32 1.1754944e-38, %v2746
    %v2748 = vsel %vm2745, %v2747, %v2743
    %v2749 = vmul.f32 1.0, %v2748
    %v2750 = vrcp.pop %v2730
    %v2751 = vmul.f32 %v2730, %v2750
    %v2752 = vsub.f32 1.0, %v2751
    %v2753 = vmul.f32 %v2750, %v2752
    %v2754 = vadd.f32 %v2750, %v2753
    %vm2755 = vweird.f32 %v2730
    %vm2756 = vweird.f32 %v2750
    %vm2757 = vmor %vm2755, %vm2756
    %v2758 = vsel %vm2757, %v2750, %v2754
    %v2759 = vand.u32 2147483647, %v2730
    %vm2760 = vcmp.eq.f32.partialorder %v2759, 8.507059e+37
    %v2761 = vand.u32 %v2730, 2147483648
    %v2762 = vor.u32 1.1754944e-38, %v2761
    %v2763 = vsel %vm2760, %v2762, %v2758
    %v2764 = vmul.f32 1.0, %v2763
    %v2765 = vrcp.pop %v2731
    %v2766 = vmul.f32 %v2731, %v2765
    %v2767 = vsub.f32 1.0, %v2766
    %v2768 = vmul.f32 %v2765, %v2767
    %v2769 = vadd.f32 %v2765, %v2768
    %vm2770 = vweird.f32 %v2731
    %vm2771 = vweird.f32 %v2765
    %vm2772 = vmor %vm2770, %vm2771
    %v2773 = vsel %vm2772, %v2765, %v2769
    %v2774 = vand.u32 2147483647, %v2731
    %vm2775 = vcmp.eq.f32.partialorder %v2774, 8.507059e+37
    %v2776 = vand.u32 %v2731, 2147483648
    %v2777 = vor.u32 1.1754944e-38, %v2776
    %v2778 = vsel %vm2775, %v2777, %v2773
    %v2779 = vmul.f32 1.0, %v2778
    %v2780 = vrcp.pop %v2732
    %v2781 = vmul.f32 %v2732, %v2780
    %v2782 = vsub.f32 1.0, %v2781
    %v2783 = vmul.f32 %v2780, %v2782
    %v2784 = vadd.f32 %v2780, %v2783
    %vm2785 = vweird.f32 %v2732
    %vm2786 = vweird.f32 %v2780
    %vm2787 = vmor %vm2785, %vm2786
    %v2788 = vsel %vm2787, %v2780, %v2784
    %v2789 = vand.u32 2147483647, %v2732
    %vm2790 = vcmp.eq.f32.partialorder %v2789, 8.507059e+37
    %v2791 = vand.u32 %v2732, 2147483648
    %v2792 = vor.u32 1.1754944e-38, %v2791
    %v2793 = vsel %vm2790, %v2792, %v2788
    %v2794 = vmul.f32 1.0, %v2793
    %v2795 = vrcp.pop %v2733
    %v2796 = vmul.f32 %v2733, %v2795
    %v2797 = vsub.f32 1.0, %v2796
    %v2798 = vmul.f32 %v2795, %v2797
    %v2799 = vadd.f32 %v2795, %v2798
    %vm2800 = vweird.f32 %v2733
    %vm2801 = vweird.f32 %v2795
    %vm2802 = vmor %vm2800, %vm2801
    %v2803 = vsel %vm2802, %v2795, %v2799
    %v2804 = vand.u32 2147483647, %v2733
    %vm2805 = vcmp.eq.f32.partialorder %v2804, 8.507059e+37
    %v2806 = vand.u32 %v2733, 2147483648
    %v2807 = vor.u32 1.1754944e-38, %v2806
    %v2808 = vsel %vm2805, %v2807, %v2803
    %v2809 = vmul.f32 1.0, %v2808
    %v2810 = vrcp.pop %v2734
    %v2811 = vmul.f32 %v2734, %v2810
    %v2812 = vsub.f32 1.0, %v2811
    %v2813 = vmul.f32 %v2810, %v2812
    %v2814 = vadd.f32 %v2810, %v2813
    %vm2815 = vweird.f32 %v2734
    %vm2816 = vweird.f32 %v2810
    %vm2817 = vmor %vm2815, %vm2816
    %v2818 = vsel %vm2817, %v2810, %v2814
    %v2819 = vand.u32 2147483647, %v2734
    %vm2820 = vcmp.eq.f32.partialorder %v2819, 8.507059e+37
    %v2821 = vand.u32 %v2734, 2147483648
    %v2822 = vor.u32 1.1754944e-38, %v2821
    %v2823 = vsel %vm2820, %v2822, %v2818
    %v2824 = vmul.f32 1.0, %v2823
    %v2825 = vtanh.pop %v2709
    %v2826 = vtanh.pop %v2710
    %v2827 = vmul.f32 %v2779, %v2477
    %v2828 = vmul.f32 %v2794, %v2478
    %v2829 = vmul.f32 %v2749, %v2825
    %v2830 = vmul.f32 %v2764, %v2826
    %v2831 = vadd.f32 %v2827, %v2829
    %v2832 = vadd.f32 %v2828, %v2830
    %v2833 = vtanh.pop %v2831
    %v2834 = vtanh.pop %v2832
    %v2835 = vmul.f32 %v2809, %v2833
    %v2836 = vmul.f32 %v2824, %v2834
    %2837 = vst [vmem:[#allocation2 + $0x30] sm:$0xff] %v2835
    %2838 = vst [vmem:[#allocation2 + $0x38] sm:$0xff] %v2836
    %v2839 = vld [vmem:[%s0 + $0x100] sm:$0xff]
    %v2840 = vld [vmem:[%s0 + $0x108] sm:$0xff]
    %v2841 = vld [vmem:[%s0 + $0x110] sm:$0xff]
    %v2842 = vld [vmem:[%s0 + $0x118] sm:$0xff]
    %v2843 = vld [vmem:[%s0 + $0x120] sm:$0xff]
    %v2844 = vld [vmem:[%s0 + $0x128] sm:$0xff]
    %v2845 = vld [vmem:[%s0 + $0x130] sm:$0xff]
    %v2846 = vld [vmem:[%s0 + $0x138] sm:$0xff]
    %v2847 = vpack.c.bf16 %v2835, %v2835
    %v2848 = vpack.c.bf16 %v2836, %v2836
    %2849 = vmatpush.bf16.msra.mxu0 %v1233
    %2850 = vmatpush.bf16.msra.mxu0 %v1225
    %2851 = vmatpush.bf16.msra.mxu0 %v1217
    %2852 = vmatpush.bf16.msra.mxu0 %v1209
    %2853 = vmatpush.bf16.msra.mxu0 %v1201
    %2854 = vmatpush.bf16.msra.mxu0 %v1193
    %2855 = vmatpush.bf16.msra.mxu0 %v1185
    %2856 = vmatpush.bf16.msra.mxu0 %v1177
    %2857 = vmatmul.bf16.gmra.mxu0 %v2847
    %v2858 = vpop.f32.mrf.mxu0
    %v2859 = vadd.f32 0.0, %v2858
    %v2860 = vpop.f32.mrf.mxu0
    %2861 = vdwg.mxu0
    %2862 = vmatpush.bf16.msra.mxu0 %v1297
    %2863 = vmatpush.bf16.msra.mxu0 %v1289
    %2864 = vmatpush.bf16.msra.mxu0 %v1281
    %2865 = vmatpush.bf16.msra.mxu0 %v1273
    %2866 = vmatpush.bf16.msra.mxu0 %v1265
    %2867 = vmatpush.bf16.msra.mxu0 %v1257
    %2868 = vmatpush.bf16.msra.mxu0 %v1249
    %2869 = vmatpush.bf16.msra.mxu0 %v1241
    %2870 = vmatmul.bf16.gmra.mxu0 %v2848
    %v2871 = vpop.f32.mrf.mxu0
    %v2872 = vadd.f32 %v2859, %v2871
    %v2873 = vpop.f32.mrf.mxu0
    %2874 = vdwg.mxu0
    %2875 = vmatpush.bf16.msra.mxu0 %v1234
    %2876 = vmatpush.bf16.msra.mxu0 %v1226
    %2877 = vmatpush.bf16.msra.mxu0 %v1218
    %2878 = vmatpush.bf16.msra.mxu0 %v1210
    %2879 = vmatpush.bf16.msra.mxu0 %v1202
    %2880 = vmatpush.bf16.msra.mxu0 %v1194
    %2881 = vmatpush.bf16.msra.mxu0 %v1186
    %2882 = vmatpush.bf16.msra.mxu0 %v1178
    %2883 = vmatmul.bf16.gmra.mxu0 %v2847
    %v2884 = vpop.f32.mrf.mxu0
    %v2885 = vadd.f32 0.0, %v2884
    %v2886 = vpop.f32.mrf.mxu0
    %2887 = vdwg.mxu0
    %2888 = vmatpush.bf16.msra.mxu0 %v1298
    %2889 = vmatpush.bf16.msra.mxu0 %v1290
    %2890 = vmatpush.bf16.msra.mxu0 %v1282
    %2891 = vmatpush.bf16.msra.mxu0 %v1274
    %2892 = vmatpush.bf16.msra.mxu0 %v1266
    %2893 = vmatpush.bf16.msra.mxu0 %v1258
    %2894 = vmatpush.bf16.msra.mxu0 %v1250
    %2895 = vmatpush.bf16.msra.mxu0 %v1242
    %2896 = vmatmul.bf16.gmra.mxu0 %v2848
    %v2897 = vpop.f32.mrf.mxu0
    %v2898 = vadd.f32 %v2885, %v2897
    %v2899 = vpop.f32.mrf.mxu0
    %2900 = vdwg.mxu0
    %2901 = vmatpush.bf16.msra.mxu0 %v1235
    %2902 = vmatpush.bf16.msra.mxu0 %v1227
    %2903 = vmatpush.bf16.msra.mxu0 %v1219
    %2904 = vmatpush.bf16.msra.mxu0 %v1211
    %2905 = vmatpush.bf16.msra.mxu0 %v1203
    %2906 = vmatpush.bf16.msra.mxu0 %v1195
    %2907 = vmatpush.bf16.msra.mxu0 %v1187
    %2908 = vmatpush.bf16.msra.mxu0 %v1179
    %2909 = vmatmul.bf16.gmra.mxu0 %v2847
    %v2910 = vpop.f32.mrf.mxu0
    %v2911 = vadd.f32 0.0, %v2910
    %v2912 = vpop.f32.mrf.mxu0
    %2913 = vdwg.mxu0
    %2914 = vmatpush.bf16.msra.mxu0 %v1299
    %2915 = vmatpush.bf16.msra.mxu0 %v1291
    %2916 = vmatpush.bf16.msra.mxu0 %v1283
    %2917 = vmatpush.bf16.msra.mxu0 %v1275
    %2918 = vmatpush.bf16.msra.mxu0 %v1267
    %2919 = vmatpush.bf16.msra.mxu0 %v1259
    %2920 = vmatpush.bf16.msra.mxu0 %v1251
    %2921 = vmatpush.bf16.msra.mxu0 %v1243
    %2922 = vmatmul.bf16.gmra.mxu0 %v2848
    %v2923 = vpop.f32.mrf.mxu0
    %v2924 = vadd.f32 %v2911, %v2923
    %v2925 = vpop.f32.mrf.mxu0
    %2926 = vdwg.mxu0
    %2927 = vmatpush.bf16.msra.mxu0 %v1236
    %2928 = vmatpush.bf16.msra.mxu0 %v1228
    %2929 = vmatpush.bf16.msra.mxu0 %v1220
    %2930 = vmatpush.bf16.msra.mxu0 %v1212
    %2931 = vmatpush.bf16.msra.mxu0 %v1204
    %2932 = vmatpush.bf16.msra.mxu0 %v1196
    %2933 = vmatpush.bf16.msra.mxu0 %v1188
    %2934 = vmatpush.bf16.msra.mxu0 %v1180
    %2935 = vmatmul.bf16.gmra.mxu0 %v2847
    %v2936 = vpop.f32.mrf.mxu0
    %v2937 = vadd.f32 0.0, %v2936
    %v2938 = vpop.f32.mrf.mxu0
    %2939 = vdwg.mxu0
    %2940 = vmatpush.bf16.msra.mxu0 %v1300
    %2941 = vmatpush.bf16.msra.mxu0 %v1292
    %2942 = vmatpush.bf16.msra.mxu0 %v1284
    %2943 = vmatpush.bf16.msra.mxu0 %v1276
    %2944 = vmatpush.bf16.msra.mxu0 %v1268
    %2945 = vmatpush.bf16.msra.mxu0 %v1260
    %2946 = vmatpush.bf16.msra.mxu0 %v1252
    %2947 = vmatpush.bf16.msra.mxu0 %v1244
    %2948 = vmatmul.bf16.gmra.mxu0 %v2848
    %v2949 = vpop.f32.mrf.mxu0
    %v2950 = vadd.f32 %v2937, %v2949
    %v2951 = vpop.f32.mrf.mxu0
    %2952 = vdwg.mxu0
    %2953 = vmatpush.bf16.msra.mxu0 %v1237
    %2954 = vmatpush.bf16.msra.mxu0 %v1229
    %2955 = vmatpush.bf16.msra.mxu0 %v1221
    %2956 = vmatpush.bf16.msra.mxu0 %v1213
    %2957 = vmatpush.bf16.msra.mxu0 %v1205
    %2958 = vmatpush.bf16.msra.mxu0 %v1197
    %2959 = vmatpush.bf16.msra.mxu0 %v1189
    %2960 = vmatpush.bf16.msra.mxu0 %v1181
    %2961 = vmatmul.bf16.gmra.mxu0 %v2847
    %v2962 = vpop.f32.mrf.mxu0
    %v2963 = vadd.f32 0.0, %v2962
    %v2964 = vpop.f32.mrf.mxu0
    %2965 = vdwg.mxu0
    %2966 = vmatpush.bf16.msra.mxu0 %v1301
    %2967 = vmatpush.bf16.msra.mxu0 %v1293
    %2968 = vmatpush.bf16.msra.mxu0 %v1285
    %2969 = vmatpush.bf16.msra.mxu0 %v1277
    %2970 = vmatpush.bf16.msra.mxu0 %v1269
    %2971 = vmatpush.bf16.msra.mxu0 %v1261
    %2972 = vmatpush.bf16.msra.mxu0 %v1253
    %2973 = vmatpush.bf16.msra.mxu0 %v1245
    %2974 = vmatmul.bf16.gmra.mxu0 %v2848
    %v2975 = vpop.f32.mrf.mxu0
    %v2976 = vadd.f32 %v2963, %v2975
    %v2977 = vpop.f32.mrf.mxu0
    %2978 = vdwg.mxu0
    %2979 = vmatpush.bf16.msra.mxu0 %v1238
    %2980 = vmatpush.bf16.msra.mxu0 %v1230
    %2981 = vmatpush.bf16.msra.mxu0 %v1222
    %2982 = vmatpush.bf16.msra.mxu0 %v1214
    %2983 = vmatpush.bf16.msra.mxu0 %v1206
    %2984 = vmatpush.bf16.msra.mxu0 %v1198
    %2985 = vmatpush.bf16.msra.mxu0 %v1190
    %2986 = vmatpush.bf16.msra.mxu0 %v1182
    %2987 = vmatmul.bf16.gmra.mxu0 %v2847
    %v2988 = vpop.f32.mrf.mxu0
    %v2989 = vadd.f32 0.0, %v2988
    %v2990 = vpop.f32.mrf.mxu0
    %2991 = vdwg.mxu0
    %2992 = vmatpush.bf16.msra.mxu0 %v1302
    %2993 = vmatpush.bf16.msra.mxu0 %v1294
    %2994 = vmatpush.bf16.msra.mxu0 %v1286
    %2995 = vmatpush.bf16.msra.mxu0 %v1278
    %2996 = vmatpush.bf16.msra.mxu0 %v1270
    %2997 = vmatpush.bf16.msra.mxu0 %v1262
    %2998 = vmatpush.bf16.msra.mxu0 %v1254
    %2999 = vmatpush.bf16.msra.mxu0 %v1246
    %3000 = vmatmul.bf16.gmra.mxu0 %v2848
    %v3001 = vpop.f32.mrf.mxu0
    %v3002 = vadd.f32 %v2989, %v3001
    %v3003 = vpop.f32.mrf.mxu0
    %3004 = vdwg.mxu0
    %3005 = vmatpush.bf16.msra.mxu0 %v1239
    %3006 = vmatpush.bf16.msra.mxu0 %v1231
    %3007 = vmatpush.bf16.msra.mxu0 %v1223
    %3008 = vmatpush.bf16.msra.mxu0 %v1215
    %3009 = vmatpush.bf16.msra.mxu0 %v1207
    %3010 = vmatpush.bf16.msra.mxu0 %v1199
    %3011 = vmatpush.bf16.msra.mxu0 %v1191
    %3012 = vmatpush.bf16.msra.mxu0 %v1183
    %3013 = vmatmul.bf16.gmra.mxu0 %v2847
    %v3014 = vpop.f32.mrf.mxu0
    %v3015 = vadd.f32 0.0, %v3014
    %v3016 = vpop.f32.mrf.mxu0
    %3017 = vdwg.mxu0
    %3018 = vmatpush.bf16.msra.mxu0 %v1303
    %3019 = vmatpush.bf16.msra.mxu0 %v1295
    %3020 = vmatpush.bf16.msra.mxu0 %v1287
    %3021 = vmatpush.bf16.msra.mxu0 %v1279
    %3022 = vmatpush.bf16.msra.mxu0 %v1271
    %3023 = vmatpush.bf16.msra.mxu0 %v1263
    %3024 = vmatpush.bf16.msra.mxu0 %v1255
    %3025 = vmatpush.bf16.msra.mxu0 %v1247
    %3026 = vmatmul.bf16.gmra.mxu0 %v2848
    %v3027 = vpop.f32.mrf.mxu0
    %v3028 = vadd.f32 %v3015, %v3027
    %v3029 = vpop.f32.mrf.mxu0
    %3030 = vdwg.mxu0
    %3031 = vmatpush.bf16.msra.mxu0 %v1240
    %3032 = vmatpush.bf16.msra.mxu0 %v1232
    %3033 = vmatpush.bf16.msra.mxu0 %v1224
    %3034 = vmatpush.bf16.msra.mxu0 %v1216
    %3035 = vmatpush.bf16.msra.mxu0 %v1208
    %3036 = vmatpush.bf16.msra.mxu0 %v1200
    %3037 = vmatpush.bf16.msra.mxu0 %v1192
    %3038 = vmatpush.bf16.msra.mxu0 %v1184
    %3039 = vmatmul.bf16.gmra.mxu0 %v2847
    %v3040 = vpop.f32.mrf.mxu0
    %v3041 = vadd.f32 0.0, %v3040
    %v3042 = vpop.f32.mrf.mxu0
    %3043 = vdwg.mxu0
    %3044 = vmatpush.bf16.msra.mxu0 %v1304
    %3045 = vmatpush.bf16.msra.mxu0 %v1296
    %3046 = vmatpush.bf16.msra.mxu0 %v1288
    %3047 = vmatpush.bf16.msra.mxu0 %v1280
    %3048 = vmatpush.bf16.msra.mxu0 %v1272
    %3049 = vmatpush.bf16.msra.mxu0 %v1264
    %3050 = vmatpush.bf16.msra.mxu0 %v1256
    %3051 = vmatpush.bf16.msra.mxu0 %v1248
    %3052 = vmatmul.bf16.gmra.mxu0 %v2848
    %v3053 = vpop.f32.mrf.mxu0
    %v3054 = vadd.f32 %v3041, %v3053
    %v3055 = vpop.f32.mrf.mxu0
    %3056 = vdwg.mxu0
    %v3057 = vadd.f32 %v2839, %v2872
    %v3058 = vadd.f32 %v2840, %v2898
    %v3059 = vadd.f32 %v2841, %v2924
    %v3060 = vadd.f32 %v2842, %v2950
    %v3061 = vadd.f32 %v2843, %v2976
    %v3062 = vadd.f32 %v2844, %v3002
    %v3063 = vadd.f32 %v2845, %v3028
    %v3064 = vadd.f32 %v2846, %v3054
    %v3065 = vxor.u32 %v3057, 2147483648
    %v3066 = vxor.u32 %v3058, 2147483648
    %v3067 = vxor.u32 %v3059, 2147483648
    %v3068 = vxor.u32 %v3060, 2147483648
    %v3069 = vxor.u32 %v3061, 2147483648
    %v3070 = vxor.u32 %v3062, 2147483648
    %v3071 = vmul.f32 %v3065, 1.442695
    %v3072 = vpow.pop %v3071
    %v3073 = vmul.f32 %v3066, 1.442695
    %v3074 = vpow.pop %v3073
    %v3075 = vmul.f32 %v3067, 1.442695
    %v3076 = vpow.pop %v3075
    %v3077 = vmul.f32 %v3068, 1.442695
    %v3078 = vpow.pop %v3077
    %v3079 = vmul.f32 %v3069, 1.442695
    %v3080 = vpow.pop %v3079
    %v3081 = vmul.f32 %v3070, 1.442695
    %v3082 = vpow.pop %v3081
    %v3083 = vadd.f32 %v3072, 1.0
    %v3084 = vadd.f32 %v3074, 1.0
    %v3085 = vadd.f32 %v3076, 1.0
    %v3086 = vadd.f32 %v3078, 1.0
    %v3087 = vadd.f32 %v3080, 1.0
    %v3088 = vadd.f32 %v3082, 1.0
    %v3089 = vrcp.pop %v3083
    %v3090 = vmul.f32 %v3083, %v3089
    %v3091 = vsub.f32 1.0, %v3090
    %v3092 = vmul.f32 %v3089, %v3091
    %v3093 = vadd.f32 %v3089, %v3092
    %vm3094 = vweird.f32 %v3083
    %vm3095 = vweird.f32 %v3089
    %vm3096 = vmor %vm3094, %vm3095
    %v3097 = vsel %vm3096, %v3089, %v3093
    %v3098 = vand.u32 2147483647, %v3083
    %vm3099 = vcmp.eq.f32.partialorder %v3098, 8.507059e+37
    %v3100 = vand.u32 %v3083, 2147483648
    %v3101 = vor.u32 1.1754944e-38, %v3100
    %v3102 = vsel %vm3099, %v3101, %v3097
    %v3103 = vmul.f32 1.0, %v3102
    %v3104 = vrcp.pop %v3084
    %v3105 = vmul.f32 %v3084, %v3104
    %v3106 = vsub.f32 1.0, %v3105
    %v3107 = vmul.f32 %v3104, %v3106
    %v3108 = vadd.f32 %v3104, %v3107
    %vm3109 = vweird.f32 %v3084
    %vm3110 = vweird.f32 %v3104
    %vm3111 = vmor %vm3109, %vm3110
    %v3112 = vsel %vm3111, %v3104, %v3108
    %v3113 = vand.u32 2147483647, %v3084
    %vm3114 = vcmp.eq.f32.partialorder %v3113, 8.507059e+37
    %v3115 = vand.u32 %v3084, 2147483648
    %v3116 = vor.u32 1.1754944e-38, %v3115
    %v3117 = vsel %vm3114, %v3116, %v3112
    %v3118 = vmul.f32 1.0, %v3117
    %v3119 = vrcp.pop %v3085
    %v3120 = vmul.f32 %v3085, %v3119
    %v3121 = vsub.f32 1.0, %v3120
    %v3122 = vmul.f32 %v3119, %v3121
    %v3123 = vadd.f32 %v3119, %v3122
    %vm3124 = vweird.f32 %v3085
    %vm3125 = vweird.f32 %v3119
    %vm3126 = vmor %vm3124, %vm3125
    %v3127 = vsel %vm3126, %v3119, %v3123
    %v3128 = vand.u32 2147483647, %v3085
    %vm3129 = vcmp.eq.f32.partialorder %v3128, 8.507059e+37
    %v3130 = vand.u32 %v3085, 2147483648
    %v3131 = vor.u32 1.1754944e-38, %v3130
    %v3132 = vsel %vm3129, %v3131, %v3127
    %v3133 = vmul.f32 1.0, %v3132
    %v3134 = vrcp.pop %v3086
    %v3135 = vmul.f32 %v3086, %v3134
    %v3136 = vsub.f32 1.0, %v3135
    %v3137 = vmul.f32 %v3134, %v3136
    %v3138 = vadd.f32 %v3134, %v3137
    %vm3139 = vweird.f32 %v3086
    %vm3140 = vweird.f32 %v3134
    %vm3141 = vmor %vm3139, %vm3140
    %v3142 = vsel %vm3141, %v3134, %v3138
    %v3143 = vand.u32 2147483647, %v3086
    %vm3144 = vcmp.eq.f32.partialorder %v3143, 8.507059e+37
    %v3145 = vand.u32 %v3086, 2147483648
    %v3146 = vor.u32 1.1754944e-38, %v3145
    %v3147 = vsel %vm3144, %v3146, %v3142
    %v3148 = vmul.f32 1.0, %v3147
    %v3149 = vrcp.pop %v3087
    %v3150 = vmul.f32 %v3087, %v3149
    %v3151 = vsub.f32 1.0, %v3150
    %v3152 = vmul.f32 %v3149, %v3151
    %v3153 = vadd.f32 %v3149, %v3152
    %vm3154 = vweird.f32 %v3087
    %vm3155 = vweird.f32 %v3149
    %vm3156 = vmor %vm3154, %vm3155
    %v3157 = vsel %vm3156, %v3149, %v3153
    %v3158 = vand.u32 2147483647, %v3087
    %vm3159 = vcmp.eq.f32.partialorder %v3158, 8.507059e+37
    %v3160 = vand.u32 %v3087, 2147483648
    %v3161 = vor.u32 1.1754944e-38, %v3160
    %v3162 = vsel %vm3159, %v3161, %v3157
    %v3163 = vmul.f32 1.0, %v3162
    %v3164 = vrcp.pop %v3088
    %v3165 = vmul.f32 %v3088, %v3164
    %v3166 = vsub.f32 1.0, %v3165
    %v3167 = vmul.f32 %v3164, %v3166
    %v3168 = vadd.f32 %v3164, %v3167
    %vm3169 = vweird.f32 %v3088
    %vm3170 = vweird.f32 %v3164
    %vm3171 = vmor %vm3169, %vm3170
    %v3172 = vsel %vm3171, %v3164, %v3168
    %v3173 = vand.u32 2147483647, %v3088
    %vm3174 = vcmp.eq.f32.partialorder %v3173, 8.507059e+37
    %v3175 = vand.u32 %v3088, 2147483648
    %v3176 = vor.u32 1.1754944e-38, %v3175
    %v3177 = vsel %vm3174, %v3176, %v3172
    %v3178 = vmul.f32 1.0, %v3177
    %v3179 = vtanh.pop %v3063
    %v3180 = vtanh.pop %v3064
    %v3181 = vmul.f32 %v3133, %v2831
    %v3182 = vmul.f32 %v3148, %v2832
    %v3183 = vmul.f32 %v3103, %v3179
    %v3184 = vmul.f32 %v3118, %v3180
    %v3185 = vadd.f32 %v3181, %v3183
    %v3186 = vadd.f32 %v3182, %v3184
    %v3187 = vtanh.pop %v3185
    %v3188 = vtanh.pop %v3186
    %v3189 = vmul.f32 %v3163, %v3187
    %v3190 = vmul.f32 %v3178, %v3188
    %3191 = vst [vmem:[#allocation2 + $0x40] sm:$0xff] %v3189
    %3192 = vst [vmem:[#allocation2 + $0x48] sm:$0xff] %v3190
    %v3193 = vld [vmem:[%s0 + $0x140] sm:$0xff]
    %v3194 = vld [vmem:[%s0 + $0x148] sm:$0xff]
    %v3195 = vld [vmem:[%s0 + $0x150] sm:$0xff]
    %v3196 = vld [vmem:[%s0 + $0x158] sm:$0xff]
    %v3197 = vld [vmem:[%s0 + $0x160] sm:$0xff]
    %v3198 = vld [vmem:[%s0 + $0x168] sm:$0xff]
    %v3199 = vld [vmem:[%s0 + $0x170] sm:$0xff]
    %v3200 = vld [vmem:[%s0 + $0x178] sm:$0xff]
    %v3201 = vpack.c.bf16 %v3189, %v3189
    %v3202 = vpack.c.bf16 %v3190, %v3190
    %3203 = vmatpush.bf16.msra.mxu0 %v1233
    %3204 = vmatpush.bf16.msra.mxu0 %v1225
    %3205 = vmatpush.bf16.msra.mxu0 %v1217
    %3206 = vmatpush.bf16.msra.mxu0 %v1209
    %3207 = vmatpush.bf16.msra.mxu0 %v1201
    %3208 = vmatpush.bf16.msra.mxu0 %v1193
    %3209 = vmatpush.bf16.msra.mxu0 %v1185
    %3210 = vmatpush.bf16.msra.mxu0 %v1177
    %3211 = vmatmul.bf16.gmra.mxu0 %v3201
    %v3212 = vpop.f32.mrf.mxu0
    %v3213 = vadd.f32 0.0, %v3212
    %v3214 = vpop.f32.mrf.mxu0
    %3215 = vdwg.mxu0
    %3216 = vmatpush.bf16.msra.mxu0 %v1297
    %3217 = vmatpush.bf16.msra.mxu0 %v1289
    %3218 = vmatpush.bf16.msra.mxu0 %v1281
    %3219 = vmatpush.bf16.msra.mxu0 %v1273
    %3220 = vmatpush.bf16.msra.mxu0 %v1265
    %3221 = vmatpush.bf16.msra.mxu0 %v1257
    %3222 = vmatpush.bf16.msra.mxu0 %v1249
    %3223 = vmatpush.bf16.msra.mxu0 %v1241
    %3224 = vmatmul.bf16.gmra.mxu0 %v3202
    %v3225 = vpop.f32.mrf.mxu0
    %v3226 = vadd.f32 %v3213, %v3225
    %v3227 = vpop.f32.mrf.mxu0
    %3228 = vdwg.mxu0
    %3229 = vmatpush.bf16.msra.mxu0 %v1234
    %3230 = vmatpush.bf16.msra.mxu0 %v1226
    %3231 = vmatpush.bf16.msra.mxu0 %v1218
    %3232 = vmatpush.bf16.msra.mxu0 %v1210
    %3233 = vmatpush.bf16.msra.mxu0 %v1202
    %3234 = vmatpush.bf16.msra.mxu0 %v1194
    %3235 = vmatpush.bf16.msra.mxu0 %v1186
    %3236 = vmatpush.bf16.msra.mxu0 %v1178
    %3237 = vmatmul.bf16.gmra.mxu0 %v3201
    %v3238 = vpop.f32.mrf.mxu0
    %v3239 = vadd.f32 0.0, %v3238
    %v3240 = vpop.f32.mrf.mxu0
    %3241 = vdwg.mxu0
    %3242 = vmatpush.bf16.msra.mxu0 %v1298
    %3243 = vmatpush.bf16.msra.mxu0 %v1290
    %3244 = vmatpush.bf16.msra.mxu0 %v1282
    %3245 = vmatpush.bf16.msra.mxu0 %v1274
    %3246 = vmatpush.bf16.msra.mxu0 %v1266
    %3247 = vmatpush.bf16.msra.mxu0 %v1258
    %3248 = vmatpush.bf16.msra.mxu0 %v1250
    %3249 = vmatpush.bf16.msra.mxu0 %v1242
    %3250 = vmatmul.bf16.gmra.mxu0 %v3202
    %v3251 = vpop.f32.mrf.mxu0
    %v3252 = vadd.f32 %v3239, %v3251
    %v3253 = vpop.f32.mrf.mxu0
    %3254 = vdwg.mxu0
    %3255 = vmatpush.bf16.msra.mxu0 %v1235
    %3256 = vmatpush.bf16.msra.mxu0 %v1227
    %3257 = vmatpush.bf16.msra.mxu0 %v1219
    %3258 = vmatpush.bf16.msra.mxu0 %v1211
    %3259 = vmatpush.bf16.msra.mxu0 %v1203
    %3260 = vmatpush.bf16.msra.mxu0 %v1195
    %3261 = vmatpush.bf16.msra.mxu0 %v1187
    %3262 = vmatpush.bf16.msra.mxu0 %v1179
    %3263 = vmatmul.bf16.gmra.mxu0 %v3201
    %v3264 = vpop.f32.mrf.mxu0
    %v3265 = vadd.f32 0.0, %v3264
    %v3266 = vpop.f32.mrf.mxu0
    %3267 = vdwg.mxu0
    %3268 = vmatpush.bf16.msra.mxu0 %v1299
    %3269 = vmatpush.bf16.msra.mxu0 %v1291
    %3270 = vmatpush.bf16.msra.mxu0 %v1283
    %3271 = vmatpush.bf16.msra.mxu0 %v1275
    %3272 = vmatpush.bf16.msra.mxu0 %v1267
    %3273 = vmatpush.bf16.msra.mxu0 %v1259
    %3274 = vmatpush.bf16.msra.mxu0 %v1251
    %3275 = vmatpush.bf16.msra.mxu0 %v1243
    %3276 = vmatmul.bf16.gmra.mxu0 %v3202
    %v3277 = vpop.f32.mrf.mxu0
    %v3278 = vadd.f32 %v3265, %v3277
    %v3279 = vpop.f32.mrf.mxu0
    %3280 = vdwg.mxu0
    %3281 = vmatpush.bf16.msra.mxu0 %v1236
    %3282 = vmatpush.bf16.msra.mxu0 %v1228
    %3283 = vmatpush.bf16.msra.mxu0 %v1220
    %3284 = vmatpush.bf16.msra.mxu0 %v1212
    %3285 = vmatpush.bf16.msra.mxu0 %v1204
    %3286 = vmatpush.bf16.msra.mxu0 %v1196
    %3287 = vmatpush.bf16.msra.mxu0 %v1188
    %3288 = vmatpush.bf16.msra.mxu0 %v1180
    %3289 = vmatmul.bf16.gmra.mxu0 %v3201
    %v3290 = vpop.f32.mrf.mxu0
    %v3291 = vadd.f32 0.0, %v3290
    %v3292 = vpop.f32.mrf.mxu0
    %3293 = vdwg.mxu0
    %3294 = vmatpush.bf16.msra.mxu0 %v1300
    %3295 = vmatpush.bf16.msra.mxu0 %v1292
    %3296 = vmatpush.bf16.msra.mxu0 %v1284
    %3297 = vmatpush.bf16.msra.mxu0 %v1276
    %3298 = vmatpush.bf16.msra.mxu0 %v1268
    %3299 = vmatpush.bf16.msra.mxu0 %v1260
    %3300 = vmatpush.bf16.msra.mxu0 %v1252
    %3301 = vmatpush.bf16.msra.mxu0 %v1244
    %3302 = vmatmul.bf16.gmra.mxu0 %v3202
    %v3303 = vpop.f32.mrf.mxu0
    %v3304 = vadd.f32 %v3291, %v3303
    %v3305 = vpop.f32.mrf.mxu0
    %3306 = vdwg.mxu0
    %3307 = vmatpush.bf16.msra.mxu0 %v1237
    %3308 = vmatpush.bf16.msra.mxu0 %v1229
    %3309 = vmatpush.bf16.msra.mxu0 %v1221
    %3310 = vmatpush.bf16.msra.mxu0 %v1213
    %3311 = vmatpush.bf16.msra.mxu0 %v1205
    %3312 = vmatpush.bf16.msra.mxu0 %v1197
    %3313 = vmatpush.bf16.msra.mxu0 %v1189
    %3314 = vmatpush.bf16.msra.mxu0 %v1181
    %3315 = vmatmul.bf16.gmra.mxu0 %v3201
    %v3316 = vpop.f32.mrf.mxu0
    %v3317 = vadd.f32 0.0, %v3316
    %v3318 = vpop.f32.mrf.mxu0
    %3319 = vdwg.mxu0
    %3320 = vmatpush.bf16.msra.mxu0 %v1301
    %3321 = vmatpush.bf16.msra.mxu0 %v1293
    %3322 = vmatpush.bf16.msra.mxu0 %v1285
    %3323 = vmatpush.bf16.msra.mxu0 %v1277
    %3324 = vmatpush.bf16.msra.mxu0 %v1269
    %3325 = vmatpush.bf16.msra.mxu0 %v1261
    %3326 = vmatpush.bf16.msra.mxu0 %v1253
    %3327 = vmatpush.bf16.msra.mxu0 %v1245
    %3328 = vmatmul.bf16.gmra.mxu0 %v3202
    %v3329 = vpop.f32.mrf.mxu0
    %v3330 = vadd.f32 %v3317, %v3329
    %v3331 = vpop.f32.mrf.mxu0
    %3332 = vdwg.mxu0
    %3333 = vmatpush.bf16.msra.mxu0 %v1238
    %3334 = vmatpush.bf16.msra.mxu0 %v1230
    %3335 = vmatpush.bf16.msra.mxu0 %v1222
    %3336 = vmatpush.bf16.msra.mxu0 %v1214
    %3337 = vmatpush.bf16.msra.mxu0 %v1206
    %3338 = vmatpush.bf16.msra.mxu0 %v1198
    %3339 = vmatpush.bf16.msra.mxu0 %v1190
    %3340 = vmatpush.bf16.msra.mxu0 %v1182
    %3341 = vmatmul.bf16.gmra.mxu0 %v3201
    %v3342 = vpop.f32.mrf.mxu0
    %v3343 = vadd.f32 0.0, %v3342
    %v3344 = vpop.f32.mrf.mxu0
    %3345 = vdwg.mxu0
    %3346 = vmatpush.bf16.msra.mxu0 %v1302
    %3347 = vmatpush.bf16.msra.mxu0 %v1294
    %3348 = vmatpush.bf16.msra.mxu0 %v1286
    %3349 = vmatpush.bf16.msra.mxu0 %v1278
    %3350 = vmatpush.bf16.msra.mxu0 %v1270
    %3351 = vmatpush.bf16.msra.mxu0 %v1262
    %3352 = vmatpush.bf16.msra.mxu0 %v1254
    %3353 = vmatpush.bf16.msra.mxu0 %v1246
    %3354 = vmatmul.bf16.gmra.mxu0 %v3202
    %v3355 = vpop.f32.mrf.mxu0
    %v3356 = vadd.f32 %v3343, %v3355
    %v3357 = vpop.f32.mrf.mxu0
    %3358 = vdwg.mxu0
    %3359 = vmatpush.bf16.msra.mxu0 %v1239
    %3360 = vmatpush.bf16.msra.mxu0 %v1231
    %3361 = vmatpush.bf16.msra.mxu0 %v1223
    %3362 = vmatpush.bf16.msra.mxu0 %v1215
    %3363 = vmatpush.bf16.msra.mxu0 %v1207
    %3364 = vmatpush.bf16.msra.mxu0 %v1199
    %3365 = vmatpush.bf16.msra.mxu0 %v1191
    %3366 = vmatpush.bf16.msra.mxu0 %v1183
    %3367 = vmatmul.bf16.gmra.mxu0 %v3201
    %v3368 = vpop.f32.mrf.mxu0
    %v3369 = vadd.f32 0.0, %v3368
    %v3370 = vpop.f32.mrf.mxu0
    %3371 = vdwg.mxu0
    %3372 = vmatpush.bf16.msra.mxu0 %v1303
    %3373 = vmatpush.bf16.msra.mxu0 %v1295
    %3374 = vmatpush.bf16.msra.mxu0 %v1287
    %3375 = vmatpush.bf16.msra.mxu0 %v1279
    %3376 = vmatpush.bf16.msra.mxu0 %v1271
    %3377 = vmatpush.bf16.msra.mxu0 %v1263
    %3378 = vmatpush.bf16.msra.mxu0 %v1255
    %3379 = vmatpush.bf16.msra.mxu0 %v1247
    %3380 = vmatmul.bf16.gmra.mxu0 %v3202
    %v3381 = vpop.f32.mrf.mxu0
    %v3382 = vadd.f32 %v3369, %v3381
    %v3383 = vpop.f32.mrf.mxu0
    %3384 = vdwg.mxu0
    %3385 = vmatpush.bf16.msra.mxu0 %v1240
    %3386 = vmatpush.bf16.msra.mxu0 %v1232
    %3387 = vmatpush.bf16.msra.mxu0 %v1224
    %3388 = vmatpush.bf16.msra.mxu0 %v1216
    %3389 = vmatpush.bf16.msra.mxu0 %v1208
    %3390 = vmatpush.bf16.msra.mxu0 %v1200
    %3391 = vmatpush.bf16.msra.mxu0 %v1192
    %3392 = vmatpush.bf16.msra.mxu0 %v1184
    %3393 = vmatmul.bf16.gmra.mxu0 %v3201
    %v3394 = vpop.f32.mrf.mxu0
    %v3395 = vadd.f32 0.0, %v3394
    %v3396 = vpop.f32.mrf.mxu0
    %3397 = vdwg.mxu0
    %3398 = vmatpush.bf16.msra.mxu0 %v1304
    %3399 = vmatpush.bf16.msra.mxu0 %v1296
    %3400 = vmatpush.bf16.msra.mxu0 %v1288
    %3401 = vmatpush.bf16.msra.mxu0 %v1280
    %3402 = vmatpush.bf16.msra.mxu0 %v1272
    %3403 = vmatpush.bf16.msra.mxu0 %v1264
    %3404 = vmatpush.bf16.msra.mxu0 %v1256
    %3405 = vmatpush.bf16.msra.mxu0 %v1248
    %3406 = vmatmul.bf16.gmra.mxu0 %v3202
    %v3407 = vpop.f32.mrf.mxu0
    %v3408 = vadd.f32 %v3395, %v3407
    %v3409 = vpop.f32.mrf.mxu0
    %3410 = vdwg.mxu0
    %v3411 = vadd.f32 %v3193, %v3226
    %v3412 = vadd.f32 %v3194, %v3252
    %v3413 = vadd.f32 %v3195, %v3278
    %v3414 = vadd.f32 %v3196, %v3304
    %v3415 = vadd.f32 %v3197, %v3330
    %v3416 = vadd.f32 %v3198, %v3356
    %v3417 = vadd.f32 %v3199, %v3382
    %v3418 = vadd.f32 %v3200, %v3408
    %v3419 = vxor.u32 %v3411, 2147483648
    %v3420 = vxor.u32 %v3412, 2147483648
    %v3421 = vxor.u32 %v3413, 2147483648
    %v3422 = vxor.u32 %v3414, 2147483648
    %v3423 = vxor.u32 %v3415, 2147483648
    %v3424 = vxor.u32 %v3416, 2147483648
    %v3425 = vmul.f32 %v3419, 1.442695
    %v3426 = vpow.pop %v3425
    %v3427 = vmul.f32 %v3420, 1.442695
    %v3428 = vpow.pop %v3427
    %v3429 = vmul.f32 %v3421, 1.442695
    %v3430 = vpow.pop %v3429
    %v3431 = vmul.f32 %v3422, 1.442695
    %v3432 = vpow.pop %v3431
    %v3433 = vmul.f32 %v3423, 1.442695
    %v3434 = vpow.pop %v3433
    %v3435 = vmul.f32 %v3424, 1.442695
    %v3436 = vpow.pop %v3435
    %v3437 = vadd.f32 %v3426, 1.0
    %v3438 = vadd.f32 %v3428, 1.0
    %v3439 = vadd.f32 %v3430, 1.0
    %v3440 = vadd.f32 %v3432, 1.0
    %v3441 = vadd.f32 %v3434, 1.0
    %v3442 = vadd.f32 %v3436, 1.0
    %v3443 = vrcp.pop %v3437
    %v3444 = vmul.f32 %v3437, %v3443
    %v3445 = vsub.f32 1.0, %v3444
    %v3446 = vmul.f32 %v3443, %v3445
    %v3447 = vadd.f32 %v3443, %v3446
    %vm3448 = vweird.f32 %v3437
    %vm3449 = vweird.f32 %v3443
    %vm3450 = vmor %vm3448, %vm3449
    %v3451 = vsel %vm3450, %v3443, %v3447
    %v3452 = vand.u32 2147483647, %v3437
    %vm3453 = vcmp.eq.f32.partialorder %v3452, 8.507059e+37
    %v3454 = vand.u32 %v3437, 2147483648
    %v3455 = vor.u32 1.1754944e-38, %v3454
    %v3456 = vsel %vm3453, %v3455, %v3451
    %v3457 = vmul.f32 1.0, %v3456
    %v3458 = vrcp.pop %v3438
    %v3459 = vmul.f32 %v3438, %v3458
    %v3460 = vsub.f32 1.0, %v3459
    %v3461 = vmul.f32 %v3458, %v3460
    %v3462 = vadd.f32 %v3458, %v3461
    %vm3463 = vweird.f32 %v3438
    %vm3464 = vweird.f32 %v3458
    %vm3465 = vmor %vm3463, %vm3464
    %v3466 = vsel %vm3465, %v3458, %v3462
    %v3467 = vand.u32 2147483647, %v3438
    %vm3468 = vcmp.eq.f32.partialorder %v3467, 8.507059e+37
    %v3469 = vand.u32 %v3438, 2147483648
    %v3470 = vor.u32 1.1754944e-38, %v3469
    %v3471 = vsel %vm3468, %v3470, %v3466
    %v3472 = vmul.f32 1.0, %v3471
    %v3473 = vrcp.pop %v3439
    %v3474 = vmul.f32 %v3439, %v3473
    %v3475 = vsub.f32 1.0, %v3474
    %v3476 = vmul.f32 %v3473, %v3475
    %v3477 = vadd.f32 %v3473, %v3476
    %vm3478 = vweird.f32 %v3439
    %vm3479 = vweird.f32 %v3473
    %vm3480 = vmor %vm3478, %vm3479
    %v3481 = vsel %vm3480, %v3473, %v3477
    %v3482 = vand.u32 2147483647, %v3439
    %vm3483 = vcmp.eq.f32.partialorder %v3482, 8.507059e+37
    %v3484 = vand.u32 %v3439, 2147483648
    %v3485 = vor.u32 1.1754944e-38, %v3484
    %v3486 = vsel %vm3483, %v3485, %v3481
    %v3487 = vmul.f32 1.0, %v3486
    %v3488 = vrcp.pop %v3440
    %v3489 = vmul.f32 %v3440, %v3488
    %v3490 = vsub.f32 1.0, %v3489
    %v3491 = vmul.f32 %v3488, %v3490
    %v3492 = vadd.f32 %v3488, %v3491
    %vm3493 = vweird.f32 %v3440
    %vm3494 = vweird.f32 %v3488
    %vm3495 = vmor %vm3493, %vm3494
    %v3496 = vsel %vm3495, %v3488, %v3492
    %v3497 = vand.u32 2147483647, %v3440
    %vm3498 = vcmp.eq.f32.partialorder %v3497, 8.507059e+37
    %v3499 = vand.u32 %v3440, 2147483648
    %v3500 = vor.u32 1.1754944e-38, %v3499
    %v3501 = vsel %vm3498, %v3500, %v3496
    %v3502 = vmul.f32 1.0, %v3501
    %v3503 = vrcp.pop %v3441
    %v3504 = vmul.f32 %v3441, %v3503
    %v3505 = vsub.f32 1.0, %v3504
    %v3506 = vmul.f32 %v3503, %v3505
    %v3507 = vadd.f32 %v3503, %v3506
    %vm3508 = vweird.f32 %v3441
    %vm3509 = vweird.f32 %v3503
    %vm3510 = vmor %vm3508, %vm3509
    %v3511 = vsel %vm3510, %v3503, %v3507
    %v3512 = vand.u32 2147483647, %v3441
    %vm3513 = vcmp.eq.f32.partialorder %v3512, 8.507059e+37
    %v3514 = vand.u32 %v3441, 2147483648
    %v3515 = vor.u32 1.1754944e-38, %v3514
    %v3516 = vsel %vm3513, %v3515, %v3511
    %v3517 = vmul.f32 1.0, %v3516
    %v3518 = vrcp.pop %v3442
    %v3519 = vmul.f32 %v3442, %v3518
    %v3520 = vsub.f32 1.0, %v3519
    %v3521 = vmul.f32 %v3518, %v3520
    %v3522 = vadd.f32 %v3518, %v3521
    %vm3523 = vweird.f32 %v3442
    %vm3524 = vweird.f32 %v3518
    %vm3525 = vmor %vm3523, %vm3524
    %v3526 = vsel %vm3525, %v3518, %v3522
    %v3527 = vand.u32 2147483647, %v3442
    %vm3528 = vcmp.eq.f32.partialorder %v3527, 8.507059e+37
    %v3529 = vand.u32 %v3442, 2147483648
    %v3530 = vor.u32 1.1754944e-38, %v3529
    %v3531 = vsel %vm3528, %v3530, %v3526
    %v3532 = vmul.f32 1.0, %v3531
    %v3533 = vtanh.pop %v3417
    %v3534 = vtanh.pop %v3418
    %v3535 = vmul.f32 %v3487, %v3185
    %v3536 = vmul.f32 %v3502, %v3186
    %v3537 = vmul.f32 %v3457, %v3533
    %v3538 = vmul.f32 %v3472, %v3534
    %v3539 = vadd.f32 %v3535, %v3537
    %v3540 = vadd.f32 %v3536, %v3538
    %v3541 = vtanh.pop %v3539
    %v3542 = vtanh.pop %v3540
    %v3543 = vmul.f32 %v3517, %v3541
    %v3544 = vmul.f32 %v3532, %v3542
    %3545 = vst [vmem:[#allocation2 + $0x50] sm:$0xff] %v3543
    %3546 = vst [vmem:[#allocation2 + $0x58] sm:$0xff] %v3544
    %v3547 = vld [vmem:[%s0 + $0x180] sm:$0xff]
    %v3548 = vld [vmem:[%s0 + $0x188] sm:$0xff]
    %v3549 = vld [vmem:[%s0 + $0x190] sm:$0xff]
    %v3550 = vld [vmem:[%s0 + $0x198] sm:$0xff]
    %v3551 = vld [vmem:[%s0 + $0x1a0] sm:$0xff]
    %v3552 = vld [vmem:[%s0 + $0x1a8] sm:$0xff]
    %v3553 = vld [vmem:[%s0 + $0x1b0] sm:$0xff]
    %v3554 = vld [vmem:[%s0 + $0x1b8] sm:$0xff]
    %v3555 = vpack.c.bf16 %v3543, %v3543
    %v3556 = vpack.c.bf16 %v3544, %v3544
    %3557 = vmatpush.bf16.msra.mxu0 %v1233
    %3558 = vmatpush.bf16.msra.mxu0 %v1225
    %3559 = vmatpush.bf16.msra.mxu0 %v1217
    %3560 = vmatpush.bf16.msra.mxu0 %v1209
    %3561 = vmatpush.bf16.msra.mxu0 %v1201
    %3562 = vmatpush.bf16.msra.mxu0 %v1193
    %3563 = vmatpush.bf16.msra.mxu0 %v1185
    %3564 = vmatpush.bf16.msra.mxu0 %v1177
    %3565 = vmatmul.bf16.gmra.mxu0 %v3555
    %v3566 = vpop.f32.mrf.mxu0
    %v3567 = vadd.f32 0.0, %v3566
    %v3568 = vpop.f32.mrf.mxu0
    %3569 = vdwg.mxu0
    %3570 = vmatpush.bf16.msra.mxu0 %v1297
    %3571 = vmatpush.bf16.msra.mxu0 %v1289
    %3572 = vmatpush.bf16.msra.mxu0 %v1281
    %3573 = vmatpush.bf16.msra.mxu0 %v1273
    %3574 = vmatpush.bf16.msra.mxu0 %v1265
    %3575 = vmatpush.bf16.msra.mxu0 %v1257
    %3576 = vmatpush.bf16.msra.mxu0 %v1249
    %3577 = vmatpush.bf16.msra.mxu0 %v1241
    %3578 = vmatmul.bf16.gmra.mxu0 %v3556
    %v3579 = vpop.f32.mrf.mxu0
    %v3580 = vadd.f32 %v3567, %v3579
    %v3581 = vpop.f32.mrf.mxu0
    %3582 = vdwg.mxu0
    %3583 = vmatpush.bf16.msra.mxu0 %v1234
    %3584 = vmatpush.bf16.msra.mxu0 %v1226
    %3585 = vmatpush.bf16.msra.mxu0 %v1218
    %3586 = vmatpush.bf16.msra.mxu0 %v1210
    %3587 = vmatpush.bf16.msra.mxu0 %v1202
    %3588 = vmatpush.bf16.msra.mxu0 %v1194
    %3589 = vmatpush.bf16.msra.mxu0 %v1186
    %3590 = vmatpush.bf16.msra.mxu0 %v1178
    %3591 = vmatmul.bf16.gmra.mxu0 %v3555
    %v3592 = vpop.f32.mrf.mxu0
    %v3593 = vadd.f32 0.0, %v3592
    %v3594 = vpop.f32.mrf.mxu0
    %3595 = vdwg.mxu0
    %3596 = vmatpush.bf16.msra.mxu0 %v1298
    %3597 = vmatpush.bf16.msra.mxu0 %v1290
    %3598 = vmatpush.bf16.msra.mxu0 %v1282
    %3599 = vmatpush.bf16.msra.mxu0 %v1274
    %3600 = vmatpush.bf16.msra.mxu0 %v1266
    %3601 = vmatpush.bf16.msra.mxu0 %v1258
    %3602 = vmatpush.bf16.msra.mxu0 %v1250
    %3603 = vmatpush.bf16.msra.mxu0 %v1242
    %3604 = vmatmul.bf16.gmra.mxu0 %v3556
    %v3605 = vpop.f32.mrf.mxu0
    %v3606 = vadd.f32 %v3593, %v3605
    %v3607 = vpop.f32.mrf.mxu0
    %3608 = vdwg.mxu0
    %3609 = vmatpush.bf16.msra.mxu0 %v1235
    %3610 = vmatpush.bf16.msra.mxu0 %v1227
    %3611 = vmatpush.bf16.msra.mxu0 %v1219
    %3612 = vmatpush.bf16.msra.mxu0 %v1211
    %3613 = vmatpush.bf16.msra.mxu0 %v1203
    %3614 = vmatpush.bf16.msra.mxu0 %v1195
    %3615 = vmatpush.bf16.msra.mxu0 %v1187
    %3616 = vmatpush.bf16.msra.mxu0 %v1179
    %3617 = vmatmul.bf16.gmra.mxu0 %v3555
    %v3618 = vpop.f32.mrf.mxu0
    %v3619 = vadd.f32 0.0, %v3618
    %v3620 = vpop.f32.mrf.mxu0
    %3621 = vdwg.mxu0
    %3622 = vmatpush.bf16.msra.mxu0 %v1299
    %3623 = vmatpush.bf16.msra.mxu0 %v1291
    %3624 = vmatpush.bf16.msra.mxu0 %v1283
    %3625 = vmatpush.bf16.msra.mxu0 %v1275
    %3626 = vmatpush.bf16.msra.mxu0 %v1267
    %3627 = vmatpush.bf16.msra.mxu0 %v1259
    %3628 = vmatpush.bf16.msra.mxu0 %v1251
    %3629 = vmatpush.bf16.msra.mxu0 %v1243
    %3630 = vmatmul.bf16.gmra.mxu0 %v3556
    %v3631 = vpop.f32.mrf.mxu0
    %v3632 = vadd.f32 %v3619, %v3631
    %v3633 = vpop.f32.mrf.mxu0
    %3634 = vdwg.mxu0
    %3635 = vmatpush.bf16.msra.mxu0 %v1236
    %3636 = vmatpush.bf16.msra.mxu0 %v1228
    %3637 = vmatpush.bf16.msra.mxu0 %v1220
    %3638 = vmatpush.bf16.msra.mxu0 %v1212
    %3639 = vmatpush.bf16.msra.mxu0 %v1204
    %3640 = vmatpush.bf16.msra.mxu0 %v1196
    %3641 = vmatpush.bf16.msra.mxu0 %v1188
    %3642 = vmatpush.bf16.msra.mxu0 %v1180
    %3643 = vmatmul.bf16.gmra.mxu0 %v3555
    %v3644 = vpop.f32.mrf.mxu0
    %v3645 = vadd.f32 0.0, %v3644
    %v3646 = vpop.f32.mrf.mxu0
    %3647 = vdwg.mxu0
    %3648 = vmatpush.bf16.msra.mxu0 %v1300
    %3649 = vmatpush.bf16.msra.mxu0 %v1292
    %3650 = vmatpush.bf16.msra.mxu0 %v1284
    %3651 = vmatpush.bf16.msra.mxu0 %v1276
    %3652 = vmatpush.bf16.msra.mxu0 %v1268
    %3653 = vmatpush.bf16.msra.mxu0 %v1260
    %3654 = vmatpush.bf16.msra.mxu0 %v1252
    %3655 = vmatpush.bf16.msra.mxu0 %v1244
    %3656 = vmatmul.bf16.gmra.mxu0 %v3556
    %v3657 = vpop.f32.mrf.mxu0
    %v3658 = vadd.f32 %v3645, %v3657
    %v3659 = vpop.f32.mrf.mxu0
    %3660 = vdwg.mxu0
    %3661 = vmatpush.bf16.msra.mxu0 %v1237
    %3662 = vmatpush.bf16.msra.mxu0 %v1229
    %3663 = vmatpush.bf16.msra.mxu0 %v1221
    %3664 = vmatpush.bf16.msra.mxu0 %v1213
    %3665 = vmatpush.bf16.msra.mxu0 %v1205
    %3666 = vmatpush.bf16.msra.mxu0 %v1197
    %3667 = vmatpush.bf16.msra.mxu0 %v1189
    %3668 = vmatpush.bf16.msra.mxu0 %v1181
    %3669 = vmatmul.bf16.gmra.mxu0 %v3555
    %v3670 = vpop.f32.mrf.mxu0
    %v3671 = vadd.f32 0.0, %v3670
    %v3672 = vpop.f32.mrf.mxu0
    %3673 = vdwg.mxu0
    %3674 = vmatpush.bf16.msra.mxu0 %v1301
    %3675 = vmatpush.bf16.msra.mxu0 %v1293
    %3676 = vmatpush.bf16.msra.mxu0 %v1285
    %3677 = vmatpush.bf16.msra.mxu0 %v1277
    %3678 = vmatpush.bf16.msra.mxu0 %v1269
    %3679 = vmatpush.bf16.msra.mxu0 %v1261
    %3680 = vmatpush.bf16.msra.mxu0 %v1253
    %3681 = vmatpush.bf16.msra.mxu0 %v1245
    %3682 = vmatmul.bf16.gmra.mxu0 %v3556
    %v3683 = vpop.f32.mrf.mxu0
    %v3684 = vadd.f32 %v3671, %v3683
    %v3685 = vpop.f32.mrf.mxu0
    %3686 = vdwg.mxu0
    %3687 = vmatpush.bf16.msra.mxu0 %v1238
    %3688 = vmatpush.bf16.msra.mxu0 %v1230
    %3689 = vmatpush.bf16.msra.mxu0 %v1222
    %3690 = vmatpush.bf16.msra.mxu0 %v1214
    %3691 = vmatpush.bf16.msra.mxu0 %v1206
    %3692 = vmatpush.bf16.msra.mxu0 %v1198
    %3693 = vmatpush.bf16.msra.mxu0 %v1190
    %3694 = vmatpush.bf16.msra.mxu0 %v1182
    %3695 = vmatmul.bf16.gmra.mxu0 %v3555
    %v3696 = vpop.f32.mrf.mxu0
    %v3697 = vadd.f32 0.0, %v3696
    %v3698 = vpop.f32.mrf.mxu0
    %3699 = vdwg.mxu0
    %3700 = vmatpush.bf16.msra.mxu0 %v1302
    %3701 = vmatpush.bf16.msra.mxu0 %v1294
    %3702 = vmatpush.bf16.msra.mxu0 %v1286
    %3703 = vmatpush.bf16.msra.mxu0 %v1278
    %3704 = vmatpush.bf16.msra.mxu0 %v1270
    %3705 = vmatpush.bf16.msra.mxu0 %v1262
    %3706 = vmatpush.bf16.msra.mxu0 %v1254
    %3707 = vmatpush.bf16.msra.mxu0 %v1246
    %3708 = vmatmul.bf16.gmra.mxu0 %v3556
    %v3709 = vpop.f32.mrf.mxu0
    %v3710 = vadd.f32 %v3697, %v3709
    %v3711 = vpop.f32.mrf.mxu0
    %3712 = vdwg.mxu0
    %3713 = vmatpush.bf16.msra.mxu0 %v1239
    %3714 = vmatpush.bf16.msra.mxu0 %v1231
    %3715 = vmatpush.bf16.msra.mxu0 %v1223
    %3716 = vmatpush.bf16.msra.mxu0 %v1215
    %3717 = vmatpush.bf16.msra.mxu0 %v1207
    %3718 = vmatpush.bf16.msra.mxu0 %v1199
    %3719 = vmatpush.bf16.msra.mxu0 %v1191
    %3720 = vmatpush.bf16.msra.mxu0 %v1183
    %3721 = vmatmul.bf16.gmra.mxu0 %v3555
    %v3722 = vpop.f32.mrf.mxu0
    %v3723 = vadd.f32 0.0, %v3722
    %v3724 = vpop.f32.mrf.mxu0
    %3725 = vdwg.mxu0
    %3726 = vmatpush.bf16.msra.mxu0 %v1303
    %3727 = vmatpush.bf16.msra.mxu0 %v1295
    %3728 = vmatpush.bf16.msra.mxu0 %v1287
    %3729 = vmatpush.bf16.msra.mxu0 %v1279
    %3730 = vmatpush.bf16.msra.mxu0 %v1271
    %3731 = vmatpush.bf16.msra.mxu0 %v1263
    %3732 = vmatpush.bf16.msra.mxu0 %v1255
    %3733 = vmatpush.bf16.msra.mxu0 %v1247
    %3734 = vmatmul.bf16.gmra.mxu0 %v3556
    %v3735 = vpop.f32.mrf.mxu0
    %v3736 = vadd.f32 %v3723, %v3735
    %v3737 = vpop.f32.mrf.mxu0
    %3738 = vdwg.mxu0
    %3739 = vmatpush.bf16.msra.mxu0 %v1240
    %3740 = vmatpush.bf16.msra.mxu0 %v1232
    %3741 = vmatpush.bf16.msra.mxu0 %v1224
    %3742 = vmatpush.bf16.msra.mxu0 %v1216
    %3743 = vmatpush.bf16.msra.mxu0 %v1208
    %3744 = vmatpush.bf16.msra.mxu0 %v1200
    %3745 = vmatpush.bf16.msra.mxu0 %v1192
    %3746 = vmatpush.bf16.msra.mxu0 %v1184
    %3747 = vmatmul.bf16.gmra.mxu0 %v3555
    %v3748 = vpop.f32.mrf.mxu0
    %v3749 = vadd.f32 0.0, %v3748
    %v3750 = vpop.f32.mrf.mxu0
    %3751 = vdwg.mxu0
    %3752 = vmatpush.bf16.msra.mxu0 %v1304
    %3753 = vmatpush.bf16.msra.mxu0 %v1296
    %3754 = vmatpush.bf16.msra.mxu0 %v1288
    %3755 = vmatpush.bf16.msra.mxu0 %v1280
    %3756 = vmatpush.bf16.msra.mxu0 %v1272
    %3757 = vmatpush.bf16.msra.mxu0 %v1264
    %3758 = vmatpush.bf16.msra.mxu0 %v1256
    %3759 = vmatpush.bf16.msra.mxu0 %v1248
    %3760 = vmatmul.bf16.gmra.mxu0 %v3556
    %v3761 = vpop.f32.mrf.mxu0
    %v3762 = vadd.f32 %v3749, %v3761
    %v3763 = vpop.f32.mrf.mxu0
    %3764 = vdwg.mxu0
    %v3765 = vadd.f32 %v3547, %v3580
    %v3766 = vadd.f32 %v3548, %v3606
    %v3767 = vadd.f32 %v3549, %v3632
    %v3768 = vadd.f32 %v3550, %v3658
    %v3769 = vadd.f32 %v3551, %v3684
    %v3770 = vadd.f32 %v3552, %v3710
    %v3771 = vadd.f32 %v3553, %v3736
    %v3772 = vadd.f32 %v3554, %v3762
    %v3773 = vxor.u32 %v3765, 2147483648
    %v3774 = vxor.u32 %v3766, 2147483648
    %v3775 = vxor.u32 %v3767, 2147483648
    %v3776 = vxor.u32 %v3768, 2147483648
    %v3777 = vxor.u32 %v3769, 2147483648
    %v3778 = vxor.u32 %v3770, 2147483648
    %v3779 = vmul.f32 %v3773, 1.442695
    %v3780 = vpow.pop %v3779
    %v3781 = vmul.f32 %v3774, 1.442695
    %v3782 = vpow.pop %v3781
    %v3783 = vmul.f32 %v3775, 1.442695
    %v3784 = vpow.pop %v3783
    %v3785 = vmul.f32 %v3776, 1.442695
    %v3786 = vpow.pop %v3785
    %v3787 = vmul.f32 %v3777, 1.442695
    %v3788 = vpow.pop %v3787
    %v3789 = vmul.f32 %v3778, 1.442695
    %v3790 = vpow.pop %v3789
    %v3791 = vadd.f32 %v3780, 1.0
    %v3792 = vadd.f32 %v3782, 1.0
    %v3793 = vadd.f32 %v3784, 1.0
    %v3794 = vadd.f32 %v3786, 1.0
    %v3795 = vadd.f32 %v3788, 1.0
    %v3796 = vadd.f32 %v3790, 1.0
    %v3797 = vrcp.pop %v3791
    %v3798 = vmul.f32 %v3791, %v3797
    %v3799 = vsub.f32 1.0, %v3798
    %v3800 = vmul.f32 %v3797, %v3799
    %v3801 = vadd.f32 %v3797, %v3800
    %vm3802 = vweird.f32 %v3791
    %vm3803 = vweird.f32 %v3797
    %vm3804 = vmor %vm3802, %vm3803
    %v3805 = vsel %vm3804, %v3797, %v3801
    %v3806 = vand.u32 2147483647, %v3791
    %vm3807 = vcmp.eq.f32.partialorder %v3806, 8.507059e+37
    %v3808 = vand.u32 %v3791, 2147483648
    %v3809 = vor.u32 1.1754944e-38, %v3808
    %v3810 = vsel %vm3807, %v3809, %v3805
    %v3811 = vmul.f32 1.0, %v3810
    %v3812 = vrcp.pop %v3792
    %v3813 = vmul.f32 %v3792, %v3812
    %v3814 = vsub.f32 1.0, %v3813
    %v3815 = vmul.f32 %v3812, %v3814
    %v3816 = vadd.f32 %v3812, %v3815
    %vm3817 = vweird.f32 %v3792
    %vm3818 = vweird.f32 %v3812
    %vm3819 = vmor %vm3817, %vm3818
    %v3820 = vsel %vm3819, %v3812, %v3816
    %v3821 = vand.u32 2147483647, %v3792
    %vm3822 = vcmp.eq.f32.partialorder %v3821, 8.507059e+37
    %v3823 = vand.u32 %v3792, 2147483648
    %v3824 = vor.u32 1.1754944e-38, %v3823
    %v3825 = vsel %vm3822, %v3824, %v3820
    %v3826 = vmul.f32 1.0, %v3825
    %v3827 = vrcp.pop %v3793
    %v3828 = vmul.f32 %v3793, %v3827
    %v3829 = vsub.f32 1.0, %v3828
    %v3830 = vmul.f32 %v3827, %v3829
    %v3831 = vadd.f32 %v3827, %v3830
    %vm3832 = vweird.f32 %v3793
    %vm3833 = vweird.f32 %v3827
    %vm3834 = vmor %vm3832, %vm3833
    %v3835 = vsel %vm3834, %v3827, %v3831
    %v3836 = vand.u32 2147483647, %v3793
    %vm3837 = vcmp.eq.f32.partialorder %v3836, 8.507059e+37
    %v3838 = vand.u32 %v3793, 2147483648
    %v3839 = vor.u32 1.1754944e-38, %v3838
    %v3840 = vsel %vm3837, %v3839, %v3835
    %v3841 = vmul.f32 1.0, %v3840
    %v3842 = vrcp.pop %v3794
    %v3843 = vmul.f32 %v3794, %v3842
    %v3844 = vsub.f32 1.0, %v3843
    %v3845 = vmul.f32 %v3842, %v3844
    %v3846 = vadd.f32 %v3842, %v3845
    %vm3847 = vweird.f32 %v3794
    %vm3848 = vweird.f32 %v3842
    %vm3849 = vmor %vm3847, %vm3848
    %v3850 = vsel %vm3849, %v3842, %v3846
    %v3851 = vand.u32 2147483647, %v3794
    %vm3852 = vcmp.eq.f32.partialorder %v3851, 8.507059e+37
    %v3853 = vand.u32 %v3794, 2147483648
    %v3854 = vor.u32 1.1754944e-38, %v3853
    %v3855 = vsel %vm3852, %v3854, %v3850
    %v3856 = vmul.f32 1.0, %v3855
    %v3857 = vrcp.pop %v3795
    %v3858 = vmul.f32 %v3795, %v3857
    %v3859 = vsub.f32 1.0, %v3858
    %v3860 = vmul.f32 %v3857, %v3859
    %v3861 = vadd.f32 %v3857, %v3860
    %vm3862 = vweird.f32 %v3795
    %vm3863 = vweird.f32 %v3857
    %vm3864 = vmor %vm3862, %vm3863
    %v3865 = vsel %vm3864, %v3857, %v3861
    %v3866 = vand.u32 2147483647, %v3795
    %vm3867 = vcmp.eq.f32.partialorder %v3866, 8.507059e+37
    %v3868 = vand.u32 %v3795, 2147483648
    %v3869 = vor.u32 1.1754944e-38, %v3868
    %v3870 = vsel %vm3867, %v3869, %v3865
    %v3871 = vmul.f32 1.0, %v3870
    %v3872 = vrcp.pop %v3796
    %v3873 = vmul.f32 %v3796, %v3872
    %v3874 = vsub.f32 1.0, %v3873
    %v3875 = vmul.f32 %v3872, %v3874
    %v3876 = vadd.f32 %v3872, %v3875
    %vm3877 = vweird.f32 %v3796
    %vm3878 = vweird.f32 %v3872
    %vm3879 = vmor %vm3877, %vm3878
    %v3880 = vsel %vm3879, %v3872, %v3876
    %v3881 = vand.u32 2147483647, %v3796
    %vm3882 = vcmp.eq.f32.partialorder %v3881, 8.507059e+37
    %v3883 = vand.u32 %v3796, 2147483648
    %v3884 = vor.u32 1.1754944e-38, %v3883
    %v3885 = vsel %vm3882, %v3884, %v3880
    %v3886 = vmul.f32 1.0, %v3885
    %v3887 = vtanh.pop %v3771
    %v3888 = vtanh.pop %v3772
    %v3889 = vmul.f32 %v3841, %v3539
    %v3890 = vmul.f32 %v3856, %v3540
    %v3891 = vmul.f32 %v3811, %v3887
    %v3892 = vmul.f32 %v3826, %v3888
    %v3893 = vadd.f32 %v3889, %v3891
    %v3894 = vadd.f32 %v3890, %v3892
    %v3895 = vtanh.pop %v3893
    %v3896 = vtanh.pop %v3894
    %v3897 = vmul.f32 %v3871, %v3895
    %v3898 = vmul.f32 %v3886, %v3896
    %3899 = vst [vmem:[#allocation2 + $0x60] sm:$0xff] %v3897
    %3900 = vst [vmem:[#allocation2 + $0x68] sm:$0xff] %v3898
    %v3901 = vld [vmem:[%s0 + $0x1c0] sm:$0xff]
    %v3902 = vld [vmem:[%s0 + $0x1c8] sm:$0xff]
    %v3903 = vld [vmem:[%s0 + $0x1d0] sm:$0xff]
    %v3904 = vld [vmem:[%s0 + $0x1d8] sm:$0xff]
    %v3905 = vld [vmem:[%s0 + $0x1e0] sm:$0xff]
    %v3906 = vld [vmem:[%s0 + $0x1e8] sm:$0xff]
    %v3907 = vld [vmem:[%s0 + $0x1f0] sm:$0xff]
    %v3908 = vld [vmem:[%s0 + $0x1f8] sm:$0xff]
    %v3909 = vpack.c.bf16 %v3897, %v3897
    %v3910 = vpack.c.bf16 %v3898, %v3898
    %3911 = vmatpush.bf16.msra.mxu0 %v1233
    %3912 = vmatpush.bf16.msra.mxu0 %v1225
    %3913 = vmatpush.bf16.msra.mxu0 %v1217
    %3914 = vmatpush.bf16.msra.mxu0 %v1209
    %3915 = vmatpush.bf16.msra.mxu0 %v1201
    %3916 = vmatpush.bf16.msra.mxu0 %v1193
    %3917 = vmatpush.bf16.msra.mxu0 %v1185
    %3918 = vmatpush.bf16.msra.mxu0 %v1177
    %3919 = vmatmul.bf16.gmra.mxu0 %v3909
    %v3920 = vpop.f32.mrf.mxu0
    %v3921 = vadd.f32 0.0, %v3920
    %v3922 = vpop.f32.mrf.mxu0
    %3923 = vdwg.mxu0
    %3924 = vmatpush.bf16.msra.mxu0 %v1297
    %3925 = vmatpush.bf16.msra.mxu0 %v1289
    %3926 = vmatpush.bf16.msra.mxu0 %v1281
    %3927 = vmatpush.bf16.msra.mxu0 %v1273
    %3928 = vmatpush.bf16.msra.mxu0 %v1265
    %3929 = vmatpush.bf16.msra.mxu0 %v1257
    %3930 = vmatpush.bf16.msra.mxu0 %v1249
    %3931 = vmatpush.bf16.msra.mxu0 %v1241
    %3932 = vmatmul.bf16.gmra.mxu0 %v3910
    %v3933 = vpop.f32.mrf.mxu0
    %v3934 = vadd.f32 %v3921, %v3933
    %v3935 = vpop.f32.mrf.mxu0
    %3936 = vdwg.mxu0
    %3937 = vmatpush.bf16.msra.mxu0 %v1234
    %3938 = vmatpush.bf16.msra.mxu0 %v1226
    %3939 = vmatpush.bf16.msra.mxu0 %v1218
    %3940 = vmatpush.bf16.msra.mxu0 %v1210
    %3941 = vmatpush.bf16.msra.mxu0 %v1202
    %3942 = vmatpush.bf16.msra.mxu0 %v1194
    %3943 = vmatpush.bf16.msra.mxu0 %v1186
    %3944 = vmatpush.bf16.msra.mxu0 %v1178
    %3945 = vmatmul.bf16.gmra.mxu0 %v3909
    %v3946 = vpop.f32.mrf.mxu0
    %v3947 = vadd.f32 0.0, %v3946
    %v3948 = vpop.f32.mrf.mxu0
    %3949 = vdwg.mxu0
    %3950 = vmatpush.bf16.msra.mxu0 %v1298
    %3951 = vmatpush.bf16.msra.mxu0 %v1290
    %3952 = vmatpush.bf16.msra.mxu0 %v1282
    %3953 = vmatpush.bf16.msra.mxu0 %v1274
    %3954 = vmatpush.bf16.msra.mxu0 %v1266
    %3955 = vmatpush.bf16.msra.mxu0 %v1258
    %3956 = vmatpush.bf16.msra.mxu0 %v1250
    %3957 = vmatpush.bf16.msra.mxu0 %v1242
    %3958 = vmatmul.bf16.gmra.mxu0 %v3910
    %v3959 = vpop.f32.mrf.mxu0
    %v3960 = vadd.f32 %v3947, %v3959
    %v3961 = vpop.f32.mrf.mxu0
    %3962 = vdwg.mxu0
    %3963 = vmatpush.bf16.msra.mxu0 %v1235
    %3964 = vmatpush.bf16.msra.mxu0 %v1227
    %3965 = vmatpush.bf16.msra.mxu0 %v1219
    %3966 = vmatpush.bf16.msra.mxu0 %v1211
    %3967 = vmatpush.bf16.msra.mxu0 %v1203
    %3968 = vmatpush.bf16.msra.mxu0 %v1195
    %3969 = vmatpush.bf16.msra.mxu0 %v1187
    %3970 = vmatpush.bf16.msra.mxu0 %v1179
    %3971 = vmatmul.bf16.gmra.mxu0 %v3909
    %v3972 = vpop.f32.mrf.mxu0
    %v3973 = vadd.f32 0.0, %v3972
    %v3974 = vpop.f32.mrf.mxu0
    %3975 = vdwg.mxu0
    %3976 = vmatpush.bf16.msra.mxu0 %v1299
    %3977 = vmatpush.bf16.msra.mxu0 %v1291
    %3978 = vmatpush.bf16.msra.mxu0 %v1283
    %3979 = vmatpush.bf16.msra.mxu0 %v1275
    %3980 = vmatpush.bf16.msra.mxu0 %v1267
    %3981 = vmatpush.bf16.msra.mxu0 %v1259
    %3982 = vmatpush.bf16.msra.mxu0 %v1251
    %3983 = vmatpush.bf16.msra.mxu0 %v1243
    %3984 = vmatmul.bf16.gmra.mxu0 %v3910
    %v3985 = vpop.f32.mrf.mxu0
    %v3986 = vadd.f32 %v3973, %v3985
    %v3987 = vpop.f32.mrf.mxu0
    %3988 = vdwg.mxu0
    %3989 = vmatpush.bf16.msra.mxu0 %v1236
    %3990 = vmatpush.bf16.msra.mxu0 %v1228
    %3991 = vmatpush.bf16.msra.mxu0 %v1220
    %3992 = vmatpush.bf16.msra.mxu0 %v1212
    %3993 = vmatpush.bf16.msra.mxu0 %v1204
    %3994 = vmatpush.bf16.msra.mxu0 %v1196
    %3995 = vmatpush.bf16.msra.mxu0 %v1188
    %3996 = vmatpush.bf16.msra.mxu0 %v1180
    %3997 = vmatmul.bf16.gmra.mxu0 %v3909
    %v3998 = vpop.f32.mrf.mxu0
    %v3999 = vadd.f32 0.0, %v3998
    %v4000 = vpop.f32.mrf.mxu0
    %4001 = vdwg.mxu0
    %4002 = vmatpush.bf16.msra.mxu0 %v1300
    %4003 = vmatpush.bf16.msra.mxu0 %v1292
    %4004 = vmatpush.bf16.msra.mxu0 %v1284
    %4005 = vmatpush.bf16.msra.mxu0 %v1276
    %4006 = vmatpush.bf16.msra.mxu0 %v1268
    %4007 = vmatpush.bf16.msra.mxu0 %v1260
    %4008 = vmatpush.bf16.msra.mxu0 %v1252
    %4009 = vmatpush.bf16.msra.mxu0 %v1244
    %4010 = vmatmul.bf16.gmra.mxu0 %v3910
    %v4011 = vpop.f32.mrf.mxu0
    %v4012 = vadd.f32 %v3999, %v4011
    %v4013 = vpop.f32.mrf.mxu0
    %4014 = vdwg.mxu0
    %4015 = vmatpush.bf16.msra.mxu0 %v1237
    %4016 = vmatpush.bf16.msra.mxu0 %v1229
    %4017 = vmatpush.bf16.msra.mxu0 %v1221
    %4018 = vmatpush.bf16.msra.mxu0 %v1213
    %4019 = vmatpush.bf16.msra.mxu0 %v1205
    %4020 = vmatpush.bf16.msra.mxu0 %v1197
    %4021 = vmatpush.bf16.msra.mxu0 %v1189
    %4022 = vmatpush.bf16.msra.mxu0 %v1181
    %4023 = vmatmul.bf16.gmra.mxu0 %v3909
    %v4024 = vpop.f32.mrf.mxu0
    %v4025 = vadd.f32 0.0, %v4024
    %v4026 = vpop.f32.mrf.mxu0
    %4027 = vdwg.mxu0
    %4028 = vmatpush.bf16.msra.mxu0 %v1301
    %4029 = vmatpush.bf16.msra.mxu0 %v1293
    %4030 = vmatpush.bf16.msra.mxu0 %v1285
    %4031 = vmatpush.bf16.msra.mxu0 %v1277
    %4032 = vmatpush.bf16.msra.mxu0 %v1269
    %4033 = vmatpush.bf16.msra.mxu0 %v1261
    %4034 = vmatpush.bf16.msra.mxu0 %v1253
    %4035 = vmatpush.bf16.msra.mxu0 %v1245
    %4036 = vmatmul.bf16.gmra.mxu0 %v3910
    %v4037 = vpop.f32.mrf.mxu0
    %v4038 = vadd.f32 %v4025, %v4037
    %v4039 = vpop.f32.mrf.mxu0
    %4040 = vdwg.mxu0
    %4041 = vmatpush.bf16.msra.mxu0 %v1238
    %4042 = vmatpush.bf16.msra.mxu0 %v1230
    %4043 = vmatpush.bf16.msra.mxu0 %v1222
    %4044 = vmatpush.bf16.msra.mxu0 %v1214
    %4045 = vmatpush.bf16.msra.mxu0 %v1206
    %4046 = vmatpush.bf16.msra.mxu0 %v1198
    %4047 = vmatpush.bf16.msra.mxu0 %v1190
    %4048 = vmatpush.bf16.msra.mxu0 %v1182
    %4049 = vmatmul.bf16.gmra.mxu0 %v3909
    %v4050 = vpop.f32.mrf.mxu0
    %v4051 = vadd.f32 0.0, %v4050
    %v4052 = vpop.f32.mrf.mxu0
    %4053 = vdwg.mxu0
    %4054 = vmatpush.bf16.msra.mxu0 %v1302
    %4055 = vmatpush.bf16.msra.mxu0 %v1294
    %4056 = vmatpush.bf16.msra.mxu0 %v1286
    %4057 = vmatpush.bf16.msra.mxu0 %v1278
    %4058 = vmatpush.bf16.msra.mxu0 %v1270
    %4059 = vmatpush.bf16.msra.mxu0 %v1262
    %4060 = vmatpush.bf16.msra.mxu0 %v1254
    %4061 = vmatpush.bf16.msra.mxu0 %v1246
    %4062 = vmatmul.bf16.gmra.mxu0 %v3910
    %v4063 = vpop.f32.mrf.mxu0
    %v4064 = vadd.f32 %v4051, %v4063
    %v4065 = vpop.f32.mrf.mxu0
    %4066 = vdwg.mxu0
    %4067 = vmatpush.bf16.msra.mxu0 %v1239
    %4068 = vmatpush.bf16.msra.mxu0 %v1231
    %4069 = vmatpush.bf16.msra.mxu0 %v1223
    %4070 = vmatpush.bf16.msra.mxu0 %v1215
    %4071 = vmatpush.bf16.msra.mxu0 %v1207
    %4072 = vmatpush.bf16.msra.mxu0 %v1199
    %4073 = vmatpush.bf16.msra.mxu0 %v1191
    %4074 = vmatpush.bf16.msra.mxu0 %v1183
    %4075 = vmatmul.bf16.gmra.mxu0 %v3909
    %v4076 = vpop.f32.mrf.mxu0
    %v4077 = vadd.f32 0.0, %v4076
    %v4078 = vpop.f32.mrf.mxu0
    %4079 = vdwg.mxu0
    %4080 = vmatpush.bf16.msra.mxu0 %v1303
    %4081 = vmatpush.bf16.msra.mxu0 %v1295
    %4082 = vmatpush.bf16.msra.mxu0 %v1287
    %4083 = vmatpush.bf16.msra.mxu0 %v1279
    %4084 = vmatpush.bf16.msra.mxu0 %v1271
    %4085 = vmatpush.bf16.msra.mxu0 %v1263
    %4086 = vmatpush.bf16.msra.mxu0 %v1255
    %4087 = vmatpush.bf16.msra.mxu0 %v1247
    %4088 = vmatmul.bf16.gmra.mxu0 %v3910
    %v4089 = vpop.f32.mrf.mxu0
    %v4090 = vadd.f32 %v4077, %v4089
    %v4091 = vpop.f32.mrf.mxu0
    %4092 = vdwg.mxu0
    %4093 = vmatpush.bf16.msra.mxu0 %v1240
    %4094 = vmatpush.bf16.msra.mxu0 %v1232
    %4095 = vmatpush.bf16.msra.mxu0 %v1224
    %4096 = vmatpush.bf16.msra.mxu0 %v1216
    %4097 = vmatpush.bf16.msra.mxu0 %v1208
    %4098 = vmatpush.bf16.msra.mxu0 %v1200
    %4099 = vmatpush.bf16.msra.mxu0 %v1192
    %4100 = vmatpush.bf16.msra.mxu0 %v1184
    %4101 = vmatmul.bf16.gmra.mxu0 %v3909
    %v4102 = vpop.f32.mrf.mxu0
    %v4103 = vadd.f32 0.0, %v4102
    %v4104 = vpop.f32.mrf.mxu0
    %4105 = vdwg.mxu0
    %4106 = vmatpush.bf16.msra.mxu0 %v1304
    %4107 = vmatpush.bf16.msra.mxu0 %v1296
    %4108 = vmatpush.bf16.msra.mxu0 %v1288
    %4109 = vmatpush.bf16.msra.mxu0 %v1280
    %4110 = vmatpush.bf16.msra.mxu0 %v1272
    %4111 = vmatpush.bf16.msra.mxu0 %v1264
    %4112 = vmatpush.bf16.msra.mxu0 %v1256
    %4113 = vmatpush.bf16.msra.mxu0 %v1248
    %4114 = vmatmul.bf16.gmra.mxu0 %v3910
    %v4115 = vpop.f32.mrf.mxu0
    %v4116 = vadd.f32 %v4103, %v4115
    %v4117 = vpop.f32.mrf.mxu0
    %4118 = vdwg.mxu0
    %v4119 = vadd.f32 %v3901, %v3934
    %v4120 = vadd.f32 %v3902, %v3960
    %v4121 = vadd.f32 %v3903, %v3986
    %v4122 = vadd.f32 %v3904, %v4012
    %v4123 = vadd.f32 %v3905, %v4038
    %v4124 = vadd.f32 %v3906, %v4064
    %v4125 = vadd.f32 %v3907, %v4090
    %v4126 = vadd.f32 %v3908, %v4116
    %v4127 = vxor.u32 %v4119, 2147483648
    %v4128 = vxor.u32 %v4120, 2147483648
    %v4129 = vxor.u32 %v4121, 2147483648
    %v4130 = vxor.u32 %v4122, 2147483648
    %v4131 = vxor.u32 %v4123, 2147483648
    %v4132 = vxor.u32 %v4124, 2147483648
    %v4133 = vmul.f32 %v4127, 1.442695
    %v4134 = vpow.pop %v4133
    %v4135 = vmul.f32 %v4128, 1.442695
    %v4136 = vpow.pop %v4135
    %v4137 = vmul.f32 %v4129, 1.442695
    %v4138 = vpow.pop %v4137
    %v4139 = vmul.f32 %v4130, 1.442695
    %v4140 = vpow.pop %v4139
    %v4141 = vmul.f32 %v4131, 1.442695
    %v4142 = vpow.pop %v4141
    %v4143 = vmul.f32 %v4132, 1.442695
    %v4144 = vpow.pop %v4143
    %v4145 = vadd.f32 %v4134, 1.0
    %v4146 = vadd.f32 %v4136, 1.0
    %v4147 = vadd.f32 %v4138, 1.0
    %v4148 = vadd.f32 %v4140, 1.0
    %v4149 = vadd.f32 %v4142, 1.0
    %v4150 = vadd.f32 %v4144, 1.0
    %v4151 = vrcp.pop %v4145
    %v4152 = vmul.f32 %v4145, %v4151
    %v4153 = vsub.f32 1.0, %v4152
    %v4154 = vmul.f32 %v4151, %v4153
    %v4155 = vadd.f32 %v4151, %v4154
    %vm4156 = vweird.f32 %v4145
    %vm4157 = vweird.f32 %v4151
    %vm4158 = vmor %vm4156, %vm4157
    %v4159 = vsel %vm4158, %v4151, %v4155
    %v4160 = vand.u32 2147483647, %v4145
    %vm4161 = vcmp.eq.f32.partialorder %v4160, 8.507059e+37
    %v4162 = vand.u32 %v4145, 2147483648
    %v4163 = vor.u32 1.1754944e-38, %v4162
    %v4164 = vsel %vm4161, %v4163, %v4159
    %v4165 = vmul.f32 1.0, %v4164
    %v4166 = vrcp.pop %v4146
    %v4167 = vmul.f32 %v4146, %v4166
    %v4168 = vsub.f32 1.0, %v4167
    %v4169 = vmul.f32 %v4166, %v4168
    %v4170 = vadd.f32 %v4166, %v4169
    %vm4171 = vweird.f32 %v4146
    %vm4172 = vweird.f32 %v4166
    %vm4173 = vmor %vm4171, %vm4172
    %v4174 = vsel %vm4173, %v4166, %v4170
    %v4175 = vand.u32 2147483647, %v4146
    %vm4176 = vcmp.eq.f32.partialorder %v4175, 8.507059e+37
    %v4177 = vand.u32 %v4146, 2147483648
    %v4178 = vor.u32 1.1754944e-38, %v4177
    %v4179 = vsel %vm4176, %v4178, %v4174
    %v4180 = vmul.f32 1.0, %v4179
    %v4181 = vrcp.pop %v4147
    %v4182 = vmul.f32 %v4147, %v4181
    %v4183 = vsub.f32 1.0, %v4182
    %v4184 = vmul.f32 %v4181, %v4183
    %v4185 = vadd.f32 %v4181, %v4184
    %vm4186 = vweird.f32 %v4147
    %vm4187 = vweird.f32 %v4181
    %vm4188 = vmor %vm4186, %vm4187
    %v4189 = vsel %vm4188, %v4181, %v4185
    %v4190 = vand.u32 2147483647, %v4147
    %vm4191 = vcmp.eq.f32.partialorder %v4190, 8.507059e+37
    %v4192 = vand.u32 %v4147, 2147483648
    %v4193 = vor.u32 1.1754944e-38, %v4192
    %v4194 = vsel %vm4191, %v4193, %v4189
    %v4195 = vmul.f32 1.0, %v4194
    %v4196 = vrcp.pop %v4148
    %v4197 = vmul.f32 %v4148, %v4196
    %v4198 = vsub.f32 1.0, %v4197
    %v4199 = vmul.f32 %v4196, %v4198
    %v4200 = vadd.f32 %v4196, %v4199
    %vm4201 = vweird.f32 %v4148
    %vm4202 = vweird.f32 %v4196
    %vm4203 = vmor %vm4201, %vm4202
    %v4204 = vsel %vm4203, %v4196, %v4200
    %v4205 = vand.u32 2147483647, %v4148
    %vm4206 = vcmp.eq.f32.partialorder %v4205, 8.507059e+37
    %v4207 = vand.u32 %v4148, 2147483648
    %v4208 = vor.u32 1.1754944e-38, %v4207
    %v4209 = vsel %vm4206, %v4208, %v4204
    %v4210 = vmul.f32 1.0, %v4209
    %v4211 = vrcp.pop %v4149
    %v4212 = vmul.f32 %v4149, %v4211
    %v4213 = vsub.f32 1.0, %v4212
    %v4214 = vmul.f32 %v4211, %v4213
    %v4215 = vadd.f32 %v4211, %v4214
    %vm4216 = vweird.f32 %v4149
    %vm4217 = vweird.f32 %v4211
    %vm4218 = vmor %vm4216, %vm4217
    %v4219 = vsel %vm4218, %v4211, %v4215
    %v4220 = vand.u32 2147483647, %v4149
    %vm4221 = vcmp.eq.f32.partialorder %v4220, 8.507059e+37
    %v4222 = vand.u32 %v4149, 2147483648
    %v4223 = vor.u32 1.1754944e-38, %v4222
    %v4224 = vsel %vm4221, %v4223, %v4219
    %v4225 = vmul.f32 1.0, %v4224
    %v4226 = vrcp.pop %v4150
    %v4227 = vmul.f32 %v4150, %v4226
    %v4228 = vsub.f32 1.0, %v4227
    %v4229 = vmul.f32 %v4226, %v4228
    %v4230 = vadd.f32 %v4226, %v4229
    %vm4231 = vweird.f32 %v4150
    %vm4232 = vweird.f32 %v4226
    %vm4233 = vmor %vm4231, %vm4232
    %v4234 = vsel %vm4233, %v4226, %v4230
    %v4235 = vand.u32 2147483647, %v4150
    %vm4236 = vcmp.eq.f32.partialorder %v4235, 8.507059e+37
    %v4237 = vand.u32 %v4150, 2147483648
    %v4238 = vor.u32 1.1754944e-38, %v4237
    %v4239 = vsel %vm4236, %v4238, %v4234
    %v4240 = vmul.f32 1.0, %v4239
    %v4241 = vtanh.pop %v4125
    %v4242 = vtanh.pop %v4126
    %v4243 = vmul.f32 %v4195, %v3893
    %v4244 = vmul.f32 %v4210, %v3894
    %v4245 = vmul.f32 %v4165, %v4241
    %v4246 = vmul.f32 %v4180, %v4242
    %v4247 = vadd.f32 %v4243, %v4245
    %v4248 = vadd.f32 %v4244, %v4246
    %v4249 = vtanh.pop %v4247
    %v4250 = vtanh.pop %v4248
    %v4251 = vmul.f32 %v4225, %v4249
    %v4252 = vmul.f32 %v4240, %v4250
    %4253 = vst [vmem:[#allocation2 + $0x70] sm:$0xff] %v4251
    %4254 = vst [vmem:[#allocation2 + $0x78] sm:$0xff] %v4252
    %4255 = vst [vmem:[#allocation14] sm:$0xff] %v4251
    %4256 = vst [vmem:[#allocation14 + $0x8] sm:$0xff] %v4252
    %4257 = vst [vmem:[#allocation16] sm:$0xff] %v4247
    %4258 = vst [vmem:[#allocation16 + $0x8] sm:$0xff] %v4248
    %s4259 = smul.u32 4, 32
    %s4260 = smul.u32 %s4259, 8
    %s4261 = sshll.u32 %s4260, 4
    %4262 = dma.done [#allocation9], %s4261
    %s4263 = sshll.u32 %s4260, 4
    %4264 = dma.done %s315, %s4263
    %s4265 = smul.u32 1, 8
    %s4266 = sshll.u32 %s4265, 4
    %4267 = dma.done %s588, %s4266
    %v4268 = vld [vmem:[#allocation2] sm:$0xff]
    %v4269 = vld [vmem:[#allocation2 + $0x8] sm:$0xff]
    %v4270 = vld [vmem:[#allocation2 + $0x10] sm:$0xff]
    %v4271 = vld [vmem:[#allocation2 + $0x18] sm:$0xff]
    %v4272 = vld [vmem:[#allocation2 + $0x20] sm:$0xff]
    %v4273 = vld [vmem:[#allocation2 + $0x28] sm:$0xff]
    %v4274 = vld [vmem:[#allocation2 + $0x30] sm:$0xff]
    %v4275 = vld [vmem:[#allocation2 + $0x38] sm:$0xff]
    %v4276 = vld [vmem:[#allocation2 + $0x40] sm:$0xff]
    %v4277 = vld [vmem:[#allocation2 + $0x48] sm:$0xff]
    %v4278 = vld [vmem:[#allocation2 + $0x50] sm:$0xff]
    %v4279 = vld [vmem:[#allocation2 + $0x58] sm:$0xff]
    %v4280 = vld [vmem:[#allocation2 + $0x60] sm:$0xff]
    %v4281 = vld [vmem:[#allocation2 + $0x68] sm:$0xff]
    %v4282 = vld [vmem:[#allocation2 + $0x70] sm:$0xff]
    %v4283 = vld [vmem:[#allocation2 + $0x78] sm:$0xff]
    %v4284 = vpack.c.bf16 %v4270, %v4268
    %v4285 = vpack.c.bf16 %v4271, %v4269
    %v4286 = vpack.c.bf16 %v4274, %v4272
    %v4287 = vpack.c.bf16 %v4275, %v4273
    %v4288 = vpack.c.bf16 %v4278, %v4276
    %v4289 = vpack.c.bf16 %v4279, %v4277
    %v4290 = vpack.c.bf16 %v4282, %v4280
    %v4291 = vpack.c.bf16 %v4283, %v4281
    %v4292 = vld [vmem:[#allocation4] sm:$0xff]
    %v4293 = vld [vmem:[#allocation4 + $0x8] sm:$0xff]
    %v4294 = vld [vmem:[#allocation4 + $0x10] sm:$0xff]
    %v4295 = vld [vmem:[#allocation4 + $0x18] sm:$0xff]
    %v4296 = vld [vmem:[#allocation4 + $0x20] sm:$0xff]
    %v4297 = vld [vmem:[#allocation4 + $0x28] sm:$0xff]
    %v4298 = vld [vmem:[#allocation4 + $0x30] sm:$0xff]
    %v4299 = vld [vmem:[#allocation4 + $0x38] sm:$0xff]
    %v4300 = vld [vmem:[#allocation4 + $0x40] sm:$0xff]
    %v4301 = vld [vmem:[#allocation4 + $0x48] sm:$0xff]
    %v4302 = vld [vmem:[#allocation4 + $0x50] sm:$0xff]
    %v4303 = vld [vmem:[#allocation4 + $0x58] sm:$0xff]
    %v4304 = vld [vmem:[#allocation4 + $0x60] sm:$0xff]
    %v4305 = vld [vmem:[#allocation4 + $0x68] sm:$0xff]
    %v4306 = vld [vmem:[#allocation4 + $0x70] sm:$0xff]
    %v4307 = vld [vmem:[#allocation4 + $0x78] sm:$0xff]
    %v4308 = vld [vmem:[#allocation4 + $0x80] sm:$0xff]
    %v4309 = vld [vmem:[#allocation4 + $0x88] sm:$0xff]
    %v4310 = vld [vmem:[#allocation4 + $0x90] sm:$0xff]
    %v4311 = vld [vmem:[#allocation4 + $0x98] sm:$0xff]
    %v4312 = vld [vmem:[#allocation4 + $0xa0] sm:$0xff]
    %v4313 = vld [vmem:[#allocation4 + $0xa8] sm:$0xff]
    %v4314 = vld [vmem:[#allocation4 + $0xb0] sm:$0xff]
    %v4315 = vld [vmem:[#allocation4 + $0xb8] sm:$0xff]
    %v4316 = vld [vmem:[#allocation4 + $0xc0] sm:$0xff]
    %v4317 = vld [vmem:[#allocation4 + $0xc8] sm:$0xff]
    %v4318 = vld [vmem:[#allocation4 + $0xd0] sm:$0xff]
    %v4319 = vld [vmem:[#allocation4 + $0xd8] sm:$0xff]
    %v4320 = vld [vmem:[#allocation4 + $0xe0] sm:$0xff]
    %v4321 = vld [vmem:[#allocation4 + $0xe8] sm:$0xff]
    %v4322 = vld [vmem:[#allocation4 + $0xf0] sm:$0xff]
    %v4323 = vld [vmem:[#allocation4 + $0xf8] sm:$0xff]
    %v4324 = vld [vmem:[#allocation4 + $0x100] sm:$0xff]
    %v4325 = vld [vmem:[#allocation4 + $0x108] sm:$0xff]
    %v4326 = vld [vmem:[#allocation4 + $0x110] sm:$0xff]
    %v4327 = vld [vmem:[#allocation4 + $0x118] sm:$0xff]
    %v4328 = vld [vmem:[#allocation4 + $0x120] sm:$0xff]
    %v4329 = vld [vmem:[#allocation4 + $0x128] sm:$0xff]
    %v4330 = vld [vmem:[#allocation4 + $0x130] sm:$0xff]
    %v4331 = vld [vmem:[#allocation4 + $0x138] sm:$0xff]
    %v4332 = vld [vmem:[#allocation4 + $0x140] sm:$0xff]
    %v4333 = vld [vmem:[#allocation4 + $0x148] sm:$0xff]
    %v4334 = vld [vmem:[#allocation4 + $0x150] sm:$0xff]
    %v4335 = vld [vmem:[#allocation4 + $0x158] sm:$0xff]
    %v4336 = vld [vmem:[#allocation4 + $0x160] sm:$0xff]
    %v4337 = vld [vmem:[#allocation4 + $0x168] sm:$0xff]
    %v4338 = vld [vmem:[#allocation4 + $0x170] sm:$0xff]
    %v4339 = vld [vmem:[#allocation4 + $0x178] sm:$0xff]
    %v4340 = vld [vmem:[#allocation4 + $0x180] sm:$0xff]
    %v4341 = vld [vmem:[#allocation4 + $0x188] sm:$0xff]
    %v4342 = vld [vmem:[#allocation4 + $0x190] sm:$0xff]
    %v4343 = vld [vmem:[#allocation4 + $0x198] sm:$0xff]
    %v4344 = vld [vmem:[#allocation4 + $0x1a0] sm:$0xff]
    %v4345 = vld [vmem:[#allocation4 + $0x1a8] sm:$0xff]
    %v4346 = vld [vmem:[#allocation4 + $0x1b0] sm:$0xff]
    %v4347 = vld [vmem:[#allocation4 + $0x1b8] sm:$0xff]
    %v4348 = vld [vmem:[#allocation4 + $0x1c0] sm:$0xff]
    %v4349 = vld [vmem:[#allocation4 + $0x1c8] sm:$0xff]
    %v4350 = vld [vmem:[#allocation4 + $0x1d0] sm:$0xff]
    %v4351 = vld [vmem:[#allocation4 + $0x1d8] sm:$0xff]
    %v4352 = vld [vmem:[#allocation4 + $0x1e0] sm:$0xff]
    %v4353 = vld [vmem:[#allocation4 + $0x1e8] sm:$0xff]
    %v4354 = vld [vmem:[#allocation4 + $0x1f0] sm:$0xff]
    %v4355 = vld [vmem:[#allocation4 + $0x1f8] sm:$0xff]
    %v4356 = vld [vmem:[#allocation4 + $0x200] sm:$0xff]
    %v4357 = vld [vmem:[#allocation4 + $0x208] sm:$0xff]
    %v4358 = vld [vmem:[#allocation4 + $0x210] sm:$0xff]
    %v4359 = vld [vmem:[#allocation4 + $0x218] sm:$0xff]
    %v4360 = vld [vmem:[#allocation4 + $0x220] sm:$0xff]
    %v4361 = vld [vmem:[#allocation4 + $0x228] sm:$0xff]
    %v4362 = vld [vmem:[#allocation4 + $0x230] sm:$0xff]
    %v4363 = vld [vmem:[#allocation4 + $0x238] sm:$0xff]
    %v4364 = vld [vmem:[#allocation4 + $0x240] sm:$0xff]
    %v4365 = vld [vmem:[#allocation4 + $0x248] sm:$0xff]
    %v4366 = vld [vmem:[#allocation4 + $0x250] sm:$0xff]
    %v4367 = vld [vmem:[#allocation4 + $0x258] sm:$0xff]
    %v4368 = vld [vmem:[#allocation4 + $0x260] sm:$0xff]
    %v4369 = vld [vmem:[#allocation4 + $0x268] sm:$0xff]
    %v4370 = vld [vmem:[#allocation4 + $0x270] sm:$0xff]
    %v4371 = vld [vmem:[#allocation4 + $0x278] sm:$0xff]
    %v4372 = vld [vmem:[#allocation4 + $0x280] sm:$0xff]
    %v4373 = vld [vmem:[#allocation4 + $0x288] sm:$0xff]
    %v4374 = vld [vmem:[#allocation4 + $0x290] sm:$0xff]
    %v4375 = vld [vmem:[#allocation4 + $0x298] sm:$0xff]
    %v4376 = vld [vmem:[#allocation4 + $0x2a0] sm:$0xff]
    %v4377 = vld [vmem:[#allocation4 + $0x2a8] sm:$0xff]
    %v4378 = vld [vmem:[#allocation4 + $0x2b0] sm:$0xff]
    %v4379 = vld [vmem:[#allocation4 + $0x2b8] sm:$0xff]
    %v4380 = vld [vmem:[#allocation4 + $0x2c0] sm:$0xff]
    %v4381 = vld [vmem:[#allocation4 + $0x2c8] sm:$0xff]
    %v4382 = vld [vmem:[#allocation4 + $0x2d0] sm:$0xff]
    %v4383 = vld [vmem:[#allocation4 + $0x2d8] sm:$0xff]
    %v4384 = vld [vmem:[#allocation4 + $0x2e0] sm:$0xff]
    %v4385 = vld [vmem:[#allocation4 + $0x2e8] sm:$0xff]
    %v4386 = vld [vmem:[#allocation4 + $0x2f0] sm:$0xff]
    %v4387 = vld [vmem:[#allocation4 + $0x2f8] sm:$0xff]
    %v4388 = vld [vmem:[#allocation4 + $0x300] sm:$0xff]
    %v4389 = vld [vmem:[#allocation4 + $0x308] sm:$0xff]
    %v4390 = vld [vmem:[#allocation4 + $0x310] sm:$0xff]
    %v4391 = vld [vmem:[#allocation4 + $0x318] sm:$0xff]
    %v4392 = vld [vmem:[#allocation4 + $0x320] sm:$0xff]
    %v4393 = vld [vmem:[#allocation4 + $0x328] sm:$0xff]
    %v4394 = vld [vmem:[#allocation4 + $0x330] sm:$0xff]
    %v4395 = vld [vmem:[#allocation4 + $0x338] sm:$0xff]
    %v4396 = vld [vmem:[#allocation4 + $0x340] sm:$0xff]
    %v4397 = vld [vmem:[#allocation4 + $0x348] sm:$0xff]
    %v4398 = vld [vmem:[#allocation4 + $0x350] sm:$0xff]
    %v4399 = vld [vmem:[#allocation4 + $0x358] sm:$0xff]
    %v4400 = vld [vmem:[#allocation4 + $0x360] sm:$0xff]
    %v4401 = vld [vmem:[#allocation4 + $0x368] sm:$0xff]
    %v4402 = vld [vmem:[#allocation4 + $0x370] sm:$0xff]
    %v4403 = vld [vmem:[#allocation4 + $0x378] sm:$0xff]
    %v4404 = vld [vmem:[#allocation4 + $0x380] sm:$0xff]
    %v4405 = vld [vmem:[#allocation4 + $0x388] sm:$0xff]
    %v4406 = vld [vmem:[#allocation4 + $0x390] sm:$0xff]
    %v4407 = vld [vmem:[#allocation4 + $0x398] sm:$0xff]
    %v4408 = vld [vmem:[#allocation4 + $0x3a0] sm:$0xff]
    %v4409 = vld [vmem:[#allocation4 + $0x3a8] sm:$0xff]
    %v4410 = vld [vmem:[#allocation4 + $0x3b0] sm:$0xff]
    %v4411 = vld [vmem:[#allocation4 + $0x3b8] sm:$0xff]
    %v4412 = vld [vmem:[#allocation4 + $0x3c0] sm:$0xff]
    %v4413 = vld [vmem:[#allocation4 + $0x3c8] sm:$0xff]
    %v4414 = vld [vmem:[#allocation4 + $0x3d0] sm:$0xff]
    %v4415 = vld [vmem:[#allocation4 + $0x3d8] sm:$0xff]
    %v4416 = vld [vmem:[#allocation4 + $0x3e0] sm:$0xff]
    %v4417 = vld [vmem:[#allocation4 + $0x3e8] sm:$0xff]
    %v4418 = vld [vmem:[#allocation4 + $0x3f0] sm:$0xff]
    %v4419 = vld [vmem:[#allocation4 + $0x3f8] sm:$0xff]
    %v4420 = vld [vmem:[#allocation6] sm:$0xff]
    %v4422 = vperm.slane %v4420, 0
    %v4423 = vperm.slane %v4420, 1
    %v4424 = vperm.slane %v4420, 2
    %v4425 = vperm.slane %v4420, 3
    %v4426 = vperm.slane %v4420, 4
    %v4427 = vperm.slane %v4420, 5
    %v4428 = vperm.slane %v4420, 6
    %v4429 = vperm.slane %v4420, 7
    %v4566 = vunpack.c.l.b16 %v4292
    %v4567 = vunpack.c.h.b16 %v4292
    %v4568 = vunpack.c.l.b16 %v4293
    %v4569 = vunpack.c.h.b16 %v4293
    %v4570 = vunpack.c.l.b16 %v4294
    %v4571 = vunpack.c.h.b16 %v4294
    %v4572 = vunpack.c.l.b16 %v4295
    %v4573 = vunpack.c.h.b16 %v4295
    %v4574 = vunpack.c.l.b16 %v4296
    %v4575 = vunpack.c.h.b16 %v4296
    %v4576 = vunpack.c.l.b16 %v4297
    %v4577 = vunpack.c.h.b16 %v4297
    %v4578 = vunpack.c.l.b16 %v4298
    %v4579 = vunpack.c.h.b16 %v4298
    %v4580 = vunpack.c.l.b16 %v4299
    %v4581 = vunpack.c.h.b16 %v4299
    %v4582 = vunpack.c.l.b16 %v4300
    %v4583 = vunpack.c.h.b16 %v4300
    %v4584 = vunpack.c.l.b16 %v4301
    %v4585 = vunpack.c.h.b16 %v4301
    %v4586 = vunpack.c.l.b16 %v4302
    %v4587 = vunpack.c.h.b16 %v4302
    %v4588 = vunpack.c.l.b16 %v4303
    %v4589 = vunpack.c.h.b16 %v4303
    %v4590 = vunpack.c.l.b16 %v4304
    %v4591 = vunpack.c.h.b16 %v4304
    %v4592 = vunpack.c.l.b16 %v4305
    %v4593 = vunpack.c.h.b16 %v4305
    %v4594 = vunpack.c.l.b16 %v4306
    %v4595 = vunpack.c.h.b16 %v4306
    %v4596 = vunpack.c.l.b16 %v4307
    %v4597 = vunpack.c.h.b16 %v4307
    %v4598 = vunpack.c.l.b16 %v4308
    %v4599 = vunpack.c.h.b16 %v4308
    %v4600 = vunpack.c.l.b16 %v4309
    %v4601 = vunpack.c.h.b16 %v4309
    %v4602 = vunpack.c.l.b16 %v4310
    %v4603 = vunpack.c.h.b16 %v4310
    %v4604 = vunpack.c.l.b16 %v4311
    %v4605 = vunpack.c.h.b16 %v4311
    %v4606 = vunpack.c.l.b16 %v4312
    %v4607 = vunpack.c.h.b16 %v4312
    %v4608 = vunpack.c.l.b16 %v4313
    %v4609 = vunpack.c.h.b16 %v4313
    %v4610 = vunpack.c.l.b16 %v4314
    %v4611 = vunpack.c.h.b16 %v4314
    %v4612 = vunpack.c.l.b16 %v4315
    %v4613 = vunpack.c.h.b16 %v4315
    %v4614 = vunpack.c.l.b16 %v4316
    %v4615 = vunpack.c.h.b16 %v4316
    %v4616 = vunpack.c.l.b16 %v4317
    %v4617 = vunpack.c.h.b16 %v4317
    %v4618 = vunpack.c.l.b16 %v4318
    %v4619 = vunpack.c.h.b16 %v4318
    %v4620 = vunpack.c.l.b16 %v4319
    %v4621 = vunpack.c.h.b16 %v4319
    %v4622 = vunpack.c.l.b16 %v4320
    %v4623 = vunpack.c.h.b16 %v4320
    %v4624 = vunpack.c.l.b16 %v4321
    %v4625 = vunpack.c.h.b16 %v4321
    %v4626 = vunpack.c.l.b16 %v4322
    %v4627 = vunpack.c.h.b16 %v4322
    %v4628 = vunpack.c.l.b16 %v4323
    %v4629 = vunpack.c.h.b16 %v4323
    %v4630 = vunpack.c.l.b16 %v4324
    %v4631 = vunpack.c.h.b16 %v4324
    %v4632 = vunpack.c.l.b16 %v4325
    %v4633 = vunpack.c.h.b16 %v4325
    %v4634 = vunpack.c.l.b16 %v4326
    %v4635 = vunpack.c.h.b16 %v4326
    %v4636 = vunpack.c.l.b16 %v4327
    %v4637 = vunpack.c.h.b16 %v4327
    %v4638 = vunpack.c.l.b16 %v4328
    %v4639 = vunpack.c.h.b16 %v4328
    %v4640 = vunpack.c.l.b16 %v4329
    %v4641 = vunpack.c.h.b16 %v4329
    %v4642 = vunpack.c.l.b16 %v4330
    %v4643 = vunpack.c.h.b16 %v4330
    %v4644 = vunpack.c.l.b16 %v4331
    %v4645 = vunpack.c.h.b16 %v4331
    %v4646 = vunpack.c.l.b16 %v4332
    %v4647 = vunpack.c.h.b16 %v4332
    %v4648 = vunpack.c.l.b16 %v4333
    %v4649 = vunpack.c.h.b16 %v4333
    %v4650 = vunpack.c.l.b16 %v4334
    %v4651 = vunpack.c.h.b16 %v4334
    %v4652 = vunpack.c.l.b16 %v4335
    %v4653 = vunpack.c.h.b16 %v4335
    %v4654 = vunpack.c.l.b16 %v4336
    %v4655 = vunpack.c.h.b16 %v4336
    %v4656 = vunpack.c.l.b16 %v4337
    %v4657 = vunpack.c.h.b16 %v4337
    %v4658 = vunpack.c.l.b16 %v4338
    %v4659 = vunpack.c.h.b16 %v4338
    %v4660 = vunpack.c.l.b16 %v4339
    %v4661 = vunpack.c.h.b16 %v4339
    %v4662 = vunpack.c.l.b16 %v4340
    %v4663 = vunpack.c.h.b16 %v4340
    %v4664 = vunpack.c.l.b16 %v4341
    %v4665 = vunpack.c.h.b16 %v4341
    %v4666 = vunpack.c.l.b16 %v4342
    %v4667 = vunpack.c.h.b16 %v4342
    %v4668 = vunpack.c.l.b16 %v4343
    %v4669 = vunpack.c.h.b16 %v4343
    %v4670 = vunpack.c.l.b16 %v4344
    %v4671 = vunpack.c.h.b16 %v4344
    %v4672 = vunpack.c.l.b16 %v4345
    %v4673 = vunpack.c.h.b16 %v4345
    %v4674 = vunpack.c.l.b16 %v4346
    %v4675 = vunpack.c.h.b16 %v4346
    %v4676 = vunpack.c.l.b16 %v4347
    %v4677 = vunpack.c.h.b16 %v4347
    %v4678 = vunpack.c.l.b16 %v4348
    %v4679 = vunpack.c.h.b16 %v4348
    %v4680 = vunpack.c.l.b16 %v4349
    %v4681 = vunpack.c.h.b16 %v4349
    %v4682 = vunpack.c.l.b16 %v4350
    %v4683 = vunpack.c.h.b16 %v4350
    %v4684 = vunpack.c.l.b16 %v4351
    %v4685 = vunpack.c.h.b16 %v4351
    %v4686 = vunpack.c.l.b16 %v4352
    %v4687 = vunpack.c.h.b16 %v4352
    %v4688 = vunpack.c.l.b16 %v4353
    %v4689 = vunpack.c.h.b16 %v4353
    %v4690 = vunpack.c.l.b16 %v4354
    %v4691 = vunpack.c.h.b16 %v4354
    %v4692 = vunpack.c.l.b16 %v4355
    %v4693 = vunpack.c.h.b16 %v4355
    %v4694 = vunpack.c.l.b16 %v4356
    %v4695 = vunpack.c.h.b16 %v4356
    %v4696 = vunpack.c.l.b16 %v4357
    %v4697 = vunpack.c.h.b16 %v4357
    %v4698 = vunpack.c.l.b16 %v4358
    %v4699 = vunpack.c.h.b16 %v4358
    %v4700 = vunpack.c.l.b16 %v4359
    %v4701 = vunpack.c.h.b16 %v4359
    %v4702 = vunpack.c.l.b16 %v4360
    %v4703 = vunpack.c.h.b16 %v4360
    %v4704 = vunpack.c.l.b16 %v4361
    %v4705 = vunpack.c.h.b16 %v4361
    %v4706 = vunpack.c.l.b16 %v4362
    %v4707 = vunpack.c.h.b16 %v4362
    %v4708 = vunpack.c.l.b16 %v4363
    %v4709 = vunpack.c.h.b16 %v4363
    %v4710 = vunpack.c.l.b16 %v4364
    %v4711 = vunpack.c.h.b16 %v4364
    %v4712 = vunpack.c.l.b16 %v4365
    %v4713 = vunpack.c.h.b16 %v4365
    %v4714 = vunpack.c.l.b16 %v4366
    %v4715 = vunpack.c.h.b16 %v4366
    %v4716 = vunpack.c.l.b16 %v4367
    %v4717 = vunpack.c.h.b16 %v4367
    %v4718 = vunpack.c.l.b16 %v4368
    %v4719 = vunpack.c.h.b16 %v4368
    %v4720 = vunpack.c.l.b16 %v4369
    %v4721 = vunpack.c.h.b16 %v4369
    %v4722 = vunpack.c.l.b16 %v4370
    %v4723 = vunpack.c.h.b16 %v4370
    %v4724 = vunpack.c.l.b16 %v4371
    %v4725 = vunpack.c.h.b16 %v4371
    %v4726 = vunpack.c.l.b16 %v4372
    %v4727 = vunpack.c.h.b16 %v4372
    %v4728 = vunpack.c.l.b16 %v4373
    %v4729 = vunpack.c.h.b16 %v4373
    %v4730 = vunpack.c.l.b16 %v4374
    %v4731 = vunpack.c.h.b16 %v4374
    %v4732 = vunpack.c.l.b16 %v4375
    %v4733 = vunpack.c.h.b16 %v4375
    %v4734 = vunpack.c.l.b16 %v4376
    %v4735 = vunpack.c.h.b16 %v4376
    %v4736 = vunpack.c.l.b16 %v4377
    %v4737 = vunpack.c.h.b16 %v4377
    %v4738 = vunpack.c.l.b16 %v4378
    %v4739 = vunpack.c.h.b16 %v4378
    %v4740 = vunpack.c.l.b16 %v4379
    %v4741 = vunpack.c.h.b16 %v4379
    %v4742 = vunpack.c.l.b16 %v4380
    %v4743 = vunpack.c.h.b16 %v4380
    %v4744 = vunpack.c.l.b16 %v4381
    %v4745 = vunpack.c.h.b16 %v4381
    %v4746 = vunpack.c.l.b16 %v4382
    %v4747 = vunpack.c.h.b16 %v4382
    %v4748 = vunpack.c.l.b16 %v4383
    %v4749 = vunpack.c.h.b16 %v4383
    %v4750 = vunpack.c.l.b16 %v4384
    %v4751 = vunpack.c.h.b16 %v4384
    %v4752 = vunpack.c.l.b16 %v4385
    %v4753 = vunpack.c.h.b16 %v4385
    %v4754 = vunpack.c.l.b16 %v4386
    %v4755 = vunpack.c.h.b16 %v4386
    %v4756 = vunpack.c.l.b16 %v4387
    %v4757 = vunpack.c.h.b16 %v4387
    %v4758 = vunpack.c.l.b16 %v4388
    %v4759 = vunpack.c.h.b16 %v4388
    %v4760 = vunpack.c.l.b16 %v4389
    %v4761 = vunpack.c.h.b16 %v4389
    %v4762 = vunpack.c.l.b16 %v4390
    %v4763 = vunpack.c.h.b16 %v4390
    %v4764 = vunpack.c.l.b16 %v4391
    %v4765 = vunpack.c.h.b16 %v4391
    %v4766 = vunpack.c.l.b16 %v4392
    %v4767 = vunpack.c.h.b16 %v4392
    %v4768 = vunpack.c.l.b16 %v4393
    %v4769 = vunpack.c.h.b16 %v4393
    %v4770 = vunpack.c.l.b16 %v4394
    %v4771 = vunpack.c.h.b16 %v4394
    %v4772 = vunpack.c.l.b16 %v4395
    %v4773 = vunpack.c.h.b16 %v4395
    %v4774 = vunpack.c.l.b16 %v4396
    %v4775 = vunpack.c.h.b16 %v4396
    %v4776 = vunpack.c.l.b16 %v4397
    %v4777 = vunpack.c.h.b16 %v4397
    %v4778 = vunpack.c.l.b16 %v4398
    %v4779 = vunpack.c.h.b16 %v4398
    %v4780 = vunpack.c.l.b16 %v4399
    %v4781 = vunpack.c.h.b16 %v4399
    %v4782 = vunpack.c.l.b16 %v4400
    %v4783 = vunpack.c.h.b16 %v4400
    %v4784 = vunpack.c.l.b16 %v4401
    %v4785 = vunpack.c.h.b16 %v4401
    %v4786 = vunpack.c.l.b16 %v4402
    %v4787 = vunpack.c.h.b16 %v4402
    %v4788 = vunpack.c.l.b16 %v4403
    %v4789 = vunpack.c.h.b16 %v4403
    %v4790 = vunpack.c.l.b16 %v4404
    %v4791 = vunpack.c.h.b16 %v4404
    %v4792 = vunpack.c.l.b16 %v4405
    %v4793 = vunpack.c.h.b16 %v4405
    %v4794 = vunpack.c.l.b16 %v4406
    %v4795 = vunpack.c.h.b16 %v4406
    %v4796 = vunpack.c.l.b16 %v4407
    %v4797 = vunpack.c.h.b16 %v4407
    %v4798 = vunpack.c.l.b16 %v4408
    %v4799 = vunpack.c.h.b16 %v4408
    %v4800 = vunpack.c.l.b16 %v4409
    %v4801 = vunpack.c.h.b16 %v4409
    %v4802 = vunpack.c.l.b16 %v4410
    %v4803 = vunpack.c.h.b16 %v4410
    %v4804 = vunpack.c.l.b16 %v4411
    %v4805 = vunpack.c.h.b16 %v4411
    %v4806 = vunpack.c.l.b16 %v4412
    %v4807 = vunpack.c.h.b16 %v4412
    %v4808 = vunpack.c.l.b16 %v4413
    %v4809 = vunpack.c.h.b16 %v4413
    %v4810 = vunpack.c.l.b16 %v4414
    %v4811 = vunpack.c.h.b16 %v4414
    %v4812 = vunpack.c.l.b16 %v4415
    %v4813 = vunpack.c.h.b16 %v4415
    %v4814 = vunpack.c.l.b16 %v4416
    %v4815 = vunpack.c.h.b16 %v4416
    %v4816 = vunpack.c.l.b16 %v4417
    %v4817 = vunpack.c.h.b16 %v4417
    %v4818 = vunpack.c.l.b16 %v4418
    %v4819 = vunpack.c.h.b16 %v4418
    %v4820 = vunpack.c.l.b16 %v4419
    %v4821 = vunpack.c.h.b16 %v4419
    %v4822 = vpack.c.b16 %v4574, %v4566
    %v4823 = vpack.c.b16 %v4575, %v4567
    %v4824 = vpack.c.b16 %v4576, %v4568
    %v4825 = vpack.c.b16 %v4577, %v4569
    %v4826 = vpack.c.b16 %v4578, %v4570
    %v4827 = vpack.c.b16 %v4579, %v4571
    %v4828 = vpack.c.b16 %v4580, %v4572
    %v4829 = vpack.c.b16 %v4581, %v4573
    %v4830 = vpack.c.b16 %v4590, %v4582
    %v4831 = vpack.c.b16 %v4591, %v4583
    %v4832 = vpack.c.b16 %v4592, %v4584
    %v4833 = vpack.c.b16 %v4593, %v4585
    %v4834 = vpack.c.b16 %v4594, %v4586
    %v4835 = vpack.c.b16 %v4595, %v4587
    %v4836 = vpack.c.b16 %v4596, %v4588
    %v4837 = vpack.c.b16 %v4597, %v4589
    %v4838 = vpack.c.b16 %v4606, %v4598
    %v4839 = vpack.c.b16 %v4607, %v4599
    %v4840 = vpack.c.b16 %v4608, %v4600
    %v4841 = vpack.c.b16 %v4609, %v4601
    %v4842 = vpack.c.b16 %v4610, %v4602
    %v4843 = vpack.c.b16 %v4611, %v4603
    %v4844 = vpack.c.b16 %v4612, %v4604
    %v4845 = vpack.c.b16 %v4613, %v4605
    %v4846 = vpack.c.b16 %v4622, %v4614
    %v4847 = vpack.c.b16 %v4623, %v4615
    %v4848 = vpack.c.b16 %v4624, %v4616
    %v4849 = vpack.c.b16 %v4625, %v4617
    %v4850 = vpack.c.b16 %v4626, %v4618
    %v4851 = vpack.c.b16 %v4627, %v4619
    %v4852 = vpack.c.b16 %v4628, %v4620
    %v4853 = vpack.c.b16 %v4629, %v4621
    %v4854 = vpack.c.b16 %v4638, %v4630
    %v4855 = vpack.c.b16 %v4639, %v4631
    %v4856 = vpack.c.b16 %v4640, %v4632
    %v4857 = vpack.c.b16 %v4641, %v4633
    %v4858 = vpack.c.b16 %v4642, %v4634
    %v4859 = vpack.c.b16 %v4643, %v4635
    %v4860 = vpack.c.b16 %v4644, %v4636
    %v4861 = vpack.c.b16 %v4645, %v4637
    %v4862 = vpack.c.b16 %v4654, %v4646
    %v4863 = vpack.c.b16 %v4655, %v4647
    %v4864 = vpack.c.b16 %v4656, %v4648
    %v4865 = vpack.c.b16 %v4657, %v4649
    %v4866 = vpack.c.b16 %v4658, %v4650
    %v4867 = vpack.c.b16 %v4659, %v4651
    %v4868 = vpack.c.b16 %v4660, %v4652
    %v4869 = vpack.c.b16 %v4661, %v4653
    %v4870 = vpack.c.b16 %v4670, %v4662
    %v4871 = vpack.c.b16 %v4671, %v4663
    %v4872 = vpack.c.b16 %v4672, %v4664
    %v4873 = vpack.c.b16 %v4673, %v4665
    %v4874 = vpack.c.b16 %v4674, %v4666
    %v4875 = vpack.c.b16 %v4675, %v4667
    %v4876 = vpack.c.b16 %v4676, %v4668
    %v4877 = vpack.c.b16 %v4677, %v4669
    %v4878 = vpack.c.b16 %v4686, %v4678
    %v4879 = vpack.c.b16 %v4687, %v4679
    %v4880 = vpack.c.b16 %v4688, %v4680
    %v4881 = vpack.c.b16 %v4689, %v4681
    %v4882 = vpack.c.b16 %v4690, %v4682
    %v4883 = vpack.c.b16 %v4691, %v4683
    %v4884 = vpack.c.b16 %v4692, %v4684
    %v4885 = vpack.c.b16 %v4693, %v4685
    %v4886 = vpack.c.b16 %v4702, %v4694
    %v4887 = vpack.c.b16 %v4703, %v4695
    %v4888 = vpack.c.b16 %v4704, %v4696
    %v4889 = vpack.c.b16 %v4705, %v4697
    %v4890 = vpack.c.b16 %v4706, %v4698
    %v4891 = vpack.c.b16 %v4707, %v4699
    %v4892 = vpack.c.b16 %v4708, %v4700
    %v4893 = vpack.c.b16 %v4709, %v4701
    %v4894 = vpack.c.b16 %v4718, %v4710
    %v4895 = vpack.c.b16 %v4719, %v4711
    %v4896 = vpack.c.b16 %v4720, %v4712
    %v4897 = vpack.c.b16 %v4721, %v4713
    %v4898 = vpack.c.b16 %v4722, %v4714
    %v4899 = vpack.c.b16 %v4723, %v4715
    %v4900 = vpack.c.b16 %v4724, %v4716
    %v4901 = vpack.c.b16 %v4725, %v4717
    %v4902 = vpack.c.b16 %v4734, %v4726
    %v4903 = vpack.c.b16 %v4735, %v4727
    %v4904 = vpack.c.b16 %v4736, %v4728
    %v4905 = vpack.c.b16 %v4737, %v4729
    %v4906 = vpack.c.b16 %v4738, %v4730
    %v4907 = vpack.c.b16 %v4739, %v4731
    %v4908 = vpack.c.b16 %v4740, %v4732
    %v4909 = vpack.c.b16 %v4741, %v4733
    %v4910 = vpack.c.b16 %v4750, %v4742
    %v4911 = vpack.c.b16 %v4751, %v4743
    %v4912 = vpack.c.b16 %v4752, %v4744
    %v4913 = vpack.c.b16 %v4753, %v4745
    %v4914 = vpack.c.b16 %v4754, %v4746
    %v4915 = vpack.c.b16 %v4755, %v4747
    %v4916 = vpack.c.b16 %v4756, %v4748
    %v4917 = vpack.c.b16 %v4757, %v4749
    %v4918 = vpack.c.b16 %v4766, %v4758
    %v4919 = vpack.c.b16 %v4767, %v4759
    %v4920 = vpack.c.b16 %v4768, %v4760
    %v4921 = vpack.c.b16 %v4769, %v4761
    %v4922 = vpack.c.b16 %v4770, %v4762
    %v4923 = vpack.c.b16 %v4771, %v4763
    %v4924 = vpack.c.b16 %v4772, %v4764
    %v4925 = vpack.c.b16 %v4773, %v4765
    %v4926 = vpack.c.b16 %v4782, %v4774
    %v4927 = vpack.c.b16 %v4783, %v4775
    %v4928 = vpack.c.b16 %v4784, %v4776
    %v4929 = vpack.c.b16 %v4785, %v4777
    %v4930 = vpack.c.b16 %v4786, %v4778
    %v4931 = vpack.c.b16 %v4787, %v4779
    %v4932 = vpack.c.b16 %v4788, %v4780
    %v4933 = vpack.c.b16 %v4789, %v4781
    %v4934 = vpack.c.b16 %v4798, %v4790
    %v4935 = vpack.c.b16 %v4799, %v4791
    %v4936 = vpack.c.b16 %v4800, %v4792
    %v4937 = vpack.c.b16 %v4801, %v4793
    %v4938 = vpack.c.b16 %v4802, %v4794
    %v4939 = vpack.c.b16 %v4803, %v4795
    %v4940 = vpack.c.b16 %v4804, %v4796
    %v4941 = vpack.c.b16 %v4805, %v4797
    %v4942 = vpack.c.b16 %v4814, %v4806
    %v4943 = vpack.c.b16 %v4815, %v4807
    %v4944 = vpack.c.b16 %v4816, %v4808
    %v4945 = vpack.c.b16 %v4817, %v4809
    %v4946 = vpack.c.b16 %v4818, %v4810
    %v4947 = vpack.c.b16 %v4819, %v4811
    %v4948 = vpack.c.b16 %v4820, %v4812
    %v4949 = vpack.c.b16 %v4821, %v4813
    %5078 = vmatpush.bf16.msra.mxu0 %v4878
    %5079 = vmatpush.bf16.msra.mxu0 %v4870
    %5080 = vmatpush.bf16.msra.mxu0 %v4862
    %5081 = vmatpush.bf16.msra.mxu0 %v4854
    %5082 = vmatpush.bf16.msra.mxu0 %v4846
    %5083 = vmatpush.bf16.msra.mxu0 %v4838
    %5084 = vmatpush.bf16.msra.mxu0 %v4830
    %5085 = vmatpush.bf16.msra.mxu0 %v4822
    %5086 = vmatmul.bf16.gmra.mxu0 %v4284
    %v5087 = vpop.f32.mrf.mxu0
    %v5088 = vadd.f32 %v4422, %v5087
    %v5089 = vpop.f32.mrf.mxu0
    %v5090 = vadd.f32 %v4422, %v5089
    %5091 = vmatmul.bf16.gmra.mxu0 %v4286
    %v5092 = vpop.f32.mrf.mxu0
    %v5093 = vadd.f32 %v4422, %v5092
    %v5094 = vpop.f32.mrf.mxu0
    %v5095 = vadd.f32 %v4422, %v5094
    %5096 = vmatmul.bf16.gmra.mxu0 %v4288
    %v5097 = vpop.f32.mrf.mxu0
    %v5098 = vadd.f32 %v4422, %v5097
    %v5099 = vpop.f32.mrf.mxu0
    %v5100 = vadd.f32 %v4422, %v5099
    %5101 = vmatmul.bf16.gmra.mxu0 %v4290
    %v5102 = vpop.f32.mrf.mxu0
    %v5103 = vadd.f32 %v4422, %v5102
    %v5104 = vpop.f32.mrf.mxu0
    %v5105 = vadd.f32 %v4422, %v5104
    %5106 = vdwg.mxu0
    %5107 = vmatpush.bf16.msra.mxu0 %v4942
    %5108 = vmatpush.bf16.msra.mxu0 %v4934
    %5109 = vmatpush.bf16.msra.mxu0 %v4926
    %5110 = vmatpush.bf16.msra.mxu0 %v4918
    %5111 = vmatpush.bf16.msra.mxu0 %v4910
    %5112 = vmatpush.bf16.msra.mxu0 %v4902
    %5113 = vmatpush.bf16.msra.mxu0 %v4894
    %5114 = vmatpush.bf16.msra.mxu0 %v4886
    %5115 = vmatmul.bf16.gmra.mxu0 %v4285
    %v5116 = vpop.f32.mrf.mxu0
    %v5117 = vadd.f32 %v5088, %v5116
    %v5118 = vpop.f32.mrf.mxu0
    %v5119 = vadd.f32 %v5090, %v5118
    %5120 = vmatmul.bf16.gmra.mxu0 %v4287
    %v5121 = vpop.f32.mrf.mxu0
    %v5122 = vadd.f32 %v5093, %v5121
    %v5123 = vpop.f32.mrf.mxu0
    %v5124 = vadd.f32 %v5095, %v5123
    %5125 = vmatmul.bf16.gmra.mxu0 %v4289
    %v5126 = vpop.f32.mrf.mxu0
    %v5127 = vadd.f32 %v5098, %v5126
    %v5128 = vpop.f32.mrf.mxu0
    %v5129 = vadd.f32 %v5100, %v5128
    %5130 = vmatmul.bf16.gmra.mxu0 %v4291
    %v5131 = vpop.f32.mrf.mxu0
    %v5132 = vadd.f32 %v5103, %v5131
    %v5133 = vpop.f32.mrf.mxu0
    %v5134 = vadd.f32 %v5105, %v5133
    %5135 = vdwg.mxu0
    %5136 = vmatpush.bf16.msra.mxu0 %v4879
    %5137 = vmatpush.bf16.msra.mxu0 %v4871
    %5138 = vmatpush.bf16.msra.mxu0 %v4863
    %5139 = vmatpush.bf16.msra.mxu0 %v4855
    %5140 = vmatpush.bf16.msra.mxu0 %v4847
    %5141 = vmatpush.bf16.msra.mxu0 %v4839
    %5142 = vmatpush.bf16.msra.mxu0 %v4831
    %5143 = vmatpush.bf16.msra.mxu0 %v4823
    %5144 = vmatmul.bf16.gmra.mxu0 %v4284
    %v5145 = vpop.f32.mrf.mxu0
    %v5146 = vadd.f32 %v4423, %v5145
    %v5147 = vpop.f32.mrf.mxu0
    %v5148 = vadd.f32 %v4423, %v5147
    %5149 = vmatmul.bf16.gmra.mxu0 %v4286
    %v5150 = vpop.f32.mrf.mxu0
    %v5151 = vadd.f32 %v4423, %v5150
    %v5152 = vpop.f32.mrf.mxu0
    %v5153 = vadd.f32 %v4423, %v5152
    %5154 = vmatmul.bf16.gmra.mxu0 %v4288
    %v5155 = vpop.f32.mrf.mxu0
    %v5156 = vadd.f32 %v4423, %v5155
    %v5157 = vpop.f32.mrf.mxu0
    %v5158 = vadd.f32 %v4423, %v5157
    %5159 = vmatmul.bf16.gmra.mxu0 %v4290
    %v5160 = vpop.f32.mrf.mxu0
    %v5161 = vadd.f32 %v4423, %v5160
    %v5162 = vpop.f32.mrf.mxu0
    %v5163 = vadd.f32 %v4423, %v5162
    %5164 = vdwg.mxu0
    %5165 = vmatpush.bf16.msra.mxu0 %v4943
    %5166 = vmatpush.bf16.msra.mxu0 %v4935
    %5167 = vmatpush.bf16.msra.mxu0 %v4927
    %5168 = vmatpush.bf16.msra.mxu0 %v4919
    %5169 = vmatpush.bf16.msra.mxu0 %v4911
    %5170 = vmatpush.bf16.msra.mxu0 %v4903
    %5171 = vmatpush.bf16.msra.mxu0 %v4895
    %5172 = vmatpush.bf16.msra.mxu0 %v4887
    %5173 = vmatmul.bf16.gmra.mxu0 %v4285
    %v5174 = vpop.f32.mrf.mxu0
    %v5175 = vadd.f32 %v5146, %v5174
    %v5176 = vpop.f32.mrf.mxu0
    %v5177 = vadd.f32 %v5148, %v5176
    %5178 = vmatmul.bf16.gmra.mxu0 %v4287
    %v5179 = vpop.f32.mrf.mxu0
    %v5180 = vadd.f32 %v5151, %v5179
    %v5181 = vpop.f32.mrf.mxu0
    %v5182 = vadd.f32 %v5153, %v5181
    %5183 = vmatmul.bf16.gmra.mxu0 %v4289
    %v5184 = vpop.f32.mrf.mxu0
    %v5185 = vadd.f32 %v5156, %v5184
    %v5186 = vpop.f32.mrf.mxu0
    %v5187 = vadd.f32 %v5158, %v5186
    %5188 = vmatmul.bf16.gmra.mxu0 %v4291
    %v5189 = vpop.f32.mrf.mxu0
    %v5190 = vadd.f32 %v5161, %v5189
    %v5191 = vpop.f32.mrf.mxu0
    %v5192 = vadd.f32 %v5163, %v5191
    %5193 = vdwg.mxu0
    %5194 = vmatpush.bf16.msra.mxu0 %v4880
    %5195 = vmatpush.bf16.msra.mxu0 %v4872
    %5196 = vmatpush.bf16.msra.mxu0 %v4864
    %5197 = vmatpush.bf16.msra.mxu0 %v4856
    %5198 = vmatpush.bf16.msra.mxu0 %v4848
    %5199 = vmatpush.bf16.msra.mxu0 %v4840
    %5200 = vmatpush.bf16.msra.mxu0 %v4832
    %5201 = vmatpush.bf16.msra.mxu0 %v4824
    %5202 = vmatmul.bf16.gmra.mxu0 %v4284
    %v5203 = vpop.f32.mrf.mxu0
    %v5204 = vadd.f32 %v4424, %v5203
    %v5205 = vpop.f32.mrf.mxu0
    %v5206 = vadd.f32 %v4424, %v5205
    %5207 = vmatmul.bf16.gmra.mxu0 %v4286
    %v5208 = vpop.f32.mrf.mxu0
    %v5209 = vadd.f32 %v4424, %v5208
    %v5210 = vpop.f32.mrf.mxu0
    %v5211 = vadd.f32 %v4424, %v5210
    %5212 = vmatmul.bf16.gmra.mxu0 %v4288
    %v5213 = vpop.f32.mrf.mxu0
    %v5214 = vadd.f32 %v4424, %v5213
    %v5215 = vpop.f32.mrf.mxu0
    %v5216 = vadd.f32 %v4424, %v5215
    %5217 = vmatmul.bf16.gmra.mxu0 %v4290
    %v5218 = vpop.f32.mrf.mxu0
    %v5219 = vadd.f32 %v4424, %v5218
    %v5220 = vpop.f32.mrf.mxu0
    %v5221 = vadd.f32 %v4424, %v5220
    %5222 = vdwg.mxu0
    %5223 = vmatpush.bf16.msra.mxu0 %v4944
    %5224 = vmatpush.bf16.msra.mxu0 %v4936
    %5225 = vmatpush.bf16.msra.mxu0 %v4928
    %5226 = vmatpush.bf16.msra.mxu0 %v4920
    %5227 = vmatpush.bf16.msra.mxu0 %v4912
    %5228 = vmatpush.bf16.msra.mxu0 %v4904
    %5229 = vmatpush.bf16.msra.mxu0 %v4896
    %5230 = vmatpush.bf16.msra.mxu0 %v4888
    %5231 = vmatmul.bf16.gmra.mxu0 %v4285
    %v5232 = vpop.f32.mrf.mxu0
    %v5233 = vadd.f32 %v5204, %v5232
    %v5234 = vpop.f32.mrf.mxu0
    %v5235 = vadd.f32 %v5206, %v5234
    %5236 = vmatmul.bf16.gmra.mxu0 %v4287
    %v5237 = vpop.f32.mrf.mxu0
    %v5238 = vadd.f32 %v5209, %v5237
    %v5239 = vpop.f32.mrf.mxu0
    %v5240 = vadd.f32 %v5211, %v5239
    %5241 = vmatmul.bf16.gmra.mxu0 %v4289
    %v5242 = vpop.f32.mrf.mxu0
    %v5243 = vadd.f32 %v5214, %v5242
    %v5244 = vpop.f32.mrf.mxu0
    %v5245 = vadd.f32 %v5216, %v5244
    %5246 = vmatmul.bf16.gmra.mxu0 %v4291
    %v5247 = vpop.f32.mrf.mxu0
    %v5248 = vadd.f32 %v5219, %v5247
    %v5249 = vpop.f32.mrf.mxu0
    %v5250 = vadd.f32 %v5221, %v5249
    %5251 = vdwg.mxu0
    %5252 = vmatpush.bf16.msra.mxu0 %v4881
    %5253 = vmatpush.bf16.msra.mxu0 %v4873
    %5254 = vmatpush.bf16.msra.mxu0 %v4865
    %5255 = vmatpush.bf16.msra.mxu0 %v4857
    %5256 = vmatpush.bf16.msra.mxu0 %v4849
    %5257 = vmatpush.bf16.msra.mxu0 %v4841
    %5258 = vmatpush.bf16.msra.mxu0 %v4833
    %5259 = vmatpush.bf16.msra.mxu0 %v4825
    %5260 = vmatmul.bf16.gmra.mxu0 %v4284
    %v5261 = vpop.f32.mrf.mxu0
    %v5262 = vadd.f32 %v4425, %v5261
    %v5263 = vpop.f32.mrf.mxu0
    %v5264 = vadd.f32 %v4425, %v5263
    %5265 = vmatmul.bf16.gmra.mxu0 %v4286
    %v5266 = vpop.f32.mrf.mxu0
    %v5267 = vadd.f32 %v4425, %v5266
    %v5268 = vpop.f32.mrf.mxu0
    %v5269 = vadd.f32 %v4425, %v5268
    %5270 = vmatmul.bf16.gmra.mxu0 %v4288
    %v5271 = vpop.f32.mrf.mxu0
    %v5272 = vadd.f32 %v4425, %v5271
    %v5273 = vpop.f32.mrf.mxu0
    %v5274 = vadd.f32 %v4425, %v5273
    %5275 = vmatmul.bf16.gmra.mxu0 %v4290
    %v5276 = vpop.f32.mrf.mxu0
    %v5277 = vadd.f32 %v4425, %v5276
    %v5278 = vpop.f32.mrf.mxu0
    %v5279 = vadd.f32 %v4425, %v5278
    %5280 = vdwg.mxu0
    %5281 = vmatpush.bf16.msra.mxu0 %v4945
    %5282 = vmatpush.bf16.msra.mxu0 %v4937
    %5283 = vmatpush.bf16.msra.mxu0 %v4929
    %5284 = vmatpush.bf16.msra.mxu0 %v4921
    %5285 = vmatpush.bf16.msra.mxu0 %v4913
    %5286 = vmatpush.bf16.msra.mxu0 %v4905
    %5287 = vmatpush.bf16.msra.mxu0 %v4897
    %5288 = vmatpush.bf16.msra.mxu0 %v4889
    %5289 = vmatmul.bf16.gmra.mxu0 %v4285
    %v5290 = vpop.f32.mrf.mxu0
    %v5291 = vadd.f32 %v5262, %v5290
    %v5292 = vpop.f32.mrf.mxu0
    %v5293 = vadd.f32 %v5264, %v5292
    %5294 = vmatmul.bf16.gmra.mxu0 %v4287
    %v5295 = vpop.f32.mrf.mxu0
    %v5296 = vadd.f32 %v5267, %v5295
    %v5297 = vpop.f32.mrf.mxu0
    %v5298 = vadd.f32 %v5269, %v5297
    %5299 = vmatmul.bf16.gmra.mxu0 %v4289
    %v5300 = vpop.f32.mrf.mxu0
    %v5301 = vadd.f32 %v5272, %v5300
    %v5302 = vpop.f32.mrf.mxu0
    %v5303 = vadd.f32 %v5274, %v5302
    %5304 = vmatmul.bf16.gmra.mxu0 %v4291
    %v5305 = vpop.f32.mrf.mxu0
    %v5306 = vadd.f32 %v5277, %v5305
    %v5307 = vpop.f32.mrf.mxu0
    %v5308 = vadd.f32 %v5279, %v5307
    %5309 = vdwg.mxu0
    %5310 = vmatpush.bf16.msra.mxu0 %v4882
    %5311 = vmatpush.bf16.msra.mxu0 %v4874
    %5312 = vmatpush.bf16.msra.mxu0 %v4866
    %5313 = vmatpush.bf16.msra.mxu0 %v4858
    %5314 = vmatpush.bf16.msra.mxu0 %v4850
    %5315 = vmatpush.bf16.msra.mxu0 %v4842
    %5316 = vmatpush.bf16.msra.mxu0 %v4834
    %5317 = vmatpush.bf16.msra.mxu0 %v4826
    %5318 = vmatmul.bf16.gmra.mxu0 %v4284
    %v5319 = vpop.f32.mrf.mxu0
    %v5320 = vadd.f32 %v4426, %v5319
    %v5321 = vpop.f32.mrf.mxu0
    %v5322 = vadd.f32 %v4426, %v5321
    %5323 = vmatmul.bf16.gmra.mxu0 %v4286
    %v5324 = vpop.f32.mrf.mxu0
    %v5325 = vadd.f32 %v4426, %v5324
    %v5326 = vpop.f32.mrf.mxu0
    %v5327 = vadd.f32 %v4426, %v5326
    %5328 = vmatmul.bf16.gmra.mxu0 %v4288
    %v5329 = vpop.f32.mrf.mxu0
    %v5330 = vadd.f32 %v4426, %v5329
    %v5331 = vpop.f32.mrf.mxu0
    %v5332 = vadd.f32 %v4426, %v5331
    %5333 = vmatmul.bf16.gmra.mxu0 %v4290
    %v5334 = vpop.f32.mrf.mxu0
    %v5335 = vadd.f32 %v4426, %v5334
    %v5336 = vpop.f32.mrf.mxu0
    %v5337 = vadd.f32 %v4426, %v5336
    %5338 = vdwg.mxu0
    %5339 = vmatpush.bf16.msra.mxu0 %v4946
    %5340 = vmatpush.bf16.msra.mxu0 %v4938
    %5341 = vmatpush.bf16.msra.mxu0 %v4930
    %5342 = vmatpush.bf16.msra.mxu0 %v4922
    %5343 = vmatpush.bf16.msra.mxu0 %v4914
    %5344 = vmatpush.bf16.msra.mxu0 %v4906
    %5345 = vmatpush.bf16.msra.mxu0 %v4898
    %5346 = vmatpush.bf16.msra.mxu0 %v4890
    %5347 = vmatmul.bf16.gmra.mxu0 %v4285
    %v5348 = vpop.f32.mrf.mxu0
    %v5349 = vadd.f32 %v5320, %v5348
    %v5350 = vpop.f32.mrf.mxu0
    %v5351 = vadd.f32 %v5322, %v5350
    %5352 = vmatmul.bf16.gmra.mxu0 %v4287
    %v5353 = vpop.f32.mrf.mxu0
    %v5354 = vadd.f32 %v5325, %v5353
    %v5355 = vpop.f32.mrf.mxu0
    %v5356 = vadd.f32 %v5327, %v5355
    %5357 = vmatmul.bf16.gmra.mxu0 %v4289
    %v5358 = vpop.f32.mrf.mxu0
    %v5359 = vadd.f32 %v5330, %v5358
    %v5360 = vpop.f32.mrf.mxu0
    %v5361 = vadd.f32 %v5332, %v5360
    %5362 = vmatmul.bf16.gmra.mxu0 %v4291
    %v5363 = vpop.f32.mrf.mxu0
    %v5364 = vadd.f32 %v5335, %v5363
    %v5365 = vpop.f32.mrf.mxu0
    %v5366 = vadd.f32 %v5337, %v5365
    %5367 = vdwg.mxu0
    %5368 = vmatpush.bf16.msra.mxu0 %v4883
    %5369 = vmatpush.bf16.msra.mxu0 %v4875
    %5370 = vmatpush.bf16.msra.mxu0 %v4867
    %5371 = vmatpush.bf16.msra.mxu0 %v4859
    %5372 = vmatpush.bf16.msra.mxu0 %v4851
    %5373 = vmatpush.bf16.msra.mxu0 %v4843
    %5374 = vmatpush.bf16.msra.mxu0 %v4835
    %5375 = vmatpush.bf16.msra.mxu0 %v4827
    %5376 = vmatmul.bf16.gmra.mxu0 %v4284
    %v5377 = vpop.f32.mrf.mxu0
    %v5378 = vadd.f32 %v4427, %v5377
    %v5379 = vpop.f32.mrf.mxu0
    %v5380 = vadd.f32 %v4427, %v5379
    %5381 = vmatmul.bf16.gmra.mxu0 %v4286
    %v5382 = vpop.f32.mrf.mxu0
    %v5383 = vadd.f32 %v4427, %v5382
    %v5384 = vpop.f32.mrf.mxu0
    %v5385 = vadd.f32 %v4427, %v5384
    %5386 = vmatmul.bf16.gmra.mxu0 %v4288
    %v5387 = vpop.f32.mrf.mxu0
    %v5388 = vadd.f32 %v4427, %v5387
    %v5389 = vpop.f32.mrf.mxu0
    %v5390 = vadd.f32 %v4427, %v5389
    %5391 = vmatmul.bf16.gmra.mxu0 %v4290
    %v5392 = vpop.f32.mrf.mxu0
    %v5393 = vadd.f32 %v4427, %v5392
    %v5394 = vpop.f32.mrf.mxu0
    %v5395 = vadd.f32 %v4427, %v5394
    %5396 = vdwg.mxu0
    %5397 = vmatpush.bf16.msra.mxu0 %v4947
    %5398 = vmatpush.bf16.msra.mxu0 %v4939
    %5399 = vmatpush.bf16.msra.mxu0 %v4931
    %5400 = vmatpush.bf16.msra.mxu0 %v4923
    %5401 = vmatpush.bf16.msra.mxu0 %v4915
    %5402 = vmatpush.bf16.msra.mxu0 %v4907
    %5403 = vmatpush.bf16.msra.mxu0 %v4899
    %5404 = vmatpush.bf16.msra.mxu0 %v4891
    %5405 = vmatmul.bf16.gmra.mxu0 %v4285
    %v5406 = vpop.f32.mrf.mxu0
    %v5407 = vadd.f32 %v5378, %v5406
    %v5408 = vpop.f32.mrf.mxu0
    %v5409 = vadd.f32 %v5380, %v5408
    %5410 = vmatmul.bf16.gmra.mxu0 %v4287
    %v5411 = vpop.f32.mrf.mxu0
    %v5412 = vadd.f32 %v5383, %v5411
    %v5413 = vpop.f32.mrf.mxu0
    %v5414 = vadd.f32 %v5385, %v5413
    %5415 = vmatmul.bf16.gmra.mxu0 %v4289
    %v5416 = vpop.f32.mrf.mxu0
    %v5417 = vadd.f32 %v5388, %v5416
    %v5418 = vpop.f32.mrf.mxu0
    %v5419 = vadd.f32 %v5390, %v5418
    %5420 = vmatmul.bf16.gmra.mxu0 %v4291
    %v5421 = vpop.f32.mrf.mxu0
    %v5422 = vadd.f32 %v5393, %v5421
    %v5423 = vpop.f32.mrf.mxu0
    %v5424 = vadd.f32 %v5395, %v5423
    %5425 = vdwg.mxu0
    %5426 = vmatpush.bf16.msra.mxu0 %v4884
    %5427 = vmatpush.bf16.msra.mxu0 %v4876
    %5428 = vmatpush.bf16.msra.mxu0 %v4868
    %5429 = vmatpush.bf16.msra.mxu0 %v4860
    %5430 = vmatpush.bf16.msra.mxu0 %v4852
    %5431 = vmatpush.bf16.msra.mxu0 %v4844
    %5432 = vmatpush.bf16.msra.mxu0 %v4836
    %5433 = vmatpush.bf16.msra.mxu0 %v4828
    %5434 = vmatmul.bf16.gmra.mxu0 %v4284
    %v5435 = vpop.f32.mrf.mxu0
    %v5436 = vadd.f32 %v4428, %v5435
    %v5437 = vpop.f32.mrf.mxu0
    %v5438 = vadd.f32 %v4428, %v5437
    %5439 = vmatmul.bf16.gmra.mxu0 %v4286
    %v5440 = vpop.f32.mrf.mxu0
    %v5441 = vadd.f32 %v4428, %v5440
    %v5442 = vpop.f32.mrf.mxu0
    %v5443 = vadd.f32 %v4428, %v5442
    %5444 = vmatmul.bf16.gmra.mxu0 %v4288
    %v5445 = vpop.f32.mrf.mxu0
    %v5446 = vadd.f32 %v4428, %v5445
    %v5447 = vpop.f32.mrf.mxu0
    %v5448 = vadd.f32 %v4428, %v5447
    %5449 = vmatmul.bf16.gmra.mxu0 %v4290
    %v5450 = vpop.f32.mrf.mxu0
    %v5451 = vadd.f32 %v4428, %v5450
    %v5452 = vpop.f32.mrf.mxu0
    %v5453 = vadd.f32 %v4428, %v5452
    %5454 = vdwg.mxu0
    %5455 = vmatpush.bf16.msra.mxu0 %v4948
    %5456 = vmatpush.bf16.msra.mxu0 %v4940
    %5457 = vmatpush.bf16.msra.mxu0 %v4932
    %5458 = vmatpush.bf16.msra.mxu0 %v4924
    %5459 = vmatpush.bf16.msra.mxu0 %v4916
    %5460 = vmatpush.bf16.msra.mxu0 %v4908
    %5461 = vmatpush.bf16.msra.mxu0 %v4900
    %5462 = vmatpush.bf16.msra.mxu0 %v4892
    %5463 = vmatmul.bf16.gmra.mxu0 %v4285
    %v5464 = vpop.f32.mrf.mxu0
    %v5465 = vadd.f32 %v5436, %v5464
    %v5466 = vpop.f32.mrf.mxu0
    %v5467 = vadd.f32 %v5438, %v5466
    %5468 = vmatmul.bf16.gmra.mxu0 %v4287
    %v5469 = vpop.f32.mrf.mxu0
    %v5470 = vadd.f32 %v5441, %v5469
    %v5471 = vpop.f32.mrf.mxu0
    %v5472 = vadd.f32 %v5443, %v5471
    %5473 = vmatmul.bf16.gmra.mxu0 %v4289
    %v5474 = vpop.f32.mrf.mxu0
    %v5475 = vadd.f32 %v5446, %v5474
    %v5476 = vpop.f32.mrf.mxu0
    %v5477 = vadd.f32 %v5448, %v5476
    %5478 = vmatmul.bf16.gmra.mxu0 %v4291
    %v5479 = vpop.f32.mrf.mxu0
    %v5480 = vadd.f32 %v5451, %v5479
    %v5481 = vpop.f32.mrf.mxu0
    %v5482 = vadd.f32 %v5453, %v5481
    %5483 = vdwg.mxu0
    %5484 = vmatpush.bf16.msra.mxu0 %v4885
    %5485 = vmatpush.bf16.msra.mxu0 %v4877
    %5486 = vmatpush.bf16.msra.mxu0 %v4869
    %5487 = vmatpush.bf16.msra.mxu0 %v4861
    %5488 = vmatpush.bf16.msra.mxu0 %v4853
    %5489 = vmatpush.bf16.msra.mxu0 %v4845
    %5490 = vmatpush.bf16.msra.mxu0 %v4837
    %5491 = vmatpush.bf16.msra.mxu0 %v4829
    %5492 = vmatmul.bf16.gmra.mxu0 %v4284
    %v5493 = vpop.f32.mrf.mxu0
    %v5494 = vadd.f32 %v4429, %v5493
    %v5495 = vpop.f32.mrf.mxu0
    %v5496 = vadd.f32 %v4429, %v5495
    %5497 = vmatmul.bf16.gmra.mxu0 %v4286
    %v5498 = vpop.f32.mrf.mxu0
    %v5499 = vadd.f32 %v4429, %v5498
    %v5500 = vpop.f32.mrf.mxu0
    %v5501 = vadd.f32 %v4429, %v5500
    %5502 = vmatmul.bf16.gmra.mxu0 %v4288
    %v5503 = vpop.f32.mrf.mxu0
    %v5504 = vadd.f32 %v4429, %v5503
    %v5505 = vpop.f32.mrf.mxu0
    %v5506 = vadd.f32 %v4429, %v5505
    %5507 = vmatmul.bf16.gmra.mxu0 %v4290
    %v5508 = vpop.f32.mrf.mxu0
    %v5509 = vadd.f32 %v4429, %v5508
    %v5510 = vpop.f32.mrf.mxu0
    %v5511 = vadd.f32 %v4429, %v5510
    %5512 = vdwg.mxu0
    %5513 = vmatpush.bf16.msra.mxu0 %v4949
    %5514 = vmatpush.bf16.msra.mxu0 %v4941
    %5515 = vmatpush.bf16.msra.mxu0 %v4933
    %5516 = vmatpush.bf16.msra.mxu0 %v4925
    %5517 = vmatpush.bf16.msra.mxu0 %v4917
    %5518 = vmatpush.bf16.msra.mxu0 %v4909
    %5519 = vmatpush.bf16.msra.mxu0 %v4901
    %5520 = vmatpush.bf16.msra.mxu0 %v4893
    %5521 = vmatmul.bf16.gmra.mxu0 %v4285
    %v5522 = vpop.f32.mrf.mxu0
    %v5523 = vadd.f32 %v5494, %v5522
    %v5524 = vpop.f32.mrf.mxu0
    %v5525 = vadd.f32 %v5496, %v5524
    %5526 = vmatmul.bf16.gmra.mxu0 %v4287
    %v5527 = vpop.f32.mrf.mxu0
    %v5528 = vadd.f32 %v5499, %v5527
    %v5529 = vpop.f32.mrf.mxu0
    %v5530 = vadd.f32 %v5501, %v5529
    %5531 = vmatmul.bf16.gmra.mxu0 %v4289
    %v5532 = vpop.f32.mrf.mxu0
    %v5533 = vadd.f32 %v5504, %v5532
    %v5534 = vpop.f32.mrf.mxu0
    %v5535 = vadd.f32 %v5506, %v5534
    %5536 = vmatmul.bf16.gmra.mxu0 %v4291
    %v5537 = vpop.f32.mrf.mxu0
    %v5538 = vadd.f32 %v5509, %v5537
    %v5539 = vpop.f32.mrf.mxu0
    %v5540 = vadd.f32 %v5511, %v5539
    %5541 = vdwg.mxu0
    %5542 = vst [vmem:[#allocation3] sm:$0xff] %v5117
    %5543 = vst [vmem:[#allocation3 + $0x8] sm:$0xff] %v5175
    %5544 = vst [vmem:[#allocation3 + $0x10] sm:$0xff] %v5233
    %5545 = vst [vmem:[#allocation3 + $0x18] sm:$0xff] %v5291
    %5546 = vst [vmem:[#allocation3 + $0x20] sm:$0xff] %v5349
    %5547 = vst [vmem:[#allocation3 + $0x28] sm:$0xff] %v5407
    %5548 = vst [vmem:[#allocation3 + $0x30] sm:$0xff] %v5465
    %5549 = vst [vmem:[#allocation3 + $0x38] sm:$0xff] %v5523
    %5550 = vst [vmem:[#allocation3 + $0x40] sm:$0xff] %v5119
    %5551 = vst [vmem:[#allocation3 + $0x48] sm:$0xff] %v5177
    %5552 = vst [vmem:[#allocation3 + $0x50] sm:$0xff] %v5235
    %5553 = vst [vmem:[#allocation3 + $0x58] sm:$0xff] %v5293
    %5554 = vst [vmem:[#allocation3 + $0x60] sm:$0xff] %v5351
    %5555 = vst [vmem:[#allocation3 + $0x68] sm:$0xff] %v5409
    %5556 = vst [vmem:[#allocation3 + $0x70] sm:$0xff] %v5467
    %5557 = vst [vmem:[#allocation3 + $0x78] sm:$0xff] %v5525
    %5558 = vst [vmem:[#allocation3 + $0x80] sm:$0xff] %v5122
    %5559 = vst [vmem:[#allocation3 + $0x88] sm:$0xff] %v5180
    %5560 = vst [vmem:[#allocation3 + $0x90] sm:$0xff] %v5238
    %5561 = vst [vmem:[#allocation3 + $0x98] sm:$0xff] %v5296
    %5562 = vst [vmem:[#allocation3 + $0xa0] sm:$0xff] %v5354
    %5563 = vst [vmem:[#allocation3 + $0xa8] sm:$0xff] %v5412
    %5564 = vst [vmem:[#allocation3 + $0xb0] sm:$0xff] %v5470
    %5565 = vst [vmem:[#allocation3 + $0xb8] sm:$0xff] %v5528
    %5566 = vst [vmem:[#allocation3 + $0xc0] sm:$0xff] %v5124
    %5567 = vst [vmem:[#allocation3 + $0xc8] sm:$0xff] %v5182
    %5568 = vst [vmem:[#allocation3 + $0xd0] sm:$0xff] %v5240
    %5569 = vst [vmem:[#allocation3 + $0xd8] sm:$0xff] %v5298
    %5570 = vst [vmem:[#allocation3 + $0xe0] sm:$0xff] %v5356
    %5571 = vst [vmem:[#allocation3 + $0xe8] sm:$0xff] %v5414
    %5572 = vst [vmem:[#allocation3 + $0xf0] sm:$0xff] %v5472
    %5573 = vst [vmem:[#allocation3 + $0xf8] sm:$0xff] %v5530
    %5574 = vst [vmem:[#allocation3 + $0x100] sm:$0xff] %v5127
    %5575 = vst [vmem:[#allocation3 + $0x108] sm:$0xff] %v5185
    %5576 = vst [vmem:[#allocation3 + $0x110] sm:$0xff] %v5243
    %5577 = vst [vmem:[#allocation3 + $0x118] sm:$0xff] %v5301
    %5578 = vst [vmem:[#allocation3 + $0x120] sm:$0xff] %v5359
    %5579 = vst [vmem:[#allocation3 + $0x128] sm:$0xff] %v5417
    %5580 = vst [vmem:[#allocation3 + $0x130] sm:$0xff] %v5475
    %5581 = vst [vmem:[#allocation3 + $0x138] sm:$0xff] %v5533
    %5582 = vst [vmem:[#allocation3 + $0x140] sm:$0xff] %v5129
    %5583 = vst [vmem:[#allocation3 + $0x148] sm:$0xff] %v5187
    %5584 = vst [vmem:[#allocation3 + $0x150] sm:$0xff] %v5245
    %5585 = vst [vmem:[#allocation3 + $0x158] sm:$0xff] %v5303
    %5586 = vst [vmem:[#allocation3 + $0x160] sm:$0xff] %v5361
    %5587 = vst [vmem:[#allocation3 + $0x168] sm:$0xff] %v5419
    %5588 = vst [vmem:[#allocation3 + $0x170] sm:$0xff] %v5477
    %5589 = vst [vmem:[#allocation3 + $0x178] sm:$0xff] %v5535
    %5590 = vst [vmem:[#allocation3 + $0x180] sm:$0xff] %v5132
    %5591 = vst [vmem:[#allocation3 + $0x188] sm:$0xff] %v5190
    %5592 = vst [vmem:[#allocation3 + $0x190] sm:$0xff] %v5248
    %5593 = vst [vmem:[#allocation3 + $0x198] sm:$0xff] %v5306
    %5594 = vst [vmem:[#allocation3 + $0x1a0] sm:$0xff] %v5364
    %5595 = vst [vmem:[#allocation3 + $0x1a8] sm:$0xff] %v5422
    %5596 = vst [vmem:[#allocation3 + $0x1b0] sm:$0xff] %v5480
    %5597 = vst [vmem:[#allocation3 + $0x1b8] sm:$0xff] %v5538
    %5598 = vst [vmem:[#allocation3 + $0x1c0] sm:$0xff] %v5134
    %5599 = vst [vmem:[#allocation3 + $0x1c8] sm:$0xff] %v5192
    %5600 = vst [vmem:[#allocation3 + $0x1d0] sm:$0xff] %v5250
    %5601 = vst [vmem:[#allocation3 + $0x1d8] sm:$0xff] %v5308
    %5602 = vst [vmem:[#allocation3 + $0x1e0] sm:$0xff] %v5366
    %5603 = vst [vmem:[#allocation3 + $0x1e8] sm:$0xff] %v5424
    %5604 = vst [vmem:[#allocation3 + $0x1f0] sm:$0xff] %v5482
    %5605 = vst [vmem:[#allocation3 + $0x1f8] sm:$0xff] %v5540
    %v5606 = vld [vmem:[#allocation5] sm:$0xff]
    %v5607 = vld [vmem:[#allocation5 + $0x8] sm:$0xff]
    %v5608 = vld [vmem:[#allocation5 + $0x10] sm:$0xff]
    %v5609 = vld [vmem:[#allocation5 + $0x18] sm:$0xff]
    %v5610 = vld [vmem:[#allocation5 + $0x20] sm:$0xff]
    %v5611 = vld [vmem:[#allocation5 + $0x28] sm:$0xff]
    %v5612 = vld [vmem:[#allocation5 + $0x30] sm:$0xff]
    %v5613 = vld [vmem:[#allocation5 + $0x38] sm:$0xff]
    %v5614 = vld [vmem:[#allocation5 + $0x40] sm:$0xff]
    %v5615 = vld [vmem:[#allocation5 + $0x48] sm:$0xff]
    %v5616 = vld [vmem:[#allocation5 + $0x50] sm:$0xff]
    %v5617 = vld [vmem:[#allocation5 + $0x58] sm:$0xff]
    %v5618 = vld [vmem:[#allocation5 + $0x60] sm:$0xff]
    %v5619 = vld [vmem:[#allocation5 + $0x68] sm:$0xff]
    %v5620 = vld [vmem:[#allocation5 + $0x70] sm:$0xff]
    %v5621 = vld [vmem:[#allocation5 + $0x78] sm:$0xff]
    %v5622 = vld [vmem:[#allocation5 + $0x80] sm:$0xff]
    %v5623 = vld [vmem:[#allocation5 + $0x88] sm:$0xff]
    %v5624 = vld [vmem:[#allocation5 + $0x90] sm:$0xff]
    %v5625 = vld [vmem:[#allocation5 + $0x98] sm:$0xff]
    %v5626 = vld [vmem:[#allocation5 + $0xa0] sm:$0xff]
    %v5627 = vld [vmem:[#allocation5 + $0xa8] sm:$0xff]
    %v5628 = vld [vmem:[#allocation5 + $0xb0] sm:$0xff]
    %v5629 = vld [vmem:[#allocation5 + $0xb8] sm:$0xff]
    %v5630 = vld [vmem:[#allocation5 + $0xc0] sm:$0xff]
    %v5631 = vld [vmem:[#allocation5 + $0xc8] sm:$0xff]
    %v5632 = vld [vmem:[#allocation5 + $0xd0] sm:$0xff]
    %v5633 = vld [vmem:[#allocation5 + $0xd8] sm:$0xff]
    %v5634 = vld [vmem:[#allocation5 + $0xe0] sm:$0xff]
    %v5635 = vld [vmem:[#allocation5 + $0xe8] sm:$0xff]
    %v5636 = vld [vmem:[#allocation5 + $0xf0] sm:$0xff]
    %v5637 = vld [vmem:[#allocation5 + $0xf8] sm:$0xff]
    %v5638 = vld [vmem:[#allocation5 + $0x100] sm:$0xff]
    %v5639 = vld [vmem:[#allocation5 + $0x108] sm:$0xff]
    %v5640 = vld [vmem:[#allocation5 + $0x110] sm:$0xff]
    %v5641 = vld [vmem:[#allocation5 + $0x118] sm:$0xff]
    %v5642 = vld [vmem:[#allocation5 + $0x120] sm:$0xff]
    %v5643 = vld [vmem:[#allocation5 + $0x128] sm:$0xff]
    %v5644 = vld [vmem:[#allocation5 + $0x130] sm:$0xff]
    %v5645 = vld [vmem:[#allocation5 + $0x138] sm:$0xff]
    %v5646 = vld [vmem:[#allocation5 + $0x140] sm:$0xff]
    %v5647 = vld [vmem:[#allocation5 + $0x148] sm:$0xff]
    %v5648 = vld [vmem:[#allocation5 + $0x150] sm:$0xff]
    %v5649 = vld [vmem:[#allocation5 + $0x158] sm:$0xff]
    %v5650 = vld [vmem:[#allocation5 + $0x160] sm:$0xff]
    %v5651 = vld [vmem:[#allocation5 + $0x168] sm:$0xff]
    %v5652 = vld [vmem:[#allocation5 + $0x170] sm:$0xff]
    %v5653 = vld [vmem:[#allocation5 + $0x178] sm:$0xff]
    %v5654 = vld [vmem:[#allocation5 + $0x180] sm:$0xff]
    %v5655 = vld [vmem:[#allocation5 + $0x188] sm:$0xff]
    %v5656 = vld [vmem:[#allocation5 + $0x190] sm:$0xff]
    %v5657 = vld [vmem:[#allocation5 + $0x198] sm:$0xff]
    %v5658 = vld [vmem:[#allocation5 + $0x1a0] sm:$0xff]
    %v5659 = vld [vmem:[#allocation5 + $0x1a8] sm:$0xff]
    %v5660 = vld [vmem:[#allocation5 + $0x1b0] sm:$0xff]
    %v5661 = vld [vmem:[#allocation5 + $0x1b8] sm:$0xff]
    %v5662 = vld [vmem:[#allocation5 + $0x1c0] sm:$0xff]
    %v5663 = vld [vmem:[#allocation5 + $0x1c8] sm:$0xff]
    %v5664 = vld [vmem:[#allocation5 + $0x1d0] sm:$0xff]
    %v5665 = vld [vmem:[#allocation5 + $0x1d8] sm:$0xff]
    %v5666 = vld [vmem:[#allocation5 + $0x1e0] sm:$0xff]
    %v5667 = vld [vmem:[#allocation5 + $0x1e8] sm:$0xff]
    %v5668 = vld [vmem:[#allocation5 + $0x1f0] sm:$0xff]
    %v5669 = vld [vmem:[#allocation5 + $0x1f8] sm:$0xff]
    %v5670 = vld [vmem:[#allocation5 + $0x200] sm:$0xff]
    %v5671 = vld [vmem:[#allocation5 + $0x208] sm:$0xff]
    %v5672 = vld [vmem:[#allocation5 + $0x210] sm:$0xff]
    %v5673 = vld [vmem:[#allocation5 + $0x218] sm:$0xff]
    %v5674 = vld [vmem:[#allocation5 + $0x220] sm:$0xff]
    %v5675 = vld [vmem:[#allocation5 + $0x228] sm:$0xff]
    %v5676 = vld [vmem:[#allocation5 + $0x230] sm:$0xff]
    %v5677 = vld [vmem:[#allocation5 + $0x238] sm:$0xff]
    %v5678 = vld [vmem:[#allocation5 + $0x240] sm:$0xff]
    %v5679 = vld [vmem:[#allocation5 + $0x248] sm:$0xff]
    %v5680 = vld [vmem:[#allocation5 + $0x250] sm:$0xff]
    %v5681 = vld [vmem:[#allocation5 + $0x258] sm:$0xff]
    %v5682 = vld [vmem:[#allocation5 + $0x260] sm:$0xff]
    %v5683 = vld [vmem:[#allocation5 + $0x268] sm:$0xff]
    %v5684 = vld [vmem:[#allocation5 + $0x270] sm:$0xff]
    %v5685 = vld [vmem:[#allocation5 + $0x278] sm:$0xff]
    %v5686 = vld [vmem:[#allocation5 + $0x280] sm:$0xff]
    %v5687 = vld [vmem:[#allocation5 + $0x288] sm:$0xff]
    %v5688 = vld [vmem:[#allocation5 + $0x290] sm:$0xff]
    %v5689 = vld [vmem:[#allocation5 + $0x298] sm:$0xff]
    %v5690 = vld [vmem:[#allocation5 + $0x2a0] sm:$0xff]
    %v5691 = vld [vmem:[#allocation5 + $0x2a8] sm:$0xff]
    %v5692 = vld [vmem:[#allocation5 + $0x2b0] sm:$0xff]
    %v5693 = vld [vmem:[#allocation5 + $0x2b8] sm:$0xff]
    %v5694 = vld [vmem:[#allocation5 + $0x2c0] sm:$0xff]
    %v5695 = vld [vmem:[#allocation5 + $0x2c8] sm:$0xff]
    %v5696 = vld [vmem:[#allocation5 + $0x2d0] sm:$0xff]
    %v5697 = vld [vmem:[#allocation5 + $0x2d8] sm:$0xff]
    %v5698 = vld [vmem:[#allocation5 + $0x2e0] sm:$0xff]
    %v5699 = vld [vmem:[#allocation5 + $0x2e8] sm:$0xff]
    %v5700 = vld [vmem:[#allocation5 + $0x2f0] sm:$0xff]
    %v5701 = vld [vmem:[#allocation5 + $0x2f8] sm:$0xff]
    %v5702 = vld [vmem:[#allocation5 + $0x300] sm:$0xff]
    %v5703 = vld [vmem:[#allocation5 + $0x308] sm:$0xff]
    %v5704 = vld [vmem:[#allocation5 + $0x310] sm:$0xff]
    %v5705 = vld [vmem:[#allocation5 + $0x318] sm:$0xff]
    %v5706 = vld [vmem:[#allocation5 + $0x320] sm:$0xff]
    %v5707 = vld [vmem:[#allocation5 + $0x328] sm:$0xff]
    %v5708 = vld [vmem:[#allocation5 + $0x330] sm:$0xff]
    %v5709 = vld [vmem:[#allocation5 + $0x338] sm:$0xff]
    %v5710 = vld [vmem:[#allocation5 + $0x340] sm:$0xff]
    %v5711 = vld [vmem:[#allocation5 + $0x348] sm:$0xff]
    %v5712 = vld [vmem:[#allocation5 + $0x350] sm:$0xff]
    %v5713 = vld [vmem:[#allocation5 + $0x358] sm:$0xff]
    %v5714 = vld [vmem:[#allocation5 + $0x360] sm:$0xff]
    %v5715 = vld [vmem:[#allocation5 + $0x368] sm:$0xff]
    %v5716 = vld [vmem:[#allocation5 + $0x370] sm:$0xff]
    %v5717 = vld [vmem:[#allocation5 + $0x378] sm:$0xff]
    %v5718 = vld [vmem:[#allocation5 + $0x380] sm:$0xff]
    %v5719 = vld [vmem:[#allocation5 + $0x388] sm:$0xff]
    %v5720 = vld [vmem:[#allocation5 + $0x390] sm:$0xff]
    %v5721 = vld [vmem:[#allocation5 + $0x398] sm:$0xff]
    %v5722 = vld [vmem:[#allocation5 + $0x3a0] sm:$0xff]
    %v5723 = vld [vmem:[#allocation5 + $0x3a8] sm:$0xff]
    %v5724 = vld [vmem:[#allocation5 + $0x3b0] sm:$0xff]
    %v5725 = vld [vmem:[#allocation5 + $0x3b8] sm:$0xff]
    %v5726 = vld [vmem:[#allocation5 + $0x3c0] sm:$0xff]
    %v5727 = vld [vmem:[#allocation5 + $0x3c8] sm:$0xff]
    %v5728 = vld [vmem:[#allocation5 + $0x3d0] sm:$0xff]
    %v5729 = vld [vmem:[#allocation5 + $0x3d8] sm:$0xff]
    %v5730 = vld [vmem:[#allocation5 + $0x3e0] sm:$0xff]
    %v5731 = vld [vmem:[#allocation5 + $0x3e8] sm:$0xff]
    %v5732 = vld [vmem:[#allocation5 + $0x3f0] sm:$0xff]
    %v5733 = vld [vmem:[#allocation5 + $0x3f8] sm:$0xff]
    %s5734 = scalar_lea.vmem %s1, 16
    %v5735 = vld [vmem:[%s5734] sm:$0xff]
    %v5736 = vld [vmem:[%s5734 + $0x8] sm:$0xff]
    %s5737 = scalar_lea.vmem [#allocation10], 16
    %v5738 = vld [vmem:[%s5737] sm:$0xff]
    %v5739 = vld [vmem:[%s5737 + $0x8] sm:$0xff]
    %v5740 = vld [vmem:[#allocation3] sm:$0xff]
    %v5741 = vld [vmem:[#allocation3 + $0x8] sm:$0xff]
    %v5742 = vld [vmem:[#allocation3 + $0x10] sm:$0xff]
    %v5743 = vld [vmem:[#allocation3 + $0x18] sm:$0xff]
    %v5744 = vld [vmem:[#allocation3 + $0x20] sm:$0xff]
    %v5745 = vld [vmem:[#allocation3 + $0x28] sm:$0xff]
    %v5746 = vld [vmem:[#allocation3 + $0x30] sm:$0xff]
    %v5747 = vld [vmem:[#allocation3 + $0x38] sm:$0xff]
    %v5748 = vpack.c.bf16 %v5735, %v5735
    %v5749 = vpack.c.bf16 %v5736, %v5736
    %v5878 = vunpack.c.l.b16 %v5606
    %v5879 = vunpack.c.h.b16 %v5606
    %v5880 = vunpack.c.l.b16 %v5607
    %v5881 = vunpack.c.h.b16 %v5607
    %v5882 = vunpack.c.l.b16 %v5608
    %v5883 = vunpack.c.h.b16 %v5608
    %v5884 = vunpack.c.l.b16 %v5609
    %v5885 = vunpack.c.h.b16 %v5609
    %v5886 = vunpack.c.l.b16 %v5610
    %v5887 = vunpack.c.h.b16 %v5610
    %v5888 = vunpack.c.l.b16 %v5611
    %v5889 = vunpack.c.h.b16 %v5611
    %v5890 = vunpack.c.l.b16 %v5612
    %v5891 = vunpack.c.h.b16 %v5612
    %v5892 = vunpack.c.l.b16 %v5613
    %v5893 = vunpack.c.h.b16 %v5613
    %v5894 = vunpack.c.l.b16 %v5614
    %v5895 = vunpack.c.h.b16 %v5614
    %v5896 = vunpack.c.l.b16 %v5615
    %v5897 = vunpack.c.h.b16 %v5615
    %v5898 = vunpack.c.l.b16 %v5616
    %v5899 = vunpack.c.h.b16 %v5616
    %v5900 = vunpack.c.l.b16 %v5617
    %v5901 = vunpack.c.h.b16 %v5617
    %v5902 = vunpack.c.l.b16 %v5618
    %v5903 = vunpack.c.h.b16 %v5618
    %v5904 = vunpack.c.l.b16 %v5619
    %v5905 = vunpack.c.h.b16 %v5619
    %v5906 = vunpack.c.l.b16 %v5620
    %v5907 = vunpack.c.h.b16 %v5620
    %v5908 = vunpack.c.l.b16 %v5621
    %v5909 = vunpack.c.h.b16 %v5621
    %v5910 = vunpack.c.l.b16 %v5622
    %v5911 = vunpack.c.h.b16 %v5622
    %v5912 = vunpack.c.l.b16 %v5623
    %v5913 = vunpack.c.h.b16 %v5623
    %v5914 = vunpack.c.l.b16 %v5624
    %v5915 = vunpack.c.h.b16 %v5624
    %v5916 = vunpack.c.l.b16 %v5625
    %v5917 = vunpack.c.h.b16 %v5625
    %v5918 = vunpack.c.l.b16 %v5626
    %v5919 = vunpack.c.h.b16 %v5626
    %v5920 = vunpack.c.l.b16 %v5627
    %v5921 = vunpack.c.h.b16 %v5627
    %v5922 = vunpack.c.l.b16 %v5628
    %v5923 = vunpack.c.h.b16 %v5628
    %v5924 = vunpack.c.l.b16 %v5629
    %v5925 = vunpack.c.h.b16 %v5629
    %v5926 = vunpack.c.l.b16 %v5630
    %v5927 = vunpack.c.h.b16 %v5630
    %v5928 = vunpack.c.l.b16 %v5631
    %v5929 = vunpack.c.h.b16 %v5631
    %v5930 = vunpack.c.l.b16 %v5632
    %v5931 = vunpack.c.h.b16 %v5632
    %v5932 = vunpack.c.l.b16 %v5633
    %v5933 = vunpack.c.h.b16 %v5633
    %v5934 = vunpack.c.l.b16 %v5634
    %v5935 = vunpack.c.h.b16 %v5634
    %v5936 = vunpack.c.l.b16 %v5635
    %v5937 = vunpack.c.h.b16 %v5635
    %v5938 = vunpack.c.l.b16 %v5636
    %v5939 = vunpack.c.h.b16 %v5636
    %v5940 = vunpack.c.l.b16 %v5637
    %v5941 = vunpack.c.h.b16 %v5637
    %v5942 = vunpack.c.l.b16 %v5638
    %v5943 = vunpack.c.h.b16 %v5638
    %v5944 = vunpack.c.l.b16 %v5639
    %v5945 = vunpack.c.h.b16 %v5639
    %v5946 = vunpack.c.l.b16 %v5640
    %v5947 = vunpack.c.h.b16 %v5640
    %v5948 = vunpack.c.l.b16 %v5641
    %v5949 = vunpack.c.h.b16 %v5641
    %v5950 = vunpack.c.l.b16 %v5642
    %v5951 = vunpack.c.h.b16 %v5642
    %v5952 = vunpack.c.l.b16 %v5643
    %v5953 = vunpack.c.h.b16 %v5643
    %v5954 = vunpack.c.l.b16 %v5644
    %v5955 = vunpack.c.h.b16 %v5644
    %v5956 = vunpack.c.l.b16 %v5645
    %v5957 = vunpack.c.h.b16 %v5645
    %v5958 = vunpack.c.l.b16 %v5646
    %v5959 = vunpack.c.h.b16 %v5646
    %v5960 = vunpack.c.l.b16 %v5647
    %v5961 = vunpack.c.h.b16 %v5647
    %v5962 = vunpack.c.l.b16 %v5648
    %v5963 = vunpack.c.h.b16 %v5648
    %v5964 = vunpack.c.l.b16 %v5649
    %v5965 = vunpack.c.h.b16 %v5649
    %v5966 = vunpack.c.l.b16 %v5650
    %v5967 = vunpack.c.h.b16 %v5650
    %v5968 = vunpack.c.l.b16 %v5651
    %v5969 = vunpack.c.h.b16 %v5651
    %v5970 = vunpack.c.l.b16 %v5652
    %v5971 = vunpack.c.h.b16 %v5652
    %v5972 = vunpack.c.l.b16 %v5653
    %v5973 = vunpack.c.h.b16 %v5653
    %v5974 = vunpack.c.l.b16 %v5654
    %v5975 = vunpack.c.h.b16 %v5654
    %v5976 = vunpack.c.l.b16 %v5655
    %v5977 = vunpack.c.h.b16 %v5655
    %v5978 = vunpack.c.l.b16 %v5656
    %v5979 = vunpack.c.h.b16 %v5656
    %v5980 = vunpack.c.l.b16 %v5657
    %v5981 = vunpack.c.h.b16 %v5657
    %v5982 = vunpack.c.l.b16 %v5658
    %v5983 = vunpack.c.h.b16 %v5658
    %v5984 = vunpack.c.l.b16 %v5659
    %v5985 = vunpack.c.h.b16 %v5659
    %v5986 = vunpack.c.l.b16 %v5660
    %v5987 = vunpack.c.h.b16 %v5660
    %v5988 = vunpack.c.l.b16 %v5661
    %v5989 = vunpack.c.h.b16 %v5661
    %v5990 = vunpack.c.l.b16 %v5662
    %v5991 = vunpack.c.h.b16 %v5662
    %v5992 = vunpack.c.l.b16 %v5663
    %v5993 = vunpack.c.h.b16 %v5663
    %v5994 = vunpack.c.l.b16 %v5664
    %v5995 = vunpack.c.h.b16 %v5664
    %v5996 = vunpack.c.l.b16 %v5665
    %v5997 = vunpack.c.h.b16 %v5665
    %v5998 = vunpack.c.l.b16 %v5666
    %v5999 = vunpack.c.h.b16 %v5666
    %v6000 = vunpack.c.l.b16 %v5667
    %v6001 = vunpack.c.h.b16 %v5667
    %v6002 = vunpack.c.l.b16 %v5668
    %v6003 = vunpack.c.h.b16 %v5668
    %v6004 = vunpack.c.l.b16 %v5669
    %v6005 = vunpack.c.h.b16 %v5669
    %v6006 = vunpack.c.l.b16 %v5670
    %v6007 = vunpack.c.h.b16 %v5670
    %v6008 = vunpack.c.l.b16 %v5671
    %v6009 = vunpack.c.h.b16 %v5671
    %v6010 = vunpack.c.l.b16 %v5672
    %v6011 = vunpack.c.h.b16 %v5672
    %v6012 = vunpack.c.l.b16 %v5673
    %v6013 = vunpack.c.h.b16 %v5673
    %v6014 = vunpack.c.l.b16 %v5674
    %v6015 = vunpack.c.h.b16 %v5674
    %v6016 = vunpack.c.l.b16 %v5675
    %v6017 = vunpack.c.h.b16 %v5675
    %v6018 = vunpack.c.l.b16 %v5676
    %v6019 = vunpack.c.h.b16 %v5676
    %v6020 = vunpack.c.l.b16 %v5677
    %v6021 = vunpack.c.h.b16 %v5677
    %v6022 = vunpack.c.l.b16 %v5678
    %v6023 = vunpack.c.h.b16 %v5678
    %v6024 = vunpack.c.l.b16 %v5679
    %v6025 = vunpack.c.h.b16 %v5679
    %v6026 = vunpack.c.l.b16 %v5680
    %v6027 = vunpack.c.h.b16 %v5680
    %v6028 = vunpack.c.l.b16 %v5681
    %v6029 = vunpack.c.h.b16 %v5681
    %v6030 = vunpack.c.l.b16 %v5682
    %v6031 = vunpack.c.h.b16 %v5682
    %v6032 = vunpack.c.l.b16 %v5683
    %v6033 = vunpack.c.h.b16 %v5683
    %v6034 = vunpack.c.l.b16 %v5684
    %v6035 = vunpack.c.h.b16 %v5684
    %v6036 = vunpack.c.l.b16 %v5685
    %v6037 = vunpack.c.h.b16 %v5685
    %v6038 = vunpack.c.l.b16 %v5686
    %v6039 = vunpack.c.h.b16 %v5686
    %v6040 = vunpack.c.l.b16 %v5687
    %v6041 = vunpack.c.h.b16 %v5687
    %v6042 = vunpack.c.l.b16 %v5688
    %v6043 = vunpack.c.h.b16 %v5688
    %v6044 = vunpack.c.l.b16 %v5689
    %v6045 = vunpack.c.h.b16 %v5689
    %v6046 = vunpack.c.l.b16 %v5690
    %v6047 = vunpack.c.h.b16 %v5690
    %v6048 = vunpack.c.l.b16 %v5691
    %v6049 = vunpack.c.h.b16 %v5691
    %v6050 = vunpack.c.l.b16 %v5692
    %v6051 = vunpack.c.h.b16 %v5692
    %v6052 = vunpack.c.l.b16 %v5693
    %v6053 = vunpack.c.h.b16 %v5693
    %v6054 = vunpack.c.l.b16 %v5694
    %v6055 = vunpack.c.h.b16 %v5694
    %v6056 = vunpack.c.l.b16 %v5695
    %v6057 = vunpack.c.h.b16 %v5695
    %v6058 = vunpack.c.l.b16 %v5696
    %v6059 = vunpack.c.h.b16 %v5696
    %v6060 = vunpack.c.l.b16 %v5697
    %v6061 = vunpack.c.h.b16 %v5697
    %v6062 = vunpack.c.l.b16 %v5698
    %v6063 = vunpack.c.h.b16 %v5698
    %v6064 = vunpack.c.l.b16 %v5699
    %v6065 = vunpack.c.h.b16 %v5699
    %v6066 = vunpack.c.l.b16 %v5700
    %v6067 = vunpack.c.h.b16 %v5700
    %v6068 = vunpack.c.l.b16 %v5701
    %v6069 = vunpack.c.h.b16 %v5701
    %v6070 = vunpack.c.l.b16 %v5702
    %v6071 = vunpack.c.h.b16 %v5702
    %v6072 = vunpack.c.l.b16 %v5703
    %v6073 = vunpack.c.h.b16 %v5703
    %v6074 = vunpack.c.l.b16 %v5704
    %v6075 = vunpack.c.h.b16 %v5704
    %v6076 = vunpack.c.l.b16 %v5705
    %v6077 = vunpack.c.h.b16 %v5705
    %v6078 = vunpack.c.l.b16 %v5706
    %v6079 = vunpack.c.h.b16 %v5706
    %v6080 = vunpack.c.l.b16 %v5707
    %v6081 = vunpack.c.h.b16 %v5707
    %v6082 = vunpack.c.l.b16 %v5708
    %v6083 = vunpack.c.h.b16 %v5708
    %v6084 = vunpack.c.l.b16 %v5709
    %v6085 = vunpack.c.h.b16 %v5709
    %v6086 = vunpack.c.l.b16 %v5710
    %v6087 = vunpack.c.h.b16 %v5710
    %v6088 = vunpack.c.l.b16 %v5711
    %v6089 = vunpack.c.h.b16 %v5711
    %v6090 = vunpack.c.l.b16 %v5712
    %v6091 = vunpack.c.h.b16 %v5712
    %v6092 = vunpack.c.l.b16 %v5713
    %v6093 = vunpack.c.h.b16 %v5713
    %v6094 = vunpack.c.l.b16 %v5714
    %v6095 = vunpack.c.h.b16 %v5714
    %v6096 = vunpack.c.l.b16 %v5715
    %v6097 = vunpack.c.h.b16 %v5715
    %v6098 = vunpack.c.l.b16 %v5716
    %v6099 = vunpack.c.h.b16 %v5716
    %v6100 = vunpack.c.l.b16 %v5717
    %v6101 = vunpack.c.h.b16 %v5717
    %v6102 = vunpack.c.l.b16 %v5718
    %v6103 = vunpack.c.h.b16 %v5718
    %v6104 = vunpack.c.l.b16 %v5719
    %v6105 = vunpack.c.h.b16 %v5719
    %v6106 = vunpack.c.l.b16 %v5720
    %v6107 = vunpack.c.h.b16 %v5720
    %v6108 = vunpack.c.l.b16 %v5721
    %v6109 = vunpack.c.h.b16 %v5721
    %v6110 = vunpack.c.l.b16 %v5722
    %v6111 = vunpack.c.h.b16 %v5722
    %v6112 = vunpack.c.l.b16 %v5723
    %v6113 = vunpack.c.h.b16 %v5723
    %v6114 = vunpack.c.l.b16 %v5724
    %v6115 = vunpack.c.h.b16 %v5724
    %v6116 = vunpack.c.l.b16 %v5725
    %v6117 = vunpack.c.h.b16 %v5725
    %v6118 = vunpack.c.l.b16 %v5726
    %v6119 = vunpack.c.h.b16 %v5726
    %v6120 = vunpack.c.l.b16 %v5727
    %v6121 = vunpack.c.h.b16 %v5727
    %v6122 = vunpack.c.l.b16 %v5728
    %v6123 = vunpack.c.h.b16 %v5728
    %v6124 = vunpack.c.l.b16 %v5729
    %v6125 = vunpack.c.h.b16 %v5729
    %v6126 = vunpack.c.l.b16 %v5730
    %v6127 = vunpack.c.h.b16 %v5730
    %v6128 = vunpack.c.l.b16 %v5731
    %v6129 = vunpack.c.h.b16 %v5731
    %v6130 = vunpack.c.l.b16 %v5732
    %v6131 = vunpack.c.h.b16 %v5732
    %v6132 = vunpack.c.l.b16 %v5733
    %v6133 = vunpack.c.h.b16 %v5733
    %v6134 = vpack.c.b16 %v5886, %v5878
    %v6135 = vpack.c.b16 %v5887, %v5879
    %v6136 = vpack.c.b16 %v5888, %v5880
    %v6137 = vpack.c.b16 %v5889, %v5881
    %v6138 = vpack.c.b16 %v5890, %v5882
    %v6139 = vpack.c.b16 %v5891, %v5883
    %v6140 = vpack.c.b16 %v5892, %v5884
    %v6141 = vpack.c.b16 %v5893, %v5885
    %v6142 = vpack.c.b16 %v5902, %v5894
    %v6143 = vpack.c.b16 %v5903, %v5895
    %v6144 = vpack.c.b16 %v5904, %v5896
    %v6145 = vpack.c.b16 %v5905, %v5897
    %v6146 = vpack.c.b16 %v5906, %v5898
    %v6147 = vpack.c.b16 %v5907, %v5899
    %v6148 = vpack.c.b16 %v5908, %v5900
    %v6149 = vpack.c.b16 %v5909, %v5901
    %v6150 = vpack.c.b16 %v5918, %v5910
    %v6151 = vpack.c.b16 %v5919, %v5911
    %v6152 = vpack.c.b16 %v5920, %v5912
    %v6153 = vpack.c.b16 %v5921, %v5913
    %v6154 = vpack.c.b16 %v5922, %v5914
    %v6155 = vpack.c.b16 %v5923, %v5915
    %v6156 = vpack.c.b16 %v5924, %v5916
    %v6157 = vpack.c.b16 %v5925, %v5917
    %v6158 = vpack.c.b16 %v5934, %v5926
    %v6159 = vpack.c.b16 %v5935, %v5927
    %v6160 = vpack.c.b16 %v5936, %v5928
    %v6161 = vpack.c.b16 %v5937, %v5929
    %v6162 = vpack.c.b16 %v5938, %v5930
    %v6163 = vpack.c.b16 %v5939, %v5931
    %v6164 = vpack.c.b16 %v5940, %v5932
    %v6165 = vpack.c.b16 %v5941, %v5933
    %v6166 = vpack.c.b16 %v5950, %v5942
    %v6167 = vpack.c.b16 %v5951, %v5943
    %v6168 = vpack.c.b16 %v5952, %v5944
    %v6169 = vpack.c.b16 %v5953, %v5945
    %v6170 = vpack.c.b16 %v5954, %v5946
    %v6171 = vpack.c.b16 %v5955, %v5947
    %v6172 = vpack.c.b16 %v5956, %v5948
    %v6173 = vpack.c.b16 %v5957, %v5949
    %v6174 = vpack.c.b16 %v5966, %v5958
    %v6175 = vpack.c.b16 %v5967, %v5959
    %v6176 = vpack.c.b16 %v5968, %v5960
    %v6177 = vpack.c.b16 %v5969, %v5961
    %v6178 = vpack.c.b16 %v5970, %v5962
    %v6179 = vpack.c.b16 %v5971, %v5963
    %v6180 = vpack.c.b16 %v5972, %v5964
    %v6181 = vpack.c.b16 %v5973, %v5965
    %v6182 = vpack.c.b16 %v5982, %v5974
    %v6183 = vpack.c.b16 %v5983, %v5975
    %v6184 = vpack.c.b16 %v5984, %v5976
    %v6185 = vpack.c.b16 %v5985, %v5977
    %v6186 = vpack.c.b16 %v5986, %v5978
    %v6187 = vpack.c.b16 %v5987, %v5979
    %v6188 = vpack.c.b16 %v5988, %v5980
    %v6189 = vpack.c.b16 %v5989, %v5981
    %v6190 = vpack.c.b16 %v5998, %v5990
    %v6191 = vpack.c.b16 %v5999, %v5991
    %v6192 = vpack.c.b16 %v6000, %v5992
    %v6193 = vpack.c.b16 %v6001, %v5993
    %v6194 = vpack.c.b16 %v6002, %v5994
    %v6195 = vpack.c.b16 %v6003, %v5995
    %v6196 = vpack.c.b16 %v6004, %v5996
    %v6197 = vpack.c.b16 %v6005, %v5997
    %v6198 = vpack.c.b16 %v6014, %v6006
    %v6199 = vpack.c.b16 %v6015, %v6007
    %v6200 = vpack.c.b16 %v6016, %v6008
    %v6201 = vpack.c.b16 %v6017, %v6009
    %v6202 = vpack.c.b16 %v6018, %v6010
    %v6203 = vpack.c.b16 %v6019, %v6011
    %v6204 = vpack.c.b16 %v6020, %v6012
    %v6205 = vpack.c.b16 %v6021, %v6013
    %v6206 = vpack.c.b16 %v6030, %v6022
    %v6207 = vpack.c.b16 %v6031, %v6023
    %v6208 = vpack.c.b16 %v6032, %v6024
    %v6209 = vpack.c.b16 %v6033, %v6025
    %v6210 = vpack.c.b16 %v6034, %v6026
    %v6211 = vpack.c.b16 %v6035, %v6027
    %v6212 = vpack.c.b16 %v6036, %v6028
    %v6213 = vpack.c.b16 %v6037, %v6029
    %v6214 = vpack.c.b16 %v6046, %v6038
    %v6215 = vpack.c.b16 %v6047, %v6039
    %v6216 = vpack.c.b16 %v6048, %v6040
    %v6217 = vpack.c.b16 %v6049, %v6041
    %v6218 = vpack.c.b16 %v6050, %v6042
    %v6219 = vpack.c.b16 %v6051, %v6043
    %v6220 = vpack.c.b16 %v6052, %v6044
    %v6221 = vpack.c.b16 %v6053, %v6045
    %v6222 = vpack.c.b16 %v6062, %v6054
    %v6223 = vpack.c.b16 %v6063, %v6055
    %v6224 = vpack.c.b16 %v6064, %v6056
    %v6225 = vpack.c.b16 %v6065, %v6057
    %v6226 = vpack.c.b16 %v6066, %v6058
    %v6227 = vpack.c.b16 %v6067, %v6059
    %v6228 = vpack.c.b16 %v6068, %v6060
    %v6229 = vpack.c.b16 %v6069, %v6061
    %v6230 = vpack.c.b16 %v6078, %v6070
    %v6231 = vpack.c.b16 %v6079, %v6071
    %v6232 = vpack.c.b16 %v6080, %v6072
    %v6233 = vpack.c.b16 %v6081, %v6073
    %v6234 = vpack.c.b16 %v6082, %v6074
    %v6235 = vpack.c.b16 %v6083, %v6075
    %v6236 = vpack.c.b16 %v6084, %v6076
    %v6237 = vpack.c.b16 %v6085, %v6077
    %v6238 = vpack.c.b16 %v6094, %v6086
    %v6239 = vpack.c.b16 %v6095, %v6087
    %v6240 = vpack.c.b16 %v6096, %v6088
    %v6241 = vpack.c.b16 %v6097, %v6089
    %v6242 = vpack.c.b16 %v6098, %v6090
    %v6243 = vpack.c.b16 %v6099, %v6091
    %v6244 = vpack.c.b16 %v6100, %v6092
    %v6245 = vpack.c.b16 %v6101, %v6093
    %v6246 = vpack.c.b16 %v6110, %v6102
    %v6247 = vpack.c.b16 %v6111, %v6103
    %v6248 = vpack.c.b16 %v6112, %v6104
    %v6249 = vpack.c.b16 %v6113, %v6105
    %v6250 = vpack.c.b16 %v6114, %v6106
    %v6251 = vpack.c.b16 %v6115, %v6107
    %v6252 = vpack.c.b16 %v6116, %v6108
    %v6253 = vpack.c.b16 %v6117, %v6109
    %v6254 = vpack.c.b16 %v6126, %v6118
    %v6255 = vpack.c.b16 %v6127, %v6119
    %v6256 = vpack.c.b16 %v6128, %v6120
    %v6257 = vpack.c.b16 %v6129, %v6121
    %v6258 = vpack.c.b16 %v6130, %v6122
    %v6259 = vpack.c.b16 %v6131, %v6123
    %v6260 = vpack.c.b16 %v6132, %v6124
    %v6261 = vpack.c.b16 %v6133, %v6125
    %6390 = vmatpush.bf16.msra.mxu0 %v6190
    %6391 = vmatpush.bf16.msra.mxu0 %v6182
    %6392 = vmatpush.bf16.msra.mxu0 %v6174
    %6393 = vmatpush.bf16.msra.mxu0 %v6166
    %6394 = vmatpush.bf16.msra.mxu0 %v6158
    %6395 = vmatpush.bf16.msra.mxu0 %v6150
    %6396 = vmatpush.bf16.msra.mxu0 %v6142
    %6397 = vmatpush.bf16.msra.mxu0 %v6134
    %6398 = vmatmul.bf16.gmra.mxu0 %v5748
    %v6399 = vpop.f32.mrf.mxu0
    %v6400 = vadd.f32 0.0, %v6399
    %v6401 = vpop.f32.mrf.mxu0
    %6402 = vdwg.mxu0
    %6403 = vmatpush.bf16.msra.mxu0 %v6254
    %6404 = vmatpush.bf16.msra.mxu0 %v6246
    %6405 = vmatpush.bf16.msra.mxu0 %v6238
    %6406 = vmatpush.bf16.msra.mxu0 %v6230
    %6407 = vmatpush.bf16.msra.mxu0 %v6222
    %6408 = vmatpush.bf16.msra.mxu0 %v6214
    %6409 = vmatpush.bf16.msra.mxu0 %v6206
    %6410 = vmatpush.bf16.msra.mxu0 %v6198
    %6411 = vmatmul.bf16.gmra.mxu0 %v5749
    %v6412 = vpop.f32.mrf.mxu0
    %v6413 = vadd.f32 %v6400, %v6412
    %v6414 = vpop.f32.mrf.mxu0
    %6415 = vdwg.mxu0
    %6416 = vmatpush.bf16.msra.mxu0 %v6191
    %6417 = vmatpush.bf16.msra.mxu0 %v6183
    %6418 = vmatpush.bf16.msra.mxu0 %v6175
    %6419 = vmatpush.bf16.msra.mxu0 %v6167
    %6420 = vmatpush.bf16.msra.mxu0 %v6159
    %6421 = vmatpush.bf16.msra.mxu0 %v6151
    %6422 = vmatpush.bf16.msra.mxu0 %v6143
    %6423 = vmatpush.bf16.msra.mxu0 %v6135
    %6424 = vmatmul.bf16.gmra.mxu0 %v5748
    %v6425 = vpop.f32.mrf.mxu0
    %v6426 = vadd.f32 0.0, %v6425
    %v6427 = vpop.f32.mrf.mxu0
    %6428 = vdwg.mxu0
    %6429 = vmatpush.bf16.msra.mxu0 %v6255
    %6430 = vmatpush.bf16.msra.mxu0 %v6247
    %6431 = vmatpush.bf16.msra.mxu0 %v6239
    %6432 = vmatpush.bf16.msra.mxu0 %v6231
    %6433 = vmatpush.bf16.msra.mxu0 %v6223
    %6434 = vmatpush.bf16.msra.mxu0 %v6215
    %6435 = vmatpush.bf16.msra.mxu0 %v6207
    %6436 = vmatpush.bf16.msra.mxu0 %v6199
    %6437 = vmatmul.bf16.gmra.mxu0 %v5749
    %v6438 = vpop.f32.mrf.mxu0
    %v6439 = vadd.f32 %v6426, %v6438
    %v6440 = vpop.f32.mrf.mxu0
    %6441 = vdwg.mxu0
    %6442 = vmatpush.bf16.msra.mxu0 %v6192
    %6443 = vmatpush.bf16.msra.mxu0 %v6184
    %6444 = vmatpush.bf16.msra.mxu0 %v6176
    %6445 = vmatpush.bf16.msra.mxu0 %v6168
    %6446 = vmatpush.bf16.msra.mxu0 %v6160
    %6447 = vmatpush.bf16.msra.mxu0 %v6152
    %6448 = vmatpush.bf16.msra.mxu0 %v6144
    %6449 = vmatpush.bf16.msra.mxu0 %v6136
    %6450 = vmatmul.bf16.gmra.mxu0 %v5748
    %v6451 = vpop.f32.mrf.mxu0
    %v6452 = vadd.f32 0.0, %v6451
    %v6453 = vpop.f32.mrf.mxu0
    %6454 = vdwg.mxu0
    %6455 = vmatpush.bf16.msra.mxu0 %v6256
    %6456 = vmatpush.bf16.msra.mxu0 %v6248
    %6457 = vmatpush.bf16.msra.mxu0 %v6240
    %6458 = vmatpush.bf16.msra.mxu0 %v6232
    %6459 = vmatpush.bf16.msra.mxu0 %v6224
    %6460 = vmatpush.bf16.msra.mxu0 %v6216
    %6461 = vmatpush.bf16.msra.mxu0 %v6208
    %6462 = vmatpush.bf16.msra.mxu0 %v6200
    %6463 = vmatmul.bf16.gmra.mxu0 %v5749
    %v6464 = vpop.f32.mrf.mxu0
    %v6465 = vadd.f32 %v6452, %v6464
    %v6466 = vpop.f32.mrf.mxu0
    %6467 = vdwg.mxu0
    %6468 = vmatpush.bf16.msra.mxu0 %v6193
    %6469 = vmatpush.bf16.msra.mxu0 %v6185
    %6470 = vmatpush.bf16.msra.mxu0 %v6177
    %6471 = vmatpush.bf16.msra.mxu0 %v6169
    %6472 = vmatpush.bf16.msra.mxu0 %v6161
    %6473 = vmatpush.bf16.msra.mxu0 %v6153
    %6474 = vmatpush.bf16.msra.mxu0 %v6145
    %6475 = vmatpush.bf16.msra.mxu0 %v6137
    %6476 = vmatmul.bf16.gmra.mxu0 %v5748
    %v6477 = vpop.f32.mrf.mxu0
    %v6478 = vadd.f32 0.0, %v6477
    %v6479 = vpop.f32.mrf.mxu0
    %6480 = vdwg.mxu0
    %6481 = vmatpush.bf16.msra.mxu0 %v6257
    %6482 = vmatpush.bf16.msra.mxu0 %v6249
    %6483 = vmatpush.bf16.msra.mxu0 %v6241
    %6484 = vmatpush.bf16.msra.mxu0 %v6233
    %6485 = vmatpush.bf16.msra.mxu0 %v6225
    %6486 = vmatpush.bf16.msra.mxu0 %v6217
    %6487 = vmatpush.bf16.msra.mxu0 %v6209
    %6488 = vmatpush.bf16.msra.mxu0 %v6201
    %6489 = vmatmul.bf16.gmra.mxu0 %v5749
    %v6490 = vpop.f32.mrf.mxu0
    %v6491 = vadd.f32 %v6478, %v6490
    %v6492 = vpop.f32.mrf.mxu0
    %6493 = vdwg.mxu0
    %6494 = vmatpush.bf16.msra.mxu0 %v6194
    %6495 = vmatpush.bf16.msra.mxu0 %v6186
    %6496 = vmatpush.bf16.msra.mxu0 %v6178
    %6497 = vmatpush.bf16.msra.mxu0 %v6170
    %6498 = vmatpush.bf16.msra.mxu0 %v6162
    %6499 = vmatpush.bf16.msra.mxu0 %v6154
    %6500 = vmatpush.bf16.msra.mxu0 %v6146
    %6501 = vmatpush.bf16.msra.mxu0 %v6138
    %6502 = vmatmul.bf16.gmra.mxu0 %v5748
    %v6503 = vpop.f32.mrf.mxu0
    %v6504 = vadd.f32 0.0, %v6503
    %v6505 = vpop.f32.mrf.mxu0
    %6506 = vdwg.mxu0
    %6507 = vmatpush.bf16.msra.mxu0 %v6258
    %6508 = vmatpush.bf16.msra.mxu0 %v6250
    %6509 = vmatpush.bf16.msra.mxu0 %v6242
    %6510 = vmatpush.bf16.msra.mxu0 %v6234
    %6511 = vmatpush.bf16.msra.mxu0 %v6226
    %6512 = vmatpush.bf16.msra.mxu0 %v6218
    %6513 = vmatpush.bf16.msra.mxu0 %v6210
    %6514 = vmatpush.bf16.msra.mxu0 %v6202
    %6515 = vmatmul.bf16.gmra.mxu0 %v5749
    %v6516 = vpop.f32.mrf.mxu0
    %v6517 = vadd.f32 %v6504, %v6516
    %v6518 = vpop.f32.mrf.mxu0
    %6519 = vdwg.mxu0
    %6520 = vmatpush.bf16.msra.mxu0 %v6195
    %6521 = vmatpush.bf16.msra.mxu0 %v6187
    %6522 = vmatpush.bf16.msra.mxu0 %v6179
    %6523 = vmatpush.bf16.msra.mxu0 %v6171
    %6524 = vmatpush.bf16.msra.mxu0 %v6163
    %6525 = vmatpush.bf16.msra.mxu0 %v6155
    %6526 = vmatpush.bf16.msra.mxu0 %v6147
    %6527 = vmatpush.bf16.msra.mxu0 %v6139
    %6528 = vmatmul.bf16.gmra.mxu0 %v5748
    %v6529 = vpop.f32.mrf.mxu0
    %v6530 = vadd.f32 0.0, %v6529
    %v6531 = vpop.f32.mrf.mxu0
    %6532 = vdwg.mxu0
    %6533 = vmatpush.bf16.msra.mxu0 %v6259
    %6534 = vmatpush.bf16.msra.mxu0 %v6251
    %6535 = vmatpush.bf16.msra.mxu0 %v6243
    %6536 = vmatpush.bf16.msra.mxu0 %v6235
    %6537 = vmatpush.bf16.msra.mxu0 %v6227
    %6538 = vmatpush.bf16.msra.mxu0 %v6219
    %6539 = vmatpush.bf16.msra.mxu0 %v6211
    %6540 = vmatpush.bf16.msra.mxu0 %v6203
    %6541 = vmatmul.bf16.gmra.mxu0 %v5749
    %v6542 = vpop.f32.mrf.mxu0
    %v6543 = vadd.f32 %v6530, %v6542
    %v6544 = vpop.f32.mrf.mxu0
    %6545 = vdwg.mxu0
    %6546 = vmatpush.bf16.msra.mxu0 %v6196
    %6547 = vmatpush.bf16.msra.mxu0 %v6188
    %6548 = vmatpush.bf16.msra.mxu0 %v6180
    %6549 = vmatpush.bf16.msra.mxu0 %v6172
    %6550 = vmatpush.bf16.msra.mxu0 %v6164
    %6551 = vmatpush.bf16.msra.mxu0 %v6156
    %6552 = vmatpush.bf16.msra.mxu0 %v6148
    %6553 = vmatpush.bf16.msra.mxu0 %v6140
    %6554 = vmatmul.bf16.gmra.mxu0 %v5748
    %v6555 = vpop.f32.mrf.mxu0
    %v6556 = vadd.f32 0.0, %v6555
    %v6557 = vpop.f32.mrf.mxu0
    %6558 = vdwg.mxu0
    %6559 = vmatpush.bf16.msra.mxu0 %v6260
    %6560 = vmatpush.bf16.msra.mxu0 %v6252
    %6561 = vmatpush.bf16.msra.mxu0 %v6244
    %6562 = vmatpush.bf16.msra.mxu0 %v6236
    %6563 = vmatpush.bf16.msra.mxu0 %v6228
    %6564 = vmatpush.bf16.msra.mxu0 %v6220
    %6565 = vmatpush.bf16.msra.mxu0 %v6212
    %6566 = vmatpush.bf16.msra.mxu0 %v6204
    %6567 = vmatmul.bf16.gmra.mxu0 %v5749
    %v6568 = vpop.f32.mrf.mxu0
    %v6569 = vadd.f32 %v6556, %v6568
    %v6570 = vpop.f32.mrf.mxu0
    %6571 = vdwg.mxu0
    %6572 = vmatpush.bf16.msra.mxu0 %v6197
    %6573 = vmatpush.bf16.msra.mxu0 %v6189
    %6574 = vmatpush.bf16.msra.mxu0 %v6181
    %6575 = vmatpush.bf16.msra.mxu0 %v6173
    %6576 = vmatpush.bf16.msra.mxu0 %v6165
    %6577 = vmatpush.bf16.msra.mxu0 %v6157
    %6578 = vmatpush.bf16.msra.mxu0 %v6149
    %6579 = vmatpush.bf16.msra.mxu0 %v6141
    %6580 = vmatmul.bf16.gmra.mxu0 %v5748
    %v6581 = vpop.f32.mrf.mxu0
    %v6582 = vadd.f32 0.0, %v6581
    %v6583 = vpop.f32.mrf.mxu0
    %6584 = vdwg.mxu0
    %6585 = vmatpush.bf16.msra.mxu0 %v6261
    %6586 = vmatpush.bf16.msra.mxu0 %v6253
    %6587 = vmatpush.bf16.msra.mxu0 %v6245
    %6588 = vmatpush.bf16.msra.mxu0 %v6237
    %6589 = vmatpush.bf16.msra.mxu0 %v6229
    %6590 = vmatpush.bf16.msra.mxu0 %v6221
    %6591 = vmatpush.bf16.msra.mxu0 %v6213
    %6592 = vmatpush.bf16.msra.mxu0 %v6205
    %6593 = vmatmul.bf16.gmra.mxu0 %v5749
    %v6594 = vpop.f32.mrf.mxu0
    %v6595 = vadd.f32 %v6582, %v6594
    %v6596 = vpop.f32.mrf.mxu0
    %6597 = vdwg.mxu0
    %v6598 = vadd.f32 %v5740, %v6413
    %v6599 = vadd.f32 %v5741, %v6439
    %v6600 = vadd.f32 %v5742, %v6465
    %v6601 = vadd.f32 %v5743, %v6491
    %v6602 = vadd.f32 %v5744, %v6517
    %v6603 = vadd.f32 %v5745, %v6543
    %v6604 = vadd.f32 %v5746, %v6569
    %v6605 = vadd.f32 %v5747, %v6595
    %v6606 = vxor.u32 %v6598, 2147483648
    %v6607 = vxor.u32 %v6599, 2147483648
    %v6608 = vxor.u32 %v6600, 2147483648
    %v6609 = vxor.u32 %v6601, 2147483648
    %v6610 = vxor.u32 %v6602, 2147483648
    %v6611 = vxor.u32 %v6603, 2147483648
    %v6612 = vmul.f32 %v6606, 1.442695
    %v6613 = vpow.pop %v6612
    %v6614 = vmul.f32 %v6607, 1.442695
    %v6615 = vpow.pop %v6614
    %v6616 = vmul.f32 %v6608, 1.442695
    %v6617 = vpow.pop %v6616
    %v6618 = vmul.f32 %v6609, 1.442695
    %v6619 = vpow.pop %v6618
    %v6620 = vmul.f32 %v6610, 1.442695
    %v6621 = vpow.pop %v6620
    %v6622 = vmul.f32 %v6611, 1.442695
    %v6623 = vpow.pop %v6622
    %v6624 = vadd.f32 %v6613, 1.0
    %v6625 = vadd.f32 %v6615, 1.0
    %v6626 = vadd.f32 %v6617, 1.0
    %v6627 = vadd.f32 %v6619, 1.0
    %v6628 = vadd.f32 %v6621, 1.0
    %v6629 = vadd.f32 %v6623, 1.0
    %v6630 = vrcp.pop %v6624
    %v6631 = vmul.f32 %v6624, %v6630
    %v6632 = vsub.f32 1.0, %v6631
    %v6633 = vmul.f32 %v6630, %v6632
    %v6634 = vadd.f32 %v6630, %v6633
    %vm6635 = vweird.f32 %v6624
    %vm6636 = vweird.f32 %v6630
    %vm6637 = vmor %vm6635, %vm6636
    %v6638 = vsel %vm6637, %v6630, %v6634
    %v6639 = vand.u32 2147483647, %v6624
    %vm6640 = vcmp.eq.f32.partialorder %v6639, 8.507059e+37
    %v6641 = vand.u32 %v6624, 2147483648
    %v6642 = vor.u32 1.1754944e-38, %v6641
    %v6643 = vsel %vm6640, %v6642, %v6638
    %v6644 = vmul.f32 1.0, %v6643
    %v6645 = vrcp.pop %v6625
    %v6646 = vmul.f32 %v6625, %v6645
    %v6647 = vsub.f32 1.0, %v6646
    %v6648 = vmul.f32 %v6645, %v6647
    %v6649 = vadd.f32 %v6645, %v6648
    %vm6650 = vweird.f32 %v6625
    %vm6651 = vweird.f32 %v6645
    %vm6652 = vmor %vm6650, %vm6651
    %v6653 = vsel %vm6652, %v6645, %v6649
    %v6654 = vand.u32 2147483647, %v6625
    %vm6655 = vcmp.eq.f32.partialorder %v6654, 8.507059e+37
    %v6656 = vand.u32 %v6625, 2147483648
    %v6657 = vor.u32 1.1754944e-38, %v6656
    %v6658 = vsel %vm6655, %v6657, %v6653
    %v6659 = vmul.f32 1.0, %v6658
    %v6660 = vrcp.pop %v6626
    %v6661 = vmul.f32 %v6626, %v6660
    %v6662 = vsub.f32 1.0, %v6661
    %v6663 = vmul.f32 %v6660, %v6662
    %v6664 = vadd.f32 %v6660, %v6663
    %vm6665 = vweird.f32 %v6626
    %vm6666 = vweird.f32 %v6660
    %vm6667 = vmor %vm6665, %vm6666
    %v6668 = vsel %vm6667, %v6660, %v6664
    %v6669 = vand.u32 2147483647, %v6626
    %vm6670 = vcmp.eq.f32.partialorder %v6669, 8.507059e+37
    %v6671 = vand.u32 %v6626, 2147483648
    %v6672 = vor.u32 1.1754944e-38, %v6671
    %v6673 = vsel %vm6670, %v6672, %v6668
    %v6674 = vmul.f32 1.0, %v6673
    %v6675 = vrcp.pop %v6627
    %v6676 = vmul.f32 %v6627, %v6675
    %v6677 = vsub.f32 1.0, %v6676
    %v6678 = vmul.f32 %v6675, %v6677
    %v6679 = vadd.f32 %v6675, %v6678
    %vm6680 = vweird.f32 %v6627
    %vm6681 = vweird.f32 %v6675
    %vm6682 = vmor %vm6680, %vm6681
    %v6683 = vsel %vm6682, %v6675, %v6679
    %v6684 = vand.u32 2147483647, %v6627
    %vm6685 = vcmp.eq.f32.partialorder %v6684, 8.507059e+37
    %v6686 = vand.u32 %v6627, 2147483648
    %v6687 = vor.u32 1.1754944e-38, %v6686
    %v6688 = vsel %vm6685, %v6687, %v6683
    %v6689 = vmul.f32 1.0, %v6688
    %v6690 = vrcp.pop %v6628
    %v6691 = vmul.f32 %v6628, %v6690
    %v6692 = vsub.f32 1.0, %v6691
    %v6693 = vmul.f32 %v6690, %v6692
    %v6694 = vadd.f32 %v6690, %v6693
    %vm6695 = vweird.f32 %v6628
    %vm6696 = vweird.f32 %v6690
    %vm6697 = vmor %vm6695, %vm6696
    %v6698 = vsel %vm6697, %v6690, %v6694
    %v6699 = vand.u32 2147483647, %v6628
    %vm6700 = vcmp.eq.f32.partialorder %v6699, 8.507059e+37
    %v6701 = vand.u32 %v6628, 2147483648
    %v6702 = vor.u32 1.1754944e-38, %v6701
    %v6703 = vsel %vm6700, %v6702, %v6698
    %v6704 = vmul.f32 1.0, %v6703
    %v6705 = vrcp.pop %v6629
    %v6706 = vmul.f32 %v6629, %v6705
    %v6707 = vsub.f32 1.0, %v6706
    %v6708 = vmul.f32 %v6705, %v6707
    %v6709 = vadd.f32 %v6705, %v6708
    %vm6710 = vweird.f32 %v6629
    %vm6711 = vweird.f32 %v6705
    %vm6712 = vmor %vm6710, %vm6711
    %v6713 = vsel %vm6712, %v6705, %v6709
    %v6714 = vand.u32 2147483647, %v6629
    %vm6715 = vcmp.eq.f32.partialorder %v6714, 8.507059e+37
    %v6716 = vand.u32 %v6629, 2147483648
    %v6717 = vor.u32 1.1754944e-38, %v6716
    %v6718 = vsel %vm6715, %v6717, %v6713
    %v6719 = vmul.f32 1.0, %v6718
    %v6720 = vtanh.pop %v6604
    %v6721 = vtanh.pop %v6605
    %v6722 = vmul.f32 %v6674, %v5738
    %v6723 = vmul.f32 %v6689, %v5739
    %v6724 = vmul.f32 %v6644, %v6720
    %v6725 = vmul.f32 %v6659, %v6721
    %v6726 = vadd.f32 %v6722, %v6724
    %v6727 = vadd.f32 %v6723, %v6725
    %v6728 = vtanh.pop %v6726
    %v6729 = vtanh.pop %v6727
    %v6730 = vmul.f32 %v6704, %v6728
    %v6731 = vmul.f32 %v6719, %v6729
    %6732 = vst [vmem:[#allocation2] sm:$0xff] %v6730
    %6733 = vst [vmem:[#allocation2 + $0x8] sm:$0xff] %v6731
    %v6734 = vld [vmem:[#allocation3 + $0x40] sm:$0xff]
    %v6735 = vld [vmem:[#allocation3 + $0x48] sm:$0xff]
    %v6736 = vld [vmem:[#allocation3 + $0x50] sm:$0xff]
    %v6737 = vld [vmem:[#allocation3 + $0x58] sm:$0xff]
    %v6738 = vld [vmem:[#allocation3 + $0x60] sm:$0xff]
    %v6739 = vld [vmem:[#allocation3 + $0x68] sm:$0xff]
    %v6740 = vld [vmem:[#allocation3 + $0x70] sm:$0xff]
    %v6741 = vld [vmem:[#allocation3 + $0x78] sm:$0xff]
    %v6742 = vpack.c.bf16 %v6730, %v6730
    %v6743 = vpack.c.bf16 %v6731, %v6731
    %6744 = vmatpush.bf16.msra.mxu0 %v6190
    %6745 = vmatpush.bf16.msra.mxu0 %v6182
    %6746 = vmatpush.bf16.msra.mxu0 %v6174
    %6747 = vmatpush.bf16.msra.mxu0 %v6166
    %6748 = vmatpush.bf16.msra.mxu0 %v6158
    %6749 = vmatpush.bf16.msra.mxu0 %v6150
    %6750 = vmatpush.bf16.msra.mxu0 %v6142
    %6751 = vmatpush.bf16.msra.mxu0 %v6134
    %6752 = vmatmul.bf16.gmra.mxu0 %v6742
    %v6753 = vpop.f32.mrf.mxu0
    %v6754 = vadd.f32 0.0, %v6753
    %v6755 = vpop.f32.mrf.mxu0
    %6756 = vdwg.mxu0
    %6757 = vmatpush.bf16.msra.mxu0 %v6254
    %6758 = vmatpush.bf16.msra.mxu0 %v6246
    %6759 = vmatpush.bf16.msra.mxu0 %v6238
    %6760 = vmatpush.bf16.msra.mxu0 %v6230
    %6761 = vmatpush.bf16.msra.mxu0 %v6222
    %6762 = vmatpush.bf16.msra.mxu0 %v6214
    %6763 = vmatpush.bf16.msra.mxu0 %v6206
    %6764 = vmatpush.bf16.msra.mxu0 %v6198
    %6765 = vmatmul.bf16.gmra.mxu0 %v6743
    %v6766 = vpop.f32.mrf.mxu0
    %v6767 = vadd.f32 %v6754, %v6766
    %v6768 = vpop.f32.mrf.mxu0
    %6769 = vdwg.mxu0
    %6770 = vmatpush.bf16.msra.mxu0 %v6191
    %6771 = vmatpush.bf16.msra.mxu0 %v6183
    %6772 = vmatpush.bf16.msra.mxu0 %v6175
    %6773 = vmatpush.bf16.msra.mxu0 %v6167
    %6774 = vmatpush.bf16.msra.mxu0 %v6159
    %6775 = vmatpush.bf16.msra.mxu0 %v6151
    %6776 = vmatpush.bf16.msra.mxu0 %v6143
    %6777 = vmatpush.bf16.msra.mxu0 %v6135
    %6778 = vmatmul.bf16.gmra.mxu0 %v6742
    %v6779 = vpop.f32.mrf.mxu0
    %v6780 = vadd.f32 0.0, %v6779
    %v6781 = vpop.f32.mrf.mxu0
    %6782 = vdwg.mxu0
    %6783 = vmatpush.bf16.msra.mxu0 %v6255
    %6784 = vmatpush.bf16.msra.mxu0 %v6247
    %6785 = vmatpush.bf16.msra.mxu0 %v6239
    %6786 = vmatpush.bf16.msra.mxu0 %v6231
    %6787 = vmatpush.bf16.msra.mxu0 %v6223
    %6788 = vmatpush.bf16.msra.mxu0 %v6215
    %6789 = vmatpush.bf16.msra.mxu0 %v6207
    %6790 = vmatpush.bf16.msra.mxu0 %v6199
    %6791 = vmatmul.bf16.gmra.mxu0 %v6743
    %v6792 = vpop.f32.mrf.mxu0
    %v6793 = vadd.f32 %v6780, %v6792
    %v6794 = vpop.f32.mrf.mxu0
    %6795 = vdwg.mxu0
    %6796 = vmatpush.bf16.msra.mxu0 %v6192
    %6797 = vmatpush.bf16.msra.mxu0 %v6184
    %6798 = vmatpush.bf16.msra.mxu0 %v6176
    %6799 = vmatpush.bf16.msra.mxu0 %v6168
    %6800 = vmatpush.bf16.msra.mxu0 %v6160
    %6801 = vmatpush.bf16.msra.mxu0 %v6152
    %6802 = vmatpush.bf16.msra.mxu0 %v6144
    %6803 = vmatpush.bf16.msra.mxu0 %v6136
    %6804 = vmatmul.bf16.gmra.mxu0 %v6742
    %v6805 = vpop.f32.mrf.mxu0
    %v6806 = vadd.f32 0.0, %v6805
    %v6807 = vpop.f32.mrf.mxu0
    %6808 = vdwg.mxu0
    %6809 = vmatpush.bf16.msra.mxu0 %v6256
    %6810 = vmatpush.bf16.msra.mxu0 %v6248
    %6811 = vmatpush.bf16.msra.mxu0 %v6240
    %6812 = vmatpush.bf16.msra.mxu0 %v6232
    %6813 = vmatpush.bf16.msra.mxu0 %v6224
    %6814 = vmatpush.bf16.msra.mxu0 %v6216
    %6815 = vmatpush.bf16.msra.mxu0 %v6208
    %6816 = vmatpush.bf16.msra.mxu0 %v6200
    %6817 = vmatmul.bf16.gmra.mxu0 %v6743
    %v6818 = vpop.f32.mrf.mxu0
    %v6819 = vadd.f32 %v6806, %v6818
    %v6820 = vpop.f32.mrf.mxu0
    %6821 = vdwg.mxu0
    %6822 = vmatpush.bf16.msra.mxu0 %v6193
    %6823 = vmatpush.bf16.msra.mxu0 %v6185
    %6824 = vmatpush.bf16.msra.mxu0 %v6177
    %6825 = vmatpush.bf16.msra.mxu0 %v6169
    %6826 = vmatpush.bf16.msra.mxu0 %v6161
    %6827 = vmatpush.bf16.msra.mxu0 %v6153
    %6828 = vmatpush.bf16.msra.mxu0 %v6145
    %6829 = vmatpush.bf16.msra.mxu0 %v6137
    %6830 = vmatmul.bf16.gmra.mxu0 %v6742
    %v6831 = vpop.f32.mrf.mxu0
    %v6832 = vadd.f32 0.0, %v6831
    %v6833 = vpop.f32.mrf.mxu0
    %6834 = vdwg.mxu0
    %6835 = vmatpush.bf16.msra.mxu0 %v6257
    %6836 = vmatpush.bf16.msra.mxu0 %v6249
    %6837 = vmatpush.bf16.msra.mxu0 %v6241
    %6838 = vmatpush.bf16.msra.mxu0 %v6233
    %6839 = vmatpush.bf16.msra.mxu0 %v6225
    %6840 = vmatpush.bf16.msra.mxu0 %v6217
    %6841 = vmatpush.bf16.msra.mxu0 %v6209
    %6842 = vmatpush.bf16.msra.mxu0 %v6201
    %6843 = vmatmul.bf16.gmra.mxu0 %v6743
    %v6844 = vpop.f32.mrf.mxu0
    %v6845 = vadd.f32 %v6832, %v6844
    %v6846 = vpop.f32.mrf.mxu0
    %6847 = vdwg.mxu0
    %6848 = vmatpush.bf16.msra.mxu0 %v6194
    %6849 = vmatpush.bf16.msra.mxu0 %v6186
    %6850 = vmatpush.bf16.msra.mxu0 %v6178
    %6851 = vmatpush.bf16.msra.mxu0 %v6170
    %6852 = vmatpush.bf16.msra.mxu0 %v6162
    %6853 = vmatpush.bf16.msra.mxu0 %v6154
    %6854 = vmatpush.bf16.msra.mxu0 %v6146
    %6855 = vmatpush.bf16.msra.mxu0 %v6138
    %6856 = vmatmul.bf16.gmra.mxu0 %v6742
    %v6857 = vpop.f32.mrf.mxu0
    %v6858 = vadd.f32 0.0, %v6857
    %v6859 = vpop.f32.mrf.mxu0
    %6860 = vdwg.mxu0
    %6861 = vmatpush.bf16.msra.mxu0 %v6258
    %6862 = vmatpush.bf16.msra.mxu0 %v6250
    %6863 = vmatpush.bf16.msra.mxu0 %v6242
    %6864 = vmatpush.bf16.msra.mxu0 %v6234
    %6865 = vmatpush.bf16.msra.mxu0 %v6226
    %6866 = vmatpush.bf16.msra.mxu0 %v6218
    %6867 = vmatpush.bf16.msra.mxu0 %v6210
    %6868 = vmatpush.bf16.msra.mxu0 %v6202
    %6869 = vmatmul.bf16.gmra.mxu0 %v6743
    %v6870 = vpop.f32.mrf.mxu0
    %v6871 = vadd.f32 %v6858, %v6870
    %v6872 = vpop.f32.mrf.mxu0
    %6873 = vdwg.mxu0
    %6874 = vmatpush.bf16.msra.mxu0 %v6195
    %6875 = vmatpush.bf16.msra.mxu0 %v6187
    %6876 = vmatpush.bf16.msra.mxu0 %v6179
    %6877 = vmatpush.bf16.msra.mxu0 %v6171
    %6878 = vmatpush.bf16.msra.mxu0 %v6163
    %6879 = vmatpush.bf16.msra.mxu0 %v6155
    %6880 = vmatpush.bf16.msra.mxu0 %v6147
    %6881 = vmatpush.bf16.msra.mxu0 %v6139
    %6882 = vmatmul.bf16.gmra.mxu0 %v6742
    %v6883 = vpop.f32.mrf.mxu0
    %v6884 = vadd.f32 0.0, %v6883
    %v6885 = vpop.f32.mrf.mxu0
    %6886 = vdwg.mxu0
    %6887 = vmatpush.bf16.msra.mxu0 %v6259
    %6888 = vmatpush.bf16.msra.mxu0 %v6251
    %6889 = vmatpush.bf16.msra.mxu0 %v6243
    %6890 = vmatpush.bf16.msra.mxu0 %v6235
    %6891 = vmatpush.bf16.msra.mxu0 %v6227
    %6892 = vmatpush.bf16.msra.mxu0 %v6219
    %6893 = vmatpush.bf16.msra.mxu0 %v6211
    %6894 = vmatpush.bf16.msra.mxu0 %v6203
    %6895 = vmatmul.bf16.gmra.mxu0 %v6743
    %v6896 = vpop.f32.mrf.mxu0
    %v6897 = vadd.f32 %v6884, %v6896
    %v6898 = vpop.f32.mrf.mxu0
    %6899 = vdwg.mxu0
    %6900 = vmatpush.bf16.msra.mxu0 %v6196
    %6901 = vmatpush.bf16.msra.mxu0 %v6188
    %6902 = vmatpush.bf16.msra.mxu0 %v6180
    %6903 = vmatpush.bf16.msra.mxu0 %v6172
    %6904 = vmatpush.bf16.msra.mxu0 %v6164
    %6905 = vmatpush.bf16.msra.mxu0 %v6156
    %6906 = vmatpush.bf16.msra.mxu0 %v6148
    %6907 = vmatpush.bf16.msra.mxu0 %v6140
    %6908 = vmatmul.bf16.gmra.mxu0 %v6742
    %v6909 = vpop.f32.mrf.mxu0
    %v6910 = vadd.f32 0.0, %v6909
    %v6911 = vpop.f32.mrf.mxu0
    %6912 = vdwg.mxu0
    %6913 = vmatpush.bf16.msra.mxu0 %v6260
    %6914 = vmatpush.bf16.msra.mxu0 %v6252
    %6915 = vmatpush.bf16.msra.mxu0 %v6244
    %6916 = vmatpush.bf16.msra.mxu0 %v6236
    %6917 = vmatpush.bf16.msra.mxu0 %v6228
    %6918 = vmatpush.bf16.msra.mxu0 %v6220
    %6919 = vmatpush.bf16.msra.mxu0 %v6212
    %6920 = vmatpush.bf16.msra.mxu0 %v6204
    %6921 = vmatmul.bf16.gmra.mxu0 %v6743
    %v6922 = vpop.f32.mrf.mxu0
    %v6923 = vadd.f32 %v6910, %v6922
    %v6924 = vpop.f32.mrf.mxu0
    %6925 = vdwg.mxu0
    %6926 = vmatpush.bf16.msra.mxu0 %v6197
    %6927 = vmatpush.bf16.msra.mxu0 %v6189
    %6928 = vmatpush.bf16.msra.mxu0 %v6181
    %6929 = vmatpush.bf16.msra.mxu0 %v6173
    %6930 = vmatpush.bf16.msra.mxu0 %v6165
    %6931 = vmatpush.bf16.msra.mxu0 %v6157
    %6932 = vmatpush.bf16.msra.mxu0 %v6149
    %6933 = vmatpush.bf16.msra.mxu0 %v6141
    %6934 = vmatmul.bf16.gmra.mxu0 %v6742
    %v6935 = vpop.f32.mrf.mxu0
    %v6936 = vadd.f32 0.0, %v6935
    %v6937 = vpop.f32.mrf.mxu0
    %6938 = vdwg.mxu0
    %6939 = vmatpush.bf16.msra.mxu0 %v6261
    %6940 = vmatpush.bf16.msra.mxu0 %v6253
    %6941 = vmatpush.bf16.msra.mxu0 %v6245
    %6942 = vmatpush.bf16.msra.mxu0 %v6237
    %6943 = vmatpush.bf16.msra.mxu0 %v6229
    %6944 = vmatpush.bf16.msra.mxu0 %v6221
    %6945 = vmatpush.bf16.msra.mxu0 %v6213
    %6946 = vmatpush.bf16.msra.mxu0 %v6205
    %6947 = vmatmul.bf16.gmra.mxu0 %v6743
    %v6948 = vpop.f32.mrf.mxu0
    %v6949 = vadd.f32 %v6936, %v6948
    %v6950 = vpop.f32.mrf.mxu0
    %6951 = vdwg.mxu0
    %v6952 = vadd.f32 %v6734, %v6767
    %v6953 = vadd.f32 %v6735, %v6793
    %v6954 = vadd.f32 %v6736, %v6819
    %v6955 = vadd.f32 %v6737, %v6845
    %v6956 = vadd.f32 %v6738, %v6871
    %v6957 = vadd.f32 %v6739, %v6897
    %v6958 = vadd.f32 %v6740, %v6923
    %v6959 = vadd.f32 %v6741, %v6949
    %v6960 = vxor.u32 %v6952, 2147483648
    %v6961 = vxor.u32 %v6953, 2147483648
    %v6962 = vxor.u32 %v6954, 2147483648
    %v6963 = vxor.u32 %v6955, 2147483648
    %v6964 = vxor.u32 %v6956, 2147483648
    %v6965 = vxor.u32 %v6957, 2147483648
    %v6966 = vmul.f32 %v6960, 1.442695
    %v6967 = vpow.pop %v6966
    %v6968 = vmul.f32 %v6961, 1.442695
    %v6969 = vpow.pop %v6968
    %v6970 = vmul.f32 %v6962, 1.442695
    %v6971 = vpow.pop %v6970
    %v6972 = vmul.f32 %v6963, 1.442695
    %v6973 = vpow.pop %v6972
    %v6974 = vmul.f32 %v6964, 1.442695
    %v6975 = vpow.pop %v6974
    %v6976 = vmul.f32 %v6965, 1.442695
    %v6977 = vpow.pop %v6976
    %v6978 = vadd.f32 %v6967, 1.0
    %v6979 = vadd.f32 %v6969, 1.0
    %v6980 = vadd.f32 %v6971, 1.0
    %v6981 = vadd.f32 %v6973, 1.0
    %v6982 = vadd.f32 %v6975, 1.0
    %v6983 = vadd.f32 %v6977, 1.0
    %v6984 = vrcp.pop %v6978
    %v6985 = vmul.f32 %v6978, %v6984
    %v6986 = vsub.f32 1.0, %v6985
    %v6987 = vmul.f32 %v6984, %v6986
    %v6988 = vadd.f32 %v6984, %v6987
    %vm6989 = vweird.f32 %v6978
    %vm6990 = vweird.f32 %v6984
    %vm6991 = vmor %vm6989, %vm6990
    %v6992 = vsel %vm6991, %v6984, %v6988
    %v6993 = vand.u32 2147483647, %v6978
    %vm6994 = vcmp.eq.f32.partialorder %v6993, 8.507059e+37
    %v6995 = vand.u32 %v6978, 2147483648
    %v6996 = vor.u32 1.1754944e-38, %v6995
    %v6997 = vsel %vm6994, %v6996, %v6992
    %v6998 = vmul.f32 1.0, %v6997
    %v6999 = vrcp.pop %v6979
    %v7000 = vmul.f32 %v6979, %v6999
    %v7001 = vsub.f32 1.0, %v7000
    %v7002 = vmul.f32 %v6999, %v7001
    %v7003 = vadd.f32 %v6999, %v7002
    %vm7004 = vweird.f32 %v6979
    %vm7005 = vweird.f32 %v6999
    %vm7006 = vmor %vm7004, %vm7005
    %v7007 = vsel %vm7006, %v6999, %v7003
    %v7008 = vand.u32 2147483647, %v6979
    %vm7009 = vcmp.eq.f32.partialorder %v7008, 8.507059e+37
    %v7010 = vand.u32 %v6979, 2147483648
    %v7011 = vor.u32 1.1754944e-38, %v7010
    %v7012 = vsel %vm7009, %v7011, %v7007
    %v7013 = vmul.f32 1.0, %v7012
    %v7014 = vrcp.pop %v6980
    %v7015 = vmul.f32 %v6980, %v7014
    %v7016 = vsub.f32 1.0, %v7015
    %v7017 = vmul.f32 %v7014, %v7016
    %v7018 = vadd.f32 %v7014, %v7017
    %vm7019 = vweird.f32 %v6980
    %vm7020 = vweird.f32 %v7014
    %vm7021 = vmor %vm7019, %vm7020
    %v7022 = vsel %vm7021, %v7014, %v7018
    %v7023 = vand.u32 2147483647, %v6980
    %vm7024 = vcmp.eq.f32.partialorder %v7023, 8.507059e+37
    %v7025 = vand.u32 %v6980, 2147483648
    %v7026 = vor.u32 1.1754944e-38, %v7025
    %v7027 = vsel %vm7024, %v7026, %v7022
    %v7028 = vmul.f32 1.0, %v7027
    %v7029 = vrcp.pop %v6981
    %v7030 = vmul.f32 %v6981, %v7029
    %v7031 = vsub.f32 1.0, %v7030
    %v7032 = vmul.f32 %v7029, %v7031
    %v7033 = vadd.f32 %v7029, %v7032
    %vm7034 = vweird.f32 %v6981
    %vm7035 = vweird.f32 %v7029
    %vm7036 = vmor %vm7034, %vm7035
    %v7037 = vsel %vm7036, %v7029, %v7033
    %v7038 = vand.u32 2147483647, %v6981
    %vm7039 = vcmp.eq.f32.partialorder %v7038, 8.507059e+37
    %v7040 = vand.u32 %v6981, 2147483648
    %v7041 = vor.u32 1.1754944e-38, %v7040
    %v7042 = vsel %vm7039, %v7041, %v7037
    %v7043 = vmul.f32 1.0, %v7042
    %v7044 = vrcp.pop %v6982
    %v7045 = vmul.f32 %v6982, %v7044
    %v7046 = vsub.f32 1.0, %v7045
    %v7047 = vmul.f32 %v7044, %v7046
    %v7048 = vadd.f32 %v7044, %v7047
    %vm7049 = vweird.f32 %v6982
    %vm7050 = vweird.f32 %v7044
    %vm7051 = vmor %vm7049, %vm7050
    %v7052 = vsel %vm7051, %v7044, %v7048
    %v7053 = vand.u32 2147483647, %v6982
    %vm7054 = vcmp.eq.f32.partialorder %v7053, 8.507059e+37
    %v7055 = vand.u32 %v6982, 2147483648
    %v7056 = vor.u32 1.1754944e-38, %v7055
    %v7057 = vsel %vm7054, %v7056, %v7052
    %v7058 = vmul.f32 1.0, %v7057
    %v7059 = vrcp.pop %v6983
    %v7060 = vmul.f32 %v6983, %v7059
    %v7061 = vsub.f32 1.0, %v7060
    %v7062 = vmul.f32 %v7059, %v7061
    %v7063 = vadd.f32 %v7059, %v7062
    %vm7064 = vweird.f32 %v6983
    %vm7065 = vweird.f32 %v7059
    %vm7066 = vmor %vm7064, %vm7065
    %v7067 = vsel %vm7066, %v7059, %v7063
    %v7068 = vand.u32 2147483647, %v6983
    %vm7069 = vcmp.eq.f32.partialorder %v7068, 8.507059e+37
    %v7070 = vand.u32 %v6983, 2147483648
    %v7071 = vor.u32 1.1754944e-38, %v7070
    %v7072 = vsel %vm7069, %v7071, %v7067
    %v7073 = vmul.f32 1.0, %v7072
    %v7074 = vtanh.pop %v6958
    %v7075 = vtanh.pop %v6959
    %v7076 = vmul.f32 %v7028, %v6726
    %v7077 = vmul.f32 %v7043, %v6727
    %v7078 = vmul.f32 %v6998, %v7074
    %v7079 = vmul.f32 %v7013, %v7075
    %v7080 = vadd.f32 %v7076, %v7078
    %v7081 = vadd.f32 %v7077, %v7079
    %v7082 = vtanh.pop %v7080
    %v7083 = vtanh.pop %v7081
    %v7084 = vmul.f32 %v7058, %v7082
    %v7085 = vmul.f32 %v7073, %v7083
    %7086 = vst [vmem:[#allocation2 + $0x10] sm:$0xff] %v7084
    %7087 = vst [vmem:[#allocation2 + $0x18] sm:$0xff] %v7085
    %v7088 = vld [vmem:[#allocation3 + $0x80] sm:$0xff]
    %v7089 = vld [vmem:[#allocation3 + $0x88] sm:$0xff]
    %v7090 = vld [vmem:[#allocation3 + $0x90] sm:$0xff]
    %v7091 = vld [vmem:[#allocation3 + $0x98] sm:$0xff]
    %v7092 = vld [vmem:[#allocation3 + $0xa0] sm:$0xff]
    %v7093 = vld [vmem:[#allocation3 + $0xa8] sm:$0xff]
    %v7094 = vld [vmem:[#allocation3 + $0xb0] sm:$0xff]
    %v7095 = vld [vmem:[#allocation3 + $0xb8] sm:$0xff]
    %v7096 = vpack.c.bf16 %v7084, %v7084
    %v7097 = vpack.c.bf16 %v7085, %v7085
    %7098 = vmatpush.bf16.msra.mxu0 %v6190
    %7099 = vmatpush.bf16.msra.mxu0 %v6182
    %7100 = vmatpush.bf16.msra.mxu0 %v6174
    %7101 = vmatpush.bf16.msra.mxu0 %v6166
    %7102 = vmatpush.bf16.msra.mxu0 %v6158
    %7103 = vmatpush.bf16.msra.mxu0 %v6150
    %7104 = vmatpush.bf16.msra.mxu0 %v6142
    %7105 = vmatpush.bf16.msra.mxu0 %v6134
    %7106 = vmatmul.bf16.gmra.mxu0 %v7096
    %v7107 = vpop.f32.mrf.mxu0
    %v7108 = vadd.f32 0.0, %v7107
    %v7109 = vpop.f32.mrf.mxu0
    %7110 = vdwg.mxu0
    %7111 = vmatpush.bf16.msra.mxu0 %v6254
    %7112 = vmatpush.bf16.msra.mxu0 %v6246
    %7113 = vmatpush.bf16.msra.mxu0 %v6238
    %7114 = vmatpush.bf16.msra.mxu0 %v6230
    %7115 = vmatpush.bf16.msra.mxu0 %v6222
    %7116 = vmatpush.bf16.msra.mxu0 %v6214
    %7117 = vmatpush.bf16.msra.mxu0 %v6206
    %7118 = vmatpush.bf16.msra.mxu0 %v6198
    %7119 = vmatmul.bf16.gmra.mxu0 %v7097
    %v7120 = vpop.f32.mrf.mxu0
    %v7121 = vadd.f32 %v7108, %v7120
    %v7122 = vpop.f32.mrf.mxu0
    %7123 = vdwg.mxu0
    %7124 = vmatpush.bf16.msra.mxu0 %v6191
    %7125 = vmatpush.bf16.msra.mxu0 %v6183
    %7126 = vmatpush.bf16.msra.mxu0 %v6175
    %7127 = vmatpush.bf16.msra.mxu0 %v6167
    %7128 = vmatpush.bf16.msra.mxu0 %v6159
    %7129 = vmatpush.bf16.msra.mxu0 %v6151
    %7130 = vmatpush.bf16.msra.mxu0 %v6143
    %7131 = vmatpush.bf16.msra.mxu0 %v6135
    %7132 = vmatmul.bf16.gmra.mxu0 %v7096
    %v7133 = vpop.f32.mrf.mxu0
    %v7134 = vadd.f32 0.0, %v7133
    %v7135 = vpop.f32.mrf.mxu0
    %7136 = vdwg.mxu0
    %7137 = vmatpush.bf16.msra.mxu0 %v6255
    %7138 = vmatpush.bf16.msra.mxu0 %v6247
    %7139 = vmatpush.bf16.msra.mxu0 %v6239
    %7140 = vmatpush.bf16.msra.mxu0 %v6231
    %7141 = vmatpush.bf16.msra.mxu0 %v6223
    %7142 = vmatpush.bf16.msra.mxu0 %v6215
    %7143 = vmatpush.bf16.msra.mxu0 %v6207
    %7144 = vmatpush.bf16.msra.mxu0 %v6199
    %7145 = vmatmul.bf16.gmra.mxu0 %v7097
    %v7146 = vpop.f32.mrf.mxu0
    %v7147 = vadd.f32 %v7134, %v7146
    %v7148 = vpop.f32.mrf.mxu0
    %7149 = vdwg.mxu0
    %7150 = vmatpush.bf16.msra.mxu0 %v6192
    %7151 = vmatpush.bf16.msra.mxu0 %v6184
    %7152 = vmatpush.bf16.msra.mxu0 %v6176
    %7153 = vmatpush.bf16.msra.mxu0 %v6168
    %7154 = vmatpush.bf16.msra.mxu0 %v6160
    %7155 = vmatpush.bf16.msra.mxu0 %v6152
    %7156 = vmatpush.bf16.msra.mxu0 %v6144
    %7157 = vmatpush.bf16.msra.mxu0 %v6136
    %7158 = vmatmul.bf16.gmra.mxu0 %v7096
    %v7159 = vpop.f32.mrf.mxu0
    %v7160 = vadd.f32 0.0, %v7159
    %v7161 = vpop.f32.mrf.mxu0
    %7162 = vdwg.mxu0
    %7163 = vmatpush.bf16.msra.mxu0 %v6256
    %7164 = vmatpush.bf16.msra.mxu0 %v6248
    %7165 = vmatpush.bf16.msra.mxu0 %v6240
    %7166 = vmatpush.bf16.msra.mxu0 %v6232
    %7167 = vmatpush.bf16.msra.mxu0 %v6224
    %7168 = vmatpush.bf16.msra.mxu0 %v6216
    %7169 = vmatpush.bf16.msra.mxu0 %v6208
    %7170 = vmatpush.bf16.msra.mxu0 %v6200
    %7171 = vmatmul.bf16.gmra.mxu0 %v7097
    %v7172 = vpop.f32.mrf.mxu0
    %v7173 = vadd.f32 %v7160, %v7172
    %v7174 = vpop.f32.mrf.mxu0
    %7175 = vdwg.mxu0
    %7176 = vmatpush.bf16.msra.mxu0 %v6193
    %7177 = vmatpush.bf16.msra.mxu0 %v6185
    %7178 = vmatpush.bf16.msra.mxu0 %v6177
    %7179 = vmatpush.bf16.msra.mxu0 %v6169
    %7180 = vmatpush.bf16.msra.mxu0 %v6161
    %7181 = vmatpush.bf16.msra.mxu0 %v6153
    %7182 = vmatpush.bf16.msra.mxu0 %v6145
    %7183 = vmatpush.bf16.msra.mxu0 %v6137
    %7184 = vmatmul.bf16.gmra.mxu0 %v7096
    %v7185 = vpop.f32.mrf.mxu0
    %v7186 = vadd.f32 0.0, %v7185
    %v7187 = vpop.f32.mrf.mxu0
    %7188 = vdwg.mxu0
    %7189 = vmatpush.bf16.msra.mxu0 %v6257
    %7190 = vmatpush.bf16.msra.mxu0 %v6249
    %7191 = vmatpush.bf16.msra.mxu0 %v6241
    %7192 = vmatpush.bf16.msra.mxu0 %v6233
    %7193 = vmatpush.bf16.msra.mxu0 %v6225
    %7194 = vmatpush.bf16.msra.mxu0 %v6217
    %7195 = vmatpush.bf16.msra.mxu0 %v6209
    %7196 = vmatpush.bf16.msra.mxu0 %v6201
    %7197 = vmatmul.bf16.gmra.mxu0 %v7097
    %v7198 = vpop.f32.mrf.mxu0
    %v7199 = vadd.f32 %v7186, %v7198
    %v7200 = vpop.f32.mrf.mxu0
    %7201 = vdwg.mxu0
    %7202 = vmatpush.bf16.msra.mxu0 %v6194
    %7203 = vmatpush.bf16.msra.mxu0 %v6186
    %7204 = vmatpush.bf16.msra.mxu0 %v6178
    %7205 = vmatpush.bf16.msra.mxu0 %v6170
    %7206 = vmatpush.bf16.msra.mxu0 %v6162
    %7207 = vmatpush.bf16.msra.mxu0 %v6154
    %7208 = vmatpush.bf16.msra.mxu0 %v6146
    %7209 = vmatpush.bf16.msra.mxu0 %v6138
    %7210 = vmatmul.bf16.gmra.mxu0 %v7096
    %v7211 = vpop.f32.mrf.mxu0
    %v7212 = vadd.f32 0.0, %v7211
    %v7213 = vpop.f32.mrf.mxu0
    %7214 = vdwg.mxu0
    %7215 = vmatpush.bf16.msra.mxu0 %v6258
    %7216 = vmatpush.bf16.msra.mxu0 %v6250
    %7217 = vmatpush.bf16.msra.mxu0 %v6242
    %7218 = vmatpush.bf16.msra.mxu0 %v6234
    %7219 = vmatpush.bf16.msra.mxu0 %v6226
    %7220 = vmatpush.bf16.msra.mxu0 %v6218
    %7221 = vmatpush.bf16.msra.mxu0 %v6210
    %7222 = vmatpush.bf16.msra.mxu0 %v6202
    %7223 = vmatmul.bf16.gmra.mxu0 %v7097
    %v7224 = vpop.f32.mrf.mxu0
    %v7225 = vadd.f32 %v7212, %v7224
    %v7226 = vpop.f32.mrf.mxu0
    %7227 = vdwg.mxu0
    %7228 = vmatpush.bf16.msra.mxu0 %v6195
    %7229 = vmatpush.bf16.msra.mxu0 %v6187
    %7230 = vmatpush.bf16.msra.mxu0 %v6179
    %7231 = vmatpush.bf16.msra.mxu0 %v6171
    %7232 = vmatpush.bf16.msra.mxu0 %v6163
    %7233 = vmatpush.bf16.msra.mxu0 %v6155
    %7234 = vmatpush.bf16.msra.mxu0 %v6147
    %7235 = vmatpush.bf16.msra.mxu0 %v6139
    %7236 = vmatmul.bf16.gmra.mxu0 %v7096
    %v7237 = vpop.f32.mrf.mxu0
    %v7238 = vadd.f32 0.0, %v7237
    %v7239 = vpop.f32.mrf.mxu0
    %7240 = vdwg.mxu0
    %7241 = vmatpush.bf16.msra.mxu0 %v6259
    %7242 = vmatpush.bf16.msra.mxu0 %v6251
    %7243 = vmatpush.bf16.msra.mxu0 %v6243
    %7244 = vmatpush.bf16.msra.mxu0 %v6235
    %7245 = vmatpush.bf16.msra.mxu0 %v6227
    %7246 = vmatpush.bf16.msra.mxu0 %v6219
    %7247 = vmatpush.bf16.msra.mxu0 %v6211
    %7248 = vmatpush.bf16.msra.mxu0 %v6203
    %7249 = vmatmul.bf16.gmra.mxu0 %v7097
    %v7250 = vpop.f32.mrf.mxu0
    %v7251 = vadd.f32 %v7238, %v7250
    %v7252 = vpop.f32.mrf.mxu0
    %7253 = vdwg.mxu0
    %7254 = vmatpush.bf16.msra.mxu0 %v6196
    %7255 = vmatpush.bf16.msra.mxu0 %v6188
    %7256 = vmatpush.bf16.msra.mxu0 %v6180
    %7257 = vmatpush.bf16.msra.mxu0 %v6172
    %7258 = vmatpush.bf16.msra.mxu0 %v6164
    %7259 = vmatpush.bf16.msra.mxu0 %v6156
    %7260 = vmatpush.bf16.msra.mxu0 %v6148
    %7261 = vmatpush.bf16.msra.mxu0 %v6140
    %7262 = vmatmul.bf16.gmra.mxu0 %v7096
    %v7263 = vpop.f32.mrf.mxu0
    %v7264 = vadd.f32 0.0, %v7263
    %v7265 = vpop.f32.mrf.mxu0
    %7266 = vdwg.mxu0
    %7267 = vmatpush.bf16.msra.mxu0 %v6260
    %7268 = vmatpush.bf16.msra.mxu0 %v6252
    %7269 = vmatpush.bf16.msra.mxu0 %v6244
    %7270 = vmatpush.bf16.msra.mxu0 %v6236
    %7271 = vmatpush.bf16.msra.mxu0 %v6228
    %7272 = vmatpush.bf16.msra.mxu0 %v6220
    %7273 = vmatpush.bf16.msra.mxu0 %v6212
    %7274 = vmatpush.bf16.msra.mxu0 %v6204
    %7275 = vmatmul.bf16.gmra.mxu0 %v7097
    %v7276 = vpop.f32.mrf.mxu0
    %v7277 = vadd.f32 %v7264, %v7276
    %v7278 = vpop.f32.mrf.mxu0
    %7279 = vdwg.mxu0
    %7280 = vmatpush.bf16.msra.mxu0 %v6197
    %7281 = vmatpush.bf16.msra.mxu0 %v6189
    %7282 = vmatpush.bf16.msra.mxu0 %v6181
    %7283 = vmatpush.bf16.msra.mxu0 %v6173
    %7284 = vmatpush.bf16.msra.mxu0 %v6165
    %7285 = vmatpush.bf16.msra.mxu0 %v6157
    %7286 = vmatpush.bf16.msra.mxu0 %v6149
    %7287 = vmatpush.bf16.msra.mxu0 %v6141
    %7288 = vmatmul.bf16.gmra.mxu0 %v7096
    %v7289 = vpop.f32.mrf.mxu0
    %v7290 = vadd.f32 0.0, %v7289
    %v7291 = vpop.f32.mrf.mxu0
    %7292 = vdwg.mxu0
    %7293 = vmatpush.bf16.msra.mxu0 %v6261
    %7294 = vmatpush.bf16.msra.mxu0 %v6253
    %7295 = vmatpush.bf16.msra.mxu0 %v6245
    %7296 = vmatpush.bf16.msra.mxu0 %v6237
    %7297 = vmatpush.bf16.msra.mxu0 %v6229
    %7298 = vmatpush.bf16.msra.mxu0 %v6221
    %7299 = vmatpush.bf16.msra.mxu0 %v6213
    %7300 = vmatpush.bf16.msra.mxu0 %v6205
    %7301 = vmatmul.bf16.gmra.mxu0 %v7097
    %v7302 = vpop.f32.mrf.mxu0
    %v7303 = vadd.f32 %v7290, %v7302
    %v7304 = vpop.f32.mrf.mxu0
    %7305 = vdwg.mxu0
    %v7306 = vadd.f32 %v7088, %v7121
    %v7307 = vadd.f32 %v7089, %v7147
    %v7308 = vadd.f32 %v7090, %v7173
    %v7309 = vadd.f32 %v7091, %v7199
    %v7310 = vadd.f32 %v7092, %v7225
    %v7311 = vadd.f32 %v7093, %v7251
    %v7312 = vadd.f32 %v7094, %v7277
    %v7313 = vadd.f32 %v7095, %v7303
    %v7314 = vxor.u32 %v7306, 2147483648
    %v7315 = vxor.u32 %v7307, 2147483648
    %v7316 = vxor.u32 %v7308, 2147483648
    %v7317 = vxor.u32 %v7309, 2147483648
    %v7318 = vxor.u32 %v7310, 2147483648
    %v7319 = vxor.u32 %v7311, 2147483648
    %v7320 = vmul.f32 %v7314, 1.442695
    %v7321 = vpow.pop %v7320
    %v7322 = vmul.f32 %v7315, 1.442695
    %v7323 = vpow.pop %v7322
    %v7324 = vmul.f32 %v7316, 1.442695
    %v7325 = vpow.pop %v7324
    %v7326 = vmul.f32 %v7317, 1.442695
    %v7327 = vpow.pop %v7326
    %v7328 = vmul.f32 %v7318, 1.442695
    %v7329 = vpow.pop %v7328
    %v7330 = vmul.f32 %v7319, 1.442695
    %v7331 = vpow.pop %v7330
    %v7332 = vadd.f32 %v7321, 1.0
    %v7333 = vadd.f32 %v7323, 1.0
    %v7334 = vadd.f32 %v7325, 1.0
    %v7335 = vadd.f32 %v7327, 1.0
    %v7336 = vadd.f32 %v7329, 1.0
    %v7337 = vadd.f32 %v7331, 1.0
    %v7338 = vrcp.pop %v7332
    %v7339 = vmul.f32 %v7332, %v7338
    %v7340 = vsub.f32 1.0, %v7339
    %v7341 = vmul.f32 %v7338, %v7340
    %v7342 = vadd.f32 %v7338, %v7341
    %vm7343 = vweird.f32 %v7332
    %vm7344 = vweird.f32 %v7338
    %vm7345 = vmor %vm7343, %vm7344
    %v7346 = vsel %vm7345, %v7338, %v7342
    %v7347 = vand.u32 2147483647, %v7332
    %vm7348 = vcmp.eq.f32.partialorder %v7347, 8.507059e+37
    %v7349 = vand.u32 %v7332, 2147483648
    %v7350 = vor.u32 1.1754944e-38, %v7349
    %v7351 = vsel %vm7348, %v7350, %v7346
    %v7352 = vmul.f32 1.0, %v7351
    %v7353 = vrcp.pop %v7333
    %v7354 = vmul.f32 %v7333, %v7353
    %v7355 = vsub.f32 1.0, %v7354
    %v7356 = vmul.f32 %v7353, %v7355
    %v7357 = vadd.f32 %v7353, %v7356
    %vm7358 = vweird.f32 %v7333
    %vm7359 = vweird.f32 %v7353
    %vm7360 = vmor %vm7358, %vm7359
    %v7361 = vsel %vm7360, %v7353, %v7357
    %v7362 = vand.u32 2147483647, %v7333
    %vm7363 = vcmp.eq.f32.partialorder %v7362, 8.507059e+37
    %v7364 = vand.u32 %v7333, 2147483648
    %v7365 = vor.u32 1.1754944e-38, %v7364
    %v7366 = vsel %vm7363, %v7365, %v7361
    %v7367 = vmul.f32 1.0, %v7366
    %v7368 = vrcp.pop %v7334
    %v7369 = vmul.f32 %v7334, %v7368
    %v7370 = vsub.f32 1.0, %v7369
    %v7371 = vmul.f32 %v7368, %v7370
    %v7372 = vadd.f32 %v7368, %v7371
    %vm7373 = vweird.f32 %v7334
    %vm7374 = vweird.f32 %v7368
    %vm7375 = vmor %vm7373, %vm7374
    %v7376 = vsel %vm7375, %v7368, %v7372
    %v7377 = vand.u32 2147483647, %v7334
    %vm7378 = vcmp.eq.f32.partialorder %v7377, 8.507059e+37
    %v7379 = vand.u32 %v7334, 2147483648
    %v7380 = vor.u32 1.1754944e-38, %v7379
    %v7381 = vsel %vm7378, %v7380, %v7376
    %v7382 = vmul.f32 1.0, %v7381
    %v7383 = vrcp.pop %v7335
    %v7384 = vmul.f32 %v7335, %v7383
    %v7385 = vsub.f32 1.0, %v7384
    %v7386 = vmul.f32 %v7383, %v7385
    %v7387 = vadd.f32 %v7383, %v7386
    %vm7388 = vweird.f32 %v7335
    %vm7389 = vweird.f32 %v7383
    %vm7390 = vmor %vm7388, %vm7389
    %v7391 = vsel %vm7390, %v7383, %v7387
    %v7392 = vand.u32 2147483647, %v7335
    %vm7393 = vcmp.eq.f32.partialorder %v7392, 8.507059e+37
    %v7394 = vand.u32 %v7335, 2147483648
    %v7395 = vor.u32 1.1754944e-38, %v7394
    %v7396 = vsel %vm7393, %v7395, %v7391
    %v7397 = vmul.f32 1.0, %v7396
    %v7398 = vrcp.pop %v7336
    %v7399 = vmul.f32 %v7336, %v7398
    %v7400 = vsub.f32 1.0, %v7399
    %v7401 = vmul.f32 %v7398, %v7400
    %v7402 = vadd.f32 %v7398, %v7401
    %vm7403 = vweird.f32 %v7336
    %vm7404 = vweird.f32 %v7398
    %vm7405 = vmor %vm7403, %vm7404
    %v7406 = vsel %vm7405, %v7398, %v7402
    %v7407 = vand.u32 2147483647, %v7336
    %vm7408 = vcmp.eq.f32.partialorder %v7407, 8.507059e+37
    %v7409 = vand.u32 %v7336, 2147483648
    %v7410 = vor.u32 1.1754944e-38, %v7409
    %v7411 = vsel %vm7408, %v7410, %v7406
    %v7412 = vmul.f32 1.0, %v7411
    %v7413 = vrcp.pop %v7337
    %v7414 = vmul.f32 %v7337, %v7413
    %v7415 = vsub.f32 1.0, %v7414
    %v7416 = vmul.f32 %v7413, %v7415
    %v7417 = vadd.f32 %v7413, %v7416
    %vm7418 = vweird.f32 %v7337
    %vm7419 = vweird.f32 %v7413
    %vm7420 = vmor %vm7418, %vm7419
    %v7421 = vsel %vm7420, %v7413, %v7417
    %v7422 = vand.u32 2147483647, %v7337
    %vm7423 = vcmp.eq.f32.partialorder %v7422, 8.507059e+37
    %v7424 = vand.u32 %v7337, 2147483648
    %v7425 = vor.u32 1.1754944e-38, %v7424
    %v7426 = vsel %vm7423, %v7425, %v7421
    %v7427 = vmul.f32 1.0, %v7426
    %v7428 = vtanh.pop %v7312
    %v7429 = vtanh.pop %v7313
    %v7430 = vmul.f32 %v7382, %v7080
    %v7431 = vmul.f32 %v7397, %v7081
    %v7432 = vmul.f32 %v7352, %v7428
    %v7433 = vmul.f32 %v7367, %v7429
    %v7434 = vadd.f32 %v7430, %v7432
    %v7435 = vadd.f32 %v7431, %v7433
    %v7436 = vtanh.pop %v7434
    %v7437 = vtanh.pop %v7435
    %v7438 = vmul.f32 %v7412, %v7436
    %v7439 = vmul.f32 %v7427, %v7437
    %7440 = vst [vmem:[#allocation2 + $0x20] sm:$0xff] %v7438
    %7441 = vst [vmem:[#allocation2 + $0x28] sm:$0xff] %v7439
    %v7442 = vld [vmem:[#allocation3 + $0xc0] sm:$0xff]
    %v7443 = vld [vmem:[#allocation3 + $0xc8] sm:$0xff]
    %v7444 = vld [vmem:[#allocation3 + $0xd0] sm:$0xff]
    %v7445 = vld [vmem:[#allocation3 + $0xd8] sm:$0xff]
    %v7446 = vld [vmem:[#allocation3 + $0xe0] sm:$0xff]
    %v7447 = vld [vmem:[#allocation3 + $0xe8] sm:$0xff]
    %v7448 = vld [vmem:[#allocation3 + $0xf0] sm:$0xff]
    %v7449 = vld [vmem:[#allocation3 + $0xf8] sm:$0xff]
    %v7450 = vpack.c.bf16 %v7438, %v7438
    %v7451 = vpack.c.bf16 %v7439, %v7439
    %7452 = vmatpush.bf16.msra.mxu0 %v6190
    %7453 = vmatpush.bf16.msra.mxu0 %v6182
    %7454 = vmatpush.bf16.msra.mxu0 %v6174
    %7455 = vmatpush.bf16.msra.mxu0 %v6166
    %7456 = vmatpush.bf16.msra.mxu0 %v6158
    %7457 = vmatpush.bf16.msra.mxu0 %v6150
    %7458 = vmatpush.bf16.msra.mxu0 %v6142
    %7459 = vmatpush.bf16.msra.mxu0 %v6134
    %7460 = vmatmul.bf16.gmra.mxu0 %v7450
    %v7461 = vpop.f32.mrf.mxu0
    %v7462 = vadd.f32 0.0, %v7461
    %v7463 = vpop.f32.mrf.mxu0
    %7464 = vdwg.mxu0
    %7465 = vmatpush.bf16.msra.mxu0 %v6254
    %7466 = vmatpush.bf16.msra.mxu0 %v6246
    %7467 = vmatpush.bf16.msra.mxu0 %v6238
    %7468 = vmatpush.bf16.msra.mxu0 %v6230
    %7469 = vmatpush.bf16.msra.mxu0 %v6222
    %7470 = vmatpush.bf16.msra.mxu0 %v6214
    %7471 = vmatpush.bf16.msra.mxu0 %v6206
    %7472 = vmatpush.bf16.msra.mxu0 %v6198
    %7473 = vmatmul.bf16.gmra.mxu0 %v7451
    %v7474 = vpop.f32.mrf.mxu0
    %v7475 = vadd.f32 %v7462, %v7474
    %v7476 = vpop.f32.mrf.mxu0
    %7477 = vdwg.mxu0
    %7478 = vmatpush.bf16.msra.mxu0 %v6191
    %7479 = vmatpush.bf16.msra.mxu0 %v6183
    %7480 = vmatpush.bf16.msra.mxu0 %v6175
    %7481 = vmatpush.bf16.msra.mxu0 %v6167
    %7482 = vmatpush.bf16.msra.mxu0 %v6159
    %7483 = vmatpush.bf16.msra.mxu0 %v6151
    %7484 = vmatpush.bf16.msra.mxu0 %v6143
    %7485 = vmatpush.bf16.msra.mxu0 %v6135
    %7486 = vmatmul.bf16.gmra.mxu0 %v7450
    %v7487 = vpop.f32.mrf.mxu0
    %v7488 = vadd.f32 0.0, %v7487
    %v7489 = vpop.f32.mrf.mxu0
    %7490 = vdwg.mxu0
    %7491 = vmatpush.bf16.msra.mxu0 %v6255
    %7492 = vmatpush.bf16.msra.mxu0 %v6247
    %7493 = vmatpush.bf16.msra.mxu0 %v6239
    %7494 = vmatpush.bf16.msra.mxu0 %v6231
    %7495 = vmatpush.bf16.msra.mxu0 %v6223
    %7496 = vmatpush.bf16.msra.mxu0 %v6215
    %7497 = vmatpush.bf16.msra.mxu0 %v6207
    %7498 = vmatpush.bf16.msra.mxu0 %v6199
    %7499 = vmatmul.bf16.gmra.mxu0 %v7451
    %v7500 = vpop.f32.mrf.mxu0
    %v7501 = vadd.f32 %v7488, %v7500
    %v7502 = vpop.f32.mrf.mxu0
    %7503 = vdwg.mxu0
    %7504 = vmatpush.bf16.msra.mxu0 %v6192
    %7505 = vmatpush.bf16.msra.mxu0 %v6184
    %7506 = vmatpush.bf16.msra.mxu0 %v6176
    %7507 = vmatpush.bf16.msra.mxu0 %v6168
    %7508 = vmatpush.bf16.msra.mxu0 %v6160
    %7509 = vmatpush.bf16.msra.mxu0 %v6152
    %7510 = vmatpush.bf16.msra.mxu0 %v6144
    %7511 = vmatpush.bf16.msra.mxu0 %v6136
    %7512 = vmatmul.bf16.gmra.mxu0 %v7450
    %v7513 = vpop.f32.mrf.mxu0
    %v7514 = vadd.f32 0.0, %v7513
    %v7515 = vpop.f32.mrf.mxu0
    %7516 = vdwg.mxu0
    %7517 = vmatpush.bf16.msra.mxu0 %v6256
    %7518 = vmatpush.bf16.msra.mxu0 %v6248
    %7519 = vmatpush.bf16.msra.mxu0 %v6240
    %7520 = vmatpush.bf16.msra.mxu0 %v6232
    %7521 = vmatpush.bf16.msra.mxu0 %v6224
    %7522 = vmatpush.bf16.msra.mxu0 %v6216
    %7523 = vmatpush.bf16.msra.mxu0 %v6208
    %7524 = vmatpush.bf16.msra.mxu0 %v6200
    %7525 = vmatmul.bf16.gmra.mxu0 %v7451
    %v7526 = vpop.f32.mrf.mxu0
    %v7527 = vadd.f32 %v7514, %v7526
    %v7528 = vpop.f32.mrf.mxu0
    %7529 = vdwg.mxu0
    %7530 = vmatpush.bf16.msra.mxu0 %v6193
    %7531 = vmatpush.bf16.msra.mxu0 %v6185
    %7532 = vmatpush.bf16.msra.mxu0 %v6177
    %7533 = vmatpush.bf16.msra.mxu0 %v6169
    %7534 = vmatpush.bf16.msra.mxu0 %v6161
    %7535 = vmatpush.bf16.msra.mxu0 %v6153
    %7536 = vmatpush.bf16.msra.mxu0 %v6145
    %7537 = vmatpush.bf16.msra.mxu0 %v6137
    %7538 = vmatmul.bf16.gmra.mxu0 %v7450
    %v7539 = vpop.f32.mrf.mxu0
    %v7540 = vadd.f32 0.0, %v7539
    %v7541 = vpop.f32.mrf.mxu0
    %7542 = vdwg.mxu0
    %7543 = vmatpush.bf16.msra.mxu0 %v6257
    %7544 = vmatpush.bf16.msra.mxu0 %v6249
    %7545 = vmatpush.bf16.msra.mxu0 %v6241
    %7546 = vmatpush.bf16.msra.mxu0 %v6233
    %7547 = vmatpush.bf16.msra.mxu0 %v6225
    %7548 = vmatpush.bf16.msra.mxu0 %v6217
    %7549 = vmatpush.bf16.msra.mxu0 %v6209
    %7550 = vmatpush.bf16.msra.mxu0 %v6201
    %7551 = vmatmul.bf16.gmra.mxu0 %v7451
    %v7552 = vpop.f32.mrf.mxu0
    %v7553 = vadd.f32 %v7540, %v7552
    %v7554 = vpop.f32.mrf.mxu0
    %7555 = vdwg.mxu0
    %7556 = vmatpush.bf16.msra.mxu0 %v6194
    %7557 = vmatpush.bf16.msra.mxu0 %v6186
    %7558 = vmatpush.bf16.msra.mxu0 %v6178
    %7559 = vmatpush.bf16.msra.mxu0 %v6170
    %7560 = vmatpush.bf16.msra.mxu0 %v6162
    %7561 = vmatpush.bf16.msra.mxu0 %v6154
    %7562 = vmatpush.bf16.msra.mxu0 %v6146
    %7563 = vmatpush.bf16.msra.mxu0 %v6138
    %7564 = vmatmul.bf16.gmra.mxu0 %v7450
    %v7565 = vpop.f32.mrf.mxu0
    %v7566 = vadd.f32 0.0, %v7565
    %v7567 = vpop.f32.mrf.mxu0
    %7568 = vdwg.mxu0
    %7569 = vmatpush.bf16.msra.mxu0 %v6258
    %7570 = vmatpush.bf16.msra.mxu0 %v6250
    %7571 = vmatpush.bf16.msra.mxu0 %v6242
    %7572 = vmatpush.bf16.msra.mxu0 %v6234
    %7573 = vmatpush.bf16.msra.mxu0 %v6226
    %7574 = vmatpush.bf16.msra.mxu0 %v6218
    %7575 = vmatpush.bf16.msra.mxu0 %v6210
    %7576 = vmatpush.bf16.msra.mxu0 %v6202
    %7577 = vmatmul.bf16.gmra.mxu0 %v7451
    %v7578 = vpop.f32.mrf.mxu0
    %v7579 = vadd.f32 %v7566, %v7578
    %v7580 = vpop.f32.mrf.mxu0
    %7581 = vdwg.mxu0
    %7582 = vmatpush.bf16.msra.mxu0 %v6195
    %7583 = vmatpush.bf16.msra.mxu0 %v6187
    %7584 = vmatpush.bf16.msra.mxu0 %v6179
    %7585 = vmatpush.bf16.msra.mxu0 %v6171
    %7586 = vmatpush.bf16.msra.mxu0 %v6163
    %7587 = vmatpush.bf16.msra.mxu0 %v6155
    %7588 = vmatpush.bf16.msra.mxu0 %v6147
    %7589 = vmatpush.bf16.msra.mxu0 %v6139
    %7590 = vmatmul.bf16.gmra.mxu0 %v7450
    %v7591 = vpop.f32.mrf.mxu0
    %v7592 = vadd.f32 0.0, %v7591
    %v7593 = vpop.f32.mrf.mxu0
    %7594 = vdwg.mxu0
    %7595 = vmatpush.bf16.msra.mxu0 %v6259
    %7596 = vmatpush.bf16.msra.mxu0 %v6251
    %7597 = vmatpush.bf16.msra.mxu0 %v6243
    %7598 = vmatpush.bf16.msra.mxu0 %v6235
    %7599 = vmatpush.bf16.msra.mxu0 %v6227
    %7600 = vmatpush.bf16.msra.mxu0 %v6219
    %7601 = vmatpush.bf16.msra.mxu0 %v6211
    %7602 = vmatpush.bf16.msra.mxu0 %v6203
    %7603 = vmatmul.bf16.gmra.mxu0 %v7451
    %v7604 = vpop.f32.mrf.mxu0
    %v7605 = vadd.f32 %v7592, %v7604
    %v7606 = vpop.f32.mrf.mxu0
    %7607 = vdwg.mxu0
    %7608 = vmatpush.bf16.msra.mxu0 %v6196
    %7609 = vmatpush.bf16.msra.mxu0 %v6188
    %7610 = vmatpush.bf16.msra.mxu0 %v6180
    %7611 = vmatpush.bf16.msra.mxu0 %v6172
    %7612 = vmatpush.bf16.msra.mxu0 %v6164
    %7613 = vmatpush.bf16.msra.mxu0 %v6156
    %7614 = vmatpush.bf16.msra.mxu0 %v6148
    %7615 = vmatpush.bf16.msra.mxu0 %v6140
    %7616 = vmatmul.bf16.gmra.mxu0 %v7450
    %v7617 = vpop.f32.mrf.mxu0
    %v7618 = vadd.f32 0.0, %v7617
    %v7619 = vpop.f32.mrf.mxu0
    %7620 = vdwg.mxu0
    %7621 = vmatpush.bf16.msra.mxu0 %v6260
    %7622 = vmatpush.bf16.msra.mxu0 %v6252
    %7623 = vmatpush.bf16.msra.mxu0 %v6244
    %7624 = vmatpush.bf16.msra.mxu0 %v6236
    %7625 = vmatpush.bf16.msra.mxu0 %v6228
    %7626 = vmatpush.bf16.msra.mxu0 %v6220
    %7627 = vmatpush.bf16.msra.mxu0 %v6212
    %7628 = vmatpush.bf16.msra.mxu0 %v6204
    %7629 = vmatmul.bf16.gmra.mxu0 %v7451
    %v7630 = vpop.f32.mrf.mxu0
    %v7631 = vadd.f32 %v7618, %v7630
    %v7632 = vpop.f32.mrf.mxu0
    %7633 = vdwg.mxu0
    %7634 = vmatpush.bf16.msra.mxu0 %v6197
    %7635 = vmatpush.bf16.msra.mxu0 %v6189
    %7636 = vmatpush.bf16.msra.mxu0 %v6181
    %7637 = vmatpush.bf16.msra.mxu0 %v6173
    %7638 = vmatpush.bf16.msra.mxu0 %v6165
    %7639 = vmatpush.bf16.msra.mxu0 %v6157
    %7640 = vmatpush.bf16.msra.mxu0 %v6149
    %7641 = vmatpush.bf16.msra.mxu0 %v6141
    %7642 = vmatmul.bf16.gmra.mxu0 %v7450
    %v7643 = vpop.f32.mrf.mxu0
    %v7644 = vadd.f32 0.0, %v7643
    %v7645 = vpop.f32.mrf.mxu0
    %7646 = vdwg.mxu0
    %7647 = vmatpush.bf16.msra.mxu0 %v6261
    %7648 = vmatpush.bf16.msra.mxu0 %v6253
    %7649 = vmatpush.bf16.msra.mxu0 %v6245
    %7650 = vmatpush.bf16.msra.mxu0 %v6237
    %7651 = vmatpush.bf16.msra.mxu0 %v6229
    %7652 = vmatpush.bf16.msra.mxu0 %v6221
    %7653 = vmatpush.bf16.msra.mxu0 %v6213
    %7654 = vmatpush.bf16.msra.mxu0 %v6205
    %7655 = vmatmul.bf16.gmra.mxu0 %v7451
    %v7656 = vpop.f32.mrf.mxu0
    %v7657 = vadd.f32 %v7644, %v7656
    %v7658 = vpop.f32.mrf.mxu0
    %7659 = vdwg.mxu0
    %v7660 = vadd.f32 %v7442, %v7475
    %v7661 = vadd.f32 %v7443, %v7501
    %v7662 = vadd.f32 %v7444, %v7527
    %v7663 = vadd.f32 %v7445, %v7553
    %v7664 = vadd.f32 %v7446, %v7579
    %v7665 = vadd.f32 %v7447, %v7605
    %v7666 = vadd.f32 %v7448, %v7631
    %v7667 = vadd.f32 %v7449, %v7657
    %v7668 = vxor.u32 %v7660, 2147483648
    %v7669 = vxor.u32 %v7661, 2147483648
    %v7670 = vxor.u32 %v7662, 2147483648
    %v7671 = vxor.u32 %v7663, 2147483648
    %v7672 = vxor.u32 %v7664, 2147483648
    %v7673 = vxor.u32 %v7665, 2147483648
    %v7674 = vmul.f32 %v7668, 1.442695
    %v7675 = vpow.pop %v7674
    %v7676 = vmul.f32 %v7669, 1.442695
    %v7677 = vpow.pop %v7676
    %v7678 = vmul.f32 %v7670, 1.442695
    %v7679 = vpow.pop %v7678
    %v7680 = vmul.f32 %v7671, 1.442695
    %v7681 = vpow.pop %v7680
    %v7682 = vmul.f32 %v7672, 1.442695
    %v7683 = vpow.pop %v7682
    %v7684 = vmul.f32 %v7673, 1.442695
    %v7685 = vpow.pop %v7684
    %v7686 = vadd.f32 %v7675, 1.0
    %v7687 = vadd.f32 %v7677, 1.0
    %v7688 = vadd.f32 %v7679, 1.0
    %v7689 = vadd.f32 %v7681, 1.0
    %v7690 = vadd.f32 %v7683, 1.0
    %v7691 = vadd.f32 %v7685, 1.0
    %v7692 = vrcp.pop %v7686
    %v7693 = vmul.f32 %v7686, %v7692
    %v7694 = vsub.f32 1.0, %v7693
    %v7695 = vmul.f32 %v7692, %v7694
    %v7696 = vadd.f32 %v7692, %v7695
    %vm7697 = vweird.f32 %v7686
    %vm7698 = vweird.f32 %v7692
    %vm7699 = vmor %vm7697, %vm7698
    %v7700 = vsel %vm7699, %v7692, %v7696
    %v7701 = vand.u32 2147483647, %v7686
    %vm7702 = vcmp.eq.f32.partialorder %v7701, 8.507059e+37
    %v7703 = vand.u32 %v7686, 2147483648
    %v7704 = vor.u32 1.1754944e-38, %v7703
    %v7705 = vsel %vm7702, %v7704, %v7700
    %v7706 = vmul.f32 1.0, %v7705
    %v7707 = vrcp.pop %v7687
    %v7708 = vmul.f32 %v7687, %v7707
    %v7709 = vsub.f32 1.0, %v7708
    %v7710 = vmul.f32 %v7707, %v7709
    %v7711 = vadd.f32 %v7707, %v7710
    %vm7712 = vweird.f32 %v7687
    %vm7713 = vweird.f32 %v7707
    %vm7714 = vmor %vm7712, %vm7713
    %v7715 = vsel %vm7714, %v7707, %v7711
    %v7716 = vand.u32 2147483647, %v7687
    %vm7717 = vcmp.eq.f32.partialorder %v7716, 8.507059e+37
    %v7718 = vand.u32 %v7687, 2147483648
    %v7719 = vor.u32 1.1754944e-38, %v7718
    %v7720 = vsel %vm7717, %v7719, %v7715
    %v7721 = vmul.f32 1.0, %v7720
    %v7722 = vrcp.pop %v7688
    %v7723 = vmul.f32 %v7688, %v7722
    %v7724 = vsub.f32 1.0, %v7723
    %v7725 = vmul.f32 %v7722, %v7724
    %v7726 = vadd.f32 %v7722, %v7725
    %vm7727 = vweird.f32 %v7688
    %vm7728 = vweird.f32 %v7722
    %vm7729 = vmor %vm7727, %vm7728
    %v7730 = vsel %vm7729, %v7722, %v7726
    %v7731 = vand.u32 2147483647, %v7688
    %vm7732 = vcmp.eq.f32.partialorder %v7731, 8.507059e+37
    %v7733 = vand.u32 %v7688, 2147483648
    %v7734 = vor.u32 1.1754944e-38, %v7733
    %v7735 = vsel %vm7732, %v7734, %v7730
    %v7736 = vmul.f32 1.0, %v7735
    %v7737 = vrcp.pop %v7689
    %v7738 = vmul.f32 %v7689, %v7737
    %v7739 = vsub.f32 1.0, %v7738
    %v7740 = vmul.f32 %v7737, %v7739
    %v7741 = vadd.f32 %v7737, %v7740
    %vm7742 = vweird.f32 %v7689
    %vm7743 = vweird.f32 %v7737
    %vm7744 = vmor %vm7742, %vm7743
    %v7745 = vsel %vm7744, %v7737, %v7741
    %v7746 = vand.u32 2147483647, %v7689
    %vm7747 = vcmp.eq.f32.partialorder %v7746, 8.507059e+37
    %v7748 = vand.u32 %v7689, 2147483648
    %v7749 = vor.u32 1.1754944e-38, %v7748
    %v7750 = vsel %vm7747, %v7749, %v7745
    %v7751 = vmul.f32 1.0, %v7750
    %v7752 = vrcp.pop %v7690
    %v7753 = vmul.f32 %v7690, %v7752
    %v7754 = vsub.f32 1.0, %v7753
    %v7755 = vmul.f32 %v7752, %v7754
    %v7756 = vadd.f32 %v7752, %v7755
    %vm7757 = vweird.f32 %v7690
    %vm7758 = vweird.f32 %v7752
    %vm7759 = vmor %vm7757, %vm7758
    %v7760 = vsel %vm7759, %v7752, %v7756
    %v7761 = vand.u32 2147483647, %v7690
    %vm7762 = vcmp.eq.f32.partialorder %v7761, 8.507059e+37
    %v7763 = vand.u32 %v7690, 2147483648
    %v7764 = vor.u32 1.1754944e-38, %v7763
    %v7765 = vsel %vm7762, %v7764, %v7760
    %v7766 = vmul.f32 1.0, %v7765
    %v7767 = vrcp.pop %v7691
    %v7768 = vmul.f32 %v7691, %v7767
    %v7769 = vsub.f32 1.0, %v7768
    %v7770 = vmul.f32 %v7767, %v7769
    %v7771 = vadd.f32 %v7767, %v7770
    %vm7772 = vweird.f32 %v7691
    %vm7773 = vweird.f32 %v7767
    %vm7774 = vmor %vm7772, %vm7773
    %v7775 = vsel %vm7774, %v7767, %v7771
    %v7776 = vand.u32 2147483647, %v7691
    %vm7777 = vcmp.eq.f32.partialorder %v7776, 8.507059e+37
    %v7778 = vand.u32 %v7691, 2147483648
    %v7779 = vor.u32 1.1754944e-38, %v7778
    %v7780 = vsel %vm7777, %v7779, %v7775
    %v7781 = vmul.f32 1.0, %v7780
    %v7782 = vtanh.pop %v7666
    %v7783 = vtanh.pop %v7667
    %v7784 = vmul.f32 %v7736, %v7434
    %v7785 = vmul.f32 %v7751, %v7435
    %v7786 = vmul.f32 %v7706, %v7782
    %v7787 = vmul.f32 %v7721, %v7783
    %v7788 = vadd.f32 %v7784, %v7786
    %v7789 = vadd.f32 %v7785, %v7787
    %v7790 = vtanh.pop %v7788
    %v7791 = vtanh.pop %v7789
    %v7792 = vmul.f32 %v7766, %v7790
    %v7793 = vmul.f32 %v7781, %v7791
    %7794 = vst [vmem:[#allocation2 + $0x30] sm:$0xff] %v7792
    %7795 = vst [vmem:[#allocation2 + $0x38] sm:$0xff] %v7793
    %v7796 = vld [vmem:[#allocation3 + $0x100] sm:$0xff]
    %v7797 = vld [vmem:[#allocation3 + $0x108] sm:$0xff]
    %v7798 = vld [vmem:[#allocation3 + $0x110] sm:$0xff]
    %v7799 = vld [vmem:[#allocation3 + $0x118] sm:$0xff]
    %v7800 = vld [vmem:[#allocation3 + $0x120] sm:$0xff]
    %v7801 = vld [vmem:[#allocation3 + $0x128] sm:$0xff]
    %v7802 = vld [vmem:[#allocation3 + $0x130] sm:$0xff]
    %v7803 = vld [vmem:[#allocation3 + $0x138] sm:$0xff]
    %v7804 = vpack.c.bf16 %v7792, %v7792
    %v7805 = vpack.c.bf16 %v7793, %v7793
    %7806 = vmatpush.bf16.msra.mxu0 %v6190
    %7807 = vmatpush.bf16.msra.mxu0 %v6182
    %7808 = vmatpush.bf16.msra.mxu0 %v6174
    %7809 = vmatpush.bf16.msra.mxu0 %v6166
    %7810 = vmatpush.bf16.msra.mxu0 %v6158
    %7811 = vmatpush.bf16.msra.mxu0 %v6150
    %7812 = vmatpush.bf16.msra.mxu0 %v6142
    %7813 = vmatpush.bf16.msra.mxu0 %v6134
    %7814 = vmatmul.bf16.gmra.mxu0 %v7804
    %v7815 = vpop.f32.mrf.mxu0
    %v7816 = vadd.f32 0.0, %v7815
    %v7817 = vpop.f32.mrf.mxu0
    %7818 = vdwg.mxu0
    %7819 = vmatpush.bf16.msra.mxu0 %v6254
    %7820 = vmatpush.bf16.msra.mxu0 %v6246
    %7821 = vmatpush.bf16.msra.mxu0 %v6238
    %7822 = vmatpush.bf16.msra.mxu0 %v6230
    %7823 = vmatpush.bf16.msra.mxu0 %v6222
    %7824 = vmatpush.bf16.msra.mxu0 %v6214
    %7825 = vmatpush.bf16.msra.mxu0 %v6206
    %7826 = vmatpush.bf16.msra.mxu0 %v6198
    %7827 = vmatmul.bf16.gmra.mxu0 %v7805
    %v7828 = vpop.f32.mrf.mxu0
    %v7829 = vadd.f32 %v7816, %v7828
    %v7830 = vpop.f32.mrf.mxu0
    %7831 = vdwg.mxu0
    %7832 = vmatpush.bf16.msra.mxu0 %v6191
    %7833 = vmatpush.bf16.msra.mxu0 %v6183
    %7834 = vmatpush.bf16.msra.mxu0 %v6175
    %7835 = vmatpush.bf16.msra.mxu0 %v6167
    %7836 = vmatpush.bf16.msra.mxu0 %v6159
    %7837 = vmatpush.bf16.msra.mxu0 %v6151
    %7838 = vmatpush.bf16.msra.mxu0 %v6143
    %7839 = vmatpush.bf16.msra.mxu0 %v6135
    %7840 = vmatmul.bf16.gmra.mxu0 %v7804
    %v7841 = vpop.f32.mrf.mxu0
    %v7842 = vadd.f32 0.0, %v7841
    %v7843 = vpop.f32.mrf.mxu0
    %7844 = vdwg.mxu0
    %7845 = vmatpush.bf16.msra.mxu0 %v6255
    %7846 = vmatpush.bf16.msra.mxu0 %v6247
    %7847 = vmatpush.bf16.msra.mxu0 %v6239
    %7848 = vmatpush.bf16.msra.mxu0 %v6231
    %7849 = vmatpush.bf16.msra.mxu0 %v6223
    %7850 = vmatpush.bf16.msra.mxu0 %v6215
    %7851 = vmatpush.bf16.msra.mxu0 %v6207
    %7852 = vmatpush.bf16.msra.mxu0 %v6199
    %7853 = vmatmul.bf16.gmra.mxu0 %v7805
    %v7854 = vpop.f32.mrf.mxu0
    %v7855 = vadd.f32 %v7842, %v7854
    %v7856 = vpop.f32.mrf.mxu0
    %7857 = vdwg.mxu0
    %7858 = vmatpush.bf16.msra.mxu0 %v6192
    %7859 = vmatpush.bf16.msra.mxu0 %v6184
    %7860 = vmatpush.bf16.msra.mxu0 %v6176
    %7861 = vmatpush.bf16.msra.mxu0 %v6168
    %7862 = vmatpush.bf16.msra.mxu0 %v6160
    %7863 = vmatpush.bf16.msra.mxu0 %v6152
    %7864 = vmatpush.bf16.msra.mxu0 %v6144
    %7865 = vmatpush.bf16.msra.mxu0 %v6136
    %7866 = vmatmul.bf16.gmra.mxu0 %v7804
    %v7867 = vpop.f32.mrf.mxu0
    %v7868 = vadd.f32 0.0, %v7867
    %v7869 = vpop.f32.mrf.mxu0
    %7870 = vdwg.mxu0
    %7871 = vmatpush.bf16.msra.mxu0 %v6256
    %7872 = vmatpush.bf16.msra.mxu0 %v6248
    %7873 = vmatpush.bf16.msra.mxu0 %v6240
    %7874 = vmatpush.bf16.msra.mxu0 %v6232
    %7875 = vmatpush.bf16.msra.mxu0 %v6224
    %7876 = vmatpush.bf16.msra.mxu0 %v6216
    %7877 = vmatpush.bf16.msra.mxu0 %v6208
    %7878 = vmatpush.bf16.msra.mxu0 %v6200
    %7879 = vmatmul.bf16.gmra.mxu0 %v7805
    %v7880 = vpop.f32.mrf.mxu0
    %v7881 = vadd.f32 %v7868, %v7880
    %v7882 = vpop.f32.mrf.mxu0
    %7883 = vdwg.mxu0
    %7884 = vmatpush.bf16.msra.mxu0 %v6193
    %7885 = vmatpush.bf16.msra.mxu0 %v6185
    %7886 = vmatpush.bf16.msra.mxu0 %v6177
    %7887 = vmatpush.bf16.msra.mxu0 %v6169
    %7888 = vmatpush.bf16.msra.mxu0 %v6161
    %7889 = vmatpush.bf16.msra.mxu0 %v6153
    %7890 = vmatpush.bf16.msra.mxu0 %v6145
    %7891 = vmatpush.bf16.msra.mxu0 %v6137
    %7892 = vmatmul.bf16.gmra.mxu0 %v7804
    %v7893 = vpop.f32.mrf.mxu0
    %v7894 = vadd.f32 0.0, %v7893
    %v7895 = vpop.f32.mrf.mxu0
    %7896 = vdwg.mxu0
    %7897 = vmatpush.bf16.msra.mxu0 %v6257
    %7898 = vmatpush.bf16.msra.mxu0 %v6249
    %7899 = vmatpush.bf16.msra.mxu0 %v6241
    %7900 = vmatpush.bf16.msra.mxu0 %v6233
    %7901 = vmatpush.bf16.msra.mxu0 %v6225
    %7902 = vmatpush.bf16.msra.mxu0 %v6217
    %7903 = vmatpush.bf16.msra.mxu0 %v6209
    %7904 = vmatpush.bf16.msra.mxu0 %v6201
    %7905 = vmatmul.bf16.gmra.mxu0 %v7805
    %v7906 = vpop.f32.mrf.mxu0
    %v7907 = vadd.f32 %v7894, %v7906
    %v7908 = vpop.f32.mrf.mxu0
    %7909 = vdwg.mxu0
    %7910 = vmatpush.bf16.msra.mxu0 %v6194
    %7911 = vmatpush.bf16.msra.mxu0 %v6186
    %7912 = vmatpush.bf16.msra.mxu0 %v6178
    %7913 = vmatpush.bf16.msra.mxu0 %v6170
    %7914 = vmatpush.bf16.msra.mxu0 %v6162
    %7915 = vmatpush.bf16.msra.mxu0 %v6154
    %7916 = vmatpush.bf16.msra.mxu0 %v6146
    %7917 = vmatpush.bf16.msra.mxu0 %v6138
    %7918 = vmatmul.bf16.gmra.mxu0 %v7804
    %v7919 = vpop.f32.mrf.mxu0
    %v7920 = vadd.f32 0.0, %v7919
    %v7921 = vpop.f32.mrf.mxu0
    %7922 = vdwg.mxu0
    %7923 = vmatpush.bf16.msra.mxu0 %v6258
    %7924 = vmatpush.bf16.msra.mxu0 %v6250
    %7925 = vmatpush.bf16.msra.mxu0 %v6242
    %7926 = vmatpush.bf16.msra.mxu0 %v6234
    %7927 = vmatpush.bf16.msra.mxu0 %v6226
    %7928 = vmatpush.bf16.msra.mxu0 %v6218
    %7929 = vmatpush.bf16.msra.mxu0 %v6210
    %7930 = vmatpush.bf16.msra.mxu0 %v6202
    %7931 = vmatmul.bf16.gmra.mxu0 %v7805
    %v7932 = vpop.f32.mrf.mxu0
    %v7933 = vadd.f32 %v7920, %v7932
    %v7934 = vpop.f32.mrf.mxu0
    %7935 = vdwg.mxu0
    %7936 = vmatpush.bf16.msra.mxu0 %v6195
    %7937 = vmatpush.bf16.msra.mxu0 %v6187
    %7938 = vmatpush.bf16.msra.mxu0 %v6179
    %7939 = vmatpush.bf16.msra.mxu0 %v6171
    %7940 = vmatpush.bf16.msra.mxu0 %v6163
    %7941 = vmatpush.bf16.msra.mxu0 %v6155
    %7942 = vmatpush.bf16.msra.mxu0 %v6147
    %7943 = vmatpush.bf16.msra.mxu0 %v6139
    %7944 = vmatmul.bf16.gmra.mxu0 %v7804
    %v7945 = vpop.f32.mrf.mxu0
    %v7946 = vadd.f32 0.0, %v7945
    %v7947 = vpop.f32.mrf.mxu0
    %7948 = vdwg.mxu0
    %7949 = vmatpush.bf16.msra.mxu0 %v6259
    %7950 = vmatpush.bf16.msra.mxu0 %v6251
    %7951 = vmatpush.bf16.msra.mxu0 %v6243
    %7952 = vmatpush.bf16.msra.mxu0 %v6235
    %7953 = vmatpush.bf16.msra.mxu0 %v6227
    %7954 = vmatpush.bf16.msra.mxu0 %v6219
    %7955 = vmatpush.bf16.msra.mxu0 %v6211
    %7956 = vmatpush.bf16.msra.mxu0 %v6203
    %7957 = vmatmul.bf16.gmra.mxu0 %v7805
    %v7958 = vpop.f32.mrf.mxu0
    %v7959 = vadd.f32 %v7946, %v7958
    %v7960 = vpop.f32.mrf.mxu0
    %7961 = vdwg.mxu0
    %7962 = vmatpush.bf16.msra.mxu0 %v6196
    %7963 = vmatpush.bf16.msra.mxu0 %v6188
    %7964 = vmatpush.bf16.msra.mxu0 %v6180
    %7965 = vmatpush.bf16.msra.mxu0 %v6172
    %7966 = vmatpush.bf16.msra.mxu0 %v6164
    %7967 = vmatpush.bf16.msra.mxu0 %v6156
    %7968 = vmatpush.bf16.msra.mxu0 %v6148
    %7969 = vmatpush.bf16.msra.mxu0 %v6140
    %7970 = vmatmul.bf16.gmra.mxu0 %v7804
    %v7971 = vpop.f32.mrf.mxu0
    %v7972 = vadd.f32 0.0, %v7971
    %v7973 = vpop.f32.mrf.mxu0
    %7974 = vdwg.mxu0
    %7975 = vmatpush.bf16.msra.mxu0 %v6260
    %7976 = vmatpush.bf16.msra.mxu0 %v6252
    %7977 = vmatpush.bf16.msra.mxu0 %v6244
    %7978 = vmatpush.bf16.msra.mxu0 %v6236
    %7979 = vmatpush.bf16.msra.mxu0 %v6228
    %7980 = vmatpush.bf16.msra.mxu0 %v6220
    %7981 = vmatpush.bf16.msra.mxu0 %v6212
    %7982 = vmatpush.bf16.msra.mxu0 %v6204
    %7983 = vmatmul.bf16.gmra.mxu0 %v7805
    %v7984 = vpop.f32.mrf.mxu0
    %v7985 = vadd.f32 %v7972, %v7984
    %v7986 = vpop.f32.mrf.mxu0
    %7987 = vdwg.mxu0
    %7988 = vmatpush.bf16.msra.mxu0 %v6197
    %7989 = vmatpush.bf16.msra.mxu0 %v6189
    %7990 = vmatpush.bf16.msra.mxu0 %v6181
    %7991 = vmatpush.bf16.msra.mxu0 %v6173
    %7992 = vmatpush.bf16.msra.mxu0 %v6165
    %7993 = vmatpush.bf16.msra.mxu0 %v6157
    %7994 = vmatpush.bf16.msra.mxu0 %v6149
    %7995 = vmatpush.bf16.msra.mxu0 %v6141
    %7996 = vmatmul.bf16.gmra.mxu0 %v7804
    %v7997 = vpop.f32.mrf.mxu0
    %v7998 = vadd.f32 0.0, %v7997
    %v7999 = vpop.f32.mrf.mxu0
    %8000 = vdwg.mxu0
    %8001 = vmatpush.bf16.msra.mxu0 %v6261
    %8002 = vmatpush.bf16.msra.mxu0 %v6253
    %8003 = vmatpush.bf16.msra.mxu0 %v6245
    %8004 = vmatpush.bf16.msra.mxu0 %v6237
    %8005 = vmatpush.bf16.msra.mxu0 %v6229
    %8006 = vmatpush.bf16.msra.mxu0 %v6221
    %8007 = vmatpush.bf16.msra.mxu0 %v6213
    %8008 = vmatpush.bf16.msra.mxu0 %v6205
    %8009 = vmatmul.bf16.gmra.mxu0 %v7805
    %v8010 = vpop.f32.mrf.mxu0
    %v8011 = vadd.f32 %v7998, %v8010
    %v8012 = vpop.f32.mrf.mxu0
    %8013 = vdwg.mxu0
    %v8014 = vadd.f32 %v7796, %v7829
    %v8015 = vadd.f32 %v7797, %v7855
    %v8016 = vadd.f32 %v7798, %v7881
    %v8017 = vadd.f32 %v7799, %v7907
    %v8018 = vadd.f32 %v7800, %v7933
    %v8019 = vadd.f32 %v7801, %v7959
    %v8020 = vadd.f32 %v7802, %v7985
    %v8021 = vadd.f32 %v7803, %v8011
    %v8022 = vxor.u32 %v8014, 2147483648
    %v8023 = vxor.u32 %v8015, 2147483648
    %v8024 = vxor.u32 %v8016, 2147483648
    %v8025 = vxor.u32 %v8017, 2147483648
    %v8026 = vxor.u32 %v8018, 2147483648
    %v8027 = vxor.u32 %v8019, 2147483648
    %v8028 = vmul.f32 %v8022, 1.442695
    %v8029 = vpow.pop %v8028
    %v8030 = vmul.f32 %v8023, 1.442695
    %v8031 = vpow.pop %v8030
    %v8032 = vmul.f32 %v8024, 1.442695
    %v8033 = vpow.pop %v8032
    %v8034 = vmul.f32 %v8025, 1.442695
    %v8035 = vpow.pop %v8034
    %v8036 = vmul.f32 %v8026, 1.442695
    %v8037 = vpow.pop %v8036
    %v8038 = vmul.f32 %v8027, 1.442695
    %v8039 = vpow.pop %v8038
    %v8040 = vadd.f32 %v8029, 1.0
    %v8041 = vadd.f32 %v8031, 1.0
    %v8042 = vadd.f32 %v8033, 1.0
    %v8043 = vadd.f32 %v8035, 1.0
    %v8044 = vadd.f32 %v8037, 1.0
    %v8045 = vadd.f32 %v8039, 1.0
    %v8046 = vrcp.pop %v8040
    %v8047 = vmul.f32 %v8040, %v8046
    %v8048 = vsub.f32 1.0, %v8047
    %v8049 = vmul.f32 %v8046, %v8048
    %v8050 = vadd.f32 %v8046, %v8049
    %vm8051 = vweird.f32 %v8040
    %vm8052 = vweird.f32 %v8046
    %vm8053 = vmor %vm8051, %vm8052
    %v8054 = vsel %vm8053, %v8046, %v8050
    %v8055 = vand.u32 2147483647, %v8040
    %vm8056 = vcmp.eq.f32.partialorder %v8055, 8.507059e+37
    %v8057 = vand.u32 %v8040, 2147483648
    %v8058 = vor.u32 1.1754944e-38, %v8057
    %v8059 = vsel %vm8056, %v8058, %v8054
    %v8060 = vmul.f32 1.0, %v8059
    %v8061 = vrcp.pop %v8041
    %v8062 = vmul.f32 %v8041, %v8061
    %v8063 = vsub.f32 1.0, %v8062
    %v8064 = vmul.f32 %v8061, %v8063
    %v8065 = vadd.f32 %v8061, %v8064
    %vm8066 = vweird.f32 %v8041
    %vm8067 = vweird.f32 %v8061
    %vm8068 = vmor %vm8066, %vm8067
    %v8069 = vsel %vm8068, %v8061, %v8065
    %v8070 = vand.u32 2147483647, %v8041
    %vm8071 = vcmp.eq.f32.partialorder %v8070, 8.507059e+37
    %v8072 = vand.u32 %v8041, 2147483648
    %v8073 = vor.u32 1.1754944e-38, %v8072
    %v8074 = vsel %vm8071, %v8073, %v8069
    %v8075 = vmul.f32 1.0, %v8074
    %v8076 = vrcp.pop %v8042
    %v8077 = vmul.f32 %v8042, %v8076
    %v8078 = vsub.f32 1.0, %v8077
    %v8079 = vmul.f32 %v8076, %v8078
    %v8080 = vadd.f32 %v8076, %v8079
    %vm8081 = vweird.f32 %v8042
    %vm8082 = vweird.f32 %v8076
    %vm8083 = vmor %vm8081, %vm8082
    %v8084 = vsel %vm8083, %v8076, %v8080
    %v8085 = vand.u32 2147483647, %v8042
    %vm8086 = vcmp.eq.f32.partialorder %v8085, 8.507059e+37
    %v8087 = vand.u32 %v8042, 2147483648
    %v8088 = vor.u32 1.1754944e-38, %v8087
    %v8089 = vsel %vm8086, %v8088, %v8084
    %v8090 = vmul.f32 1.0, %v8089
    %v8091 = vrcp.pop %v8043
    %v8092 = vmul.f32 %v8043, %v8091
    %v8093 = vsub.f32 1.0, %v8092
    %v8094 = vmul.f32 %v8091, %v8093
    %v8095 = vadd.f32 %v8091, %v8094
    %vm8096 = vweird.f32 %v8043
    %vm8097 = vweird.f32 %v8091
    %vm8098 = vmor %vm8096, %vm8097
    %v8099 = vsel %vm8098, %v8091, %v8095
    %v8100 = vand.u32 2147483647, %v8043
    %vm8101 = vcmp.eq.f32.partialorder %v8100, 8.507059e+37
    %v8102 = vand.u32 %v8043, 2147483648
    %v8103 = vor.u32 1.1754944e-38, %v8102
    %v8104 = vsel %vm8101, %v8103, %v8099
    %v8105 = vmul.f32 1.0, %v8104
    %v8106 = vrcp.pop %v8044
    %v8107 = vmul.f32 %v8044, %v8106
    %v8108 = vsub.f32 1.0, %v8107
    %v8109 = vmul.f32 %v8106, %v8108
    %v8110 = vadd.f32 %v8106, %v8109
    %vm8111 = vweird.f32 %v8044
    %vm8112 = vweird.f32 %v8106
    %vm8113 = vmor %vm8111, %vm8112
    %v8114 = vsel %vm8113, %v8106, %v8110
    %v8115 = vand.u32 2147483647, %v8044
    %vm8116 = vcmp.eq.f32.partialorder %v8115, 8.507059e+37
    %v8117 = vand.u32 %v8044, 2147483648
    %v8118 = vor.u32 1.1754944e-38, %v8117
    %v8119 = vsel %vm8116, %v8118, %v8114
    %v8120 = vmul.f32 1.0, %v8119
    %v8121 = vrcp.pop %v8045
    %v8122 = vmul.f32 %v8045, %v8121
    %v8123 = vsub.f32 1.0, %v8122
    %v8124 = vmul.f32 %v8121, %v8123
    %v8125 = vadd.f32 %v8121, %v8124
    %vm8126 = vweird.f32 %v8045
    %vm8127 = vweird.f32 %v8121
    %vm8128 = vmor %vm8126, %vm8127
    %v8129 = vsel %vm8128, %v8121, %v8125
    %v8130 = vand.u32 2147483647, %v8045
    %vm8131 = vcmp.eq.f32.partialorder %v8130, 8.507059e+37
    %v8132 = vand.u32 %v8045, 2147483648
    %v8133 = vor.u32 1.1754944e-38, %v8132
    %v8134 = vsel %vm8131, %v8133, %v8129
    %v8135 = vmul.f32 1.0, %v8134
    %v8136 = vtanh.pop %v8020
    %v8137 = vtanh.pop %v8021
    %v8138 = vmul.f32 %v8090, %v7788
    %v8139 = vmul.f32 %v8105, %v7789
    %v8140 = vmul.f32 %v8060, %v8136
    %v8141 = vmul.f32 %v8075, %v8137
    %v8142 = vadd.f32 %v8138, %v8140
    %v8143 = vadd.f32 %v8139, %v8141
    %v8144 = vtanh.pop %v8142
    %v8145 = vtanh.pop %v8143
    %v8146 = vmul.f32 %v8120, %v8144
    %v8147 = vmul.f32 %v8135, %v8145
    %8148 = vst [vmem:[#allocation2 + $0x40] sm:$0xff] %v8146
    %8149 = vst [vmem:[#allocation2 + $0x48] sm:$0xff] %v8147
    %v8150 = vld [vmem:[#allocation3 + $0x140] sm:$0xff]
    %v8151 = vld [vmem:[#allocation3 + $0x148] sm:$0xff]
    %v8152 = vld [vmem:[#allocation3 + $0x150] sm:$0xff]
    %v8153 = vld [vmem:[#allocation3 + $0x158] sm:$0xff]
    %v8154 = vld [vmem:[#allocation3 + $0x160] sm:$0xff]
    %v8155 = vld [vmem:[#allocation3 + $0x168] sm:$0xff]
    %v8156 = vld [vmem:[#allocation3 + $0x170] sm:$0xff]
    %v8157 = vld [vmem:[#allocation3 + $0x178] sm:$0xff]
    %v8158 = vpack.c.bf16 %v8146, %v8146
    %v8159 = vpack.c.bf16 %v8147, %v8147
    %8160 = vmatpush.bf16.msra.mxu0 %v6190
    %8161 = vmatpush.bf16.msra.mxu0 %v6182
    %8162 = vmatpush.bf16.msra.mxu0 %v6174
    %8163 = vmatpush.bf16.msra.mxu0 %v6166
    %8164 = vmatpush.bf16.msra.mxu0 %v6158
    %8165 = vmatpush.bf16.msra.mxu0 %v6150
    %8166 = vmatpush.bf16.msra.mxu0 %v6142
    %8167 = vmatpush.bf16.msra.mxu0 %v6134
    %8168 = vmatmul.bf16.gmra.mxu0 %v8158
    %v8169 = vpop.f32.mrf.mxu0
    %v8170 = vadd.f32 0.0, %v8169
    %v8171 = vpop.f32.mrf.mxu0
    %8172 = vdwg.mxu0
    %8173 = vmatpush.bf16.msra.mxu0 %v6254
    %8174 = vmatpush.bf16.msra.mxu0 %v6246
    %8175 = vmatpush.bf16.msra.mxu0 %v6238
    %8176 = vmatpush.bf16.msra.mxu0 %v6230
    %8177 = vmatpush.bf16.msra.mxu0 %v6222
    %8178 = vmatpush.bf16.msra.mxu0 %v6214
    %8179 = vmatpush.bf16.msra.mxu0 %v6206
    %8180 = vmatpush.bf16.msra.mxu0 %v6198
    %8181 = vmatmul.bf16.gmra.mxu0 %v8159
    %v8182 = vpop.f32.mrf.mxu0
    %v8183 = vadd.f32 %v8170, %v8182
    %v8184 = vpop.f32.mrf.mxu0
    %8185 = vdwg.mxu0
    %8186 = vmatpush.bf16.msra.mxu0 %v6191
    %8187 = vmatpush.bf16.msra.mxu0 %v6183
    %8188 = vmatpush.bf16.msra.mxu0 %v6175
    %8189 = vmatpush.bf16.msra.mxu0 %v6167
    %8190 = vmatpush.bf16.msra.mxu0 %v6159
    %8191 = vmatpush.bf16.msra.mxu0 %v6151
    %8192 = vmatpush.bf16.msra.mxu0 %v6143
    %8193 = vmatpush.bf16.msra.mxu0 %v6135
    %8194 = vmatmul.bf16.gmra.mxu0 %v8158
    %v8195 = vpop.f32.mrf.mxu0
    %v8196 = vadd.f32 0.0, %v8195
    %v8197 = vpop.f32.mrf.mxu0
    %8198 = vdwg.mxu0
    %8199 = vmatpush.bf16.msra.mxu0 %v6255
    %8200 = vmatpush.bf16.msra.mxu0 %v6247
    %8201 = vmatpush.bf16.msra.mxu0 %v6239
    %8202 = vmatpush.bf16.msra.mxu0 %v6231
    %8203 = vmatpush.bf16.msra.mxu0 %v6223
    %8204 = vmatpush.bf16.msra.mxu0 %v6215
    %8205 = vmatpush.bf16.msra.mxu0 %v6207
    %8206 = vmatpush.bf16.msra.mxu0 %v6199
    %8207 = vmatmul.bf16.gmra.mxu0 %v8159
    %v8208 = vpop.f32.mrf.mxu0
    %v8209 = vadd.f32 %v8196, %v8208
    %v8210 = vpop.f32.mrf.mxu0
    %8211 = vdwg.mxu0
    %8212 = vmatpush.bf16.msra.mxu0 %v6192
    %8213 = vmatpush.bf16.msra.mxu0 %v6184
    %8214 = vmatpush.bf16.msra.mxu0 %v6176
    %8215 = vmatpush.bf16.msra.mxu0 %v6168
    %8216 = vmatpush.bf16.msra.mxu0 %v6160
    %8217 = vmatpush.bf16.msra.mxu0 %v6152
    %8218 = vmatpush.bf16.msra.mxu0 %v6144
    %8219 = vmatpush.bf16.msra.mxu0 %v6136
    %8220 = vmatmul.bf16.gmra.mxu0 %v8158
    %v8221 = vpop.f32.mrf.mxu0
    %v8222 = vadd.f32 0.0, %v8221
    %v8223 = vpop.f32.mrf.mxu0
    %8224 = vdwg.mxu0
    %8225 = vmatpush.bf16.msra.mxu0 %v6256
    %8226 = vmatpush.bf16.msra.mxu0 %v6248
    %8227 = vmatpush.bf16.msra.mxu0 %v6240
    %8228 = vmatpush.bf16.msra.mxu0 %v6232
    %8229 = vmatpush.bf16.msra.mxu0 %v6224
    %8230 = vmatpush.bf16.msra.mxu0 %v6216
    %8231 = vmatpush.bf16.msra.mxu0 %v6208
    %8232 = vmatpush.bf16.msra.mxu0 %v6200
    %8233 = vmatmul.bf16.gmra.mxu0 %v8159
    %v8234 = vpop.f32.mrf.mxu0
    %v8235 = vadd.f32 %v8222, %v8234
    %v8236 = vpop.f32.mrf.mxu0
    %8237 = vdwg.mxu0
    %8238 = vmatpush.bf16.msra.mxu0 %v6193
    %8239 = vmatpush.bf16.msra.mxu0 %v6185
    %8240 = vmatpush.bf16.msra.mxu0 %v6177
    %8241 = vmatpush.bf16.msra.mxu0 %v6169
    %8242 = vmatpush.bf16.msra.mxu0 %v6161
    %8243 = vmatpush.bf16.msra.mxu0 %v6153
    %8244 = vmatpush.bf16.msra.mxu0 %v6145
    %8245 = vmatpush.bf16.msra.mxu0 %v6137
    %8246 = vmatmul.bf16.gmra.mxu0 %v8158
    %v8247 = vpop.f32.mrf.mxu0
    %v8248 = vadd.f32 0.0, %v8247
    %v8249 = vpop.f32.mrf.mxu0
    %8250 = vdwg.mxu0
    %8251 = vmatpush.bf16.msra.mxu0 %v6257
    %8252 = vmatpush.bf16.msra.mxu0 %v6249
    %8253 = vmatpush.bf16.msra.mxu0 %v6241
    %8254 = vmatpush.bf16.msra.mxu0 %v6233
    %8255 = vmatpush.bf16.msra.mxu0 %v6225
    %8256 = vmatpush.bf16.msra.mxu0 %v6217
    %8257 = vmatpush.bf16.msra.mxu0 %v6209
    %8258 = vmatpush.bf16.msra.mxu0 %v6201
    %8259 = vmatmul.bf16.gmra.mxu0 %v8159
    %v8260 = vpop.f32.mrf.mxu0
    %v8261 = vadd.f32 %v8248, %v8260
    %v8262 = vpop.f32.mrf.mxu0
    %8263 = vdwg.mxu0
    %8264 = vmatpush.bf16.msra.mxu0 %v6194
    %8265 = vmatpush.bf16.msra.mxu0 %v6186
    %8266 = vmatpush.bf16.msra.mxu0 %v6178
    %8267 = vmatpush.bf16.msra.mxu0 %v6170
    %8268 = vmatpush.bf16.msra.mxu0 %v6162
    %8269 = vmatpush.bf16.msra.mxu0 %v6154
    %8270 = vmatpush.bf16.msra.mxu0 %v6146
    %8271 = vmatpush.bf16.msra.mxu0 %v6138
    %8272 = vmatmul.bf16.gmra.mxu0 %v8158
    %v8273 = vpop.f32.mrf.mxu0
    %v8274 = vadd.f32 0.0, %v8273
    %v8275 = vpop.f32.mrf.mxu0
    %8276 = vdwg.mxu0
    %8277 = vmatpush.bf16.msra.mxu0 %v6258
    %8278 = vmatpush.bf16.msra.mxu0 %v6250
    %8279 = vmatpush.bf16.msra.mxu0 %v6242
    %8280 = vmatpush.bf16.msra.mxu0 %v6234
    %8281 = vmatpush.bf16.msra.mxu0 %v6226
    %8282 = vmatpush.bf16.msra.mxu0 %v6218
    %8283 = vmatpush.bf16.msra.mxu0 %v6210
    %8284 = vmatpush.bf16.msra.mxu0 %v6202
    %8285 = vmatmul.bf16.gmra.mxu0 %v8159
    %v8286 = vpop.f32.mrf.mxu0
    %v8287 = vadd.f32 %v8274, %v8286
    %v8288 = vpop.f32.mrf.mxu0
    %8289 = vdwg.mxu0
    %8290 = vmatpush.bf16.msra.mxu0 %v6195
    %8291 = vmatpush.bf16.msra.mxu0 %v6187
    %8292 = vmatpush.bf16.msra.mxu0 %v6179
    %8293 = vmatpush.bf16.msra.mxu0 %v6171
    %8294 = vmatpush.bf16.msra.mxu0 %v6163
    %8295 = vmatpush.bf16.msra.mxu0 %v6155
    %8296 = vmatpush.bf16.msra.mxu0 %v6147
    %8297 = vmatpush.bf16.msra.mxu0 %v6139
    %8298 = vmatmul.bf16.gmra.mxu0 %v8158
    %v8299 = vpop.f32.mrf.mxu0
    %v8300 = vadd.f32 0.0, %v8299
    %v8301 = vpop.f32.mrf.mxu0
    %8302 = vdwg.mxu0
    %8303 = vmatpush.bf16.msra.mxu0 %v6259
    %8304 = vmatpush.bf16.msra.mxu0 %v6251
    %8305 = vmatpush.bf16.msra.mxu0 %v6243
    %8306 = vmatpush.bf16.msra.mxu0 %v6235
    %8307 = vmatpush.bf16.msra.mxu0 %v6227
    %8308 = vmatpush.bf16.msra.mxu0 %v6219
    %8309 = vmatpush.bf16.msra.mxu0 %v6211
    %8310 = vmatpush.bf16.msra.mxu0 %v6203
    %8311 = vmatmul.bf16.gmra.mxu0 %v8159
    %v8312 = vpop.f32.mrf.mxu0
    %v8313 = vadd.f32 %v8300, %v8312
    %v8314 = vpop.f32.mrf.mxu0
    %8315 = vdwg.mxu0
    %8316 = vmatpush.bf16.msra.mxu0 %v6196
    %8317 = vmatpush.bf16.msra.mxu0 %v6188
    %8318 = vmatpush.bf16.msra.mxu0 %v6180
    %8319 = vmatpush.bf16.msra.mxu0 %v6172
    %8320 = vmatpush.bf16.msra.mxu0 %v6164
    %8321 = vmatpush.bf16.msra.mxu0 %v6156
    %8322 = vmatpush.bf16.msra.mxu0 %v6148
    %8323 = vmatpush.bf16.msra.mxu0 %v6140
    %8324 = vmatmul.bf16.gmra.mxu0 %v8158
    %v8325 = vpop.f32.mrf.mxu0
    %v8326 = vadd.f32 0.0, %v8325
    %v8327 = vpop.f32.mrf.mxu0
    %8328 = vdwg.mxu0
    %8329 = vmatpush.bf16.msra.mxu0 %v6260
    %8330 = vmatpush.bf16.msra.mxu0 %v6252
    %8331 = vmatpush.bf16.msra.mxu0 %v6244
    %8332 = vmatpush.bf16.msra.mxu0 %v6236
    %8333 = vmatpush.bf16.msra.mxu0 %v6228
    %8334 = vmatpush.bf16.msra.mxu0 %v6220
    %8335 = vmatpush.bf16.msra.mxu0 %v6212
    %8336 = vmatpush.bf16.msra.mxu0 %v6204
    %8337 = vmatmul.bf16.gmra.mxu0 %v8159
    %v8338 = vpop.f32.mrf.mxu0
    %v8339 = vadd.f32 %v8326, %v8338
    %v8340 = vpop.f32.mrf.mxu0
    %8341 = vdwg.mxu0
    %8342 = vmatpush.bf16.msra.mxu0 %v6197
    %8343 = vmatpush.bf16.msra.mxu0 %v6189
    %8344 = vmatpush.bf16.msra.mxu0 %v6181
    %8345 = vmatpush.bf16.msra.mxu0 %v6173
    %8346 = vmatpush.bf16.msra.mxu0 %v6165
    %8347 = vmatpush.bf16.msra.mxu0 %v6157
    %8348 = vmatpush.bf16.msra.mxu0 %v6149
    %8349 = vmatpush.bf16.msra.mxu0 %v6141
    %8350 = vmatmul.bf16.gmra.mxu0 %v8158
    %v8351 = vpop.f32.mrf.mxu0
    %v8352 = vadd.f32 0.0, %v8351
    %v8353 = vpop.f32.mrf.mxu0
    %8354 = vdwg.mxu0
    %8355 = vmatpush.bf16.msra.mxu0 %v6261
    %8356 = vmatpush.bf16.msra.mxu0 %v6253
    %8357 = vmatpush.bf16.msra.mxu0 %v6245
    %8358 = vmatpush.bf16.msra.mxu0 %v6237
    %8359 = vmatpush.bf16.msra.mxu0 %v6229
    %8360 = vmatpush.bf16.msra.mxu0 %v6221
    %8361 = vmatpush.bf16.msra.mxu0 %v6213
    %8362 = vmatpush.bf16.msra.mxu0 %v6205
    %8363 = vmatmul.bf16.gmra.mxu0 %v8159
    %v8364 = vpop.f32.mrf.mxu0
    %v8365 = vadd.f32 %v8352, %v8364
    %v8366 = vpop.f32.mrf.mxu0
    %8367 = vdwg.mxu0
    %v8368 = vadd.f32 %v8150, %v8183
    %v8369 = vadd.f32 %v8151, %v8209
    %v8370 = vadd.f32 %v8152, %v8235
    %v8371 = vadd.f32 %v8153, %v8261
    %v8372 = vadd.f32 %v8154, %v8287
    %v8373 = vadd.f32 %v8155, %v8313
    %v8374 = vadd.f32 %v8156, %v8339
    %v8375 = vadd.f32 %v8157, %v8365
    %v8376 = vxor.u32 %v8368, 2147483648
    %v8377 = vxor.u32 %v8369, 2147483648
    %v8378 = vxor.u32 %v8370, 2147483648
    %v8379 = vxor.u32 %v8371, 2147483648
    %v8380 = vxor.u32 %v8372, 2147483648
    %v8381 = vxor.u32 %v8373, 2147483648
    %v8382 = vmul.f32 %v8376, 1.442695
    %v8383 = vpow.pop %v8382
    %v8384 = vmul.f32 %v8377, 1.442695
    %v8385 = vpow.pop %v8384
    %v8386 = vmul.f32 %v8378, 1.442695
    %v8387 = vpow.pop %v8386
    %v8388 = vmul.f32 %v8379, 1.442695
    %v8389 = vpow.pop %v8388
    %v8390 = vmul.f32 %v8380, 1.442695
    %v8391 = vpow.pop %v8390
    %v8392 = vmul.f32 %v8381, 1.442695
    %v8393 = vpow.pop %v8392
    %v8394 = vadd.f32 %v8383, 1.0
    %v8395 = vadd.f32 %v8385, 1.0
    %v8396 = vadd.f32 %v8387, 1.0
    %v8397 = vadd.f32 %v8389, 1.0
    %v8398 = vadd.f32 %v8391, 1.0
    %v8399 = vadd.f32 %v8393, 1.0
    %v8400 = vrcp.pop %v8394
    %v8401 = vmul.f32 %v8394, %v8400
    %v8402 = vsub.f32 1.0, %v8401
    %v8403 = vmul.f32 %v8400, %v8402
    %v8404 = vadd.f32 %v8400, %v8403
    %vm8405 = vweird.f32 %v8394
    %vm8406 = vweird.f32 %v8400
    %vm8407 = vmor %vm8405, %vm8406
    %v8408 = vsel %vm8407, %v8400, %v8404
    %v8409 = vand.u32 2147483647, %v8394
    %vm8410 = vcmp.eq.f32.partialorder %v8409, 8.507059e+37
    %v8411 = vand.u32 %v8394, 2147483648
    %v8412 = vor.u32 1.1754944e-38, %v8411
    %v8413 = vsel %vm8410, %v8412, %v8408
    %v8414 = vmul.f32 1.0, %v8413
    %v8415 = vrcp.pop %v8395
    %v8416 = vmul.f32 %v8395, %v8415
    %v8417 = vsub.f32 1.0, %v8416
    %v8418 = vmul.f32 %v8415, %v8417
    %v8419 = vadd.f32 %v8415, %v8418
    %vm8420 = vweird.f32 %v8395
    %vm8421 = vweird.f32 %v8415
    %vm8422 = vmor %vm8420, %vm8421
    %v8423 = vsel %vm8422, %v8415, %v8419
    %v8424 = vand.u32 2147483647, %v8395
    %vm8425 = vcmp.eq.f32.partialorder %v8424, 8.507059e+37
    %v8426 = vand.u32 %v8395, 2147483648
    %v8427 = vor.u32 1.1754944e-38, %v8426
    %v8428 = vsel %vm8425, %v8427, %v8423
    %v8429 = vmul.f32 1.0, %v8428
    %v8430 = vrcp.pop %v8396
    %v8431 = vmul.f32 %v8396, %v8430
    %v8432 = vsub.f32 1.0, %v8431
    %v8433 = vmul.f32 %v8430, %v8432
    %v8434 = vadd.f32 %v8430, %v8433
    %vm8435 = vweird.f32 %v8396
    %vm8436 = vweird.f32 %v8430
    %vm8437 = vmor %vm8435, %vm8436
    %v8438 = vsel %vm8437, %v8430, %v8434
    %v8439 = vand.u32 2147483647, %v8396
    %vm8440 = vcmp.eq.f32.partialorder %v8439, 8.507059e+37
    %v8441 = vand.u32 %v8396, 2147483648
    %v8442 = vor.u32 1.1754944e-38, %v8441
    %v8443 = vsel %vm8440, %v8442, %v8438
    %v8444 = vmul.f32 1.0, %v8443
    %v8445 = vrcp.pop %v8397
    %v8446 = vmul.f32 %v8397, %v8445
    %v8447 = vsub.f32 1.0, %v8446
    %v8448 = vmul.f32 %v8445, %v8447
    %v8449 = vadd.f32 %v8445, %v8448
    %vm8450 = vweird.f32 %v8397
    %vm8451 = vweird.f32 %v8445
    %vm8452 = vmor %vm8450, %vm8451
    %v8453 = vsel %vm8452, %v8445, %v8449
    %v8454 = vand.u32 2147483647, %v8397
    %vm8455 = vcmp.eq.f32.partialorder %v8454, 8.507059e+37
    %v8456 = vand.u32 %v8397, 2147483648
    %v8457 = vor.u32 1.1754944e-38, %v8456
    %v8458 = vsel %vm8455, %v8457, %v8453
    %v8459 = vmul.f32 1.0, %v8458
    %v8460 = vrcp.pop %v8398
    %v8461 = vmul.f32 %v8398, %v8460
    %v8462 = vsub.f32 1.0, %v8461
    %v8463 = vmul.f32 %v8460, %v8462
    %v8464 = vadd.f32 %v8460, %v8463
    %vm8465 = vweird.f32 %v8398
    %vm8466 = vweird.f32 %v8460
    %vm8467 = vmor %vm8465, %vm8466
    %v8468 = vsel %vm8467, %v8460, %v8464
    %v8469 = vand.u32 2147483647, %v8398
    %vm8470 = vcmp.eq.f32.partialorder %v8469, 8.507059e+37
    %v8471 = vand.u32 %v8398, 2147483648
    %v8472 = vor.u32 1.1754944e-38, %v8471
    %v8473 = vsel %vm8470, %v8472, %v8468
    %v8474 = vmul.f32 1.0, %v8473
    %v8475 = vrcp.pop %v8399
    %v8476 = vmul.f32 %v8399, %v8475
    %v8477 = vsub.f32 1.0, %v8476
    %v8478 = vmul.f32 %v8475, %v8477
    %v8479 = vadd.f32 %v8475, %v8478
    %vm8480 = vweird.f32 %v8399
    %vm8481 = vweird.f32 %v8475
    %vm8482 = vmor %vm8480, %vm8481
    %v8483 = vsel %vm8482, %v8475, %v8479
    %v8484 = vand.u32 2147483647, %v8399
    %vm8485 = vcmp.eq.f32.partialorder %v8484, 8.507059e+37
    %v8486 = vand.u32 %v8399, 2147483648
    %v8487 = vor.u32 1.1754944e-38, %v8486
    %v8488 = vsel %vm8485, %v8487, %v8483
    %v8489 = vmul.f32 1.0, %v8488
    %v8490 = vtanh.pop %v8374
    %v8491 = vtanh.pop %v8375
    %v8492 = vmul.f32 %v8444, %v8142
    %v8493 = vmul.f32 %v8459, %v8143
    %v8494 = vmul.f32 %v8414, %v8490
    %v8495 = vmul.f32 %v8429, %v8491
    %v8496 = vadd.f32 %v8492, %v8494
    %v8497 = vadd.f32 %v8493, %v8495
    %v8498 = vtanh.pop %v8496
    %v8499 = vtanh.pop %v8497
    %v8500 = vmul.f32 %v8474, %v8498
    %v8501 = vmul.f32 %v8489, %v8499
    %8502 = vst [vmem:[#allocation2 + $0x50] sm:$0xff] %v8500
    %8503 = vst [vmem:[#allocation2 + $0x58] sm:$0xff] %v8501
    %v8504 = vld [vmem:[#allocation3 + $0x180] sm:$0xff]
    %v8505 = vld [vmem:[#allocation3 + $0x188] sm:$0xff]
    %v8506 = vld [vmem:[#allocation3 + $0x190] sm:$0xff]
    %v8507 = vld [vmem:[#allocation3 + $0x198] sm:$0xff]
    %v8508 = vld [vmem:[#allocation3 + $0x1a0] sm:$0xff]
    %v8509 = vld [vmem:[#allocation3 + $0x1a8] sm:$0xff]
    %v8510 = vld [vmem:[#allocation3 + $0x1b0] sm:$0xff]
    %v8511 = vld [vmem:[#allocation3 + $0x1b8] sm:$0xff]
    %v8512 = vpack.c.bf16 %v8500, %v8500
    %v8513 = vpack.c.bf16 %v8501, %v8501
    %8514 = vmatpush.bf16.msra.mxu0 %v6190
    %8515 = vmatpush.bf16.msra.mxu0 %v6182
    %8516 = vmatpush.bf16.msra.mxu0 %v6174
    %8517 = vmatpush.bf16.msra.mxu0 %v6166
    %8518 = vmatpush.bf16.msra.mxu0 %v6158
    %8519 = vmatpush.bf16.msra.mxu0 %v6150
    %8520 = vmatpush.bf16.msra.mxu0 %v6142
    %8521 = vmatpush.bf16.msra.mxu0 %v6134
    %8522 = vmatmul.bf16.gmra.mxu0 %v8512
    %v8523 = vpop.f32.mrf.mxu0
    %v8524 = vadd.f32 0.0, %v8523
    %v8525 = vpop.f32.mrf.mxu0
    %8526 = vdwg.mxu0
    %8527 = vmatpush.bf16.msra.mxu0 %v6254
    %8528 = vmatpush.bf16.msra.mxu0 %v6246
    %8529 = vmatpush.bf16.msra.mxu0 %v6238
    %8530 = vmatpush.bf16.msra.mxu0 %v6230
    %8531 = vmatpush.bf16.msra.mxu0 %v6222
    %8532 = vmatpush.bf16.msra.mxu0 %v6214
    %8533 = vmatpush.bf16.msra.mxu0 %v6206
    %8534 = vmatpush.bf16.msra.mxu0 %v6198
    %8535 = vmatmul.bf16.gmra.mxu0 %v8513
    %v8536 = vpop.f32.mrf.mxu0
    %v8537 = vadd.f32 %v8524, %v8536
    %v8538 = vpop.f32.mrf.mxu0
    %8539 = vdwg.mxu0
    %8540 = vmatpush.bf16.msra.mxu0 %v6191
    %8541 = vmatpush.bf16.msra.mxu0 %v6183
    %8542 = vmatpush.bf16.msra.mxu0 %v6175
    %8543 = vmatpush.bf16.msra.mxu0 %v6167
    %8544 = vmatpush.bf16.msra.mxu0 %v6159
    %8545 = vmatpush.bf16.msra.mxu0 %v6151
    %8546 = vmatpush.bf16.msra.mxu0 %v6143
    %8547 = vmatpush.bf16.msra.mxu0 %v6135
    %8548 = vmatmul.bf16.gmra.mxu0 %v8512
    %v8549 = vpop.f32.mrf.mxu0
    %v8550 = vadd.f32 0.0, %v8549
    %v8551 = vpop.f32.mrf.mxu0
    %8552 = vdwg.mxu0
    %8553 = vmatpush.bf16.msra.mxu0 %v6255
    %8554 = vmatpush.bf16.msra.mxu0 %v6247
    %8555 = vmatpush.bf16.msra.mxu0 %v6239
    %8556 = vmatpush.bf16.msra.mxu0 %v6231
    %8557 = vmatpush.bf16.msra.mxu0 %v6223
    %8558 = vmatpush.bf16.msra.mxu0 %v6215
    %8559 = vmatpush.bf16.msra.mxu0 %v6207
    %8560 = vmatpush.bf16.msra.mxu0 %v6199
    %8561 = vmatmul.bf16.gmra.mxu0 %v8513
    %v8562 = vpop.f32.mrf.mxu0
    %v8563 = vadd.f32 %v8550, %v8562
    %v8564 = vpop.f32.mrf.mxu0
    %8565 = vdwg.mxu0
    %8566 = vmatpush.bf16.msra.mxu0 %v6192
    %8567 = vmatpush.bf16.msra.mxu0 %v6184
    %8568 = vmatpush.bf16.msra.mxu0 %v6176
    %8569 = vmatpush.bf16.msra.mxu0 %v6168
    %8570 = vmatpush.bf16.msra.mxu0 %v6160
    %8571 = vmatpush.bf16.msra.mxu0 %v6152
    %8572 = vmatpush.bf16.msra.mxu0 %v6144
    %8573 = vmatpush.bf16.msra.mxu0 %v6136
    %8574 = vmatmul.bf16.gmra.mxu0 %v8512
    %v8575 = vpop.f32.mrf.mxu0
    %v8576 = vadd.f32 0.0, %v8575
    %v8577 = vpop.f32.mrf.mxu0
    %8578 = vdwg.mxu0
    %8579 = vmatpush.bf16.msra.mxu0 %v6256
    %8580 = vmatpush.bf16.msra.mxu0 %v6248
    %8581 = vmatpush.bf16.msra.mxu0 %v6240
    %8582 = vmatpush.bf16.msra.mxu0 %v6232
    %8583 = vmatpush.bf16.msra.mxu0 %v6224
    %8584 = vmatpush.bf16.msra.mxu0 %v6216
    %8585 = vmatpush.bf16.msra.mxu0 %v6208
    %8586 = vmatpush.bf16.msra.mxu0 %v6200
    %8587 = vmatmul.bf16.gmra.mxu0 %v8513
    %v8588 = vpop.f32.mrf.mxu0
    %v8589 = vadd.f32 %v8576, %v8588
    %v8590 = vpop.f32.mrf.mxu0
    %8591 = vdwg.mxu0
    %8592 = vmatpush.bf16.msra.mxu0 %v6193
    %8593 = vmatpush.bf16.msra.mxu0 %v6185
    %8594 = vmatpush.bf16.msra.mxu0 %v6177
    %8595 = vmatpush.bf16.msra.mxu0 %v6169
    %8596 = vmatpush.bf16.msra.mxu0 %v6161
    %8597 = vmatpush.bf16.msra.mxu0 %v6153
    %8598 = vmatpush.bf16.msra.mxu0 %v6145
    %8599 = vmatpush.bf16.msra.mxu0 %v6137
    %8600 = vmatmul.bf16.gmra.mxu0 %v8512
    %v8601 = vpop.f32.mrf.mxu0
    %v8602 = vadd.f32 0.0, %v8601
    %v8603 = vpop.f32.mrf.mxu0
    %8604 = vdwg.mxu0
    %8605 = vmatpush.bf16.msra.mxu0 %v6257
    %8606 = vmatpush.bf16.msra.mxu0 %v6249
    %8607 = vmatpush.bf16.msra.mxu0 %v6241
    %8608 = vmatpush.bf16.msra.mxu0 %v6233
    %8609 = vmatpush.bf16.msra.mxu0 %v6225
    %8610 = vmatpush.bf16.msra.mxu0 %v6217
    %8611 = vmatpush.bf16.msra.mxu0 %v6209
    %8612 = vmatpush.bf16.msra.mxu0 %v6201
    %8613 = vmatmul.bf16.gmra.mxu0 %v8513
    %v8614 = vpop.f32.mrf.mxu0
    %v8615 = vadd.f32 %v8602, %v8614
    %v8616 = vpop.f32.mrf.mxu0
    %8617 = vdwg.mxu0
    %8618 = vmatpush.bf16.msra.mxu0 %v6194
    %8619 = vmatpush.bf16.msra.mxu0 %v6186
    %8620 = vmatpush.bf16.msra.mxu0 %v6178
    %8621 = vmatpush.bf16.msra.mxu0 %v6170
    %8622 = vmatpush.bf16.msra.mxu0 %v6162
    %8623 = vmatpush.bf16.msra.mxu0 %v6154
    %8624 = vmatpush.bf16.msra.mxu0 %v6146
    %8625 = vmatpush.bf16.msra.mxu0 %v6138
    %8626 = vmatmul.bf16.gmra.mxu0 %v8512
    %v8627 = vpop.f32.mrf.mxu0
    %v8628 = vadd.f32 0.0, %v8627
    %v8629 = vpop.f32.mrf.mxu0
    %8630 = vdwg.mxu0
    %8631 = vmatpush.bf16.msra.mxu0 %v6258
    %8632 = vmatpush.bf16.msra.mxu0 %v6250
    %8633 = vmatpush.bf16.msra.mxu0 %v6242
    %8634 = vmatpush.bf16.msra.mxu0 %v6234
    %8635 = vmatpush.bf16.msra.mxu0 %v6226
    %8636 = vmatpush.bf16.msra.mxu0 %v6218
    %8637 = vmatpush.bf16.msra.mxu0 %v6210
    %8638 = vmatpush.bf16.msra.mxu0 %v6202
    %8639 = vmatmul.bf16.gmra.mxu0 %v8513
    %v8640 = vpop.f32.mrf.mxu0
    %v8641 = vadd.f32 %v8628, %v8640
    %v8642 = vpop.f32.mrf.mxu0
    %8643 = vdwg.mxu0
    %8644 = vmatpush.bf16.msra.mxu0 %v6195
    %8645 = vmatpush.bf16.msra.mxu0 %v6187
    %8646 = vmatpush.bf16.msra.mxu0 %v6179
    %8647 = vmatpush.bf16.msra.mxu0 %v6171
    %8648 = vmatpush.bf16.msra.mxu0 %v6163
    %8649 = vmatpush.bf16.msra.mxu0 %v6155
    %8650 = vmatpush.bf16.msra.mxu0 %v6147
    %8651 = vmatpush.bf16.msra.mxu0 %v6139
    %8652 = vmatmul.bf16.gmra.mxu0 %v8512
    %v8653 = vpop.f32.mrf.mxu0
    %v8654 = vadd.f32 0.0, %v8653
    %v8655 = vpop.f32.mrf.mxu0
    %8656 = vdwg.mxu0
    %8657 = vmatpush.bf16.msra.mxu0 %v6259
    %8658 = vmatpush.bf16.msra.mxu0 %v6251
    %8659 = vmatpush.bf16.msra.mxu0 %v6243
    %8660 = vmatpush.bf16.msra.mxu0 %v6235
    %8661 = vmatpush.bf16.msra.mxu0 %v6227
    %8662 = vmatpush.bf16.msra.mxu0 %v6219
    %8663 = vmatpush.bf16.msra.mxu0 %v6211
    %8664 = vmatpush.bf16.msra.mxu0 %v6203
    %8665 = vmatmul.bf16.gmra.mxu0 %v8513
    %v8666 = vpop.f32.mrf.mxu0
    %v8667 = vadd.f32 %v8654, %v8666
    %v8668 = vpop.f32.mrf.mxu0
    %8669 = vdwg.mxu0
    %8670 = vmatpush.bf16.msra.mxu0 %v6196
    %8671 = vmatpush.bf16.msra.mxu0 %v6188
    %8672 = vmatpush.bf16.msra.mxu0 %v6180
    %8673 = vmatpush.bf16.msra.mxu0 %v6172
    %8674 = vmatpush.bf16.msra.mxu0 %v6164
    %8675 = vmatpush.bf16.msra.mxu0 %v6156
    %8676 = vmatpush.bf16.msra.mxu0 %v6148
    %8677 = vmatpush.bf16.msra.mxu0 %v6140
    %8678 = vmatmul.bf16.gmra.mxu0 %v8512
    %v8679 = vpop.f32.mrf.mxu0
    %v8680 = vadd.f32 0.0, %v8679
    %v8681 = vpop.f32.mrf.mxu0
    %8682 = vdwg.mxu0
    %8683 = vmatpush.bf16.msra.mxu0 %v6260
    %8684 = vmatpush.bf16.msra.mxu0 %v6252
    %8685 = vmatpush.bf16.msra.mxu0 %v6244
    %8686 = vmatpush.bf16.msra.mxu0 %v6236
    %8687 = vmatpush.bf16.msra.mxu0 %v6228
    %8688 = vmatpush.bf16.msra.mxu0 %v6220
    %8689 = vmatpush.bf16.msra.mxu0 %v6212
    %8690 = vmatpush.bf16.msra.mxu0 %v6204
    %8691 = vmatmul.bf16.gmra.mxu0 %v8513
    %v8692 = vpop.f32.mrf.mxu0
    %v8693 = vadd.f32 %v8680, %v8692
    %v8694 = vpop.f32.mrf.mxu0
    %8695 = vdwg.mxu0
    %8696 = vmatpush.bf16.msra.mxu0 %v6197
    %8697 = vmatpush.bf16.msra.mxu0 %v6189
    %8698 = vmatpush.bf16.msra.mxu0 %v6181
    %8699 = vmatpush.bf16.msra.mxu0 %v6173
    %8700 = vmatpush.bf16.msra.mxu0 %v6165
    %8701 = vmatpush.bf16.msra.mxu0 %v6157
    %8702 = vmatpush.bf16.msra.mxu0 %v6149
    %8703 = vmatpush.bf16.msra.mxu0 %v6141
    %8704 = vmatmul.bf16.gmra.mxu0 %v8512
    %v8705 = vpop.f32.mrf.mxu0
    %v8706 = vadd.f32 0.0, %v8705
    %v8707 = vpop.f32.mrf.mxu0
    %8708 = vdwg.mxu0
    %8709 = vmatpush.bf16.msra.mxu0 %v6261
    %8710 = vmatpush.bf16.msra.mxu0 %v6253
    %8711 = vmatpush.bf16.msra.mxu0 %v6245
    %8712 = vmatpush.bf16.msra.mxu0 %v6237
    %8713 = vmatpush.bf16.msra.mxu0 %v6229
    %8714 = vmatpush.bf16.msra.mxu0 %v6221
    %8715 = vmatpush.bf16.msra.mxu0 %v6213
    %8716 = vmatpush.bf16.msra.mxu0 %v6205
    %8717 = vmatmul.bf16.gmra.mxu0 %v8513
    %v8718 = vpop.f32.mrf.mxu0
    %v8719 = vadd.f32 %v8706, %v8718
    %v8720 = vpop.f32.mrf.mxu0
    %8721 = vdwg.mxu0
    %v8722 = vadd.f32 %v8504, %v8537
    %v8723 = vadd.f32 %v8505, %v8563
    %v8724 = vadd.f32 %v8506, %v8589
    %v8725 = vadd.f32 %v8507, %v8615
    %v8726 = vadd.f32 %v8508, %v8641
    %v8727 = vadd.f32 %v8509, %v8667
    %v8728 = vadd.f32 %v8510, %v8693
    %v8729 = vadd.f32 %v8511, %v8719
    %v8730 = vxor.u32 %v8722, 2147483648
    %v8731 = vxor.u32 %v8723, 2147483648
    %v8732 = vxor.u32 %v8724, 2147483648
    %v8733 = vxor.u32 %v8725, 2147483648
    %v8734 = vxor.u32 %v8726, 2147483648
    %v8735 = vxor.u32 %v8727, 2147483648
    %v8736 = vmul.f32 %v8730, 1.442695
    %v8737 = vpow.pop %v8736
    %v8738 = vmul.f32 %v8731, 1.442695
    %v8739 = vpow.pop %v8738
    %v8740 = vmul.f32 %v8732, 1.442695
    %v8741 = vpow.pop %v8740
    %v8742 = vmul.f32 %v8733, 1.442695
    %v8743 = vpow.pop %v8742
    %v8744 = vmul.f32 %v8734, 1.442695
    %v8745 = vpow.pop %v8744
    %v8746 = vmul.f32 %v8735, 1.442695
    %v8747 = vpow.pop %v8746
    %v8748 = vadd.f32 %v8737, 1.0
    %v8749 = vadd.f32 %v8739, 1.0
    %v8750 = vadd.f32 %v8741, 1.0
    %v8751 = vadd.f32 %v8743, 1.0
    %v8752 = vadd.f32 %v8745, 1.0
    %v8753 = vadd.f32 %v8747, 1.0
    %v8754 = vrcp.pop %v8748
    %v8755 = vmul.f32 %v8748, %v8754
    %v8756 = vsub.f32 1.0, %v8755
    %v8757 = vmul.f32 %v8754, %v8756
    %v8758 = vadd.f32 %v8754, %v8757
    %vm8759 = vweird.f32 %v8748
    %vm8760 = vweird.f32 %v8754
    %vm8761 = vmor %vm8759, %vm8760
    %v8762 = vsel %vm8761, %v8754, %v8758
    %v8763 = vand.u32 2147483647, %v8748
    %vm8764 = vcmp.eq.f32.partialorder %v8763, 8.507059e+37
    %v8765 = vand.u32 %v8748, 2147483648
    %v8766 = vor.u32 1.1754944e-38, %v8765
    %v8767 = vsel %vm8764, %v8766, %v8762
    %v8768 = vmul.f32 1.0, %v8767
    %v8769 = vrcp.pop %v8749
    %v8770 = vmul.f32 %v8749, %v8769
    %v8771 = vsub.f32 1.0, %v8770
    %v8772 = vmul.f32 %v8769, %v8771
    %v8773 = vadd.f32 %v8769, %v8772
    %vm8774 = vweird.f32 %v8749
    %vm8775 = vweird.f32 %v8769
    %vm8776 = vmor %vm8774, %vm8775
    %v8777 = vsel %vm8776, %v8769, %v8773
    %v8778 = vand.u32 2147483647, %v8749
    %vm8779 = vcmp.eq.f32.partialorder %v8778, 8.507059e+37
    %v8780 = vand.u32 %v8749, 2147483648
    %v8781 = vor.u32 1.1754944e-38, %v8780
    %v8782 = vsel %vm8779, %v8781, %v8777
    %v8783 = vmul.f32 1.0, %v8782
    %v8784 = vrcp.pop %v8750
    %v8785 = vmul.f32 %v8750, %v8784
    %v8786 = vsub.f32 1.0, %v8785
    %v8787 = vmul.f32 %v8784, %v8786
    %v8788 = vadd.f32 %v8784, %v8787
    %vm8789 = vweird.f32 %v8750
    %vm8790 = vweird.f32 %v8784
    %vm8791 = vmor %vm8789, %vm8790
    %v8792 = vsel %vm8791, %v8784, %v8788
    %v8793 = vand.u32 2147483647, %v8750
    %vm8794 = vcmp.eq.f32.partialorder %v8793, 8.507059e+37
    %v8795 = vand.u32 %v8750, 2147483648
    %v8796 = vor.u32 1.1754944e-38, %v8795
    %v8797 = vsel %vm8794, %v8796, %v8792
    %v8798 = vmul.f32 1.0, %v8797
    %v8799 = vrcp.pop %v8751
    %v8800 = vmul.f32 %v8751, %v8799
    %v8801 = vsub.f32 1.0, %v8800
    %v8802 = vmul.f32 %v8799, %v8801
    %v8803 = vadd.f32 %v8799, %v8802
    %vm8804 = vweird.f32 %v8751
    %vm8805 = vweird.f32 %v8799
    %vm8806 = vmor %vm8804, %vm8805
    %v8807 = vsel %vm8806, %v8799, %v8803
    %v8808 = vand.u32 2147483647, %v8751
    %vm8809 = vcmp.eq.f32.partialorder %v8808, 8.507059e+37
    %v8810 = vand.u32 %v8751, 2147483648
    %v8811 = vor.u32 1.1754944e-38, %v8810
    %v8812 = vsel %vm8809, %v8811, %v8807
    %v8813 = vmul.f32 1.0, %v8812
    %v8814 = vrcp.pop %v8752
    %v8815 = vmul.f32 %v8752, %v8814
    %v8816 = vsub.f32 1.0, %v8815
    %v8817 = vmul.f32 %v8814, %v8816
    %v8818 = vadd.f32 %v8814, %v8817
    %vm8819 = vweird.f32 %v8752
    %vm8820 = vweird.f32 %v8814
    %vm8821 = vmor %vm8819, %vm8820
    %v8822 = vsel %vm8821, %v8814, %v8818
    %v8823 = vand.u32 2147483647, %v8752
    %vm8824 = vcmp.eq.f32.partialorder %v8823, 8.507059e+37
    %v8825 = vand.u32 %v8752, 2147483648
    %v8826 = vor.u32 1.1754944e-38, %v8825
    %v8827 = vsel %vm8824, %v8826, %v8822
    %v8828 = vmul.f32 1.0, %v8827
    %v8829 = vrcp.pop %v8753
    %v8830 = vmul.f32 %v8753, %v8829
    %v8831 = vsub.f32 1.0, %v8830
    %v8832 = vmul.f32 %v8829, %v8831
    %v8833 = vadd.f32 %v8829, %v8832
    %vm8834 = vweird.f32 %v8753
    %vm8835 = vweird.f32 %v8829
    %vm8836 = vmor %vm8834, %vm8835
    %v8837 = vsel %vm8836, %v8829, %v8833
    %v8838 = vand.u32 2147483647, %v8753
    %vm8839 = vcmp.eq.f32.partialorder %v8838, 8.507059e+37
    %v8840 = vand.u32 %v8753, 2147483648
    %v8841 = vor.u32 1.1754944e-38, %v8840
    %v8842 = vsel %vm8839, %v8841, %v8837
    %v8843 = vmul.f32 1.0, %v8842
    %v8844 = vtanh.pop %v8728
    %v8845 = vtanh.pop %v8729
    %v8846 = vmul.f32 %v8798, %v8496
    %v8847 = vmul.f32 %v8813, %v8497
    %v8848 = vmul.f32 %v8768, %v8844
    %v8849 = vmul.f32 %v8783, %v8845
    %v8850 = vadd.f32 %v8846, %v8848
    %v8851 = vadd.f32 %v8847, %v8849
    %v8852 = vtanh.pop %v8850
    %v8853 = vtanh.pop %v8851
    %v8854 = vmul.f32 %v8828, %v8852
    %v8855 = vmul.f32 %v8843, %v8853
    %8856 = vst [vmem:[#allocation2 + $0x60] sm:$0xff] %v8854
    %8857 = vst [vmem:[#allocation2 + $0x68] sm:$0xff] %v8855
    %v8858 = vld [vmem:[#allocation3 + $0x1c0] sm:$0xff]
    %v8859 = vld [vmem:[#allocation3 + $0x1c8] sm:$0xff]
    %v8860 = vld [vmem:[#allocation3 + $0x1d0] sm:$0xff]
    %v8861 = vld [vmem:[#allocation3 + $0x1d8] sm:$0xff]
    %v8862 = vld [vmem:[#allocation3 + $0x1e0] sm:$0xff]
    %v8863 = vld [vmem:[#allocation3 + $0x1e8] sm:$0xff]
    %v8864 = vld [vmem:[#allocation3 + $0x1f0] sm:$0xff]
    %v8865 = vld [vmem:[#allocation3 + $0x1f8] sm:$0xff]
    %v8866 = vpack.c.bf16 %v8854, %v8854
    %v8867 = vpack.c.bf16 %v8855, %v8855
    %8868 = vmatpush.bf16.msra.mxu0 %v6190
    %8869 = vmatpush.bf16.msra.mxu0 %v6182
    %8870 = vmatpush.bf16.msra.mxu0 %v6174
    %8871 = vmatpush.bf16.msra.mxu0 %v6166
    %8872 = vmatpush.bf16.msra.mxu0 %v6158
    %8873 = vmatpush.bf16.msra.mxu0 %v6150
    %8874 = vmatpush.bf16.msra.mxu0 %v6142
    %8875 = vmatpush.bf16.msra.mxu0 %v6134
    %8876 = vmatmul.bf16.gmra.mxu0 %v8866
    %v8877 = vpop.f32.mrf.mxu0
    %v8878 = vadd.f32 0.0, %v8877
    %v8879 = vpop.f32.mrf.mxu0
    %8880 = vdwg.mxu0
    %8881 = vmatpush.bf16.msra.mxu0 %v6254
    %8882 = vmatpush.bf16.msra.mxu0 %v6246
    %8883 = vmatpush.bf16.msra.mxu0 %v6238
    %8884 = vmatpush.bf16.msra.mxu0 %v6230
    %8885 = vmatpush.bf16.msra.mxu0 %v6222
    %8886 = vmatpush.bf16.msra.mxu0 %v6214
    %8887 = vmatpush.bf16.msra.mxu0 %v6206
    %8888 = vmatpush.bf16.msra.mxu0 %v6198
    %8889 = vmatmul.bf16.gmra.mxu0 %v8867
    %v8890 = vpop.f32.mrf.mxu0
    %v8891 = vadd.f32 %v8878, %v8890
    %v8892 = vpop.f32.mrf.mxu0
    %8893 = vdwg.mxu0
    %8894 = vmatpush.bf16.msra.mxu0 %v6191
    %8895 = vmatpush.bf16.msra.mxu0 %v6183
    %8896 = vmatpush.bf16.msra.mxu0 %v6175
    %8897 = vmatpush.bf16.msra.mxu0 %v6167
    %8898 = vmatpush.bf16.msra.mxu0 %v6159
    %8899 = vmatpush.bf16.msra.mxu0 %v6151
    %8900 = vmatpush.bf16.msra.mxu0 %v6143
    %8901 = vmatpush.bf16.msra.mxu0 %v6135
    %8902 = vmatmul.bf16.gmra.mxu0 %v8866
    %v8903 = vpop.f32.mrf.mxu0
    %v8904 = vadd.f32 0.0, %v8903
    %v8905 = vpop.f32.mrf.mxu0
    %8906 = vdwg.mxu0
    %8907 = vmatpush.bf16.msra.mxu0 %v6255
    %8908 = vmatpush.bf16.msra.mxu0 %v6247
    %8909 = vmatpush.bf16.msra.mxu0 %v6239
    %8910 = vmatpush.bf16.msra.mxu0 %v6231
    %8911 = vmatpush.bf16.msra.mxu0 %v6223
    %8912 = vmatpush.bf16.msra.mxu0 %v6215
    %8913 = vmatpush.bf16.msra.mxu0 %v6207
    %8914 = vmatpush.bf16.msra.mxu0 %v6199
    %8915 = vmatmul.bf16.gmra.mxu0 %v8867
    %v8916 = vpop.f32.mrf.mxu0
    %v8917 = vadd.f32 %v8904, %v8916
    %v8918 = vpop.f32.mrf.mxu0
    %8919 = vdwg.mxu0
    %8920 = vmatpush.bf16.msra.mxu0 %v6192
    %8921 = vmatpush.bf16.msra.mxu0 %v6184
    %8922 = vmatpush.bf16.msra.mxu0 %v6176
    %8923 = vmatpush.bf16.msra.mxu0 %v6168
    %8924 = vmatpush.bf16.msra.mxu0 %v6160
    %8925 = vmatpush.bf16.msra.mxu0 %v6152
    %8926 = vmatpush.bf16.msra.mxu0 %v6144
    %8927 = vmatpush.bf16.msra.mxu0 %v6136
    %8928 = vmatmul.bf16.gmra.mxu0 %v8866
    %v8929 = vpop.f32.mrf.mxu0
    %v8930 = vadd.f32 0.0, %v8929
    %v8931 = vpop.f32.mrf.mxu0
    %8932 = vdwg.mxu0
    %8933 = vmatpush.bf16.msra.mxu0 %v6256
    %8934 = vmatpush.bf16.msra.mxu0 %v6248
    %8935 = vmatpush.bf16.msra.mxu0 %v6240
    %8936 = vmatpush.bf16.msra.mxu0 %v6232
    %8937 = vmatpush.bf16.msra.mxu0 %v6224
    %8938 = vmatpush.bf16.msra.mxu0 %v6216
    %8939 = vmatpush.bf16.msra.mxu0 %v6208
    %8940 = vmatpush.bf16.msra.mxu0 %v6200
    %8941 = vmatmul.bf16.gmra.mxu0 %v8867
    %v8942 = vpop.f32.mrf.mxu0
    %v8943 = vadd.f32 %v8930, %v8942
    %v8944 = vpop.f32.mrf.mxu0
    %8945 = vdwg.mxu0
    %8946 = vmatpush.bf16.msra.mxu0 %v6193
    %8947 = vmatpush.bf16.msra.mxu0 %v6185
    %8948 = vmatpush.bf16.msra.mxu0 %v6177
    %8949 = vmatpush.bf16.msra.mxu0 %v6169
    %8950 = vmatpush.bf16.msra.mxu0 %v6161
    %8951 = vmatpush.bf16.msra.mxu0 %v6153
    %8952 = vmatpush.bf16.msra.mxu0 %v6145
    %8953 = vmatpush.bf16.msra.mxu0 %v6137
    %8954 = vmatmul.bf16.gmra.mxu0 %v8866
    %v8955 = vpop.f32.mrf.mxu0
    %v8956 = vadd.f32 0.0, %v8955
    %v8957 = vpop.f32.mrf.mxu0
    %8958 = vdwg.mxu0
    %8959 = vmatpush.bf16.msra.mxu0 %v6257
    %8960 = vmatpush.bf16.msra.mxu0 %v6249
    %8961 = vmatpush.bf16.msra.mxu0 %v6241
    %8962 = vmatpush.bf16.msra.mxu0 %v6233
    %8963 = vmatpush.bf16.msra.mxu0 %v6225
    %8964 = vmatpush.bf16.msra.mxu0 %v6217
    %8965 = vmatpush.bf16.msra.mxu0 %v6209
    %8966 = vmatpush.bf16.msra.mxu0 %v6201
    %8967 = vmatmul.bf16.gmra.mxu0 %v8867
    %v8968 = vpop.f32.mrf.mxu0
    %v8969 = vadd.f32 %v8956, %v8968
    %v8970 = vpop.f32.mrf.mxu0
    %8971 = vdwg.mxu0
    %8972 = vmatpush.bf16.msra.mxu0 %v6194
    %8973 = vmatpush.bf16.msra.mxu0 %v6186
    %8974 = vmatpush.bf16.msra.mxu0 %v6178
    %8975 = vmatpush.bf16.msra.mxu0 %v6170
    %8976 = vmatpush.bf16.msra.mxu0 %v6162
    %8977 = vmatpush.bf16.msra.mxu0 %v6154
    %8978 = vmatpush.bf16.msra.mxu0 %v6146
    %8979 = vmatpush.bf16.msra.mxu0 %v6138
    %8980 = vmatmul.bf16.gmra.mxu0 %v8866
    %v8981 = vpop.f32.mrf.mxu0
    %v8982 = vadd.f32 0.0, %v8981
    %v8983 = vpop.f32.mrf.mxu0
    %8984 = vdwg.mxu0
    %8985 = vmatpush.bf16.msra.mxu0 %v6258
    %8986 = vmatpush.bf16.msra.mxu0 %v6250
    %8987 = vmatpush.bf16.msra.mxu0 %v6242
    %8988 = vmatpush.bf16.msra.mxu0 %v6234
    %8989 = vmatpush.bf16.msra.mxu0 %v6226
    %8990 = vmatpush.bf16.msra.mxu0 %v6218
    %8991 = vmatpush.bf16.msra.mxu0 %v6210
    %8992 = vmatpush.bf16.msra.mxu0 %v6202
    %8993 = vmatmul.bf16.gmra.mxu0 %v8867
    %v8994 = vpop.f32.mrf.mxu0
    %v8995 = vadd.f32 %v8982, %v8994
    %v8996 = vpop.f32.mrf.mxu0
    %8997 = vdwg.mxu0
    %8998 = vmatpush.bf16.msra.mxu0 %v6195
    %8999 = vmatpush.bf16.msra.mxu0 %v6187
    %9000 = vmatpush.bf16.msra.mxu0 %v6179
    %9001 = vmatpush.bf16.msra.mxu0 %v6171
    %9002 = vmatpush.bf16.msra.mxu0 %v6163
    %9003 = vmatpush.bf16.msra.mxu0 %v6155
    %9004 = vmatpush.bf16.msra.mxu0 %v6147
    %9005 = vmatpush.bf16.msra.mxu0 %v6139
    %9006 = vmatmul.bf16.gmra.mxu0 %v8866
    %v9007 = vpop.f32.mrf.mxu0
    %v9008 = vadd.f32 0.0, %v9007
    %v9009 = vpop.f32.mrf.mxu0
    %9010 = vdwg.mxu0
    %9011 = vmatpush.bf16.msra.mxu0 %v6259
    %9012 = vmatpush.bf16.msra.mxu0 %v6251
    %9013 = vmatpush.bf16.msra.mxu0 %v6243
    %9014 = vmatpush.bf16.msra.mxu0 %v6235
    %9015 = vmatpush.bf16.msra.mxu0 %v6227
    %9016 = vmatpush.bf16.msra.mxu0 %v6219
    %9017 = vmatpush.bf16.msra.mxu0 %v6211
    %9018 = vmatpush.bf16.msra.mxu0 %v6203
    %9019 = vmatmul.bf16.gmra.mxu0 %v8867
    %v9020 = vpop.f32.mrf.mxu0
    %v9021 = vadd.f32 %v9008, %v9020
    %v9022 = vpop.f32.mrf.mxu0
    %9023 = vdwg.mxu0
    %9024 = vmatpush.bf16.msra.mxu0 %v6196
    %9025 = vmatpush.bf16.msra.mxu0 %v6188
    %9026 = vmatpush.bf16.msra.mxu0 %v6180
    %9027 = vmatpush.bf16.msra.mxu0 %v6172
    %9028 = vmatpush.bf16.msra.mxu0 %v6164
    %9029 = vmatpush.bf16.msra.mxu0 %v6156
    %9030 = vmatpush.bf16.msra.mxu0 %v6148
    %9031 = vmatpush.bf16.msra.mxu0 %v6140
    %9032 = vmatmul.bf16.gmra.mxu0 %v8866
    %v9033 = vpop.f32.mrf.mxu0
    %v9034 = vadd.f32 0.0, %v9033
    %v9035 = vpop.f32.mrf.mxu0
    %9036 = vdwg.mxu0
    %9037 = vmatpush.bf16.msra.mxu0 %v6260
    %9038 = vmatpush.bf16.msra.mxu0 %v6252
    %9039 = vmatpush.bf16.msra.mxu0 %v6244
    %9040 = vmatpush.bf16.msra.mxu0 %v6236
    %9041 = vmatpush.bf16.msra.mxu0 %v6228
    %9042 = vmatpush.bf16.msra.mxu0 %v6220
    %9043 = vmatpush.bf16.msra.mxu0 %v6212
    %9044 = vmatpush.bf16.msra.mxu0 %v6204
    %9045 = vmatmul.bf16.gmra.mxu0 %v8867
    %v9046 = vpop.f32.mrf.mxu0
    %v9047 = vadd.f32 %v9034, %v9046
    %v9048 = vpop.f32.mrf.mxu0
    %9049 = vdwg.mxu0
    %9050 = vmatpush.bf16.msra.mxu0 %v6197
    %9051 = vmatpush.bf16.msra.mxu0 %v6189
    %9052 = vmatpush.bf16.msra.mxu0 %v6181
    %9053 = vmatpush.bf16.msra.mxu0 %v6173
    %9054 = vmatpush.bf16.msra.mxu0 %v6165
    %9055 = vmatpush.bf16.msra.mxu0 %v6157
    %9056 = vmatpush.bf16.msra.mxu0 %v6149
    %9057 = vmatpush.bf16.msra.mxu0 %v6141
    %9058 = vmatmul.bf16.gmra.mxu0 %v8866
    %v9059 = vpop.f32.mrf.mxu0
    %v9060 = vadd.f32 0.0, %v9059
    %v9061 = vpop.f32.mrf.mxu0
    %9062 = vdwg.mxu0
    %9063 = vmatpush.bf16.msra.mxu0 %v6261
    %9064 = vmatpush.bf16.msra.mxu0 %v6253
    %9065 = vmatpush.bf16.msra.mxu0 %v6245
    %9066 = vmatpush.bf16.msra.mxu0 %v6237
    %9067 = vmatpush.bf16.msra.mxu0 %v6229
    %9068 = vmatpush.bf16.msra.mxu0 %v6221
    %9069 = vmatpush.bf16.msra.mxu0 %v6213
    %9070 = vmatpush.bf16.msra.mxu0 %v6205
    %9071 = vmatmul.bf16.gmra.mxu0 %v8867
    %v9072 = vpop.f32.mrf.mxu0
    %v9073 = vadd.f32 %v9060, %v9072
    %v9074 = vpop.f32.mrf.mxu0
    %9075 = vdwg.mxu0
    %v9076 = vadd.f32 %v8858, %v8891
    %v9077 = vadd.f32 %v8859, %v8917
    %v9078 = vadd.f32 %v8860, %v8943
    %v9079 = vadd.f32 %v8861, %v8969
    %v9080 = vadd.f32 %v8862, %v8995
    %v9081 = vadd.f32 %v8863, %v9021
    %v9082 = vadd.f32 %v8864, %v9047
    %v9083 = vadd.f32 %v8865, %v9073
    %v9084 = vxor.u32 %v9076, 2147483648
    %v9085 = vxor.u32 %v9077, 2147483648
    %v9086 = vxor.u32 %v9078, 2147483648
    %v9087 = vxor.u32 %v9079, 2147483648
    %v9088 = vxor.u32 %v9080, 2147483648
    %v9089 = vxor.u32 %v9081, 2147483648
    %v9090 = vmul.f32 %v9084, 1.442695
    %v9091 = vpow.pop %v9090
    %v9092 = vmul.f32 %v9085, 1.442695
    %v9093 = vpow.pop %v9092
    %v9094 = vmul.f32 %v9086, 1.442695
    %v9095 = vpow.pop %v9094
    %v9096 = vmul.f32 %v9087, 1.442695
    %v9097 = vpow.pop %v9096
    %v9098 = vmul.f32 %v9088, 1.442695
    %v9099 = vpow.pop %v9098
    %v9100 = vmul.f32 %v9089, 1.442695
    %v9101 = vpow.pop %v9100
    %v9102 = vadd.f32 %v9091, 1.0
    %v9103 = vadd.f32 %v9093, 1.0
    %v9104 = vadd.f32 %v9095, 1.0
    %v9105 = vadd.f32 %v9097, 1.0
    %v9106 = vadd.f32 %v9099, 1.0
    %v9107 = vadd.f32 %v9101, 1.0
    %v9108 = vrcp.pop %v9102
    %v9109 = vmul.f32 %v9102, %v9108
    %v9110 = vsub.f32 1.0, %v9109
    %v9111 = vmul.f32 %v9108, %v9110
    %v9112 = vadd.f32 %v9108, %v9111
    %vm9113 = vweird.f32 %v9102
    %vm9114 = vweird.f32 %v9108
    %vm9115 = vmor %vm9113, %vm9114
    %v9116 = vsel %vm9115, %v9108, %v9112
    %v9117 = vand.u32 2147483647, %v9102
    %vm9118 = vcmp.eq.f32.partialorder %v9117, 8.507059e+37
    %v9119 = vand.u32 %v9102, 2147483648
    %v9120 = vor.u32 1.1754944e-38, %v9119
    %v9121 = vsel %vm9118, %v9120, %v9116
    %v9122 = vmul.f32 1.0, %v9121
    %v9123 = vrcp.pop %v9103
    %v9124 = vmul.f32 %v9103, %v9123
    %v9125 = vsub.f32 1.0, %v9124
    %v9126 = vmul.f32 %v9123, %v9125
    %v9127 = vadd.f32 %v9123, %v9126
    %vm9128 = vweird.f32 %v9103
    %vm9129 = vweird.f32 %v9123
    %vm9130 = vmor %vm9128, %vm9129
    %v9131 = vsel %vm9130, %v9123, %v9127
    %v9132 = vand.u32 2147483647, %v9103
    %vm9133 = vcmp.eq.f32.partialorder %v9132, 8.507059e+37
    %v9134 = vand.u32 %v9103, 2147483648
    %v9135 = vor.u32 1.1754944e-38, %v9134
    %v9136 = vsel %vm9133, %v9135, %v9131
    %v9137 = vmul.f32 1.0, %v9136
    %v9138 = vrcp.pop %v9104
    %v9139 = vmul.f32 %v9104, %v9138
    %v9140 = vsub.f32 1.0, %v9139
    %v9141 = vmul.f32 %v9138, %v9140
    %v9142 = vadd.f32 %v9138, %v9141
    %vm9143 = vweird.f32 %v9104
    %vm9144 = vweird.f32 %v9138
    %vm9145 = vmor %vm9143, %vm9144
    %v9146 = vsel %vm9145, %v9138, %v9142
    %v9147 = vand.u32 2147483647, %v9104
    %vm9148 = vcmp.eq.f32.partialorder %v9147, 8.507059e+37
    %v9149 = vand.u32 %v9104, 2147483648
    %v9150 = vor.u32 1.1754944e-38, %v9149
    %v9151 = vsel %vm9148, %v9150, %v9146
    %v9152 = vmul.f32 1.0, %v9151
    %v9153 = vrcp.pop %v9105
    %v9154 = vmul.f32 %v9105, %v9153
    %v9155 = vsub.f32 1.0, %v9154
    %v9156 = vmul.f32 %v9153, %v9155
    %v9157 = vadd.f32 %v9153, %v9156
    %vm9158 = vweird.f32 %v9105
    %vm9159 = vweird.f32 %v9153
    %vm9160 = vmor %vm9158, %vm9159
    %v9161 = vsel %vm9160, %v9153, %v9157
    %v9162 = vand.u32 2147483647, %v9105
    %vm9163 = vcmp.eq.f32.partialorder %v9162, 8.507059e+37
    %v9164 = vand.u32 %v9105, 2147483648
    %v9165 = vor.u32 1.1754944e-38, %v9164
    %v9166 = vsel %vm9163, %v9165, %v9161
    %v9167 = vmul.f32 1.0, %v9166
    %v9168 = vrcp.pop %v9106
    %v9169 = vmul.f32 %v9106, %v9168
    %v9170 = vsub.f32 1.0, %v9169
    %v9171 = vmul.f32 %v9168, %v9170
    %v9172 = vadd.f32 %v9168, %v9171
    %vm9173 = vweird.f32 %v9106
    %vm9174 = vweird.f32 %v9168
    %vm9175 = vmor %vm9173, %vm9174
    %v9176 = vsel %vm9175, %v9168, %v9172
    %v9177 = vand.u32 2147483647, %v9106
    %vm9178 = vcmp.eq.f32.partialorder %v9177, 8.507059e+37
    %v9179 = vand.u32 %v9106, 2147483648
    %v9180 = vor.u32 1.1754944e-38, %v9179
    %v9181 = vsel %vm9178, %v9180, %v9176
    %v9182 = vmul.f32 1.0, %v9181
    %v9183 = vrcp.pop %v9107
    %v9184 = vmul.f32 %v9107, %v9183
    %v9185 = vsub.f32 1.0, %v9184
    %v9186 = vmul.f32 %v9183, %v9185
    %v9187 = vadd.f32 %v9183, %v9186
    %vm9188 = vweird.f32 %v9107
    %vm9189 = vweird.f32 %v9183
    %vm9190 = vmor %vm9188, %vm9189
    %v9191 = vsel %vm9190, %v9183, %v9187
    %v9192 = vand.u32 2147483647, %v9107
    %vm9193 = vcmp.eq.f32.partialorder %v9192, 8.507059e+37
    %v9194 = vand.u32 %v9107, 2147483648
    %v9195 = vor.u32 1.1754944e-38, %v9194
    %v9196 = vsel %vm9193, %v9195, %v9191
    %v9197 = vmul.f32 1.0, %v9196
    %v9198 = vtanh.pop %v9082
    %v9199 = vtanh.pop %v9083
    %v9200 = vmul.f32 %v9152, %v8850
    %v9201 = vmul.f32 %v9167, %v8851
    %v9202 = vmul.f32 %v9122, %v9198
    %v9203 = vmul.f32 %v9137, %v9199
    %v9204 = vadd.f32 %v9200, %v9202
    %v9205 = vadd.f32 %v9201, %v9203
    %v9206 = vtanh.pop %v9204
    %v9207 = vtanh.pop %v9205
    %v9208 = vmul.f32 %v9182, %v9206
    %v9209 = vmul.f32 %v9197, %v9207
    %9210 = vst [vmem:[#allocation2 + $0x70] sm:$0xff] %v9208
    %9211 = vst [vmem:[#allocation2 + $0x78] sm:$0xff] %v9209
    %s9212 = scalar_lea.vmem [#allocation14], 16
    %9213 = vst [vmem:[%s9212] sm:$0xff] %v9208
    %9214 = vst [vmem:[%s9212 + $0x8] sm:$0xff] %v9209
    %s9215 = scalar_lea.vmem [#allocation16], 16
    %9216 = vst [vmem:[%s9215] sm:$0xff] %v9204
    %9217 = vst [vmem:[%s9215 + $0x8] sm:$0xff] %v9205
    %s9218 = smul.u32 %s4259, 1
    %s9219 = sshll.u32 %s9218, 4
    %9220 = dma.done %s602, %s9219
    %s9221 = smul.u32 1, 1
    %s9222 = sshll.u32 %s9221, 4
    %9223 = dma.done %s616, %s9222
    %v9224 = vld [vmem:[#allocation2] sm:$0xff]
    %v9225 = vld [vmem:[#allocation2 + $0x8] sm:$0xff]
    %v9226 = vld [vmem:[#allocation2 + $0x10] sm:$0xff]
    %v9227 = vld [vmem:[#allocation2 + $0x18] sm:$0xff]
    %v9228 = vld [vmem:[#allocation2 + $0x20] sm:$0xff]
    %v9229 = vld [vmem:[#allocation2 + $0x28] sm:$0xff]
    %v9230 = vld [vmem:[#allocation2 + $0x30] sm:$0xff]
    %v9231 = vld [vmem:[#allocation2 + $0x38] sm:$0xff]
    %v9232 = vld [vmem:[#allocation2 + $0x40] sm:$0xff]
    %v9233 = vld [vmem:[#allocation2 + $0x48] sm:$0xff]
    %v9234 = vld [vmem:[#allocation2 + $0x50] sm:$0xff]
    %v9235 = vld [vmem:[#allocation2 + $0x58] sm:$0xff]
    %v9236 = vld [vmem:[#allocation2 + $0x60] sm:$0xff]
    %v9237 = vld [vmem:[#allocation2 + $0x68] sm:$0xff]
    %v9238 = vld [vmem:[#allocation2 + $0x70] sm:$0xff]
    %v9239 = vld [vmem:[#allocation2 + $0x78] sm:$0xff]
    %v9240 = vpack.c.bf16 %v9226, %v9224
    %v9241 = vpack.c.bf16 %v9227, %v9225
    %v9242 = vpack.c.bf16 %v9230, %v9228
    %v9243 = vpack.c.bf16 %v9231, %v9229
    %v9244 = vpack.c.bf16 %v9234, %v9232
    %v9245 = vpack.c.bf16 %v9235, %v9233
    %v9246 = vpack.c.bf16 %v9238, %v9236
    %v9247 = vpack.c.bf16 %v9239, %v9237
    %v9248 = vld [vmem:[#allocation7] sm:$0xf]
    %v9249 = vld [vmem:[#allocation7 + $0x4] sm:$0xf]
    %v9250 = vld [vmem:[#allocation7 + $0x8] sm:$0xf]
    %v9251 = vld [vmem:[#allocation7 + $0xc] sm:$0xf]
    %v9252 = vld [vmem:[#allocation7 + $0x10] sm:$0xf]
    %v9253 = vld [vmem:[#allocation7 + $0x14] sm:$0xf]
    %v9254 = vld [vmem:[#allocation7 + $0x18] sm:$0xf]
    %v9255 = vld [vmem:[#allocation7 + $0x1c] sm:$0xf]
    %v9256 = vld [vmem:[#allocation7 + $0x20] sm:$0xf]
    %v9257 = vld [vmem:[#allocation7 + $0x24] sm:$0xf]
    %v9258 = vld [vmem:[#allocation7 + $0x28] sm:$0xf]
    %v9259 = vld [vmem:[#allocation7 + $0x2c] sm:$0xf]
    %v9260 = vld [vmem:[#allocation7 + $0x30] sm:$0xf]
    %v9261 = vld [vmem:[#allocation7 + $0x34] sm:$0xf]
    %v9262 = vld [vmem:[#allocation7 + $0x38] sm:$0xf]
    %v9263 = vld [vmem:[#allocation7 + $0x3c] sm:$0xf]
    %v9264 = vld [vmem:[#allocation7 + $0x40] sm:$0xf]
    %v9265 = vld [vmem:[#allocation7 + $0x44] sm:$0xf]
    %v9266 = vld [vmem:[#allocation7 + $0x48] sm:$0xf]
    %v9267 = vld [vmem:[#allocation7 + $0x4c] sm:$0xf]
    %v9268 = vld [vmem:[#allocation7 + $0x50] sm:$0xf]
    %v9269 = vld [vmem:[#allocation7 + $0x54] sm:$0xf]
    %v9270 = vld [vmem:[#allocation7 + $0x58] sm:$0xf]
    %v9271 = vld [vmem:[#allocation7 + $0x5c] sm:$0xf]
    %v9272 = vld [vmem:[#allocation7 + $0x60] sm:$0xf]
    %v9273 = vld [vmem:[#allocation7 + $0x64] sm:$0xf]
    %v9274 = vld [vmem:[#allocation7 + $0x68] sm:$0xf]
    %v9275 = vld [vmem:[#allocation7 + $0x6c] sm:$0xf]
    %v9276 = vld [vmem:[#allocation7 + $0x70] sm:$0xf]
    %v9277 = vld [vmem:[#allocation7 + $0x74] sm:$0xf]
    %v9278 = vld [vmem:[#allocation7 + $0x78] sm:$0xf]
    %v9279 = vld [vmem:[#allocation7 + $0x7c] sm:$0xf]
    %v9280 = vld [vmem:[#allocation8] sm:$0x1]
    %v9282 = vperm.slane %v9280, 0
    %v9316 = vunpack.c.l.b16 %v9248
    %v9317 = vunpack.c.l.b16 %v9249
    %v9318 = vunpack.c.l.b16 %v9250
    %v9319 = vunpack.c.l.b16 %v9251
    %v9320 = vunpack.c.l.b16 %v9252
    %v9321 = vunpack.c.l.b16 %v9253
    %v9322 = vunpack.c.l.b16 %v9254
    %v9323 = vunpack.c.l.b16 %v9255
    %v9324 = vunpack.c.l.b16 %v9256
    %v9325 = vunpack.c.l.b16 %v9257
    %v9326 = vunpack.c.l.b16 %v9258
    %v9327 = vunpack.c.l.b16 %v9259
    %v9328 = vunpack.c.l.b16 %v9260
    %v9329 = vunpack.c.l.b16 %v9261
    %v9330 = vunpack.c.l.b16 %v9262
    %v9331 = vunpack.c.l.b16 %v9263
    %v9332 = vunpack.c.l.b16 %v9264
    %v9333 = vunpack.c.l.b16 %v9265
    %v9334 = vunpack.c.l.b16 %v9266
    %v9335 = vunpack.c.l.b16 %v9267
    %v9336 = vunpack.c.l.b16 %v9268
    %v9337 = vunpack.c.l.b16 %v9269
    %v9338 = vunpack.c.l.b16 %v9270
    %v9339 = vunpack.c.l.b16 %v9271
    %v9340 = vunpack.c.l.b16 %v9272
    %v9341 = vunpack.c.l.b16 %v9273
    %v9342 = vunpack.c.l.b16 %v9274
    %v9343 = vunpack.c.l.b16 %v9275
    %v9344 = vunpack.c.l.b16 %v9276
    %v9345 = vunpack.c.l.b16 %v9277
    %v9346 = vunpack.c.l.b16 %v9278
    %v9347 = vunpack.c.l.b16 %v9279
    %v9348 = vpack.c.b16 %v9317, %v9316
    %v9349 = vpack.c.b16 %v9319, %v9318
    %v9350 = vpack.c.b16 %v9321, %v9320
    %v9351 = vpack.c.b16 %v9323, %v9322
    %v9352 = vpack.c.b16 %v9325, %v9324
    %v9353 = vpack.c.b16 %v9327, %v9326
    %v9354 = vpack.c.b16 %v9329, %v9328
    %v9355 = vpack.c.b16 %v9331, %v9330
    %v9356 = vpack.c.b16 %v9333, %v9332
    %v9357 = vpack.c.b16 %v9335, %v9334
    %v9358 = vpack.c.b16 %v9337, %v9336
    %v9359 = vpack.c.b16 %v9339, %v9338
    %v9360 = vpack.c.b16 %v9341, %v9340
    %v9361 = vpack.c.b16 %v9343, %v9342
    %v9362 = vpack.c.b16 %v9345, %v9344
    %v9363 = vpack.c.b16 %v9347, %v9346
    %9380 = vmatpush.bf16.msra.mxu0 %v9355
    %9381 = vmatpush.bf16.msra.mxu0 %v9354
    %9382 = vmatpush.bf16.msra.mxu0 %v9353
    %9383 = vmatpush.bf16.msra.mxu0 %v9352
    %9384 = vmatpush.bf16.msra.mxu0 %v9351
    %9385 = vmatpush.bf16.msra.mxu0 %v9350
    %9386 = vmatpush.bf16.msra.mxu0 %v9349
    %9387 = vmatpush.bf16.msra.mxu0 %v9348
    %9388 = vmatmul.bf16.gmra.mxu0 %v9240
    %v9389 = vpop.f32.mrf.mxu0
    %v9390 = vadd.f32 %v9282, %v9389
    %v9391 = vpop.f32.mrf.mxu0
    %v9392 = vadd.f32 %v9282, %v9391
    %9393 = vmatmul.bf16.gmra.mxu0 %v9242
    %v9394 = vpop.f32.mrf.mxu0
    %v9395 = vadd.f32 %v9282, %v9394
    %v9396 = vpop.f32.mrf.mxu0
    %v9397 = vadd.f32 %v9282, %v9396
    %9398 = vmatmul.bf16.gmra.mxu0 %v9244
    %v9399 = vpop.f32.mrf.mxu0
    %v9400 = vadd.f32 %v9282, %v9399
    %v9401 = vpop.f32.mrf.mxu0
    %v9402 = vadd.f32 %v9282, %v9401
    %9403 = vmatmul.bf16.gmra.mxu0 %v9246
    %v9404 = vpop.f32.mrf.mxu0
    %v9405 = vadd.f32 %v9282, %v9404
    %v9406 = vpop.f32.mrf.mxu0
    %v9407 = vadd.f32 %v9282, %v9406
    %9408 = vdwg.mxu0
    %9409 = vmatpush.bf16.msra.mxu0 %v9363
    %9410 = vmatpush.bf16.msra.mxu0 %v9362
    %9411 = vmatpush.bf16.msra.mxu0 %v9361
    %9412 = vmatpush.bf16.msra.mxu0 %v9360
    %9413 = vmatpush.bf16.msra.mxu0 %v9359
    %9414 = vmatpush.bf16.msra.mxu0 %v9358
    %9415 = vmatpush.bf16.msra.mxu0 %v9357
    %9416 = vmatpush.bf16.msra.mxu0 %v9356
    %9417 = vmatmul.bf16.gmra.mxu0 %v9241
    %v9418 = vpop.f32.mrf.mxu0
    %v9419 = vadd.f32 %v9390, %v9418
    %v9420 = vpop.f32.mrf.mxu0
    %v9421 = vadd.f32 %v9392, %v9420
    %9422 = vmatmul.bf16.gmra.mxu0 %v9243
    %v9423 = vpop.f32.mrf.mxu0
    %v9424 = vadd.f32 %v9395, %v9423
    %v9425 = vpop.f32.mrf.mxu0
    %v9426 = vadd.f32 %v9397, %v9425
    %9427 = vmatmul.bf16.gmra.mxu0 %v9245
    %v9428 = vpop.f32.mrf.mxu0
    %v9429 = vadd.f32 %v9400, %v9428
    %v9430 = vpop.f32.mrf.mxu0
    %v9431 = vadd.f32 %v9402, %v9430
    %9432 = vmatmul.bf16.gmra.mxu0 %v9247
    %v9433 = vpop.f32.mrf.mxu0
    %v9434 = vadd.f32 %v9405, %v9433
    %v9435 = vpop.f32.mrf.mxu0
    %v9436 = vadd.f32 %v9407, %v9435
    %9437 = vdwg.mxu0
    %9438 = vst [vmem:[#allocation13] sm:$0xff] %v9419
    %9439 = vst [vmem:[#allocation13 + $0x8] sm:$0xff] %v9421
    %9440 = vst [vmem:[#allocation13 + $0x10] sm:$0xff] %v9424
    %9441 = vst [vmem:[#allocation13 + $0x18] sm:$0xff] %v9426
    %9442 = vst [vmem:[#allocation13 + $0x20] sm:$0xff] %v9429
    %9443 = vst [vmem:[#allocation13 + $0x28] sm:$0xff] %v9431
    %9444 = vst [vmem:[#allocation13 + $0x30] sm:$0xff] %v9434
    %9445 = vst [vmem:[#allocation13 + $0x38] sm:$0xff] %v9436
    // Predicated region
    $region98: #{rnn_model_forward.1} parent=1 // pred_check
      _
    $region99: #{rnn_model_forward.1} parent=1 // pred_check_branch
      %9447 = sbr.rel (0) target = $region101
    $region100: #{rnn_model_forward.1} parent=1 // pred_region
      %9449 = vsyncadd [#allocation12], 0
      %s9450 = sshll.u32 [#allocation13], 4
      %s9451 = int_to_ptr.vmem [resolvable:$true] %s9450
      %s9452 = sshll.u32 %s9, 4
      %s9453 = int_to_ptr.hbm [resolvable:$true] %s9452
      %9458 = dma.vmem_to_hbm [thread:$0]  %s9451, 1024, %s9453, [#allocation12], 128, 128, 8
    $region101: #{rnn_model_forward.1} parent=1 // pred_fallthru
      _
    // Predicated region
    $region102: #{rnn_model_forward.1} parent=1 // pred_check
      _
    $region103: #{rnn_model_forward.1} parent=1 // pred_check_branch
      %9460 = sbr.rel (0) target = $region105
    $region104: #{rnn_model_forward.1} parent=1 // pred_region
      %9462 = vsyncadd [#allocation15], 0
      %s9463 = sshll.u32 [#allocation14], 4
      %s9464 = int_to_ptr.vmem [resolvable:$true] %s9463
      %s9465 = sshll.u32 %s10, 4
      %s9466 = int_to_ptr.hbm [resolvable:$true] %s9465
      %9471 = dma.vmem_to_hbm [thread:$0]  %s9464, 512, %s9466, [#allocation15], 256, 256, 16
    $region105: #{rnn_model_forward.1} parent=1 // pred_fallthru
      _
    // Predicated region
    $region106: #{rnn_model_forward.1} parent=1 // pred_check
      _
    $region107: #{rnn_model_forward.1} parent=1 // pred_check_branch
      %9473 = sbr.rel (0) target = $region109
    $region108: #{rnn_model_forward.1} parent=1 // pred_region
      %9475 = vsyncadd [#allocation15], 0
      %s9476 = sshll.u32 [#allocation16], 4
      %s9477 = int_to_ptr.vmem [resolvable:$true] %s9476
      %s9478 = sshll.u32 %s11, 4
      %s9479 = int_to_ptr.hbm [resolvable:$true] %s9478
      %9484 = dma.vmem_to_hbm [thread:$0]  %s9477, 512, %s9479, [#allocation15], 256, 256, 16
    $region109: #{rnn_model_forward.1} parent=1 // pred_fallthru
      _
    // Predicated region
    $region110: #{rnn_model_forward.1} parent=1 // pred_check
      _
    $region111: #{rnn_model_forward.1} parent=1 // pred_check_branch
      %9486 = sbr.rel (0) target = $region113
    $region112: #{rnn_model_forward.1} parent=1 // pred_region
      %9488 = dma.done [#allocation12], 1024
    $region113: #{rnn_model_forward.1} parent=1 // pred_fallthru
      _
    // Predicated region
    $region114: #{rnn_model_forward.1} parent=1 // pred_check
      _
    $region115: #{rnn_model_forward.1} parent=1 // pred_check_branch
      %9490 = sbr.rel (0) target = $region117
    $region116: #{rnn_model_forward.1} parent=1 // pred_region
      %9492 = dma.done [#allocation15], 512
    $region117: #{rnn_model_forward.1} parent=1 // pred_fallthru
      _
    // Predicated region
    $region118: #{rnn_model_forward.1} parent=1 // pred_check
      _
    $region119: #{rnn_model_forward.1} parent=1 // pred_check_branch
      %9494 = sbr.rel (0) target = $region121
    $region120: #{rnn_model_forward.1} parent=1 // pred_region
      %9496 = dma.done [#allocation15], 512
    $region121: #{rnn_model_forward.1} parent=1 // pred_fallthru
      _
    %9497 = vsyncpa [#allocation11], 1
    %9498 = vsyncpa [#allocation12], 1
    %9499 = vsyncpa [#allocation15], 1
  %9500 = vsyncmov [#allocation9]
  %s9501 = vpop.sfrf %9500
  %p9502 = scmp.eq.s32.totalorder %s9501, 0
  %p9503 = pneg %p9502
  %9505 = shalt.err (%p9503)
  %s9506 = scalar_lea.sflag [#allocation9], 1
  %9507 = vsyncmov %s9506
  %s9508 = vpop.sfrf %9507
  %p9509 = scmp.eq.s32.totalorder %s9508, 0
  %p9510 = pneg %p9509
  %9512 = shalt.err (%p9510)
  %s9513 = scalar_lea.sflag [#allocation9], 2
  %9514 = vsyncmov %s9513
  %s9515 = vpop.sfrf %9514
  %p9516 = scmp.eq.s32.totalorder %s9515, 0
  %p9517 = pneg %p9516
  %9519 = shalt.err (%p9517)
  %s9520 = scalar_lea.sflag [#allocation9], 3
  %9521 = vsyncmov %s9520
  %s9522 = vpop.sfrf %9521
  %p9523 = scmp.eq.s32.totalorder %s9522, 0
  %p9524 = pneg %p9523
  %9526 = shalt.err (%p9524)
  %s9527 = scalar_lea.sflag [#allocation9], 4
  %9528 = vsyncmov %s9527
  %s9529 = vpop.sfrf %9528
  %p9530 = scmp.eq.s32.totalorder %s9529, 0
  %p9531 = pneg %p9530
  %9533 = shalt.err (%p9531)

</llo_original>
